<compile_context>
chip_gen: v6e
topology: v6e:2x2x1
jax: 0.10.0
libtpu: 0.0.40
codegen_flags: <defaults>
</compile_context>

<pallas_src>
import math
from functools import partial

import jax
import jax.numpy as jnp
import numpy as np
from jax.experimental import pallas as pl
from jax.experimental.pallas import tpu as pltpu


# ----------------------------- Pallas kernel ------------------------------ #
def encoder_layer_kernel(x_ref, wqkv_ref, wo_ref, bo_ref,
                         g1_ref, bn1_ref, g2_ref, bn2_ref,
                         csq_ref, ssq_ref, csk_ref, ssk_ref,
                         w1_ref, bf1_ref, w2_ref, bf2_ref,
                         o_ref, ctx_ref, *, num_heads):
    S, D = csq_ref.shape
    H = num_heads
    hd = D // H
    hd2 = hd // 2
    D2 = D // 2
    inv_sqrt_hd = 1.0 / math.sqrt(hd)

    x = x_ref[0]                                   # (S, D) f32

    # ---- hoisted constant loads (used once; never reloaded inside loops) ----
    g1, bn1 = g1_ref[...], bn1_ref[...]
    g2, bn2 = g2_ref[...], bn2_ref[...]
    bo = bo_ref[...]
    bf1, bf2 = bf1_ref[...], bf2_ref[...]
    csq, ssq = csq_ref[...], ssq_ref[...]
    csk, ssk = csk_ref[...], ssk_ref[...]

    def layer_norm(t, g, b):
        mu = jnp.mean(t, axis=-1, keepdims=True)
        var = jnp.mean(jnp.square(t - mu), axis=-1, keepdims=True)
        return (t - mu) * jax.lax.rsqrt(var + 1e-5) * g + b

    def erf_approx(z):
        # Abramowitz & Stegun 7.1.26, |error| < 1.5e-7 (float32 resolution)
        a1, a2, a3, a4, a5 = 0.254829592, -0.284496736, 1.421413741, -1.453152027, 1.061405429
        p = 0.3275911
        s = jnp.where(z >= 0.0, 1.0, -1.0)
        az = jnp.abs(z)
        t = 1.0 / (1.0 + p * az)
        poly = ((((a5 * t + a4) * t + a3) * t + a2) * t + a1) * t
        return s * (1.0 - poly * jnp.exp(-az * az))

    # ---- x + SelfAttention(LayerNorm1(x)) ----
    xn = layer_norm(x, g1, bn1)

    # Fused QKV projection: one full-width bf16 MXU pass, f32 accumulation.
    qkv = jnp.dot(xn.astype(jnp.bfloat16), wqkv_ref[...],
                  preferred_element_type=jnp.float32)          # (S, 3D) f32
    q = qkv[:, :D]
    k = qkv[:, D:2 * D]
    v = qkv[:, 2 * D:].astype(jnp.bfloat16)

    # xpos rotary: q/k columns are in the global half-split basis, so rotate_half is a
    # single lane roll by D/2 (direction-agnostic since 2*(D/2)==D); signs/scales are
    # baked into the (S, D) sin/cos tables.
    q = (q * csq + pltpu.roll(q, D2, 1) * ssq).astype(jnp.bfloat16)
    k = (k * csk + pltpu.roll(k, D2, 1) * ssk).astype(jnp.bfloat16)

    dn = (((1,), (1,)), ((), ()))                               # contract last dims (q @ k.T)
    for h in range(H):                                          # static unroll (per-head softmax)
        a = h * hd2
        b = a + hd2
        # head h lives in columns [a:b] (first-half dims) and [D2+a:D2+b] (second-half dims)
        s1 = jax.lax.dot_general(q[:, a:b], k[:, a:b], dn,
                                 preferred_element_type=jnp.float32)
        s2 = jax.lax.dot_general(q[:, D2 + a:D2 + b], k[:, D2 + a:D2 + b], dn,
                                 preferred_element_type=jnp.float32)
        scores = (s1 + s2) * inv_sqrt_hd                        # (S, S) f32

        m = jnp.max(scores, axis=-1, keepdims=True)
        e = jnp.exp(scores - m)
        inv = pl.reciprocal(jnp.sum(e, axis=-1, keepdims=True), approx=True)
        probs = (e * inv).astype(jnp.bfloat16)

        oh = jnp.dot(probs, v[:, h * hd:(h + 1) * hd],
                     preferred_element_type=jnp.float32)        # (S, hd) f32
        # bf16 head-slice write into the (S, D) context slab (halves scratch traffic
        # and removes the full-width f32->bf16 cast before the output projection).
        ctx_ref[:, h * hd:(h + 1) * hd] = oh.astype(jnp.bfloat16)

    # single full-width output projection
    attn = jnp.dot(ctx_ref[...], wo_ref[...],
                   preferred_element_type=jnp.float32) + bo
    x1 = x + attn                                               # dropout1 == identity

    # ---- x + FFN(LayerNorm2(x)) ----
    x2n = layer_norm(x1, g2, bn2)
    hdn = jnp.dot(x2n.astype(jnp.bfloat16), w1_ref[...],
                  preferred_element_type=jnp.float32) + bf1
    gel = 0.5 * hdn * (1.0 + erf_approx(hdn * 0.7071067811865475))   # exact GELU
    ff = jnp.dot(gel.astype(jnp.bfloat16), w2_ref[...],
                 preferred_element_type=jnp.float32) + bf2

    o_ref[0] = x1 + ff


# ------------------------------ JAX wrapper -------------------------------- #
def transformer_encoder_layer(x, kp, num_heads):
    """x: (N, S, D) float32; kp: kernel-layout params from build_params."""
    N, S, D = x.shape
    F = kp["w1"].shape[1]
    assert kp["csq"].shape == (S, D), "rotary tables were baked for a different seq length"

    def const_spec(shape):
        return pl.BlockSpec(shape, lambda i, _r=len(shape): (0,) * _r)

    in_specs = [
        pl.BlockSpec((1, S, D), lambda i: (i, 0, 0)),            # x
        const_spec((D, 3 * D)),                                  # fused Wqkv (bf16)
        const_spec((D, D)), const_spec((1, D)),                  # Wo (bf16), bo
        const_spec((1, D)), const_spec((1, D)),                  # ln1 gamma/beta
        const_spec((1, D)), const_spec((1, D)),                  # ln2 gamma/beta
        const_spec((S, D)), const_spec((S, D)),                  # cos*scale, sin*scale (q, signed)
        const_spec((S, D)), const_spec((S, D)),                  # cos/scale, sin/scale (k, signed)
        const_spec((D, F)), const_spec((1, F)),                  # ffn w1 (bf16), b1
        const_spec((F, D)), const_spec((1, D)),                  # ffn w2 (bf16), b2
    ]
    out_specs = pl.BlockSpec((1, S, D), lambda i: (i, 0, 0))

    return pl.pallas_call(
        partial(encoder_layer_kernel, num_heads=num_heads),
        out_shape=jax.ShapeDtypeStruct((N, S, D), jnp.float32),
        grid_spec=pltpu.PrefetchScalarGridSpec(
            num_scalar_prefetch=0,
            grid=(N,),
            in_specs=in_specs,
            out_specs=out_specs,
            scratch_shapes=[pltpu.VMEM((S, D), jnp.bfloat16)],   # per-head context slab (bf16)
        ),
        compiler_params=pltpu.CompilerParams(
            dimension_semantics=("parallel",),                   # batch across TCs (v7x: 2)
            vmem_limit_bytes=32 * 1024 * 1024,
        ),
    )(x, kp["wqkv"], kp["wo"], kp["bo"],
      kp["g1"], kp["bn1"], kp["g2"], kp["bn2"],
      kp["csq"], kp["ssq"], kp["csk"], kp["ssk"],
      kp["w1"], kp["bf1"], kp["w2"], kp["bf2"])


# -------------------- parameter construction (glue) ------------------------ #
def build_params(key, D, H, F, S):
    hd = D // H
    ks = jax.random.split(key, 10)

    def w(k, shape, scale=0.08):
        return jax.random.normal(k, shape, jnp.float32) * scale

    P = {  # torch-equivalent ("full") f32 parameters, laid out for y = x @ W
        "wq_full": w(ks[0], (D, D)), "wk_full": w(ks[1], (D, D)), "wv_full": w(ks[2], (D, D)),
        "wo_full": w(ks[3], (D, D)), "bo": w(ks[4], (1, D)),
        "w1": w(ks[5], (D, F)), "bf1": w(ks[6], (1, F)),
        "w2": w(ks[7], (F, D)), "bf2": w(ks[8], (1, D)),
        "g1": jnp.ones((1, D), jnp.float32), "bn1": jnp.zeros((1, D), jnp.float32),
        "g2": jnp.ones((1, D), jnp.float32), "bn2": jnp.zeros((1, D), jnp.float32),
    }

    # Global half-split column permutation for Q/K: new order is
    #   [head0 even dims, head1 even dims, ..., head0 odd dims, head1 odd dims, ...]
    # Per-head q.k inner products are invariant under this shared permutation.
    idx = np.arange(D).reshape(H, hd)
    perm = np.concatenate([idx[:, 0::2].reshape(-1), idx[:, 1::2].reshape(-1)])

    wq_g = P["wq_full"][:, perm]
    wk_g = P["wk_full"][:, perm]
    wqkv = jnp.concatenate([wq_g, wk_g, P["wv_full"]], axis=1)   # (D, 3D)

    kp = {
        "wqkv": wqkv.astype(jnp.bfloat16),
        "wo": P["wo_full"].astype(jnp.bfloat16),
        "w1": P["w1"].astype(jnp.bfloat16),
        "w2": P["w2"].astype(jnp.bfloat16),
        "bo": P["bo"], "bf1": P["bf1"], "bf2": P["bf2"],
        "g1": P["g1"], "bn1": P["bn1"], "g2": P["g2"], "bn2": P["bn2"],
    }

    # xpos rotary tables tiled to (S, D) in the global half-split basis,
    # with the rotate_half sign folded into the sin tables ([-sin | +sin]).
    inv_freq = 1.0 / (10000.0 ** (jnp.arange(0, hd, 2, dtype=jnp.float32) / hd))   # (hd2,)
    pos = jnp.arange(S, dtype=jnp.float32)
    ang = pos[:, None] * inv_freq[None, :]                                         # (S, hd2)
    xscale = (((jnp.arange(0, hd, 2, dtype=jnp.float32) + 0.4 * hd) / (1.4 * hd))[None, :]
              ** ((pos - float(S // 2)) / 512.0)[:, None])                         # (S, hd2)
    cos_h, sin_h = jnp.cos(ang), jnp.sin(ang)

    def tables(sc):
        cos_full = jnp.tile(cos_h * sc, (1, 2 * H))                                # (S, D)
        sin_full = jnp.concatenate([jnp.tile(-sin_h * sc, (1, H)),
                                    jnp.tile(sin_h * sc, (1, H))], axis=1)         # (S, D)
        return cos_full, sin_full

    kp["csq"], kp["ssq"] = tables(xscale)          # q scaled by xpos scale
    kp["csk"], kp["ssk"] = tables(1.0 / xscale)    # k scaled by inverse
    return P, kp


# ----------------------- plain-JAX reference (check) ----------------------- #
def reference_layer(x, P, H):
    N, S, D = x.shape
    hd = D // H

    def ln(t, g, b):
        mu = t.mean(-1, keepdims=True)
        var = ((t - mu) ** 2).mean(-1, keepdims=True)
        return (t - mu) / jnp.sqrt(var + 1e-5) * g + b

    xn = ln(x, P["g1"], P["bn1"])
    q = (xn @ P["wq_full"]).reshape(N, S, H, hd).transpose(0, 2, 1, 3)
    k = (xn @ P["wk_full"]).reshape(N, S, H, hd).transpose(0, 2, 1, 3)
    v = (xn @ P["wv_full"]).reshape(N, S, H, hd).transpose(0, 2, 1, 3)

    inv_freq = 1.0 / (10000.0 ** (jnp.arange(0, hd, 2, dtype=jnp.float32) / hd))
    pos = jnp.arange(S, dtype=jnp.float32)
    ang = jnp.repeat(pos[:, None] * inv_freq[None, :], 2, axis=-1)            # interleaved
    scale = jnp.repeat(
        (((jnp.arange(0, hd, 2, dtype=jnp.float32) + 0.4 * hd) / (1.4 * hd))[None, :]
         ** ((pos - float(S // 2)) / 512.0)[:, None]), 2, axis=-1)

    def rot_half_i(t):
        t1, t2 = t[..., 0::2], t[..., 1::2]
        return jnp.stack([-t2, t1], axis=-1).reshape(t.shape)

    cos, sin = jnp.cos(ang), jnp.sin(ang)
    q = q * cos * scale + rot_half_i(q) * sin * scale
    k = k * cos / scale + rot_half_i(k) * sin / scale

    scores = jnp.einsum("nhqd,nhkd->nhqk", q, k) / jnp.sqrt(jnp.float32(hd))
    probs = jax.nn.softmax(scores, axis=-1)
    o = jnp.einsum("nhqk,nhkd->nhqd", probs, v).transpose(0, 2, 1, 3).reshape(N, S, D)
    attn = o @ P["wo_full"] + P["bo"]
    x1 = x + attn
    x2n = ln(x1, P["g2"], P["bn2"])
    ff = jax.nn.gelu(x2n @ P["w1"] + P["bf1"], approximate=False) @ P["w2"] + P["bf2"]
    return x1 + ff


# --------------------------------- main ------------------------------------ #
if __name__ == "__main__":
    # Small but TPU-aligned shapes (lane-dense D, sublane-aligned S).
    N, S, D, H, F = 2, 128, 128, 4, 256   # batch, seq, d_model, nhead, dim_feedforward

    key = jax.random.PRNGKey(0)
    kx, kw = jax.random.split(key)
    x = jax.random.normal(kx, (N, S, D), jnp.float32)

    P, kp = build_params(kw, D, H, F, S)

    out = transformer_encoder_layer(x, kp, H)
    out = jax.block_until_ready(out)

    ref = reference_layer(x, P, H)
    # Slightly looser than f32-only tolerance: matmul operands are bf16 (f32 accumulation).
    np.testing.assert_allclose(np.asarray(out), np.asarray(ref), rtol=2e-2, atol=2e-2)

    print("KERNEL_OK")
</pallas_src>

<mosaic_0001>
module attributes {stable_mosaic.version = 11 : i64} {
  func.func @encoder_layer_kernel(%arg0: i32, %arg1: memref<1x128x128xf32, #tpu.memory_space<vmem>>, %arg2: memref<128x384xbf16, #tpu.memory_space<vmem>>, %arg3: memref<128x128xbf16, #tpu.memory_space<vmem>>, %arg4: memref<1x128xf32, #tpu.memory_space<vmem>>, %arg5: memref<1x128xf32, #tpu.memory_space<vmem>>, %arg6: memref<1x128xf32, #tpu.memory_space<vmem>>, %arg7: memref<1x128xf32, #tpu.memory_space<vmem>>, %arg8: memref<1x128xf32, #tpu.memory_space<vmem>>, %arg9: memref<128x128xf32, #tpu.memory_space<vmem>>, %arg10: memref<128x128xf32, #tpu.memory_space<vmem>>, %arg11: memref<128x128xf32, #tpu.memory_space<vmem>>, %arg12: memref<128x128xf32, #tpu.memory_space<vmem>>, %arg13: memref<128x256xbf16, #tpu.memory_space<vmem>>, %arg14: memref<1x256xf32, #tpu.memory_space<vmem>>, %arg15: memref<256x128xbf16, #tpu.memory_space<vmem>>, %arg16: memref<1x128xf32, #tpu.memory_space<vmem>>, %arg17: memref<1x128x128xf32, #tpu.memory_space<vmem>>, %arg18: memref<128x128xbf16, #tpu.memory_space<vmem>>) attributes {dimension_semantics = [#tpu.dimension_semantics<parallel>], iteration_bounds = array<i64: 2>, scalar_prefetch = 0 : i64, scratch_operands = 1 : i64, tpu.core_type = #tpu.core_type<tc>, window_params = [{transform_indices = @transform_0, window_bounds = array<i64: 1, 128, 128>}, {pipeline_mode = #tpu.pipeline_mode<synchronous>, transform_indices = @transform_1, window_bounds = array<i64: 128, 384>}, {pipeline_mode = #tpu.pipeline_mode<synchronous>, transform_indices = @transform_2, window_bounds = array<i64: 128, 128>}, {pipeline_mode = #tpu.pipeline_mode<synchronous>, transform_indices = @transform_3, window_bounds = array<i64: 1, 128>}, {pipeline_mode = #tpu.pipeline_mode<synchronous>, transform_indices = @transform_4, window_bounds = array<i64: 1, 128>}, {pipeline_mode = #tpu.pipeline_mode<synchronous>, transform_indices = @transform_5, window_bounds = array<i64: 1, 128>}, {pipeline_mode = #tpu.pipeline_mode<synchronous>, transform_indices = @transform_6, window_bounds = array<i64: 1, 128>}, {pipeline_mode = #tpu.pipeline_mode<synchronous>, transform_indices = @transform_7, window_bounds = array<i64: 1, 128>}, {pipeline_mode = #tpu.pipeline_mode<synchronous>, transform_indices = @transform_8, window_bounds = array<i64: 128, 128>}, {pipeline_mode = #tpu.pipeline_mode<synchronous>, transform_indices = @transform_9, window_bounds = array<i64: 128, 128>}, {pipeline_mode = #tpu.pipeline_mode<synchronous>, transform_indices = @transform_10, window_bounds = array<i64: 128, 128>}, {pipeline_mode = #tpu.pipeline_mode<synchronous>, transform_indices = @transform_11, window_bounds = array<i64: 128, 128>}, {pipeline_mode = #tpu.pipeline_mode<synchronous>, transform_indices = @transform_12, window_bounds = array<i64: 128, 256>}, {pipeline_mode = #tpu.pipeline_mode<synchronous>, transform_indices = @transform_13, window_bounds = array<i64: 1, 256>}, {pipeline_mode = #tpu.pipeline_mode<synchronous>, transform_indices = @transform_14, window_bounds = array<i64: 256, 128>}, {pipeline_mode = #tpu.pipeline_mode<synchronous>, transform_indices = @transform_15, window_bounds = array<i64: 1, 128>}, {transform_indices = @transform_16, window_bounds = array<i64: 1, 128, 128>}]} {
    %c0 = arith.constant 0 : index
    %c0_0 = arith.constant 0 : index
    %c0_1 = arith.constant 0 : index
    %0 = vector.load %arg1[%c0, %c0_0, %c0_1] : memref<1x128x128xf32, #tpu.memory_space<vmem>>, vector<1x128x128xf32>
    %1 = vector.shape_cast %0 : vector<1x128x128xf32> to vector<128x128xf32>
    %c0_2 = arith.constant 0 : index
    %c0_3 = arith.constant 0 : index
    %2 = vector.load %arg5[%c0_2, %c0_3] : memref<1x128xf32, #tpu.memory_space<vmem>>, vector<1x128xf32>
    %c0_4 = arith.constant 0 : index
    %c0_5 = arith.constant 0 : index
    %3 = vector.load %arg6[%c0_4, %c0_5] : memref<1x128xf32, #tpu.memory_space<vmem>>, vector<1x128xf32>
    %c0_6 = arith.constant 0 : index
    %c0_7 = arith.constant 0 : index
    %4 = vector.load %arg7[%c0_6, %c0_7] : memref<1x128xf32, #tpu.memory_space<vmem>>, vector<1x128xf32>
    %c0_8 = arith.constant 0 : index
    %c0_9 = arith.constant 0 : index
    %5 = vector.load %arg8[%c0_8, %c0_9] : memref<1x128xf32, #tpu.memory_space<vmem>>, vector<1x128xf32>
    %c0_10 = arith.constant 0 : index
    %c0_11 = arith.constant 0 : index
    %6 = vector.load %arg4[%c0_10, %c0_11] : memref<1x128xf32, #tpu.memory_space<vmem>>, vector<1x128xf32>
    %c0_12 = arith.constant 0 : index
    %c0_13 = arith.constant 0 : index
    %7 = vector.load %arg14[%c0_12, %c0_13] : memref<1x256xf32, #tpu.memory_space<vmem>>, vector<1x256xf32>
    %c0_14 = arith.constant 0 : index
    %c0_15 = arith.constant 0 : index
    %8 = vector.load %arg16[%c0_14, %c0_15] : memref<1x128xf32, #tpu.memory_space<vmem>>, vector<1x128xf32>
    %c0_16 = arith.constant 0 : index
    %c0_17 = arith.constant 0 : index
    %9 = vector.load %arg9[%c0_16, %c0_17] : memref<128x128xf32, #tpu.memory_space<vmem>>, vector<128x128xf32>
    %c0_18 = arith.constant 0 : index
    %c0_19 = arith.constant 0 : index
    %10 = vector.load %arg10[%c0_18, %c0_19] : memref<128x128xf32, #tpu.memory_space<vmem>>, vector<128x128xf32>
    %c0_20 = arith.constant 0 : index
    %c0_21 = arith.constant 0 : index
    %11 = vector.load %arg11[%c0_20, %c0_21] : memref<128x128xf32, #tpu.memory_space<vmem>>, vector<128x128xf32>
    %c0_22 = arith.constant 0 : index
    %c0_23 = arith.constant 0 : index
    %12 = vector.load %arg12[%c0_22, %c0_23] : memref<128x128xf32, #tpu.memory_space<vmem>>, vector<128x128xf32>
    %cst = arith.constant dense<0.000000e+00> : vector<128xf32>
    %13 = vector.multi_reduction <add>, %1, %cst [1] : vector<128x128xf32> to vector<128xf32>
    %14 = vector.shape_cast %13 : vector<128xf32> to vector<128x1xf32>
    %cst_24 = arith.constant 1.280000e+02 : f32
    %15 = vector.broadcast %cst_24 : f32 to vector<128x1xf32>
    %16 = arith.divf %14, %15 : vector<128x1xf32>
    %17 = vector.broadcast %16 : vector<128x1xf32> to vector<128x128xf32>
    %18 = arith.subf %1, %17 : vector<128x128xf32>
    %19 = arith.mulf %18, %18 : vector<128x128xf32>
    %cst_25 = arith.constant dense<0.000000e+00> : vector<128xf32>
    %20 = vector.multi_reduction <add>, %19, %cst_25 [1] : vector<128x128xf32> to vector<128xf32>
    %21 = vector.shape_cast %20 : vector<128xf32> to vector<128x1xf32>
    %cst_26 = arith.constant 1.280000e+02 : f32
    %22 = vector.broadcast %cst_26 : f32 to vector<128x1xf32>
    %23 = arith.divf %21, %22 : vector<128x1xf32>
    %24 = vector.broadcast %16 : vector<128x1xf32> to vector<128x128xf32>
    %25 = arith.subf %1, %24 : vector<128x128xf32>
    %cst_27 = arith.constant 9.99999974E-6 : f32
    %26 = vector.broadcast %cst_27 : f32 to vector<128x1xf32>
    %27 = arith.addf %23, %26 : vector<128x1xf32>
    %28 = math.rsqrt %27 : vector<128x1xf32>
    %29 = vector.broadcast %28 : vector<128x1xf32> to vector<128x128xf32>
    %30 = arith.mulf %25, %29 : vector<128x128xf32>
    %31 = vector.broadcast %2 : vector<1x128xf32> to vector<128x128xf32>
    %32 = arith.mulf %30, %31 : vector<128x128xf32>
    %33 = vector.broadcast %3 : vector<1x128xf32> to vector<128x128xf32>
    %34 = arith.addf %32, %33 : vector<128x128xf32>
    %35 = arith.truncf %34 : vector<128x128xf32> to vector<128x128xbf16>
    %c0_28 = arith.constant 0 : index
    %c0_29 = arith.constant 0 : index
    %36 = vector.load %arg2[%c0_28, %c0_29] : memref<128x384xbf16, #tpu.memory_space<vmem>>, vector<128x384xbf16>
    %cst_30 = arith.constant dense<0.000000e+00> : vector<128x384xf32>
    %37 = tpu.matmul %35, %36, %cst_30 {dimension_numbers = #tpu.dot_dimension_numbers<[1], [0], [0], [1], [0, 0, 1, 1], [], []>} : vector<128x128xbf16>, vector<128x384xbf16>, vector<128x384xf32> -> vector<128x384xf32>
    %38 = vector.extract_strided_slice %37 {offsets = [0, 0], sizes = [128, 128], strides = [1, 1]} : vector<128x384xf32> to vector<128x128xf32>
    %39 = vector.extract_strided_slice %37 {offsets = [0, 128], sizes = [128, 128], strides = [1, 1]} : vector<128x384xf32> to vector<128x128xf32>
    %40 = vector.extract_strided_slice %37 {offsets = [0, 256], sizes = [128, 128], strides = [1, 1]} : vector<128x384xf32> to vector<128x128xf32>
    %41 = arith.truncf %40 : vector<128x128xf32> to vector<128x128xbf16>
    %42 = arith.mulf %38, %9 : vector<128x128xf32>
    %c64_i32 = arith.constant 64 : i32
    %43 = tpu.dynamic_rotate %38 by %c64_i32 dim 1 : vector<128x128xf32>, i32 -> vector<128x128xf32>
    %44 = arith.mulf %43, %10 : vector<128x128xf32>
    %45 = arith.addf %42, %44 : vector<128x128xf32>
    %46 = arith.truncf %45 : vector<128x128xf32> to vector<128x128xbf16>
    %47 = arith.mulf %39, %11 : vector<128x128xf32>
    %c64_i32_31 = arith.constant 64 : i32
    %48 = tpu.dynamic_rotate %39 by %c64_i32_31 dim 1 : vector<128x128xf32>, i32 -> vector<128x128xf32>
    %49 = arith.mulf %48, %12 : vector<128x128xf32>
    %50 = arith.addf %47, %49 : vector<128x128xf32>
    %51 = arith.truncf %50 : vector<128x128xf32> to vector<128x128xbf16>
    %52 = vector.extract_strided_slice %46 {offsets = [0, 0], sizes = [128, 16], strides = [1, 1]} : vector<128x128xbf16> to vector<128x16xbf16>
    %53 = vector.extract_strided_slice %51 {offsets = [0, 0], sizes = [128, 16], strides = [1, 1]} : vector<128x128xbf16> to vector<128x16xbf16>
    %cst_32 = arith.constant dense<0.000000e+00> : vector<128x128xf32>
    %54 = tpu.matmul %52, %53, %cst_32 {dimension_numbers = #tpu.dot_dimension_numbers<[1], [1], [0], [0], [0, 0, 1, 0], [], []>} : vector<128x16xbf16>, vector<128x16xbf16>, vector<128x128xf32> -> vector<128x128xf32>
    %55 = vector.extract_strided_slice %46 {offsets = [0, 64], sizes = [128, 16], strides = [1, 1]} : vector<128x128xbf16> to vector<128x16xbf16>
    %56 = vector.extract_strided_slice %51 {offsets = [0, 64], sizes = [128, 16], strides = [1, 1]} : vector<128x128xbf16> to vector<128x16xbf16>
    %cst_33 = arith.constant dense<0.000000e+00> : vector<128x128xf32>
    %57 = tpu.matmul %55, %56, %cst_33 {dimension_numbers = #tpu.dot_dimension_numbers<[1], [1], [0], [0], [0, 0, 1, 0], [], []>} : vector<128x16xbf16>, vector<128x16xbf16>, vector<128x128xf32> -> vector<128x128xf32>
    %58 = arith.addf %54, %57 : vector<128x128xf32>
    %cst_34 = arith.constant 0.176776692 : f32
    %59 = vector.broadcast %cst_34 : f32 to vector<128x128xf32>
    %60 = arith.mulf %58, %59 : vector<128x128xf32>
    %cst_35 = arith.constant dense<0xFF800000> : vector<128xf32>
    %61 = vector.multi_reduction <maximumf>, %60, %cst_35 [1] : vector<128x128xf32> to vector<128xf32>
    %62 = vector.shape_cast %61 : vector<128xf32> to vector<128x1xf32>
    %63 = vector.broadcast %62 : vector<128x1xf32> to vector<128x128xf32>
    %64 = arith.subf %60, %63 : vector<128x128xf32>
    %65 = math.exp %64 : vector<128x128xf32>
    %cst_36 = arith.constant dense<0.000000e+00> : vector<128xf32>
    %66 = vector.multi_reduction <add>, %65, %cst_36 [1] : vector<128x128xf32> to vector<128xf32>
    %67 = vector.shape_cast %66 : vector<128xf32> to vector<128x1xf32>
    %68 = tpu.reciprocal %67 {approx = true} : vector<128x1xf32> -> vector<128x1xf32>
    %69 = vector.broadcast %68 : vector<128x1xf32> to vector<128x128xf32>
    %70 = arith.mulf %65, %69 : vector<128x128xf32>
    %71 = arith.truncf %70 : vector<128x128xf32> to vector<128x128xbf16>
    %72 = vector.extract_strided_slice %41 {offsets = [0, 0], sizes = [128, 32], strides = [1, 1]} : vector<128x128xbf16> to vector<128x32xbf16>
    %cst_37 = arith.constant dense<0.000000e+00> : vector<128x32xf32>
    %73 = tpu.matmul %71, %72, %cst_37 {dimension_numbers = #tpu.dot_dimension_numbers<[1], [0], [0], [1], [0, 0, 1, 1], [], []>} : vector<128x128xbf16>, vector<128x32xbf16>, vector<128x32xf32> -> vector<128x32xf32>
    %74 = arith.truncf %73 : vector<128x32xf32> to vector<128x32xbf16>
    %c0_38 = arith.constant 0 : index
    %c0_39 = arith.constant 0 : index
    %75 = vector.load %arg18[%c0_38, %c0_39] : memref<128x128xbf16, #tpu.memory_space<vmem>>, vector<128x32xbf16>
    tpu.vector_store %arg18[%c0_38, %c0_39], %74 {strides = array<i32>} : memref<128x128xbf16, #tpu.memory_space<vmem>>, vector<128x32xbf16>,
    %76 = vector.extract_strided_slice %46 {offsets = [0, 16], sizes = [128, 16], strides = [1, 1]} : vector<128x128xbf16> to vector<128x16xbf16>
    %77 = vector.extract_strided_slice %51 {offsets = [0, 16], sizes = [128, 16], strides = [1, 1]} : vector<128x128xbf16> to vector<128x16xbf16>
    %cst_40 = arith.constant dense<0.000000e+00> : vector<128x128xf32>
    %78 = tpu.matmul %76, %77, %cst_40 {dimension_numbers = #tpu.dot_dimension_numbers<[1], [1], [0], [0], [0, 0, 1, 0], [], []>} : vector<128x16xbf16>, vector<128x16xbf16>, vector<128x128xf32> -> vector<128x128xf32>
    %79 = vector.extract_strided_slice %46 {offsets = [0, 80], sizes = [128, 16], strides = [1, 1]} : vector<128x128xbf16> to vector<128x16xbf16>
    %80 = vector.extract_strided_slice %51 {offsets = [0, 80], sizes = [128, 16], strides = [1, 1]} : vector<128x128xbf16> to vector<128x16xbf16>
    %cst_41 = arith.constant dense<0.000000e+00> : vector<128x128xf32>
    %81 = tpu.matmul %79, %80, %cst_41 {dimension_numbers = #tpu.dot_dimension_numbers<[1], [1], [0], [0], [0, 0, 1, 0], [], []>} : vector<128x16xbf16>, vector<128x16xbf16>, vector<128x128xf32> -> vector<128x128xf32>
    %82 = arith.addf %78, %81 : vector<128x128xf32>
    %cst_42 = arith.constant 0.176776692 : f32
    %83 = vector.broadcast %cst_42 : f32 to vector<128x128xf32>
    %84 = arith.mulf %82, %83 : vector<128x128xf32>
    %cst_43 = arith.constant dense<0xFF800000> : vector<128xf32>
    %85 = vector.multi_reduction <maximumf>, %84, %cst_43 [1] : vector<128x128xf32> to vector<128xf32>
    %86 = vector.shape_cast %85 : vector<128xf32> to vector<128x1xf32>
    %87 = vector.broadcast %86 : vector<128x1xf32> to vector<128x128xf32>
    %88 = arith.subf %84, %87 : vector<128x128xf32>
    %89 = math.exp %88 : vector<128x128xf32>
    %cst_44 = arith.constant dense<0.000000e+00> : vector<128xf32>
    %90 = vector.multi_reduction <add>, %89, %cst_44 [1] : vector<128x128xf32> to vector<128xf32>
    %91 = vector.shape_cast %90 : vector<128xf32> to vector<128x1xf32>
    %92 = tpu.reciprocal %91 {approx = true} : vector<128x1xf32> -> vector<128x1xf32>
    %93 = vector.broadcast %92 : vector<128x1xf32> to vector<128x128xf32>
    %94 = arith.mulf %89, %93 : vector<128x128xf32>
    %95 = arith.truncf %94 : vector<128x128xf32> to vector<128x128xbf16>
    %96 = vector.extract_strided_slice %41 {offsets = [0, 32], sizes = [128, 32], strides = [1, 1]} : vector<128x128xbf16> to vector<128x32xbf16>
    %cst_45 = arith.constant dense<0.000000e+00> : vector<128x32xf32>
    %97 = tpu.matmul %95, %96, %cst_45 {dimension_numbers = #tpu.dot_dimension_numbers<[1], [0], [0], [1], [0, 0, 1, 1], [], []>} : vector<128x128xbf16>, vector<128x32xbf16>, vector<128x32xf32> -> vector<128x32xf32>
    %98 = arith.truncf %97 : vector<128x32xf32> to vector<128x32xbf16>
    %c0_46 = arith.constant 0 : index
    %c32 = arith.constant 32 : index
    %99 = vector.load %arg18[%c0_46, %c32] : memref<128x128xbf16, #tpu.memory_space<vmem>>, vector<128x32xbf16>
    tpu.vector_store %arg18[%c0_46, %c32], %98 {strides = array<i32>} : memref<128x128xbf16, #tpu.memory_space<vmem>>, vector<128x32xbf16>,
    %100 = vector.extract_strided_slice %46 {offsets = [0, 32], sizes = [128, 16], strides = [1, 1]} : vector<128x128xbf16> to vector<128x16xbf16>
    %101 = vector.extract_strided_slice %51 {offsets = [0, 32], sizes = [128, 16], strides = [1, 1]} : vector<128x128xbf16> to vector<128x16xbf16>
    %cst_47 = arith.constant dense<0.000000e+00> : vector<128x128xf32>
    %102 = tpu.matmul %100, %101, %cst_47 {dimension_numbers = #tpu.dot_dimension_numbers<[1], [1], [0], [0], [0, 0, 1, 0], [], []>} : vector<128x16xbf16>, vector<128x16xbf16>, vector<128x128xf32> -> vector<128x128xf32>
    %103 = vector.extract_strided_slice %46 {offsets = [0, 96], sizes = [128, 16], strides = [1, 1]} : vector<128x128xbf16> to vector<128x16xbf16>
    %104 = vector.extract_strided_slice %51 {offsets = [0, 96], sizes = [128, 16], strides = [1, 1]} : vector<128x128xbf16> to vector<128x16xbf16>
    %cst_48 = arith.constant dense<0.000000e+00> : vector<128x128xf32>
    %105 = tpu.matmul %103, %104, %cst_48 {dimension_numbers = #tpu.dot_dimension_numbers<[1], [1], [0], [0], [0, 0, 1, 0], [], []>} : vector<128x16xbf16>, vector<128x16xbf16>, vector<128x128xf32> -> vector<128x128xf32>
    %106 = arith.addf %102, %105 : vector<128x128xf32>
    %cst_49 = arith.constant 0.176776692 : f32
    %107 = vector.broadcast %cst_49 : f32 to vector<128x128xf32>
    %108 = arith.mulf %106, %107 : vector<128x128xf32>
    %cst_50 = arith.constant dense<0xFF800000> : vector<128xf32>
    %109 = vector.multi_reduction <maximumf>, %108, %cst_50 [1] : vector<128x128xf32> to vector<128xf32>
    %110 = vector.shape_cast %109 : vector<128xf32> to vector<128x1xf32>
    %111 = vector.broadcast %110 : vector<128x1xf32> to vector<128x128xf32>
    %112 = arith.subf %108, %111 : vector<128x128xf32>
    %113 = math.exp %112 : vector<128x128xf32>
    %cst_51 = arith.constant dense<0.000000e+00> : vector<128xf32>
    %114 = vector.multi_reduction <add>, %113, %cst_51 [1] : vector<128x128xf32> to vector<128xf32>
    %115 = vector.shape_cast %114 : vector<128xf32> to vector<128x1xf32>
    %116 = tpu.reciprocal %115 {approx = true} : vector<128x1xf32> -> vector<128x1xf32>
    %117 = vector.broadcast %116 : vector<128x1xf32> to vector<128x128xf32>
    %118 = arith.mulf %113, %117 : vector<128x128xf32>
    %119 = arith.truncf %118 : vector<128x128xf32> to vector<128x128xbf16>
    %120 = vector.extract_strided_slice %41 {offsets = [0, 64], sizes = [128, 32], strides = [1, 1]} : vector<128x128xbf16> to vector<128x32xbf16>
    %cst_52 = arith.constant dense<0.000000e+00> : vector<128x32xf32>
    %121 = tpu.matmul %119, %120, %cst_52 {dimension_numbers = #tpu.dot_dimension_numbers<[1], [0], [0], [1], [0, 0, 1, 1], [], []>} : vector<128x128xbf16>, vector<128x32xbf16>, vector<128x32xf32> -> vector<128x32xf32>
    %122 = arith.truncf %121 : vector<128x32xf32> to vector<128x32xbf16>
    %c0_53 = arith.constant 0 : index
    %c64 = arith.constant 64 : index
    %123 = vector.load %arg18[%c0_53, %c64] : memref<128x128xbf16, #tpu.memory_space<vmem>>, vector<128x32xbf16>
    tpu.vector_store %arg18[%c0_53, %c64], %122 {strides = array<i32>} : memref<128x128xbf16, #tpu.memory_space<vmem>>, vector<128x32xbf16>,
    %124 = vector.extract_strided_slice %46 {offsets = [0, 48], sizes = [128, 16], strides = [1, 1]} : vector<128x128xbf16> to vector<128x16xbf16>
    %125 = vector.extract_strided_slice %51 {offsets = [0, 48], sizes = [128, 16], strides = [1, 1]} : vector<128x128xbf16> to vector<128x16xbf16>
    %cst_54 = arith.constant dense<0.000000e+00> : vector<128x128xf32>
    %126 = tpu.matmul %124, %125, %cst_54 {dimension_numbers = #tpu.dot_dimension_numbers<[1], [1], [0], [0], [0, 0, 1, 0], [], []>} : vector<128x16xbf16>, vector<128x16xbf16>, vector<128x128xf32> -> vector<128x128xf32>
    %127 = vector.extract_strided_slice %46 {offsets = [0, 112], sizes = [128, 16], strides = [1, 1]} : vector<128x128xbf16> to vector<128x16xbf16>
    %128 = vector.extract_strided_slice %51 {offsets = [0, 112], sizes = [128, 16], strides = [1, 1]} : vector<128x128xbf16> to vector<128x16xbf16>
    %cst_55 = arith.constant dense<0.000000e+00> : vector<128x128xf32>
    %129 = tpu.matmul %127, %128, %cst_55 {dimension_numbers = #tpu.dot_dimension_numbers<[1], [1], [0], [0], [0, 0, 1, 0], [], []>} : vector<128x16xbf16>, vector<128x16xbf16>, vector<128x128xf32> -> vector<128x128xf32>
    %130 = arith.addf %126, %129 : vector<128x128xf32>
    %cst_56 = arith.constant 0.176776692 : f32
    %131 = vector.broadcast %cst_56 : f32 to vector<128x128xf32>
    %132 = arith.mulf %130, %131 : vector<128x128xf32>
    %cst_57 = arith.constant dense<0xFF800000> : vector<128xf32>
    %133 = vector.multi_reduction <maximumf>, %132, %cst_57 [1] : vector<128x128xf32> to vector<128xf32>
    %134 = vector.shape_cast %133 : vector<128xf32> to vector<128x1xf32>
    %135 = vector.broadcast %134 : vector<128x1xf32> to vector<128x128xf32>
    %136 = arith.subf %132, %135 : vector<128x128xf32>
    %137 = math.exp %136 : vector<128x128xf32>
    %cst_58 = arith.constant dense<0.000000e+00> : vector<128xf32>
    %138 = vector.multi_reduction <add>, %137, %cst_58 [1] : vector<128x128xf32> to vector<128xf32>
    %139 = vector.shape_cast %138 : vector<128xf32> to vector<128x1xf32>
    %140 = tpu.reciprocal %139 {approx = true} : vector<128x1xf32> -> vector<128x1xf32>
    %141 = vector.broadcast %140 : vector<128x1xf32> to vector<128x128xf32>
    %142 = arith.mulf %137, %141 : vector<128x128xf32>
    %143 = arith.truncf %142 : vector<128x128xf32> to vector<128x128xbf16>
    %144 = vector.extract_strided_slice %41 {offsets = [0, 96], sizes = [128, 32], strides = [1, 1]} : vector<128x128xbf16> to vector<128x32xbf16>
    %cst_59 = arith.constant dense<0.000000e+00> : vector<128x32xf32>
    %145 = tpu.matmul %143, %144, %cst_59 {dimension_numbers = #tpu.dot_dimension_numbers<[1], [0], [0], [1], [0, 0, 1, 1], [], []>} : vector<128x128xbf16>, vector<128x32xbf16>, vector<128x32xf32> -> vector<128x32xf32>
    %146 = arith.truncf %145 : vector<128x32xf32> to vector<128x32xbf16>
    %c0_60 = arith.constant 0 : index
    %c96 = arith.constant 96 : index
    %147 = vector.load %arg18[%c0_60, %c96] : memref<128x128xbf16, #tpu.memory_space<vmem>>, vector<128x32xbf16>
    tpu.vector_store %arg18[%c0_60, %c96], %146 {strides = array<i32>} : memref<128x128xbf16, #tpu.memory_space<vmem>>, vector<128x32xbf16>,
    %c0_61 = arith.constant 0 : index
    %c0_62 = arith.constant 0 : index
    %148 = vector.load %arg18[%c0_61, %c0_62] : memref<128x128xbf16, #tpu.memory_space<vmem>>, vector<128x128xbf16>
    %c0_63 = arith.constant 0 : index
    %c0_64 = arith.constant 0 : index
    %149 = vector.load %arg3[%c0_63, %c0_64] : memref<128x128xbf16, #tpu.memory_space<vmem>>, vector<128x128xbf16>
    %cst_65 = arith.constant dense<0.000000e+00> : vector<128x128xf32>
    %150 = tpu.matmul %148, %149, %cst_65 {dimension_numbers = #tpu.dot_dimension_numbers<[1], [0], [0], [1], [0, 0, 1, 1], [], []>} : vector<128x128xbf16>, vector<128x128xbf16>, vector<128x128xf32> -> vector<128x128xf32>
    %151 = vector.broadcast %6 : vector<1x128xf32> to vector<128x128xf32>
    %152 = arith.addf %150, %151 : vector<128x128xf32>
    %153 = arith.addf %1, %152 : vector<128x128xf32>
    %cst_66 = arith.constant dense<0.000000e+00> : vector<128xf32>
    %154 = vector.multi_reduction <add>, %153, %cst_66 [1] : vector<128x128xf32> to vector<128xf32>
    %155 = vector.shape_cast %154 : vector<128xf32> to vector<128x1xf32>
    %cst_67 = arith.constant 1.280000e+02 : f32
    %156 = vector.broadcast %cst_67 : f32 to vector<128x1xf32>
    %157 = arith.divf %155, %156 : vector<128x1xf32>
    %158 = vector.broadcast %157 : vector<128x1xf32> to vector<128x128xf32>
    %159 = arith.subf %153, %158 : vector<128x128xf32>
    %160 = arith.mulf %159, %159 : vector<128x128xf32>
    %cst_68 = arith.constant dense<0.000000e+00> : vector<128xf32>
    %161 = vector.multi_reduction <add>, %160, %cst_68 [1] : vector<128x128xf32> to vector<128xf32>
    %162 = vector.shape_cast %161 : vector<128xf32> to vector<128x1xf32>
    %cst_69 = arith.constant 1.280000e+02 : f32
    %163 = vector.broadcast %cst_69 : f32 to vector<128x1xf32>
    %164 = arith.divf %162, %163 : vector<128x1xf32>
    %165 = vector.broadcast %157 : vector<128x1xf32> to vector<128x128xf32>
    %166 = arith.subf %153, %165 : vector<128x128xf32>
    %cst_70 = arith.constant 9.99999974E-6 : f32
    %167 = vector.broadcast %cst_70 : f32 to vector<128x1xf32>
    %168 = arith.addf %164, %167 : vector<128x1xf32>
    %169 = math.rsqrt %168 : vector<128x1xf32>
    %170 = vector.broadcast %169 : vector<128x1xf32> to vector<128x128xf32>
    %171 = arith.mulf %166, %170 : vector<128x128xf32>
    %172 = vector.broadcast %4 : vector<1x128xf32> to vector<128x128xf32>
    %173 = arith.mulf %171, %172 : vector<128x128xf32>
    %174 = vector.broadcast %5 : vector<1x128xf32> to vector<128x128xf32>
    %175 = arith.addf %173, %174 : vector<128x128xf32>
    %176 = arith.truncf %175 : vector<128x128xf32> to vector<128x128xbf16>
    %c0_71 = arith.constant 0 : index
    %c0_72 = arith.constant 0 : index
    %177 = vector.load %arg13[%c0_71, %c0_72] : memref<128x256xbf16, #tpu.memory_space<vmem>>, vector<128x256xbf16>
    %cst_73 = arith.constant dense<0.000000e+00> : vector<128x256xf32>
    %178 = tpu.matmul %176, %177, %cst_73 {dimension_numbers = #tpu.dot_dimension_numbers<[1], [0], [0], [1], [0, 0, 1, 1], [], []>} : vector<128x128xbf16>, vector<128x256xbf16>, vector<128x256xf32> -> vector<128x256xf32>
    %179 = vector.broadcast %7 : vector<1x256xf32> to vector<128x256xf32>
    %180 = arith.addf %178, %179 : vector<128x256xf32>
    %cst_74 = arith.constant 5.000000e-01 : f32
    %181 = vector.broadcast %cst_74 : f32 to vector<128x256xf32>
    %182 = arith.mulf %181, %180 : vector<128x256xf32>
    %cst_75 = arith.constant 0.707106769 : f32
    %183 = vector.broadcast %cst_75 : f32 to vector<128x256xf32>
    %184 = arith.mulf %180, %183 : vector<128x256xf32>
    %cst_76 = arith.constant 0.000000e+00 : f32
    %185 = vector.broadcast %cst_76 : f32 to vector<128x256xf32>
    %186 = arith.cmpf oge, %184, %185 : vector<128x256xf32>
    %cst_77 = arith.constant 1.000000e+00 : f32
    %cst_78 = arith.constant -1.000000e+00 : f32
    %187 = vector.broadcast %cst_77 : f32 to vector<128x256xf32>
    %188 = vector.broadcast %cst_78 : f32 to vector<128x256xf32>
    %189 = arith.select %186, %187, %188 : vector<128x256xi1>, vector<128x256xf32>
    %190 = math.absf %184 : vector<128x256xf32>
    %cst_79 = arith.constant 0.327591091 : f32
    %191 = vector.broadcast %cst_79 : f32 to vector<128x256xf32>
    %192 = arith.mulf %191, %190 : vector<128x256xf32>
    %cst_80 = arith.constant 1.000000e+00 : f32
    %193 = vector.broadcast %cst_80 : f32 to vector<128x256xf32>
    %194 = arith.addf %193, %192 : vector<128x256xf32>
    %cst_81 = arith.constant 1.000000e+00 : f32
    %195 = vector.broadcast %cst_81 : f32 to vector<128x256xf32>
    %196 = arith.divf %195, %194 : vector<128x256xf32>
    %cst_82 = arith.constant 1.06140542 : f32
    %197 = vector.broadcast %cst_82 : f32 to vector<128x256xf32>
    %198 = arith.mulf %197, %196 : vector<128x256xf32>
    %cst_83 = arith.constant -1.45315206 : f32
    %199 = vector.broadcast %cst_83 : f32 to vector<128x256xf32>
    %200 = arith.addf %198, %199 : vector<128x256xf32>
    %201 = arith.mulf %200, %196 : vector<128x256xf32>
    %cst_84 = arith.constant 1.42141378 : f32
    %202 = vector.broadcast %cst_84 : f32 to vector<128x256xf32>
    %203 = arith.addf %201, %202 : vector<128x256xf32>
    %204 = arith.mulf %203, %196 : vector<128x256xf32>
    %cst_85 = arith.constant -0.284496725 : f32
    %205 = vector.broadcast %cst_85 : f32 to vector<128x256xf32>
    %206 = arith.addf %204, %205 : vector<128x256xf32>
    %207 = arith.mulf %206, %196 : vector<128x256xf32>
    %cst_86 = arith.constant 0.254829586 : f32
    %208 = vector.broadcast %cst_86 : f32 to vector<128x256xf32>
    %209 = arith.addf %207, %208 : vector<128x256xf32>
    %210 = arith.mulf %209, %196 : vector<128x256xf32>
    %cst_87 = arith.constant 0.000000e+00 : f32
    %211 = vector.broadcast %cst_87 : f32 to vector<128x256xf32>
    %212 = arith.subf %211, %190 : vector<128x256xf32>
    %213 = arith.mulf %212, %190 : vector<128x256xf32>
    %214 = math.exp %213 : vector<128x256xf32>
    %215 = arith.mulf %210, %214 : vector<128x256xf32>
    %cst_88 = arith.constant 1.000000e+00 : f32
    %216 = vector.broadcast %cst_88 : f32 to vector<128x256xf32>
    %217 = arith.subf %216, %215 : vector<128x256xf32>
    %218 = arith.mulf %189, %217 : vector<128x256xf32>
    %cst_89 = arith.constant 1.000000e+00 : f32
    %219 = vector.broadcast %cst_89 : f32 to vector<128x256xf32>
    %220 = arith.addf %219, %218 : vector<128x256xf32>
    %221 = arith.mulf %182, %220 : vector<128x256xf32>
    %222 = arith.truncf %221 : vector<128x256xf32> to vector<128x256xbf16>
    %c0_90 = arith.constant 0 : index
    %c0_91 = arith.constant 0 : index
    %223 = vector.load %arg15[%c0_90, %c0_91] : memref<256x128xbf16, #tpu.memory_space<vmem>>, vector<256x128xbf16>
    %cst_92 = arith.constant dense<0.000000e+00> : vector<128x128xf32>
    %224 = tpu.matmul %222, %223, %cst_92 {dimension_numbers = #tpu.dot_dimension_numbers<[1], [0], [0], [1], [0, 0, 1, 1], [], []>} : vector<128x256xbf16>, vector<256x128xbf16>, vector<128x128xf32> -> vector<128x128xf32>
    %225 = vector.broadcast %8 : vector<1x128xf32> to vector<128x128xf32>
    %226 = arith.addf %224, %225 : vector<128x128xf32>
    %227 = arith.addf %153, %226 : vector<128x128xf32>
    %c0_93 = arith.constant 0 : index
    %c0_94 = arith.constant 0 : index
    %c0_95 = arith.constant 0 : index
    %228 = vector.load %arg17[%c0_93, %c0_94, %c0_95] : memref<1x128x128xf32, #tpu.memory_space<vmem>>, vector<1x128x128xf32>
    %229 = vector.shape_cast %228 : vector<1x128x128xf32> to vector<128x128xf32>
    %230 = vector.shape_cast %227 : vector<128x128xf32> to vector<1x128x128xf32>
    tpu.vector_store %arg17[%c0_93, %c0_94, %c0_95], %230 {strides = array<i32>} : memref<1x128x128xf32, #tpu.memory_space<vmem>>, vector<1x128x128xf32>,
    return
  }
  func.func @transform_0(%arg0: i32) -> (i32, i32, i32) {
    %c0_i32 = arith.constant 0 : i32
    %c0_i32_0 = arith.constant 0 : i32
    %c0_i32_1 = arith.constant 0 : i32
    return %arg0, %c0_i32, %c0_i32_0 : i32, i32, i32
  }
  func.func @transform_1(%arg0: i32) -> (i32, i32) {
    %c0_i32 = arith.constant 0 : i32
    %c0_i32_0 = arith.constant 0 : i32
    %c0_i32_1 = arith.constant 0 : i32
    return %c0_i32, %c0_i32_0 : i32, i32
  }
  func.func @transform_2(%arg0: i32) -> (i32, i32) {
    %c0_i32 = arith.constant 0 : i32
    %c0_i32_0 = arith.constant 0 : i32
    %c0_i32_1 = arith.constant 0 : i32
    return %c0_i32, %c0_i32_0 : i32, i32
  }
  func.func @transform_3(%arg0: i32) -> (i32, i32) {
    %c0_i32 = arith.constant 0 : i32
    %c0_i32_0 = arith.constant 0 : i32
    %c0_i32_1 = arith.constant 0 : i32
    return %c0_i32, %c0_i32_0 : i32, i32
  }
  func.func @transform_4(%arg0: i32) -> (i32, i32) {
    %c0_i32 = arith.constant 0 : i32
    %c0_i32_0 = arith.constant 0 : i32
    %c0_i32_1 = arith.constant 0 : i32
    return %c0_i32, %c0_i32_0 : i32, i32
  }
  func.func @transform_5(%arg0: i32) -> (i32, i32) {
    %c0_i32 = arith.constant 0 : i32
    %c0_i32_0 = arith.constant 0 : i32
    %c0_i32_1 = arith.constant 0 : i32
    return %c0_i32, %c0_i32_0 : i32, i32
  }
  func.func @transform_6(%arg0: i32) -> (i32, i32) {
    %c0_i32 = arith.constant 0 : i32
    %c0_i32_0 = arith.constant 0 : i32
    %c0_i32_1 = arith.constant 0 : i32
    return %c0_i32, %c0_i32_0 : i32, i32
  }
  func.func @transform_7(%arg0: i32) -> (i32, i32) {
    %c0_i32 = arith.constant 0 : i32
    %c0_i32_0 = arith.constant 0 : i32
    %c0_i32_1 = arith.constant 0 : i32
    return %c0_i32, %c0_i32_0 : i32, i32
  }
  func.func @transform_8(%arg0: i32) -> (i32, i32) {
    %c0_i32 = arith.constant 0 : i32
    %c0_i32_0 = arith.constant 0 : i32
    %c0_i32_1 = arith.constant 0 : i32
    return %c0_i32, %c0_i32_0 : i32, i32
  }
  func.func @transform_9(%arg0: i32) -> (i32, i32) {
    %c0_i32 = arith.constant 0 : i32
    %c0_i32_0 = arith.constant 0 : i32
    %c0_i32_1 = arith.constant 0 : i32
    return %c0_i32, %c0_i32_0 : i32, i32
  }
  func.func @transform_10(%arg0: i32) -> (i32, i32) {
    %c0_i32 = arith.constant 0 : i32
    %c0_i32_0 = arith.constant 0 : i32
    %c0_i32_1 = arith.constant 0 : i32
    return %c0_i32, %c0_i32_0 : i32, i32
  }
  func.func @transform_11(%arg0: i32) -> (i32, i32) {
    %c0_i32 = arith.constant 0 : i32
    %c0_i32_0 = arith.constant 0 : i32
    %c0_i32_1 = arith.constant 0 : i32
    return %c0_i32, %c0_i32_0 : i32, i32
  }
  func.func @transform_12(%arg0: i32) -> (i32, i32) {
    %c0_i32 = arith.constant 0 : i32
    %c0_i32_0 = arith.constant 0 : i32
    %c0_i32_1 = arith.constant 0 : i32
    return %c0_i32, %c0_i32_0 : i32, i32
  }
  func.func @transform_13(%arg0: i32) -> (i32, i32) {
    %c0_i32 = arith.constant 0 : i32
    %c0_i32_0 = arith.constant 0 : i32
    %c0_i32_1 = arith.constant 0 : i32
    return %c0_i32, %c0_i32_0 : i32, i32
  }
  func.func @transform_14(%arg0: i32) -> (i32, i32) {
    %c0_i32 = arith.constant 0 : i32
    %c0_i32_0 = arith.constant 0 : i32
    %c0_i32_1 = arith.constant 0 : i32
    return %c0_i32, %c0_i32_0 : i32, i32
  }
  func.func @transform_15(%arg0: i32) -> (i32, i32) {
    %c0_i32 = arith.constant 0 : i32
    %c0_i32_0 = arith.constant 0 : i32
    %c0_i32_1 = arith.constant 0 : i32
    return %c0_i32, %c0_i32_0 : i32, i32
  }
  func.func @transform_16(%arg0: i32) -> (i32, i32, i32) {
    %c0_i32 = arith.constant 0 : i32
    %c0_i32_0 = arith.constant 0 : i32
    %c0_i32_1 = arith.constant 0 : i32
    return %arg0, %c0_i32, %c0_i32_0 : i32, i32, i32
  }
}

</mosaic_0001>

<llo_original>
// kernel: tpu_custom_call.1
$region0: #{tpu_custom_call.1}
  #allocation0 [shape = 'u32[]', space=smem, size = 0x4, offset = 0x4, fixed_abs, tag = 'smem constant byte address 0x4 - core index']
  #allocation1 [shape = 'u32[144,128]{1,0:T(1,128)}', space=vmem, size = 0x12000, scoped, tag = 'internal scratch']
  #allocation2 [shape = 'bf16[128,128]{1,0:T(8,128)(2,1)}', space=vmem, size = 0x8000, scoped, tag = 'scratch operand']
  %s0 = inlined_call_operand.hbm [shape: f32[2,128,128], index: 0, kind: input, shape index: {}]
  %s1 = inlined_call_operand.hbm [shape: bf16[128,384], index: 1, kind: input, shape index: {}]
  %s2 = inlined_call_operand.hbm [shape: bf16[128,128], index: 2, kind: input, shape index: {}]
  %s3 = inlined_call_operand.vmem [shape: f32[1,128], index: 3, kind: input, shape index: {}]
  %s4 = inlined_call_operand.vmem [shape: f32[1,128], index: 4, kind: input, shape index: {}]
  %s5 = inlined_call_operand.vmem [shape: f32[1,128], index: 5, kind: input, shape index: {}]
  %s6 = inlined_call_operand.vmem [shape: f32[1,128], index: 6, kind: input, shape index: {}]
  %s7 = inlined_call_operand.vmem [shape: f32[1,128], index: 7, kind: input, shape index: {}]
  %s8 = inlined_call_operand.hbm [shape: f32[128,128], index: 8, kind: input, shape index: {}]
  %s9 = inlined_call_operand.hbm [shape: f32[128,128], index: 9, kind: input, shape index: {}]
  %s10 = inlined_call_operand.hbm [shape: f32[128,128], index: 10, kind: input, shape index: {}]
  %s11 = inlined_call_operand.hbm [shape: f32[128,128], index: 11, kind: input, shape index: {}]
  %s12 = inlined_call_operand.hbm [shape: bf16[128,256], index: 12, kind: input, shape index: {}]
  %s13 = inlined_call_operand.vmem [shape: f32[1,256], index: 13, kind: input, shape index: {}]
  %s14 = inlined_call_operand.hbm [shape: bf16[256,128], index: 14, kind: input, shape index: {}]
  %s15 = inlined_call_operand.vmem [shape: f32[1,128], index: 15, kind: input, shape index: {}]
  %s16 = inlined_call_operand.hbm [shape: f32[2,128,128], index: 16, kind: output, shape index: {}]
  %s17 = sld [smem:[#allocation0]]
  $region133: #{tpu_custom_call.1} parent=0
    _
  %s19 = ssub.s32 1, %s17
  %s20 = scalar_select 0, %s19, %s17
  $region1: #{tpu_custom_call.1} parent=0
    #allocation3 [shape = 'u8[131072]{0}', space=vmem, size = 0x20000, scoped, tag = 'input window, operand 0']
    #allocation4 [shape = 's32[2]{0}', space=sflag, size = 0x8, scoped, tag = 'scoped memory for tpu_custom_call.1']
    #allocation5 [shape = 's32[2]{0}', space=sflag, size = 0x8, scoped, tag = 'scoped memory for tpu_custom_call.1']
    #allocation6 [shape = 'u8[98304]{0}', space=vmem, size = 0x18000, scoped, tag = 'input window, operand 1, single buffered']
    #allocation7 [shape = 's32[1]{0}', space=sflag, size = 0x4, scoped, tag = 'scoped memory for tpu_custom_call.1']
    #allocation8 [shape = 'u8[32768]{0}', space=vmem, size = 0x8000, scoped, tag = 'input window, operand 2, single buffered']
    #allocation9 [shape = 'u8[65536]{0}', space=vmem, size = 0x10000, scoped, tag = 'input window, operand 8, single buffered']
    #allocation10 [shape = 's32[1]{0}', space=sflag, size = 0x4, scoped, tag = 'scoped memory for tpu_custom_call.1']
    #allocation11 [shape = 'u8[65536]{0}', space=vmem, size = 0x10000, scoped, tag = 'input window, operand 9, single buffered']
    #allocation12 [shape = 'u8[65536]{0}', space=vmem, size = 0x10000, scoped, tag = 'input window, operand 10, single buffered']
    #allocation13 [shape = 's32[1]{0}', space=sflag, size = 0x4, scoped, tag = 'scoped memory for tpu_custom_call.1']
    #allocation14 [shape = 'u8[65536]{0}', space=vmem, size = 0x10000, scoped, tag = 'input window, operand 11, single buffered']
    #allocation15 [shape = 'u8[65536]{0}', space=vmem, size = 0x10000, scoped, tag = 'input window, operand 12, single buffered']
    #allocation16 [shape = 's32[1]{0}', space=sflag, size = 0x4, scoped, tag = 'scoped memory for tpu_custom_call.1']
    #allocation17 [shape = 'u8[65536]{0}', space=vmem, size = 0x10000, scoped, tag = 'input window, operand 14, single buffered']
    #allocation18 [shape = 'u8[131072]{0}', space=vmem, size = 0x20000, scoped, tag = 'output window, operand 0']
    %21 = vsyncpa [#allocation4], 0
    %s22 = scalar_lea.sflag [#allocation4], 1
    %23 = vsyncpa %s22, 0
    %24 = vsyncpa [#allocation7], 0
    %25 = vsyncpa [#allocation10], 0
    %26 = vsyncpa [#allocation13], 0
    %27 = vsyncpa [#allocation16], 0
    %28 = vsyncpa [#allocation5], 0
    %s29 = scalar_lea.sflag [#allocation5], 1
    %30 = vsyncpa %s29, 0
    loop: start=0, step=1, limit=4
    $region2: #{tpu_custom_call.1} parent=1 // loop_pre_header
      _
    $region3: #{tpu_custom_call.1} parent=1 // loop_header
      %s32 = sphi 0, %s36
      %p33 = scmp.ge.s32.totalorder %s32, 4
      %s42 = sphi 0, %s44
      %s45 = sphi 0, %s42
      %s46 = sphi 0, %s45
      %s62 = sphi 0, %s46
      %s66 = sphi 0, %s66
      %s68 = sphi 0, %s66
      %s69 = sphi 0, %s68
      %s83 = sphi 0, %s69
      %s87 = sphi 0, %s87
      %s89 = sphi 0, %s87
      %s90 = sphi 0, %s89
      %s104 = sphi 0, %s90
      %s108 = sphi 0, %s108
      %s110 = sphi 0, %s108
      %s111 = sphi 0, %s110
      %s125 = sphi 0, %s111
      %s129 = sphi 0, %s129
      %s131 = sphi 0, %s129
      %s132 = sphi 0, %s131
      %s146 = sphi 0, %s132
      %s150 = sphi 0, %s150
      %s152 = sphi 0, %s150
      %s153 = sphi 0, %s152
      %s167 = sphi 0, %s153
      %s171 = sphi 0, %s171
      %s173 = sphi 0, %s171
      %s174 = sphi 0, %s173
      %s188 = sphi 0, %s174
      %s192 = sphi 0, %s192
      %s194 = sphi 0, %s192
      %s195 = sphi 0, %s194
      %s209 = sphi 0, %s195
      %s213 = sphi 0, %s213
      %s215 = sphi 0, %s213
      %s216 = sphi 0, %s215
      %s230 = sphi 0, %s216
      %s234 = sphi 0, %s234
      %s236 = sphi 0, %s234
      %s237 = sphi 0, %s236
      %s251 = sphi 0, %s237
      %s255 = sphi 0, %s255
      %s257 = sphi 0, %s255
      %s258 = sphi 0, %s257
      %s272 = sphi 0, %s258
      %s276 = sphi 0, %s276
      %s278 = sphi 0, %s276
      %s279 = sphi 0, %s278
      %s293 = sphi 0, %s279
      %s297 = sphi 0, %s297
      %s299 = sphi 0, %s297
      %s300 = sphi 0, %s299
      %s314 = sphi 0, %s300
      %s318 = sphi 0, %s318
      %s320 = sphi 0, %s318
      %s321 = sphi 0, %s320
      %s335 = sphi 0, %s321
      %s339 = sphi 0, %s339
      %s341 = sphi 0, %s339
      %s342 = sphi 0, %s341
      %s356 = sphi 0, %s342
      %s360 = sphi 0, %s360
      %s362 = sphi 0, %s360
      %s363 = sphi 0, %s362
      %s377 = sphi 0, %s363
      %s383 = sphi 0, %s385
      %s386 = sphi 0, %s383
      %s387 = sphi 0, %s386
      %s403 = sphi 0, %s387
    $region4: #{tpu_custom_call.1} parent=1 // loop_header_branch
      %35 = sbr.rel (%p33) target = $region8
    $region5: #{tpu_custom_call.1} parent=1 // loop_body
      %s37 = ssub.s32 %s32, 1
      %s38 = ssub.s32 %s32, 2
      %s39 = sadd.s32 %s32, 1
      %s40 = ssub.s32 %s32, %s39
      %p41 = scmp.eq.s32.totalorder %s40, 0
      %s43 = sadd.s32 %s42, 1
      %s44 = scalar_select %p41, %s42, %s43
      %p47 = pneg %p41
      %p48 = scmp.eq.s32.totalorder %s32, 1
      %p49 = por %p47, %p48
      %p50 = scmp.ne.s32.totalorder %s42, %s45
      %p51 = scmp.eq.s32.totalorder %s32, 0
      %p52 = por %p50, %p51
      %p53 = scmp.ne.s32.totalorder %s42, %s45
      %p54 = scmp.eq.s32.totalorder %s37, 1
      %p55 = por %p53, %p54
      %p56 = scmp.ne.s32.totalorder %s45, %s46
      %p57 = scmp.eq.s32.totalorder %s37, 0
      %p58 = por %p56, %p57
      %p59 = scmp.ne.s32.totalorder %s45, %s46
      %p60 = scmp.eq.s32.totalorder %s38, 1
      %p61 = por %p59, %p60
      %p63 = scmp.ne.s32.totalorder %s46, %s62
      %p64 = scmp.eq.s32.totalorder %s38, 0
      %p65 = por %p63, %p64
      %s67 = sadd.s32 %s66, 1
      %p70 = scmp.eq.s32.totalorder %s32, 1
      %p71 = scmp.ne.s32.totalorder %s66, %s68
      %p72 = scmp.eq.s32.totalorder %s32, 0
      %p73 = por %p71, %p72
      %p74 = scmp.ne.s32.totalorder %s66, %s68
      %p75 = scmp.eq.s32.totalorder %s37, 1
      %p76 = por %p74, %p75
      %p77 = scmp.ne.s32.totalorder %s68, %s69
      %p78 = scmp.eq.s32.totalorder %s37, 0
      %p79 = por %p77, %p78
      %p80 = scmp.ne.s32.totalorder %s68, %s69
      %p81 = scmp.eq.s32.totalorder %s38, 1
      %p82 = por %p80, %p81
      %p84 = scmp.ne.s32.totalorder %s69, %s83
      %p85 = scmp.eq.s32.totalorder %s38, 0
      %p86 = por %p84, %p85
      %s88 = sadd.s32 %s87, 1
      %p91 = scmp.eq.s32.totalorder %s32, 1
      %p92 = scmp.ne.s32.totalorder %s87, %s89
      %p93 = scmp.eq.s32.totalorder %s32, 0
      %p94 = por %p92, %p93
      %p95 = scmp.ne.s32.totalorder %s87, %s89
      %p96 = scmp.eq.s32.totalorder %s37, 1
      %p97 = por %p95, %p96
      %p98 = scmp.ne.s32.totalorder %s89, %s90
      %p99 = scmp.eq.s32.totalorder %s37, 0
      %p100 = por %p98, %p99
      %p101 = scmp.ne.s32.totalorder %s89, %s90
      %p102 = scmp.eq.s32.totalorder %s38, 1
      %p103 = por %p101, %p102
      %p105 = scmp.ne.s32.totalorder %s90, %s104
      %p106 = scmp.eq.s32.totalorder %s38, 0
      %p107 = por %p105, %p106
      %s109 = sadd.s32 %s108, 1
      %p112 = scmp.eq.s32.totalorder %s32, 1
      %p113 = scmp.ne.s32.totalorder %s108, %s110
      %p114 = scmp.eq.s32.totalorder %s32, 0
      %p115 = por %p113, %p114
      %p116 = scmp.ne.s32.totalorder %s108, %s110
      %p117 = scmp.eq.s32.totalorder %s37, 1
      %p118 = por %p116, %p117
      %p119 = scmp.ne.s32.totalorder %s110, %s111
      %p120 = scmp.eq.s32.totalorder %s37, 0
      %p121 = por %p119, %p120
      %p122 = scmp.ne.s32.totalorder %s110, %s111
      %p123 = scmp.eq.s32.totalorder %s38, 1
      %p124 = por %p122, %p123
      %p126 = scmp.ne.s32.totalorder %s111, %s125
      %p127 = scmp.eq.s32.totalorder %s38, 0
      %p128 = por %p126, %p127
      %s130 = sadd.s32 %s129, 1
      %p133 = scmp.eq.s32.totalorder %s32, 1
      %p134 = scmp.ne.s32.totalorder %s129, %s131
      %p135 = scmp.eq.s32.totalorder %s32, 0
      %p136 = por %p134, %p135
      %p137 = scmp.ne.s32.totalorder %s129, %s131
      %p138 = scmp.eq.s32.totalorder %s37, 1
      %p139 = por %p137, %p138
      %p140 = scmp.ne.s32.totalorder %s131, %s132
      %p141 = scmp.eq.s32.totalorder %s37, 0
      %p142 = por %p140, %p141
      %p143 = scmp.ne.s32.totalorder %s131, %s132
      %p144 = scmp.eq.s32.totalorder %s38, 1
      %p145 = por %p143, %p144
      %p147 = scmp.ne.s32.totalorder %s132, %s146
      %p148 = scmp.eq.s32.totalorder %s38, 0
      %p149 = por %p147, %p148
      %s151 = sadd.s32 %s150, 1
      %p154 = scmp.eq.s32.totalorder %s32, 1
      %p155 = scmp.ne.s32.totalorder %s150, %s152
      %p156 = scmp.eq.s32.totalorder %s32, 0
      %p157 = por %p155, %p156
      %p158 = scmp.ne.s32.totalorder %s150, %s152
      %p159 = scmp.eq.s32.totalorder %s37, 1
      %p160 = por %p158, %p159
      %p161 = scmp.ne.s32.totalorder %s152, %s153
      %p162 = scmp.eq.s32.totalorder %s37, 0
      %p163 = por %p161, %p162
      %p164 = scmp.ne.s32.totalorder %s152, %s153
      %p165 = scmp.eq.s32.totalorder %s38, 1
      %p166 = por %p164, %p165
      %p168 = scmp.ne.s32.totalorder %s153, %s167
      %p169 = scmp.eq.s32.totalorder %s38, 0
      %p170 = por %p168, %p169
      %s172 = sadd.s32 %s171, 1
      %p175 = scmp.eq.s32.totalorder %s32, 1
      %p176 = scmp.ne.s32.totalorder %s171, %s173
      %p177 = scmp.eq.s32.totalorder %s32, 0
      %p178 = por %p176, %p177
      %p179 = scmp.ne.s32.totalorder %s171, %s173
      %p180 = scmp.eq.s32.totalorder %s37, 1
      %p181 = por %p179, %p180
      %p182 = scmp.ne.s32.totalorder %s173, %s174
      %p183 = scmp.eq.s32.totalorder %s37, 0
      %p184 = por %p182, %p183
      %p185 = scmp.ne.s32.totalorder %s173, %s174
      %p186 = scmp.eq.s32.totalorder %s38, 1
      %p187 = por %p185, %p186
      %p189 = scmp.ne.s32.totalorder %s174, %s188
      %p190 = scmp.eq.s32.totalorder %s38, 0
      %p191 = por %p189, %p190
      %s193 = sadd.s32 %s192, 1
      %p196 = scmp.eq.s32.totalorder %s32, 1
      %p197 = scmp.ne.s32.totalorder %s192, %s194
      %p198 = scmp.eq.s32.totalorder %s32, 0
      %p199 = por %p197, %p198
      %p200 = scmp.ne.s32.totalorder %s192, %s194
      %p201 = scmp.eq.s32.totalorder %s37, 1
      %p202 = por %p200, %p201
      %p203 = scmp.ne.s32.totalorder %s194, %s195
      %p204 = scmp.eq.s32.totalorder %s37, 0
      %p205 = por %p203, %p204
      %p206 = scmp.ne.s32.totalorder %s194, %s195
      %p207 = scmp.eq.s32.totalorder %s38, 1
      %p208 = por %p206, %p207
      %p210 = scmp.ne.s32.totalorder %s195, %s209
      %p211 = scmp.eq.s32.totalorder %s38, 0
      %p212 = por %p210, %p211
      %s214 = sadd.s32 %s213, 1
      %p217 = scmp.eq.s32.totalorder %s32, 1
      %p218 = scmp.ne.s32.totalorder %s213, %s215
      %p219 = scmp.eq.s32.totalorder %s32, 0
      %p220 = por %p218, %p219
      %p221 = scmp.ne.s32.totalorder %s213, %s215
      %p222 = scmp.eq.s32.totalorder %s37, 1
      %p223 = por %p221, %p222
      %p224 = scmp.ne.s32.totalorder %s215, %s216
      %p225 = scmp.eq.s32.totalorder %s37, 0
      %p226 = por %p224, %p225
      %p227 = scmp.ne.s32.totalorder %s215, %s216
      %p228 = scmp.eq.s32.totalorder %s38, 1
      %p229 = por %p227, %p228
      %p231 = scmp.ne.s32.totalorder %s216, %s230
      %p232 = scmp.eq.s32.totalorder %s38, 0
      %p233 = por %p231, %p232
      %s235 = sadd.s32 %s234, 1
      %p238 = scmp.eq.s32.totalorder %s32, 1
      %p239 = scmp.ne.s32.totalorder %s234, %s236
      %p240 = scmp.eq.s32.totalorder %s32, 0
      %p241 = por %p239, %p240
      %p242 = scmp.ne.s32.totalorder %s234, %s236
      %p243 = scmp.eq.s32.totalorder %s37, 1
      %p244 = por %p242, %p243
      %p245 = scmp.ne.s32.totalorder %s236, %s237
      %p246 = scmp.eq.s32.totalorder %s37, 0
      %p247 = por %p245, %p246
      %p248 = scmp.ne.s32.totalorder %s236, %s237
      %p249 = scmp.eq.s32.totalorder %s38, 1
      %p250 = por %p248, %p249
      %p252 = scmp.ne.s32.totalorder %s237, %s251
      %p253 = scmp.eq.s32.totalorder %s38, 0
      %p254 = por %p252, %p253
      %s256 = sadd.s32 %s255, 1
      %p259 = scmp.eq.s32.totalorder %s32, 1
      %p260 = scmp.ne.s32.totalorder %s255, %s257
      %p261 = scmp.eq.s32.totalorder %s32, 0
      %p262 = por %p260, %p261
      %p263 = scmp.ne.s32.totalorder %s255, %s257
      %p264 = scmp.eq.s32.totalorder %s37, 1
      %p265 = por %p263, %p264
      %p266 = scmp.ne.s32.totalorder %s257, %s258
      %p267 = scmp.eq.s32.totalorder %s37, 0
      %p268 = por %p266, %p267
      %p269 = scmp.ne.s32.totalorder %s257, %s258
      %p270 = scmp.eq.s32.totalorder %s38, 1
      %p271 = por %p269, %p270
      %p273 = scmp.ne.s32.totalorder %s258, %s272
      %p274 = scmp.eq.s32.totalorder %s38, 0
      %p275 = por %p273, %p274
      %s277 = sadd.s32 %s276, 1
      %p280 = scmp.eq.s32.totalorder %s32, 1
      %p281 = scmp.ne.s32.totalorder %s276, %s278
      %p282 = scmp.eq.s32.totalorder %s32, 0
      %p283 = por %p281, %p282
      %p284 = scmp.ne.s32.totalorder %s276, %s278
      %p285 = scmp.eq.s32.totalorder %s37, 1
      %p286 = por %p284, %p285
      %p287 = scmp.ne.s32.totalorder %s278, %s279
      %p288 = scmp.eq.s32.totalorder %s37, 0
      %p289 = por %p287, %p288
      %p290 = scmp.ne.s32.totalorder %s278, %s279
      %p291 = scmp.eq.s32.totalorder %s38, 1
      %p292 = por %p290, %p291
      %p294 = scmp.ne.s32.totalorder %s279, %s293
      %p295 = scmp.eq.s32.totalorder %s38, 0
      %p296 = por %p294, %p295
      %s298 = sadd.s32 %s297, 1
      %p301 = scmp.eq.s32.totalorder %s32, 1
      %p302 = scmp.ne.s32.totalorder %s297, %s299
      %p303 = scmp.eq.s32.totalorder %s32, 0
      %p304 = por %p302, %p303
      %p305 = scmp.ne.s32.totalorder %s297, %s299
      %p306 = scmp.eq.s32.totalorder %s37, 1
      %p307 = por %p305, %p306
      %p308 = scmp.ne.s32.totalorder %s299, %s300
      %p309 = scmp.eq.s32.totalorder %s37, 0
      %p310 = por %p308, %p309
      %p311 = scmp.ne.s32.totalorder %s299, %s300
      %p312 = scmp.eq.s32.totalorder %s38, 1
      %p313 = por %p311, %p312
      %p315 = scmp.ne.s32.totalorder %s300, %s314
      %p316 = scmp.eq.s32.totalorder %s38, 0
      %p317 = por %p315, %p316
      %s319 = sadd.s32 %s318, 1
      %p322 = scmp.eq.s32.totalorder %s32, 1
      %p323 = scmp.ne.s32.totalorder %s318, %s320
      %p324 = scmp.eq.s32.totalorder %s32, 0
      %p325 = por %p323, %p324
      %p326 = scmp.ne.s32.totalorder %s318, %s320
      %p327 = scmp.eq.s32.totalorder %s37, 1
      %p328 = por %p326, %p327
      %p329 = scmp.ne.s32.totalorder %s320, %s321
      %p330 = scmp.eq.s32.totalorder %s37, 0
      %p331 = por %p329, %p330
      %p332 = scmp.ne.s32.totalorder %s320, %s321
      %p333 = scmp.eq.s32.totalorder %s38, 1
      %p334 = por %p332, %p333
      %p336 = scmp.ne.s32.totalorder %s321, %s335
      %p337 = scmp.eq.s32.totalorder %s38, 0
      %p338 = por %p336, %p337
      %s340 = sadd.s32 %s339, 1
      %p343 = scmp.eq.s32.totalorder %s32, 1
      %p344 = scmp.ne.s32.totalorder %s339, %s341
      %p345 = scmp.eq.s32.totalorder %s32, 0
      %p346 = por %p344, %p345
      %p347 = scmp.ne.s32.totalorder %s339, %s341
      %p348 = scmp.eq.s32.totalorder %s37, 1
      %p349 = por %p347, %p348
      %p350 = scmp.ne.s32.totalorder %s341, %s342
      %p351 = scmp.eq.s32.totalorder %s37, 0
      %p352 = por %p350, %p351
      %p353 = scmp.ne.s32.totalorder %s341, %s342
      %p354 = scmp.eq.s32.totalorder %s38, 1
      %p355 = por %p353, %p354
      %p357 = scmp.ne.s32.totalorder %s342, %s356
      %p358 = scmp.eq.s32.totalorder %s38, 0
      %p359 = por %p357, %p358
      %s361 = sadd.s32 %s360, 1
      %p364 = scmp.eq.s32.totalorder %s32, 1
      %p365 = scmp.ne.s32.totalorder %s360, %s362
      %p366 = scmp.eq.s32.totalorder %s32, 0
      %p367 = por %p365, %p366
      %p368 = scmp.ne.s32.totalorder %s360, %s362
      %p369 = scmp.eq.s32.totalorder %s37, 1
      %p370 = por %p368, %p369
      %p371 = scmp.ne.s32.totalorder %s362, %s363
      %p372 = scmp.eq.s32.totalorder %s37, 0
      %p373 = por %p371, %p372
      %p374 = scmp.ne.s32.totalorder %s362, %s363
      %p375 = scmp.eq.s32.totalorder %s38, 1
      %p376 = por %p374, %p375
      %p378 = scmp.ne.s32.totalorder %s363, %s377
      %p379 = scmp.eq.s32.totalorder %s38, 0
      %p380 = por %p378, %p379
      %s381 = ssub.s32 %s32, %s39
      %p382 = scmp.eq.s32.totalorder %s381, 0
      %s384 = sadd.s32 %s383, 1
      %s385 = scalar_select %p382, %s383, %s384
      %p388 = pneg %p382
      %p389 = scmp.eq.s32.totalorder %s32, 1
      %p390 = por %p388, %p389
      %p391 = scmp.ne.s32.totalorder %s383, %s386
      %p392 = scmp.eq.s32.totalorder %s32, 0
      %p393 = por %p391, %p392
      %p394 = scmp.ne.s32.totalorder %s383, %s386
      %p395 = scmp.eq.s32.totalorder %s37, 1
      %p396 = por %p394, %p395
      %p397 = scmp.ne.s32.totalorder %s386, %s387
      %p398 = scmp.eq.s32.totalorder %s37, 0
      %p399 = por %p397, %p398
      %p400 = scmp.ne.s32.totalorder %s386, %s387
      %p401 = scmp.eq.s32.totalorder %s38, 1
      %p402 = por %p400, %p401
      %p404 = scmp.ne.s32.totalorder %s387, %s403
      %p405 = scmp.eq.s32.totalorder %s38, 0
      %p406 = por %p404, %p405
      %p407 = scmp.le.s32.totalorder 1, %s32
      %p408 = scmp.lt.s32.totalorder %s32, 3
      %p409 = pnand %p407, %p408
      %p410 = pneg %p409
      // Predicated region
      $region9: #{tpu_custom_call.1} parent=5 // pred_check
        _
      $region10: #{tpu_custom_call.1} parent=5 // pred_check_branch
        %412 = sbr.rel (%p409) target = $region12
      $region11: #{tpu_custom_call.1} parent=5 // pred_region
        %s413 = ssub.s32 %s32, 1
        // Predicated region
        $region13: #{tpu_custom_call.1} parent=11 // pred_check
          %p414 = pneg %p79
        $region14: #{tpu_custom_call.1} parent=11 // pred_check_branch
          %416 = sbr.rel (%p414) target = $region16
        $region15: #{tpu_custom_call.1} parent=11 // pred_region
          %s418 = ssub.s32 3072, 3072
          %419 = vsyncadd [#allocation7], %s418
          %s420 = sshll.u32 [#allocation6], 4
          %s421 = int_to_ptr.vmem [resolvable:$true] %s420
          %426 = dma.hbm_to_vmem [thread:$0]  %s1, 3072, %s421, [#allocation7], 192, 192, 12
        $region16: #{tpu_custom_call.1} parent=11 // pred_fallthru
          _
        // Predicated region
        $region17: #{tpu_custom_call.1} parent=11 // pred_check
          %p427 = pneg %p100
        $region18: #{tpu_custom_call.1} parent=11 // pred_check_branch
          %429 = sbr.rel (%p427) target = $region20
        $region19: #{tpu_custom_call.1} parent=11 // pred_region
          %s431 = ssub.s32 1024, 1024
          %432 = vsyncadd [#allocation7], %s431
          %s433 = sshll.u32 [#allocation8], 4
          %s434 = int_to_ptr.vmem [resolvable:$true] %s433
          %439 = dma.hbm_to_vmem [thread:$0]  %s2, 1024, %s434, [#allocation7], 64, 64, 4
        $region20: #{tpu_custom_call.1} parent=11 // pred_fallthru
          _
        // Predicated region
        $region21: #{tpu_custom_call.1} parent=11 // pred_check
          %p440 = pneg %p121
        $region22: #{tpu_custom_call.1} parent=11 // pred_check_branch
          %442 = sbr.rel (%p440) target = $region24
        $region23: #{tpu_custom_call.1} parent=11 // pred_region
          _
        $region24: #{tpu_custom_call.1} parent=11 // pred_fallthru
          _
        // Predicated region
        $region25: #{tpu_custom_call.1} parent=11 // pred_check
          %p443 = pneg %p142
        $region26: #{tpu_custom_call.1} parent=11 // pred_check_branch
          %445 = sbr.rel (%p443) target = $region28
        $region27: #{tpu_custom_call.1} parent=11 // pred_region
          _
        $region28: #{tpu_custom_call.1} parent=11 // pred_fallthru
          _
        // Predicated region
        $region29: #{tpu_custom_call.1} parent=11 // pred_check
          %p446 = pneg %p163
        $region30: #{tpu_custom_call.1} parent=11 // pred_check_branch
          %448 = sbr.rel (%p446) target = $region32
        $region31: #{tpu_custom_call.1} parent=11 // pred_region
          _
        $region32: #{tpu_custom_call.1} parent=11 // pred_fallthru
          _
        // Predicated region
        $region33: #{tpu_custom_call.1} parent=11 // pred_check
          %p449 = pneg %p184
        $region34: #{tpu_custom_call.1} parent=11 // pred_check_branch
          %451 = sbr.rel (%p449) target = $region36
        $region35: #{tpu_custom_call.1} parent=11 // pred_region
          _
        $region36: #{tpu_custom_call.1} parent=11 // pred_fallthru
          _
        // Predicated region
        $region37: #{tpu_custom_call.1} parent=11 // pred_check
          %p452 = pneg %p205
        $region38: #{tpu_custom_call.1} parent=11 // pred_check_branch
          %454 = sbr.rel (%p452) target = $region40
        $region39: #{tpu_custom_call.1} parent=11 // pred_region
          _
        $region40: #{tpu_custom_call.1} parent=11 // pred_fallthru
          _
        // Predicated region
        $region41: #{tpu_custom_call.1} parent=11 // pred_check
          %p455 = pneg %p226
        $region42: #{tpu_custom_call.1} parent=11 // pred_check_branch
          %457 = sbr.rel (%p455) target = $region44
        $region43: #{tpu_custom_call.1} parent=11 // pred_region
          %s459 = ssub.s32 2048, 2048
          %460 = vsyncadd [#allocation10], %s459
          %s461 = sshll.u32 [#allocation9], 4
          %s462 = int_to_ptr.vmem [resolvable:$true] %s461
          %467 = dma.hbm_to_vmem [thread:$0]  %s8, 2048, %s462, [#allocation10], 128, 128, 8
        $region44: #{tpu_custom_call.1} parent=11 // pred_fallthru
          _
        // Predicated region
        $region45: #{tpu_custom_call.1} parent=11 // pred_check
          %p468 = pneg %p247
        $region46: #{tpu_custom_call.1} parent=11 // pred_check_branch
          %470 = sbr.rel (%p468) target = $region48
        $region47: #{tpu_custom_call.1} parent=11 // pred_region
          %s472 = ssub.s32 2048, 2048
          %473 = vsyncadd [#allocation10], %s472
          %s474 = sshll.u32 [#allocation11], 4
          %s475 = int_to_ptr.vmem [resolvable:$true] %s474
          %480 = dma.hbm_to_vmem [thread:$0]  %s9, 2048, %s475, [#allocation10], 128, 128, 8
        $region48: #{tpu_custom_call.1} parent=11 // pred_fallthru
          _
        // Predicated region
        $region49: #{tpu_custom_call.1} parent=11 // pred_check
          %p481 = pneg %p268
        $region50: #{tpu_custom_call.1} parent=11 // pred_check_branch
          %483 = sbr.rel (%p481) target = $region52
        $region51: #{tpu_custom_call.1} parent=11 // pred_region
          %s485 = ssub.s32 2048, 2048
          %486 = vsyncadd [#allocation13], %s485
          %s487 = sshll.u32 [#allocation12], 4
          %s488 = int_to_ptr.vmem [resolvable:$true] %s487
          %493 = dma.hbm_to_vmem [thread:$0]  %s10, 2048, %s488, [#allocation13], 128, 128, 8
        $region52: #{tpu_custom_call.1} parent=11 // pred_fallthru
          _
        // Predicated region
        $region53: #{tpu_custom_call.1} parent=11 // pred_check
          %p494 = pneg %p289
        $region54: #{tpu_custom_call.1} parent=11 // pred_check_branch
          %496 = sbr.rel (%p494) target = $region56
        $region55: #{tpu_custom_call.1} parent=11 // pred_region
          %s498 = ssub.s32 2048, 2048
          %499 = vsyncadd [#allocation13], %s498
          %s500 = sshll.u32 [#allocation14], 4
          %s501 = int_to_ptr.vmem [resolvable:$true] %s500
          %506 = dma.hbm_to_vmem [thread:$0]  %s11, 2048, %s501, [#allocation13], 128, 128, 8
        $region56: #{tpu_custom_call.1} parent=11 // pred_fallthru
          _
        // Predicated region
        $region57: #{tpu_custom_call.1} parent=11 // pred_check
          %p507 = pneg %p310
        $region58: #{tpu_custom_call.1} parent=11 // pred_check_branch
          %509 = sbr.rel (%p507) target = $region60
        $region59: #{tpu_custom_call.1} parent=11 // pred_region
          %s511 = ssub.s32 2048, 2048
          %512 = vsyncadd [#allocation16], %s511
          %s513 = sshll.u32 [#allocation15], 4
          %s514 = int_to_ptr.vmem [resolvable:$true] %s513
          %519 = dma.hbm_to_vmem [thread:$0]  %s12, 2048, %s514, [#allocation16], 128, 128, 8
        $region60: #{tpu_custom_call.1} parent=11 // pred_fallthru
          _
        // Predicated region
        $region61: #{tpu_custom_call.1} parent=11 // pred_check
          %p520 = pneg %p331
        $region62: #{tpu_custom_call.1} parent=11 // pred_check_branch
          %522 = sbr.rel (%p520) target = $region64
        $region63: #{tpu_custom_call.1} parent=11 // pred_region
          _
        $region64: #{tpu_custom_call.1} parent=11 // pred_fallthru
          _
        // Predicated region
        $region65: #{tpu_custom_call.1} parent=11 // pred_check
          %p523 = pneg %p352
        $region66: #{tpu_custom_call.1} parent=11 // pred_check_branch
          %525 = sbr.rel (%p523) target = $region68
        $region67: #{tpu_custom_call.1} parent=11 // pred_region
          %s527 = ssub.s32 2048, 2048
          %528 = vsyncadd [#allocation16], %s527
          %s529 = sshll.u32 [#allocation17], 4
          %s530 = int_to_ptr.vmem [resolvable:$true] %s529
          %535 = dma.hbm_to_vmem [thread:$0]  %s14, 2048, %s530, [#allocation16], 64, 64, 4
        $region68: #{tpu_custom_call.1} parent=11 // pred_fallthru
          _
        // Predicated region
        $region69: #{tpu_custom_call.1} parent=11 // pred_check
          %p536 = pneg %p373
        $region70: #{tpu_custom_call.1} parent=11 // pred_check_branch
          %538 = sbr.rel (%p536) target = $region72
        $region71: #{tpu_custom_call.1} parent=11 // pred_region
          _
        $region72: #{tpu_custom_call.1} parent=11 // pred_fallthru
          _
      $region12: #{tpu_custom_call.1} parent=5 // pred_fallthru
        _
      %p539 = scmp.lt.s32.totalorder %s32, 2
      // Predicated region
      $region73: #{tpu_custom_call.1} parent=5 // pred_check
        %p540 = pneg %p539
      $region74: #{tpu_custom_call.1} parent=5 // pred_check_branch
        %542 = sbr.rel (%p540) target = $region76
      $region75: #{tpu_custom_call.1} parent=5 // pred_region
        // Predicated region
        $region77: #{tpu_custom_call.1} parent=75 // pred_check
          %p543 = pneg %p52
        $region78: #{tpu_custom_call.1} parent=75 // pred_check_branch
          %545 = sbr.rel (%p543) target = $region80
        $region79: #{tpu_custom_call.1} parent=75 // pred_region
          %s546 = sand.u32 %s42, 1
          %s547 = scalar_lea.sflag [#allocation4], %s546
          %s548 = sand.u32 %s42, 1
          %s549 = smul.addr %s548, 128
          %s550 = scalar_lea.vmem [#allocation3], %s549
          %s552 = ssub.s32 2048, 2048
          %553 = vsyncadd %s547, %s552
          %s554 = smul.addr %s32, 16
          %s555 = smul.addr %s554, 128
          %s556 = scalar_lea.hbm %s0, %s555
          %s557 = sshll.u32 %s550, 4
          %s558 = int_to_ptr.vmem [resolvable:$true] %s557
          %563 = dma.hbm_to_vmem [thread:$0]  %s556, 2048, %s558, %s547, 128, 128, 8
        $region80: #{tpu_custom_call.1} parent=75 // pred_fallthru
          _
      $region76: #{tpu_custom_call.1} parent=5 // pred_fallthru
        _
      %p564 = scmp.le.s32.totalorder 1, %s32
      %p565 = scmp.lt.s32.totalorder %s32, 3
      %p566 = pnand %p564, %p565
      %p567 = pneg %p566
      // Predicated region
      $region81: #{tpu_custom_call.1} parent=5 // pred_check
        _
      $region82: #{tpu_custom_call.1} parent=5 // pred_check_branch
        %569 = sbr.rel (%p566) target = $region84
      $region83: #{tpu_custom_call.1} parent=5 // pred_region
        %s570 = ssub.s32 %s32, 1
        %s571 = sand.u32 %s45, 1
        %s572 = scalar_lea.sflag [#allocation4], %s571
        %s573 = sand.u32 %s45, 1
        %s574 = smul.addr %s573, 128
        %s575 = scalar_lea.vmem [#allocation3], %s574
        // Predicated region
        $region85: #{tpu_custom_call.1} parent=83 // pred_check
          %p576 = pneg %p58
        $region86: #{tpu_custom_call.1} parent=83 // pred_check_branch
          %578 = sbr.rel (%p576) target = $region88
        $region87: #{tpu_custom_call.1} parent=83 // pred_region
          %579 = dma.done %s572, 2048
        $region88: #{tpu_custom_call.1} parent=83 // pred_fallthru
          _
        // Predicated region
        $region89: #{tpu_custom_call.1} parent=83 // pred_check
          %p580 = pneg %p79
        $region90: #{tpu_custom_call.1} parent=83 // pred_check_branch
          %582 = sbr.rel (%p580) target = $region92
        $region91: #{tpu_custom_call.1} parent=83 // pred_region
          %583 = dma.done [#allocation7], 3072
        $region92: #{tpu_custom_call.1} parent=83 // pred_fallthru
          _
        // Predicated region
        $region93: #{tpu_custom_call.1} parent=83 // pred_check
          %p584 = pneg %p100
        $region94: #{tpu_custom_call.1} parent=83 // pred_check_branch
          %586 = sbr.rel (%p584) target = $region96
        $region95: #{tpu_custom_call.1} parent=83 // pred_region
          %587 = dma.done [#allocation7], 1024
        $region96: #{tpu_custom_call.1} parent=83 // pred_fallthru
          _
        // Predicated region
        $region97: #{tpu_custom_call.1} parent=83 // pred_check
          %p588 = pneg %p226
        $region98: #{tpu_custom_call.1} parent=83 // pred_check_branch
          %590 = sbr.rel (%p588) target = $region100
        $region99: #{tpu_custom_call.1} parent=83 // pred_region
          %591 = dma.done [#allocation10], 2048
        $region100: #{tpu_custom_call.1} parent=83 // pred_fallthru
          _
        // Predicated region
        $region101: #{tpu_custom_call.1} parent=83 // pred_check
          %p592 = pneg %p247
        $region102: #{tpu_custom_call.1} parent=83 // pred_check_branch
          %594 = sbr.rel (%p592) target = $region104
        $region103: #{tpu_custom_call.1} parent=83 // pred_region
          %595 = dma.done [#allocation10], 2048
        $region104: #{tpu_custom_call.1} parent=83 // pred_fallthru
          _
        // Predicated region
        $region105: #{tpu_custom_call.1} parent=83 // pred_check
          %p596 = pneg %p268
        $region106: #{tpu_custom_call.1} parent=83 // pred_check_branch
          %598 = sbr.rel (%p596) target = $region108
        $region107: #{tpu_custom_call.1} parent=83 // pred_region
          %599 = dma.done [#allocation13], 2048
        $region108: #{tpu_custom_call.1} parent=83 // pred_fallthru
          _
        // Predicated region
        $region109: #{tpu_custom_call.1} parent=83 // pred_check
          %p600 = pneg %p289
        $region110: #{tpu_custom_call.1} parent=83 // pred_check_branch
          %602 = sbr.rel (%p600) target = $region112
        $region111: #{tpu_custom_call.1} parent=83 // pred_region
          %603 = dma.done [#allocation13], 2048
        $region112: #{tpu_custom_call.1} parent=83 // pred_fallthru
          _
        // Predicated region
        $region113: #{tpu_custom_call.1} parent=83 // pred_check
          %p604 = pneg %p310
        $region114: #{tpu_custom_call.1} parent=83 // pred_check_branch
          %606 = sbr.rel (%p604) target = $region116
        $region115: #{tpu_custom_call.1} parent=83 // pred_region
          %607 = dma.done [#allocation16], 2048
        $region116: #{tpu_custom_call.1} parent=83 // pred_fallthru
          _
        // Predicated region
        $region117: #{tpu_custom_call.1} parent=83 // pred_check
          %p608 = pneg %p352
        $region118: #{tpu_custom_call.1} parent=83 // pred_check_branch
          %610 = sbr.rel (%p608) target = $region120
        $region119: #{tpu_custom_call.1} parent=83 // pred_region
          %611 = dma.done [#allocation16], 2048
        $region120: #{tpu_custom_call.1} parent=83 // pred_fallthru
          _
        %s612 = sand.u32 %s45, 1
        %s613 = scalar_lea.sflag [#allocation4], %s612
        %s614 = sand.u32 %s45, 1
        %s615 = smul.addr %s614, 128
        %s616 = scalar_lea.vmem [#allocation3], %s615
        %p617 = pneg %p58
        %p618 = pneg %p55
        %p619 = pneg %p79
        %p620 = pneg %p76
        %p621 = pneg %p100
        %p622 = pneg %p97
        %p623 = pneg %p121
        %p624 = pneg %p118
        %p625 = pneg %p142
        %p626 = pneg %p139
        %p627 = pneg %p163
        %p628 = pneg %p160
        %p629 = pneg %p184
        %p630 = pneg %p181
        %p631 = pneg %p205
        %p632 = pneg %p202
        %p633 = pneg %p226
        %p634 = pneg %p223
        %p635 = pneg %p247
        %p636 = pneg %p244
        %p637 = pneg %p268
        %p638 = pneg %p265
        %p639 = pneg %p289
        %p640 = pneg %p286
        %p641 = pneg %p310
        %p642 = pneg %p307
        %p643 = pneg %p331
        %p644 = pneg %p328
        %p645 = pneg %p352
        %p646 = pneg %p349
        %p647 = pneg %p373
        %p648 = pneg %p370
        %p649 = pneg %p399
        %p650 = pneg %p396
        %s651 = sand.u32 %s386, 1
        %s652 = scalar_lea.sflag [#allocation5], %s651
        %s653 = sand.u32 %s386, 1
        %s654 = smul.addr %s653, 128
        %s655 = scalar_lea.vmem [#allocation18], %s654
        %v657 = vld [vmem:[%s575] sm:$0xff]
        %v658 = vld [vmem:[%s575 + $0x8] sm:$0xff]
        %v659 = vld [vmem:[%s575 + $0x10] sm:$0xff]
        %v660 = vld [vmem:[%s575 + $0x18] sm:$0xff]
        %v661 = vld [vmem:[%s575 + $0x20] sm:$0xff]
        %v662 = vld [vmem:[%s575 + $0x28] sm:$0xff]
        %v663 = vld [vmem:[%s575 + $0x30] sm:$0xff]
        %v664 = vld [vmem:[%s575 + $0x38] sm:$0xff]
        %v665 = vld [vmem:[%s575 + $0x40] sm:$0xff]
        %v666 = vld [vmem:[%s575 + $0x48] sm:$0xff]
        %v667 = vld [vmem:[%s575 + $0x50] sm:$0xff]
        %v668 = vld [vmem:[%s575 + $0x58] sm:$0xff]
        %v669 = vld [vmem:[%s575 + $0x60] sm:$0xff]
        %v670 = vld [vmem:[%s575 + $0x68] sm:$0xff]
        %v671 = vld [vmem:[%s575 + $0x70] sm:$0xff]
        %v672 = vld [vmem:[%s575 + $0x78] sm:$0xff]
        %v673 = vld [vmem:[%s4] sm:$0x1]
        %v674 = vld [vmem:[%s5] sm:$0x1]
        %v675 = vld [vmem:[%s6] sm:$0x1]
        %v676 = vld [vmem:[%s7] sm:$0x1]
        %v677 = vld [vmem:[%s3] sm:$0x1]
        %v678 = vld [vmem:[%s13] sm:$0x3]
        %v679 = vld [vmem:[%s15] sm:$0x1]
        %v680 = vld [vmem:[#allocation9] sm:$0xff]
        %v681 = vld [vmem:[#allocation9 + $0x8] sm:$0xff]
        %v682 = vld [vmem:[#allocation9 + $0x10] sm:$0xff]
        %v683 = vld [vmem:[#allocation9 + $0x18] sm:$0xff]
        %v684 = vld [vmem:[#allocation9 + $0x20] sm:$0xff]
        %v685 = vld [vmem:[#allocation9 + $0x28] sm:$0xff]
        %v686 = vld [vmem:[#allocation9 + $0x30] sm:$0xff]
        %v687 = vld [vmem:[#allocation9 + $0x38] sm:$0xff]
        %v688 = vld [vmem:[#allocation9 + $0x40] sm:$0xff]
        %v689 = vld [vmem:[#allocation9 + $0x48] sm:$0xff]
        %v690 = vld [vmem:[#allocation9 + $0x50] sm:$0xff]
        %v691 = vld [vmem:[#allocation9 + $0x58] sm:$0xff]
        %v692 = vld [vmem:[#allocation9 + $0x60] sm:$0xff]
        %v693 = vld [vmem:[#allocation9 + $0x68] sm:$0xff]
        %v694 = vld [vmem:[#allocation9 + $0x70] sm:$0xff]
        %v695 = vld [vmem:[#allocation9 + $0x78] sm:$0xff]
        %v696 = vld [vmem:[#allocation11] sm:$0xff]
        %v697 = vld [vmem:[#allocation11 + $0x8] sm:$0xff]
        %v698 = vld [vmem:[#allocation11 + $0x10] sm:$0xff]
        %v699 = vld [vmem:[#allocation11 + $0x18] sm:$0xff]
        %v700 = vld [vmem:[#allocation11 + $0x20] sm:$0xff]
        %v701 = vld [vmem:[#allocation11 + $0x28] sm:$0xff]
        %v702 = vld [vmem:[#allocation11 + $0x30] sm:$0xff]
        %v703 = vld [vmem:[#allocation11 + $0x38] sm:$0xff]
        %v704 = vld [vmem:[#allocation11 + $0x40] sm:$0xff]
        %v705 = vld [vmem:[#allocation11 + $0x48] sm:$0xff]
        %v706 = vld [vmem:[#allocation11 + $0x50] sm:$0xff]
        %v707 = vld [vmem:[#allocation11 + $0x58] sm:$0xff]
        %v708 = vld [vmem:[#allocation11 + $0x60] sm:$0xff]
        %v709 = vld [vmem:[#allocation11 + $0x68] sm:$0xff]
        %v710 = vld [vmem:[#allocation11 + $0x70] sm:$0xff]
        %v711 = vld [vmem:[#allocation11 + $0x78] sm:$0xff]
        %v712 = vld [vmem:[#allocation12] sm:$0xff]
        %v713 = vld [vmem:[#allocation12 + $0x8] sm:$0xff]
        %v714 = vld [vmem:[#allocation12 + $0x10] sm:$0xff]
        %v715 = vld [vmem:[#allocation12 + $0x18] sm:$0xff]
        %v716 = vld [vmem:[#allocation12 + $0x20] sm:$0xff]
        %v717 = vld [vmem:[#allocation12 + $0x28] sm:$0xff]
        %v718 = vld [vmem:[#allocation12 + $0x30] sm:$0xff]
        %v719 = vld [vmem:[#allocation12 + $0x38] sm:$0xff]
        %v720 = vld [vmem:[#allocation12 + $0x40] sm:$0xff]
        %v721 = vld [vmem:[#allocation12 + $0x48] sm:$0xff]
        %v722 = vld [vmem:[#allocation12 + $0x50] sm:$0xff]
        %v723 = vld [vmem:[#allocation12 + $0x58] sm:$0xff]
        %v724 = vld [vmem:[#allocation12 + $0x60] sm:$0xff]
        %v725 = vld [vmem:[#allocation12 + $0x68] sm:$0xff]
        %v726 = vld [vmem:[#allocation12 + $0x70] sm:$0xff]
        %v727 = vld [vmem:[#allocation12 + $0x78] sm:$0xff]
        %v728 = vld [vmem:[#allocation14] sm:$0xff]
        %v729 = vld [vmem:[#allocation14 + $0x8] sm:$0xff]
        %v730 = vld [vmem:[#allocation14 + $0x10] sm:$0xff]
        %v731 = vld [vmem:[#allocation14 + $0x18] sm:$0xff]
        %v732 = vld [vmem:[#allocation14 + $0x20] sm:$0xff]
        %v733 = vld [vmem:[#allocation14 + $0x28] sm:$0xff]
        %v734 = vld [vmem:[#allocation14 + $0x30] sm:$0xff]
        %v735 = vld [vmem:[#allocation14 + $0x38] sm:$0xff]
        %v736 = vld [vmem:[#allocation14 + $0x40] sm:$0xff]
        %v737 = vld [vmem:[#allocation14 + $0x48] sm:$0xff]
        %v738 = vld [vmem:[#allocation14 + $0x50] sm:$0xff]
        %v739 = vld [vmem:[#allocation14 + $0x58] sm:$0xff]
        %v740 = vld [vmem:[#allocation14 + $0x60] sm:$0xff]
        %v741 = vld [vmem:[#allocation14 + $0x68] sm:$0xff]
        %v742 = vld [vmem:[#allocation14 + $0x70] sm:$0xff]
        %v743 = vld [vmem:[#allocation14 + $0x78] sm:$0xff]
        %744 = vadd.xlane.f32.xlu0 %v657
        %v745 = vpop.xlane.xlu0 %744
        %746 = vadd.xlane.f32.xlu0 %v658
        %v747 = vpop.xlane.xlu0 %746
        %748 = vadd.xlane.f32.xlu0 %v659
        %v749 = vpop.xlane.xlu0 %748
        %750 = vadd.xlane.f32.xlu0 %v660
        %v751 = vpop.xlane.xlu0 %750
        %752 = vadd.xlane.f32.xlu0 %v661
        %v753 = vpop.xlane.xlu0 %752
        %754 = vadd.xlane.f32.xlu0 %v662
        %v755 = vpop.xlane.xlu0 %754
        %756 = vadd.xlane.f32.xlu0 %v663
        %v757 = vpop.xlane.xlu0 %756
        %758 = vadd.xlane.f32.xlu0 %v664
        %v759 = vpop.xlane.xlu0 %758
        %760 = vadd.xlane.f32.xlu0 %v665
        %v761 = vpop.xlane.xlu0 %760
        %762 = vadd.xlane.f32.xlu0 %v666
        %v763 = vpop.xlane.xlu0 %762
        %764 = vadd.xlane.f32.xlu0 %v667
        %v765 = vpop.xlane.xlu0 %764
        %766 = vadd.xlane.f32.xlu0 %v668
        %v767 = vpop.xlane.xlu0 %766
        %768 = vadd.xlane.f32.xlu0 %v669
        %v769 = vpop.xlane.xlu0 %768
        %770 = vadd.xlane.f32.xlu0 %v670
        %v771 = vpop.xlane.xlu0 %770
        %772 = vadd.xlane.f32.xlu0 %v671
        %v773 = vpop.xlane.xlu0 %772
        %774 = vadd.xlane.f32.xlu0 %v672
        %v775 = vpop.xlane.xlu0 %774
        %v776 = vrcp.pop 128.0
        %v777 = vmul.f32 %v745, %v776
        %v778 = vmul.f32 %v747, %v776
        %v779 = vmul.f32 %v749, %v776
        %v780 = vmul.f32 %v751, %v776
        %v781 = vmul.f32 %v753, %v776
        %v782 = vmul.f32 %v755, %v776
        %v783 = vmul.f32 %v757, %v776
        %v784 = vmul.f32 %v759, %v776
        %v785 = vmul.f32 %v761, %v776
        %v786 = vmul.f32 %v763, %v776
        %v787 = vmul.f32 %v765, %v776
        %v788 = vmul.f32 %v767, %v776
        %v789 = vmul.f32 %v769, %v776
        %v790 = vmul.f32 %v771, %v776
        %v791 = vmul.f32 %v773, %v776
        %v792 = vmul.f32 %v775, %v776
        %v793 = vsub.f32 %v657, %v777
        %v794 = vsub.f32 %v658, %v778
        %v795 = vsub.f32 %v659, %v779
        %v796 = vsub.f32 %v660, %v780
        %v797 = vsub.f32 %v661, %v781
        %v798 = vsub.f32 %v662, %v782
        %v799 = vsub.f32 %v663, %v783
        %v800 = vsub.f32 %v664, %v784
        %v801 = vsub.f32 %v665, %v785
        %v802 = vsub.f32 %v666, %v786
        %v803 = vsub.f32 %v667, %v787
        %v804 = vsub.f32 %v668, %v788
        %v805 = vsub.f32 %v669, %v789
        %v806 = vsub.f32 %v670, %v790
        %v807 = vsub.f32 %v671, %v791
        %v808 = vsub.f32 %v672, %v792
        %v809 = vmul.f32 %v793, %v793
        %v810 = vmul.f32 %v794, %v794
        %v811 = vmul.f32 %v795, %v795
        %v812 = vmul.f32 %v796, %v796
        %v813 = vmul.f32 %v797, %v797
        %v814 = vmul.f32 %v798, %v798
        %v815 = vmul.f32 %v799, %v799
        %v816 = vmul.f32 %v800, %v800
        %v817 = vmul.f32 %v801, %v801
        %v818 = vmul.f32 %v802, %v802
        %v819 = vmul.f32 %v803, %v803
        %v820 = vmul.f32 %v804, %v804
        %v821 = vmul.f32 %v805, %v805
        %v822 = vmul.f32 %v806, %v806
        %v823 = vmul.f32 %v807, %v807
        %v824 = vmul.f32 %v808, %v808
        %825 = vadd.xlane.f32.xlu0 %v809
        %v826 = vpop.xlane.xlu0 %825
        %827 = vadd.xlane.f32.xlu0 %v810
        %v828 = vpop.xlane.xlu0 %827
        %829 = vadd.xlane.f32.xlu0 %v811
        %v830 = vpop.xlane.xlu0 %829
        %831 = vadd.xlane.f32.xlu0 %v812
        %v832 = vpop.xlane.xlu0 %831
        %833 = vadd.xlane.f32.xlu0 %v813
        %v834 = vpop.xlane.xlu0 %833
        %835 = vadd.xlane.f32.xlu0 %v814
        %v836 = vpop.xlane.xlu0 %835
        %837 = vadd.xlane.f32.xlu0 %v815
        %v838 = vpop.xlane.xlu0 %837
        %839 = vadd.xlane.f32.xlu0 %v816
        %v840 = vpop.xlane.xlu0 %839
        %841 = vadd.xlane.f32.xlu0 %v817
        %v842 = vpop.xlane.xlu0 %841
        %843 = vadd.xlane.f32.xlu0 %v818
        %v844 = vpop.xlane.xlu0 %843
        %845 = vadd.xlane.f32.xlu0 %v819
        %v846 = vpop.xlane.xlu0 %845
        %847 = vadd.xlane.f32.xlu0 %v820
        %v848 = vpop.xlane.xlu0 %847
        %849 = vadd.xlane.f32.xlu0 %v821
        %v850 = vpop.xlane.xlu0 %849
        %851 = vadd.xlane.f32.xlu0 %v822
        %v852 = vpop.xlane.xlu0 %851
        %853 = vadd.xlane.f32.xlu0 %v823
        %v854 = vpop.xlane.xlu0 %853
        %855 = vadd.xlane.f32.xlu0 %v824
        %v856 = vpop.xlane.xlu0 %855
        %v857 = vmul.f32 %v826, %v776
        %v858 = vmul.f32 %v828, %v776
        %v859 = vmul.f32 %v830, %v776
        %v860 = vmul.f32 %v832, %v776
        %v861 = vmul.f32 %v834, %v776
        %v862 = vmul.f32 %v836, %v776
        %v863 = vmul.f32 %v838, %v776
        %v864 = vmul.f32 %v840, %v776
        %v865 = vmul.f32 %v842, %v776
        %v866 = vmul.f32 %v844, %v776
        %v867 = vmul.f32 %v846, %v776
        %v868 = vmul.f32 %v848, %v776
        %v869 = vmul.f32 %v850, %v776
        %v870 = vmul.f32 %v852, %v776
        %v871 = vmul.f32 %v854, %v776
        %v872 = vmul.f32 %v856, %v776
        %v873 = vadd.f32 %v857, 1e-05
        %v874 = vadd.f32 %v858, 1e-05
        %v875 = vadd.f32 %v859, 1e-05
        %v876 = vadd.f32 %v860, 1e-05
        %v877 = vadd.f32 %v861, 1e-05
        %v878 = vadd.f32 %v862, 1e-05
        %v879 = vadd.f32 %v863, 1e-05
        %v880 = vadd.f32 %v864, 1e-05
        %v881 = vadd.f32 %v865, 1e-05
        %v882 = vadd.f32 %v866, 1e-05
        %v883 = vadd.f32 %v867, 1e-05
        %v884 = vadd.f32 %v868, 1e-05
        %v885 = vadd.f32 %v869, 1e-05
        %v886 = vadd.f32 %v870, 1e-05
        %v887 = vadd.f32 %v871, 1e-05
        %v888 = vadd.f32 %v872, 1e-05
        %v889 = vrsqrt.pop %v873
        %v890 = vrsqrt.pop %v874
        %v891 = vrsqrt.pop %v875
        %v892 = vrsqrt.pop %v876
        %v893 = vrsqrt.pop %v877
        %v894 = vrsqrt.pop %v878
        %v895 = vrsqrt.pop %v879
        %v896 = vrsqrt.pop %v880
        %v897 = vrsqrt.pop %v881
        %v898 = vrsqrt.pop %v882
        %v899 = vrsqrt.pop %v883
        %v900 = vrsqrt.pop %v884
        %v901 = vrsqrt.pop %v885
        %v902 = vrsqrt.pop %v886
        %v903 = vrsqrt.pop %v887
        %v904 = vrsqrt.pop %v888
        %v905 = vmul.f32 %v793, %v889
        %v906 = vmul.f32 %v794, %v890
        %v907 = vmul.f32 %v795, %v891
        %v908 = vmul.f32 %v796, %v892
        %v909 = vmul.f32 %v797, %v893
        %v910 = vmul.f32 %v798, %v894
        %v911 = vmul.f32 %v799, %v895
        %v912 = vmul.f32 %v800, %v896
        %v913 = vmul.f32 %v801, %v897
        %v914 = vmul.f32 %v802, %v898
        %v915 = vmul.f32 %v803, %v899
        %v916 = vmul.f32 %v804, %v900
        %v917 = vmul.f32 %v805, %v901
        %v918 = vmul.f32 %v806, %v902
        %v919 = vmul.f32 %v807, %v903
        %v920 = vmul.f32 %v808, %v904
        %v922 = vlaneseq
        %v923 = vshrl.u32 %v922, 7
        %v924 = vsub.s32 0, %v923
        %v925 = vrot.slane %v673, %v924
        %v927 = vmul.f32 %v905, %v925
        %v928 = vmul.f32 %v906, %v925
        %v929 = vmul.f32 %v907, %v925
        %v930 = vmul.f32 %v908, %v925
        %v931 = vmul.f32 %v909, %v925
        %v932 = vmul.f32 %v910, %v925
        %v933 = vmul.f32 %v911, %v925
        %v934 = vmul.f32 %v912, %v925
        %v935 = vmul.f32 %v913, %v925
        %v936 = vmul.f32 %v914, %v925
        %v937 = vmul.f32 %v915, %v925
        %v938 = vmul.f32 %v916, %v925
        %v939 = vmul.f32 %v917, %v925
        %v940 = vmul.f32 %v918, %v925
        %v941 = vmul.f32 %v919, %v925
        %v942 = vmul.f32 %v920, %v925
        %v944 = vlaneseq
        %v945 = vshrl.u32 %v944, 7
        %v946 = vsub.s32 0, %v945
        %v947 = vrot.slane %v674, %v946
        %v949 = vadd.f32 %v927, %v947
        %v950 = vadd.f32 %v928, %v947
        %v951 = vadd.f32 %v929, %v947
        %v952 = vadd.f32 %v930, %v947
        %v953 = vadd.f32 %v931, %v947
        %v954 = vadd.f32 %v932, %v947
        %v955 = vadd.f32 %v933, %v947
        %v956 = vadd.f32 %v934, %v947
        %v957 = vadd.f32 %v935, %v947
        %v958 = vadd.f32 %v936, %v947
        %v959 = vadd.f32 %v937, %v947
        %v960 = vadd.f32 %v938, %v947
        %v961 = vadd.f32 %v939, %v947
        %v962 = vadd.f32 %v940, %v947
        %v963 = vadd.f32 %v941, %v947
        %v964 = vadd.f32 %v942, %v947
        %v965 = vpack.c.bf16 %v950, %v949
        %v966 = vpack.c.bf16 %v952, %v951
        %v967 = vpack.c.bf16 %v954, %v953
        %v968 = vpack.c.bf16 %v956, %v955
        %v969 = vpack.c.bf16 %v958, %v957
        %v970 = vpack.c.bf16 %v960, %v959
        %v971 = vpack.c.bf16 %v962, %v961
        %v972 = vpack.c.bf16 %v964, %v963
        %v973 = vld [vmem:[#allocation6] sm:$0xff]
        %v974 = vld [vmem:[#allocation6 + $0x8] sm:$0xf]
        %v975 = vld [vmem:[#allocation6 + $0xc] sm:$0xff]
        %v976 = vld [vmem:[#allocation6 + $0x14] sm:$0xf]
        %v977 = vld [vmem:[#allocation6 + $0x18] sm:$0xff]
        %v978 = vld [vmem:[#allocation6 + $0x20] sm:$0xf]
        %v979 = vld [vmem:[#allocation6 + $0x24] sm:$0xff]
        %v980 = vld [vmem:[#allocation6 + $0x2c] sm:$0xf]
        %v981 = vld [vmem:[#allocation6 + $0x30] sm:$0xff]
        %v982 = vld [vmem:[#allocation6 + $0x38] sm:$0xf]
        %v983 = vld [vmem:[#allocation6 + $0x3c] sm:$0xff]
        %v984 = vld [vmem:[#allocation6 + $0x44] sm:$0xf]
        %v985 = vld [vmem:[#allocation6 + $0x48] sm:$0xff]
        %v986 = vld [vmem:[#allocation6 + $0x50] sm:$0xf]
        %v987 = vld [vmem:[#allocation6 + $0x54] sm:$0xff]
        %v988 = vld [vmem:[#allocation6 + $0x5c] sm:$0xf]
        %v989 = vld [vmem:[#allocation6 + $0x60] sm:$0xff]
        %v990 = vld [vmem:[#allocation6 + $0x68] sm:$0xf]
        %v991 = vld [vmem:[#allocation6 + $0x6c] sm:$0xff]
        %v992 = vld [vmem:[#allocation6 + $0x74] sm:$0xf]
        %v993 = vld [vmem:[#allocation6 + $0x78] sm:$0xff]
        %v994 = vld [vmem:[#allocation6 + $0x80] sm:$0xf]
        %v995 = vld [vmem:[#allocation6 + $0x84] sm:$0xff]
        %v996 = vld [vmem:[#allocation6 + $0x8c] sm:$0xf]
        %v997 = vld [vmem:[#allocation6 + $0x90] sm:$0xff]
        %v998 = vld [vmem:[#allocation6 + $0x98] sm:$0xf]
        %v999 = vld [vmem:[#allocation6 + $0x9c] sm:$0xff]
        %v1000 = vld [vmem:[#allocation6 + $0xa4] sm:$0xf]
        %v1001 = vld [vmem:[#allocation6 + $0xa8] sm:$0xff]
        %v1002 = vld [vmem:[#allocation6 + $0xb0] sm:$0xf]
        %v1003 = vld [vmem:[#allocation6 + $0xb4] sm:$0xff]
        %v1004 = vld [vmem:[#allocation6 + $0xbc] sm:$0xf]
        %v1037 = vunpack.c.l.b16 %v973
        %v1038 = vunpack.c.h.b16 %v973
        %v1039 = vunpack.c.l.b16 %v974
        %v1040 = vunpack.c.l.b16 %v975
        %v1041 = vunpack.c.h.b16 %v975
        %v1042 = vunpack.c.l.b16 %v976
        %v1043 = vunpack.c.l.b16 %v977
        %v1044 = vunpack.c.h.b16 %v977
        %v1045 = vunpack.c.l.b16 %v978
        %v1046 = vunpack.c.l.b16 %v979
        %v1047 = vunpack.c.h.b16 %v979
        %v1048 = vunpack.c.l.b16 %v980
        %v1049 = vunpack.c.l.b16 %v981
        %v1050 = vunpack.c.h.b16 %v981
        %v1051 = vunpack.c.l.b16 %v982
        %v1052 = vunpack.c.l.b16 %v983
        %v1053 = vunpack.c.h.b16 %v983
        %v1054 = vunpack.c.l.b16 %v984
        %v1055 = vunpack.c.l.b16 %v985
        %v1056 = vunpack.c.h.b16 %v985
        %v1057 = vunpack.c.l.b16 %v986
        %v1058 = vunpack.c.l.b16 %v987
        %v1059 = vunpack.c.h.b16 %v987
        %v1060 = vunpack.c.l.b16 %v988
        %v1061 = vunpack.c.l.b16 %v989
        %v1062 = vunpack.c.h.b16 %v989
        %v1063 = vunpack.c.l.b16 %v990
        %v1064 = vunpack.c.l.b16 %v991
        %v1065 = vunpack.c.h.b16 %v991
        %v1066 = vunpack.c.l.b16 %v992
        %v1067 = vunpack.c.l.b16 %v993
        %v1068 = vunpack.c.h.b16 %v993
        %v1069 = vunpack.c.l.b16 %v994
        %v1070 = vunpack.c.l.b16 %v995
        %v1071 = vunpack.c.h.b16 %v995
        %v1072 = vunpack.c.l.b16 %v996
        %v1073 = vunpack.c.l.b16 %v997
        %v1074 = vunpack.c.h.b16 %v997
        %v1075 = vunpack.c.l.b16 %v998
        %v1076 = vunpack.c.l.b16 %v999
        %v1077 = vunpack.c.h.b16 %v999
        %v1078 = vunpack.c.l.b16 %v1000
        %v1079 = vunpack.c.l.b16 %v1001
        %v1080 = vunpack.c.h.b16 %v1001
        %v1081 = vunpack.c.l.b16 %v1002
        %v1082 = vunpack.c.l.b16 %v1003
        %v1083 = vunpack.c.h.b16 %v1003
        %v1084 = vunpack.c.l.b16 %v1004
        %v1085 = vpack.c.b16 %v1040, %v1037
        %v1086 = vpack.c.b16 %v1041, %v1038
        %v1087 = vpack.c.b16 %v1042, %v1039
        %v1088 = vpack.c.b16 %v1046, %v1043
        %v1089 = vpack.c.b16 %v1047, %v1044
        %v1090 = vpack.c.b16 %v1048, %v1045
        %v1091 = vpack.c.b16 %v1052, %v1049
        %v1092 = vpack.c.b16 %v1053, %v1050
        %v1093 = vpack.c.b16 %v1054, %v1051
        %v1094 = vpack.c.b16 %v1058, %v1055
        %v1095 = vpack.c.b16 %v1059, %v1056
        %v1096 = vpack.c.b16 %v1060, %v1057
        %v1097 = vpack.c.b16 %v1064, %v1061
        %v1098 = vpack.c.b16 %v1065, %v1062
        %v1099 = vpack.c.b16 %v1066, %v1063
        %v1100 = vpack.c.b16 %v1070, %v1067
        %v1101 = vpack.c.b16 %v1071, %v1068
        %v1102 = vpack.c.b16 %v1072, %v1069
        %v1103 = vpack.c.b16 %v1076, %v1073
        %v1104 = vpack.c.b16 %v1077, %v1074
        %v1105 = vpack.c.b16 %v1078, %v1075
        %v1106 = vpack.c.b16 %v1082, %v1079
        %v1107 = vpack.c.b16 %v1083, %v1080
        %v1108 = vpack.c.b16 %v1084, %v1081
        %1133 = vmatprep.subr.bf16.mxu0 %v1107
        %1134 = vmatpush1.bf16.msra.mxu0 %v1106
        %1135 = vmatprep.subr.bf16.mxu0 %v1104
        %1136 = vmatpush1.bf16.msra.mxu0 %v1103
        %1137 = vmatprep.subr.bf16.mxu0 %v1101
        %1138 = vmatpush1.bf16.msra.mxu0 %v1100
        %1139 = vmatprep.subr.bf16.mxu0 %v1098
        %1140 = vmatpush1.bf16.msra.mxu0 %v1097
        %1141 = vmatprep.subr.bf16.mxu0 %v1095
        %1142 = vmatpush1.bf16.msra.mxu0 %v1094
        %1143 = vmatprep.subr.bf16.mxu0 %v1092
        %1144 = vmatpush1.bf16.msra.mxu0 %v1091
        %1145 = vmatprep.subr.bf16.mxu0 %v1089
        %1146 = vmatpush1.bf16.msra.mxu0 %v1088
        %1147 = vmatprep.subr.bf16.mxu0 %v1086
        %1148 = vmatpush1.bf16.msra.mxu0 %v1085
        %1149 = vmatprep.subr.bf16.mxu0 0
        %1150 = vmatpush2.bf16.msra.mxu0 0
        %1151 = vmatprep.subr.bf16.mxu0 0
        %1152 = vmatpush2.bf16.msra.mxu0 0
        %1153 = vmatprep.subr.bf16.mxu0 0
        %1154 = vmatpush2.bf16.msra.mxu0 0
        %1155 = vmatprep.subr.bf16.mxu0 0
        %1156 = vmatpush2.bf16.msra.mxu0 0
        %1157 = vmatprep.subr.bf16.mxu0 0
        %1158 = vmatpush2.bf16.msra.mxu0 0
        %1159 = vmatprep.subr.bf16.mxu0 0
        %1160 = vmatpush2.bf16.msra.mxu0 0
        %1161 = vmatprep.subr.bf16.mxu0 0
        %1162 = vmatpush2.bf16.msra.mxu0 0
        %1163 = vmatprep.subr.bf16.mxu0 0
        %1164 = vmatpush2.bf16.msra.mxu0 0
        %1165 = vmatprep.mubr.bf16.mxu0 0
        %1166 = vmatmul.mubr.bf16.gmra.mxu0 %v965
        %v1167 = vpop.f32.mrf.mxu0
        %v1168 = vadd.f32 0.0, %v1167
        %v1169 = vpop.f32.mrf.mxu0
        %v1170 = vadd.f32 0.0, %v1169
        %v1171 = vpop.f32.mrf.mxu0
        %v1172 = vadd.f32 0.0, %v1171
        %v1173 = vpop.f32.mrf.mxu0
        %v1174 = vadd.f32 0.0, %v1173
        %1175 = vmatprep.mubr.bf16.mxu0 0
        %1176 = vmatmul.mubr.bf16.gmra.mxu0 %v966
        %v1177 = vpop.f32.mrf.mxu0
        %v1178 = vadd.f32 0.0, %v1177
        %v1179 = vpop.f32.mrf.mxu0
        %v1180 = vadd.f32 0.0, %v1179
        %v1181 = vpop.f32.mrf.mxu0
        %v1182 = vadd.f32 0.0, %v1181
        %v1183 = vpop.f32.mrf.mxu0
        %v1184 = vadd.f32 0.0, %v1183
        %1185 = vmatprep.mubr.bf16.mxu0 0
        %1186 = vmatmul.mubr.bf16.gmra.mxu0 %v967
        %v1187 = vpop.f32.mrf.mxu0
        %v1188 = vadd.f32 0.0, %v1187
        %v1189 = vpop.f32.mrf.mxu0
        %v1190 = vadd.f32 0.0, %v1189
        %v1191 = vpop.f32.mrf.mxu0
        %v1192 = vadd.f32 0.0, %v1191
        %v1193 = vpop.f32.mrf.mxu0
        %v1194 = vadd.f32 0.0, %v1193
        %1195 = vmatprep.mubr.bf16.mxu0 0
        %1196 = vmatmul.mubr.bf16.gmra.mxu0 %v968
        %v1197 = vpop.f32.mrf.mxu0
        %v1198 = vadd.f32 0.0, %v1197
        %v1199 = vpop.f32.mrf.mxu0
        %v1200 = vadd.f32 0.0, %v1199
        %v1201 = vpop.f32.mrf.mxu0
        %v1202 = vadd.f32 0.0, %v1201
        %v1203 = vpop.f32.mrf.mxu0
        %v1204 = vadd.f32 0.0, %v1203
        %1205 = vmatprep.mubr.bf16.mxu0 0
        %1206 = vmatmul.mubr.bf16.gmra.mxu0 %v969
        %v1207 = vpop.f32.mrf.mxu0
        %v1208 = vadd.f32 0.0, %v1207
        %v1209 = vpop.f32.mrf.mxu0
        %v1210 = vadd.f32 0.0, %v1209
        %v1211 = vpop.f32.mrf.mxu0
        %v1212 = vadd.f32 0.0, %v1211
        %v1213 = vpop.f32.mrf.mxu0
        %v1214 = vadd.f32 0.0, %v1213
        %1215 = vmatprep.mubr.bf16.mxu0 0
        %1216 = vmatmul.mubr.bf16.gmra.mxu0 %v970
        %v1217 = vpop.f32.mrf.mxu0
        %v1218 = vadd.f32 0.0, %v1217
        %v1219 = vpop.f32.mrf.mxu0
        %v1220 = vadd.f32 0.0, %v1219
        %v1221 = vpop.f32.mrf.mxu0
        %v1222 = vadd.f32 0.0, %v1221
        %v1223 = vpop.f32.mrf.mxu0
        %v1224 = vadd.f32 0.0, %v1223
        %1225 = vmatprep.mubr.bf16.mxu0 0
        %1226 = vmatmul.mubr.bf16.gmra.mxu0 %v971
        %v1227 = vpop.f32.mrf.mxu0
        %v1228 = vadd.f32 0.0, %v1227
        %v1229 = vpop.f32.mrf.mxu0
        %v1230 = vadd.f32 0.0, %v1229
        %v1231 = vpop.f32.mrf.mxu0
        %v1232 = vadd.f32 0.0, %v1231
        %v1233 = vpop.f32.mrf.mxu0
        %v1234 = vadd.f32 0.0, %v1233
        %1235 = vmatprep.mubr.bf16.mxu0 0
        %1236 = vmatmul.mubr.bf16.gmra.mxu0 %v972
        %v1237 = vpop.f32.mrf.mxu0
        %v1238 = vadd.f32 0.0, %v1237
        %v1239 = vpop.f32.mrf.mxu0
        %v1240 = vadd.f32 0.0, %v1239
        %v1241 = vpop.f32.mrf.mxu0
        %v1242 = vadd.f32 0.0, %v1241
        %v1243 = vpop.f32.mrf.mxu0
        %v1244 = vadd.f32 0.0, %v1243
        %1245 = vdwg.mxu0
        %1246 = vmatprep.subr.bf16.mxu0 0
        %1247 = vmatpush1.bf16.msra.mxu0 %v1108
        %1248 = vmatprep.subr.bf16.mxu0 0
        %1249 = vmatpush1.bf16.msra.mxu0 %v1105
        %1250 = vmatprep.subr.bf16.mxu0 0
        %1251 = vmatpush1.bf16.msra.mxu0 %v1102
        %1252 = vmatprep.subr.bf16.mxu0 0
        %1253 = vmatpush1.bf16.msra.mxu0 %v1099
        %1254 = vmatprep.subr.bf16.mxu0 0
        %1255 = vmatpush1.bf16.msra.mxu0 %v1096
        %1256 = vmatprep.subr.bf16.mxu0 0
        %1257 = vmatpush1.bf16.msra.mxu0 %v1093
        %1258 = vmatprep.subr.bf16.mxu0 0
        %1259 = vmatpush1.bf16.msra.mxu0 %v1090
        %1260 = vmatprep.subr.bf16.mxu0 0
        %1261 = vmatpush1.bf16.msra.mxu0 %v1087
        %1262 = vmatprep.subr.bf16.mxu0 0
        %1263 = vmatpush2.bf16.msra.mxu0 0
        %1264 = vmatprep.subr.bf16.mxu0 0
        %1265 = vmatpush2.bf16.msra.mxu0 0
        %1266 = vmatprep.subr.bf16.mxu0 0
        %1267 = vmatpush2.bf16.msra.mxu0 0
        %1268 = vmatprep.subr.bf16.mxu0 0
        %1269 = vmatpush2.bf16.msra.mxu0 0
        %1270 = vmatprep.subr.bf16.mxu0 0
        %1271 = vmatpush2.bf16.msra.mxu0 0
        %1272 = vmatprep.subr.bf16.mxu0 0
        %1273 = vmatpush2.bf16.msra.mxu0 0
        %1274 = vmatprep.subr.bf16.mxu0 0
        %1275 = vmatpush2.bf16.msra.mxu0 0
        %1276 = vmatprep.subr.bf16.mxu0 0
        %1277 = vmatpush2.bf16.msra.mxu0 0
        %1278 = vmatprep.mubr.bf16.mxu0 0
        %1279 = vmatmul.mubr.bf16.gmra.mxu0 %v965
        %v1280 = vpop.f32.mrf.mxu0
        %v1281 = vadd.f32 0.0, %v1280
        %v1282 = vpop.f32.mrf.mxu0
        %v1283 = vpop.f32.mrf.mxu0
        %v1284 = vadd.f32 0.0, %v1283
        %v1285 = vpop.f32.mrf.mxu0
        %1286 = vmatprep.mubr.bf16.mxu0 0
        %1287 = vmatmul.mubr.bf16.gmra.mxu0 %v966
        %v1288 = vpop.f32.mrf.mxu0
        %v1289 = vadd.f32 0.0, %v1288
        %v1290 = vpop.f32.mrf.mxu0
        %v1291 = vpop.f32.mrf.mxu0
        %v1292 = vadd.f32 0.0, %v1291
        %v1293 = vpop.f32.mrf.mxu0
        %1294 = vmatprep.mubr.bf16.mxu0 0
        %1295 = vmatmul.mubr.bf16.gmra.mxu0 %v967
        %v1296 = vpop.f32.mrf.mxu0
        %v1297 = vadd.f32 0.0, %v1296
        %v1298 = vpop.f32.mrf.mxu0
        %v1299 = vpop.f32.mrf.mxu0
        %v1300 = vadd.f32 0.0, %v1299
        %v1301 = vpop.f32.mrf.mxu0
        %1302 = vmatprep.mubr.bf16.mxu0 0
        %1303 = vmatmul.mubr.bf16.gmra.mxu0 %v968
        %v1304 = vpop.f32.mrf.mxu0
        %v1305 = vadd.f32 0.0, %v1304
        %v1306 = vpop.f32.mrf.mxu0
        %v1307 = vpop.f32.mrf.mxu0
        %v1308 = vadd.f32 0.0, %v1307
        %v1309 = vpop.f32.mrf.mxu0
        %1310 = vmatprep.mubr.bf16.mxu0 0
        %1311 = vmatmul.mubr.bf16.gmra.mxu0 %v969
        %v1312 = vpop.f32.mrf.mxu0
        %v1313 = vadd.f32 0.0, %v1312
        %v1314 = vpop.f32.mrf.mxu0
        %v1315 = vpop.f32.mrf.mxu0
        %v1316 = vadd.f32 0.0, %v1315
        %v1317 = vpop.f32.mrf.mxu0
        %1318 = vmatprep.mubr.bf16.mxu0 0
        %1319 = vmatmul.mubr.bf16.gmra.mxu0 %v970
        %v1320 = vpop.f32.mrf.mxu0
        %v1321 = vadd.f32 0.0, %v1320
        %v1322 = vpop.f32.mrf.mxu0
        %v1323 = vpop.f32.mrf.mxu0
        %v1324 = vadd.f32 0.0, %v1323
        %v1325 = vpop.f32.mrf.mxu0
        %1326 = vmatprep.mubr.bf16.mxu0 0
        %1327 = vmatmul.mubr.bf16.gmra.mxu0 %v971
        %v1328 = vpop.f32.mrf.mxu0
        %v1329 = vadd.f32 0.0, %v1328
        %v1330 = vpop.f32.mrf.mxu0
        %v1331 = vpop.f32.mrf.mxu0
        %v1332 = vadd.f32 0.0, %v1331
        %v1333 = vpop.f32.mrf.mxu0
        %1334 = vmatprep.mubr.bf16.mxu0 0
        %1335 = vmatmul.mubr.bf16.gmra.mxu0 %v972
        %v1336 = vpop.f32.mrf.mxu0
        %v1337 = vadd.f32 0.0, %v1336
        %v1338 = vpop.f32.mrf.mxu0
        %v1339 = vpop.f32.mrf.mxu0
        %v1340 = vadd.f32 0.0, %v1339
        %v1341 = vpop.f32.mrf.mxu0
        %1342 = vdwg.mxu0
        %v1343 = vpack.c.bf16 %v1284, %v1281
        %v1344 = vpack.c.bf16 %v1292, %v1289
        %v1345 = vpack.c.bf16 %v1300, %v1297
        %v1346 = vpack.c.bf16 %v1308, %v1305
        %v1347 = vpack.c.bf16 %v1316, %v1313
        %v1348 = vpack.c.bf16 %v1324, %v1321
        %v1349 = vpack.c.bf16 %v1332, %v1329
        %v1350 = vpack.c.bf16 %v1340, %v1337
        %v1351 = vmul.f32 %v1168, %v680
        %v1352 = vmul.f32 %v1172, %v681
        %v1353 = vmul.f32 %v1178, %v682
        %v1354 = vmul.f32 %v1182, %v683
        %v1355 = vmul.f32 %v1188, %v684
        %v1356 = vmul.f32 %v1192, %v685
        %v1357 = vmul.f32 %v1198, %v686
        %v1358 = vmul.f32 %v1202, %v687
        %v1359 = vmul.f32 %v1208, %v688
        %v1360 = vmul.f32 %v1212, %v689
        %v1361 = vmul.f32 %v1218, %v690
        %v1362 = vmul.f32 %v1222, %v691
        %v1363 = vmul.f32 %v1228, %v692
        %v1364 = vmul.f32 %v1232, %v693
        %v1365 = vmul.f32 %v1238, %v694
        %v1366 = vmul.f32 %v1242, %v695
        %1367 = vrot.lane.b32.xlu0 %v1168, 64
        %v1368 = vpop.permute.xlu0 %1367
        %1369 = vrot.lane.b32.xlu0 %v1172, 64
        %v1370 = vpop.permute.xlu0 %1369
        %1371 = vrot.lane.b32.xlu0 %v1178, 64
        %v1372 = vpop.permute.xlu0 %1371
        %1373 = vrot.lane.b32.xlu0 %v1182, 64
        %v1374 = vpop.permute.xlu0 %1373
        %1375 = vrot.lane.b32.xlu0 %v1188, 64
        %v1376 = vpop.permute.xlu0 %1375
        %1377 = vrot.lane.b32.xlu0 %v1192, 64
        %v1378 = vpop.permute.xlu0 %1377
        %1379 = vrot.lane.b32.xlu0 %v1198, 64
        %v1380 = vpop.permute.xlu0 %1379
        %1381 = vrot.lane.b32.xlu0 %v1202, 64
        %v1382 = vpop.permute.xlu0 %1381
        %1383 = vrot.lane.b32.xlu0 %v1208, 64
        %v1384 = vpop.permute.xlu0 %1383
        %1385 = vrot.lane.b32.xlu0 %v1212, 64
        %v1386 = vpop.permute.xlu0 %1385
        %1387 = vrot.lane.b32.xlu0 %v1218, 64
        %v1388 = vpop.permute.xlu0 %1387
        %1389 = vrot.lane.b32.xlu0 %v1222, 64
        %v1390 = vpop.permute.xlu0 %1389
        %1391 = vrot.lane.b32.xlu0 %v1228, 64
        %v1392 = vpop.permute.xlu0 %1391
        %1393 = vrot.lane.b32.xlu0 %v1232, 64
        %v1394 = vpop.permute.xlu0 %1393
        %1395 = vrot.lane.b32.xlu0 %v1238, 64
        %v1396 = vpop.permute.xlu0 %1395
        %1397 = vrot.lane.b32.xlu0 %v1242, 64
        %v1398 = vpop.permute.xlu0 %1397
        %v1399 = vmul.f32 %v1368, %v696
        %v1400 = vmul.f32 %v1370, %v697
        %v1401 = vmul.f32 %v1372, %v698
        %v1402 = vmul.f32 %v1374, %v699
        %v1403 = vmul.f32 %v1376, %v700
        %v1404 = vmul.f32 %v1378, %v701
        %v1405 = vmul.f32 %v1380, %v702
        %v1406 = vmul.f32 %v1382, %v703
        %v1407 = vmul.f32 %v1384, %v704
        %v1408 = vmul.f32 %v1386, %v705
        %v1409 = vmul.f32 %v1388, %v706
        %v1410 = vmul.f32 %v1390, %v707
        %v1411 = vmul.f32 %v1392, %v708
        %v1412 = vmul.f32 %v1394, %v709
        %v1413 = vmul.f32 %v1396, %v710
        %v1414 = vmul.f32 %v1398, %v711
        %v1415 = vadd.f32 %v1351, %v1399
        %v1416 = vadd.f32 %v1352, %v1400
        %v1417 = vadd.f32 %v1353, %v1401
        %v1418 = vadd.f32 %v1354, %v1402
        %v1419 = vadd.f32 %v1355, %v1403
        %v1420 = vadd.f32 %v1356, %v1404
        %v1421 = vadd.f32 %v1357, %v1405
        %v1422 = vadd.f32 %v1358, %v1406
        %v1423 = vadd.f32 %v1359, %v1407
        %v1424 = vadd.f32 %v1360, %v1408
        %v1425 = vadd.f32 %v1361, %v1409
        %v1426 = vadd.f32 %v1362, %v1410
        %v1427 = vadd.f32 %v1363, %v1411
        %v1428 = vadd.f32 %v1364, %v1412
        %v1429 = vadd.f32 %v1365, %v1413
        %v1430 = vadd.f32 %v1366, %v1414
        %v1431 = vpack.c.bf16 %v1416, %v1415
        %v1432 = vpack.c.bf16 %v1418, %v1417
        %v1433 = vpack.c.bf16 %v1420, %v1419
        %v1434 = vpack.c.bf16 %v1422, %v1421
        %v1435 = vpack.c.bf16 %v1424, %v1423
        %v1436 = vpack.c.bf16 %v1426, %v1425
        %v1437 = vpack.c.bf16 %v1428, %v1427
        %v1438 = vpack.c.bf16 %v1430, %v1429
        %v1439 = vmul.f32 %v1170, %v712
        %v1440 = vmul.f32 %v1174, %v713
        %v1441 = vmul.f32 %v1180, %v714
        %v1442 = vmul.f32 %v1184, %v715
        %v1443 = vmul.f32 %v1190, %v716
        %v1444 = vmul.f32 %v1194, %v717
        %v1445 = vmul.f32 %v1200, %v718
        %v1446 = vmul.f32 %v1204, %v719
        %v1447 = vmul.f32 %v1210, %v720
        %v1448 = vmul.f32 %v1214, %v721
        %v1449 = vmul.f32 %v1220, %v722
        %v1450 = vmul.f32 %v1224, %v723
        %v1451 = vmul.f32 %v1230, %v724
        %v1452 = vmul.f32 %v1234, %v725
        %v1453 = vmul.f32 %v1240, %v726
        %v1454 = vmul.f32 %v1244, %v727
        %1455 = vrot.lane.b32.xlu0 %v1170, 64
        %v1456 = vpop.permute.xlu0 %1455
        %1457 = vrot.lane.b32.xlu0 %v1174, 64
        %v1458 = vpop.permute.xlu0 %1457
        %1459 = vrot.lane.b32.xlu0 %v1180, 64
        %v1460 = vpop.permute.xlu0 %1459
        %1461 = vrot.lane.b32.xlu0 %v1184, 64
        %v1462 = vpop.permute.xlu0 %1461
        %1463 = vrot.lane.b32.xlu0 %v1190, 64
        %v1464 = vpop.permute.xlu0 %1463
        %1465 = vrot.lane.b32.xlu0 %v1194, 64
        %v1466 = vpop.permute.xlu0 %1465
        %1467 = vrot.lane.b32.xlu0 %v1200, 64
        %v1468 = vpop.permute.xlu0 %1467
        %1469 = vrot.lane.b32.xlu0 %v1204, 64
        %v1470 = vpop.permute.xlu0 %1469
        %1471 = vrot.lane.b32.xlu0 %v1210, 64
        %v1472 = vpop.permute.xlu0 %1471
        %1473 = vrot.lane.b32.xlu0 %v1214, 64
        %v1474 = vpop.permute.xlu0 %1473
        %1475 = vrot.lane.b32.xlu0 %v1220, 64
        %v1476 = vpop.permute.xlu0 %1475
        %1477 = vrot.lane.b32.xlu0 %v1224, 64
        %v1478 = vpop.permute.xlu0 %1477
        %1479 = vrot.lane.b32.xlu0 %v1230, 64
        %v1480 = vpop.permute.xlu0 %1479
        %1481 = vrot.lane.b32.xlu0 %v1234, 64
        %v1482 = vpop.permute.xlu0 %1481
        %1483 = vrot.lane.b32.xlu0 %v1240, 64
        %v1484 = vpop.permute.xlu0 %1483
        %1485 = vrot.lane.b32.xlu0 %v1244, 64
        %v1486 = vpop.permute.xlu0 %1485
        %v1487 = vmul.f32 %v1456, %v728
        %v1488 = vmul.f32 %v1458, %v729
        %v1489 = vmul.f32 %v1460, %v730
        %v1490 = vmul.f32 %v1462, %v731
        %v1491 = vmul.f32 %v1464, %v732
        %v1492 = vmul.f32 %v1466, %v733
        %v1493 = vmul.f32 %v1468, %v734
        %v1494 = vmul.f32 %v1470, %v735
        %v1495 = vmul.f32 %v1472, %v736
        %v1496 = vmul.f32 %v1474, %v737
        %v1497 = vmul.f32 %v1476, %v738
        %v1498 = vmul.f32 %v1478, %v739
        %v1499 = vmul.f32 %v1480, %v740
        %v1500 = vmul.f32 %v1482, %v741
        %v1501 = vmul.f32 %v1484, %v742
        %v1502 = vmul.f32 %v1486, %v743
        %v1503 = vadd.f32 %v1439, %v1487
        %v1504 = vadd.f32 %v1440, %v1488
        %v1505 = vadd.f32 %v1441, %v1489
        %v1506 = vadd.f32 %v1442, %v1490
        %v1507 = vadd.f32 %v1443, %v1491
        %v1508 = vadd.f32 %v1444, %v1492
        %v1509 = vadd.f32 %v1445, %v1493
        %v1510 = vadd.f32 %v1446, %v1494
        %v1511 = vadd.f32 %v1447, %v1495
        %v1512 = vadd.f32 %v1448, %v1496
        %v1513 = vadd.f32 %v1449, %v1497
        %v1514 = vadd.f32 %v1450, %v1498
        %v1515 = vadd.f32 %v1451, %v1499
        %v1516 = vadd.f32 %v1452, %v1500
        %v1517 = vadd.f32 %v1453, %v1501
        %v1518 = vadd.f32 %v1454, %v1502
        %v1519 = vpack.c.bf16 %v1504, %v1503
        %v1520 = vpack.c.bf16 %v1506, %v1505
        %v1521 = vpack.c.bf16 %v1508, %v1507
        %v1522 = vpack.c.bf16 %v1510, %v1509
        %v1523 = vpack.c.bf16 %v1512, %v1511
        %v1524 = vpack.c.bf16 %v1514, %v1513
        %v1525 = vpack.c.bf16 %v1516, %v1515
        %v1526 = vpack.c.bf16 %v1518, %v1517
        %1535 = vrot.lane.b32.xlu0 %v1431, 64
        %v1536 = vpop.permute.xlu0 %1535
        %1537 = vrot.lane.b32.xlu0 %v1432, 64
        %v1538 = vpop.permute.xlu0 %1537
        %1539 = vrot.lane.b32.xlu0 %v1433, 64
        %v1540 = vpop.permute.xlu0 %1539
        %1541 = vrot.lane.b32.xlu0 %v1434, 64
        %v1542 = vpop.permute.xlu0 %1541
        %1543 = vrot.lane.b32.xlu0 %v1435, 64
        %v1544 = vpop.permute.xlu0 %1543
        %1545 = vrot.lane.b32.xlu0 %v1436, 64
        %v1546 = vpop.permute.xlu0 %1545
        %1547 = vrot.lane.b32.xlu0 %v1437, 64
        %v1548 = vpop.permute.xlu0 %1547
        %1549 = vrot.lane.b32.xlu0 %v1438, 64
        %v1550 = vpop.permute.xlu0 %1549
        %1559 = vrot.lane.b32.xlu0 %v1519, 64
        %v1560 = vpop.permute.xlu0 %1559
        %1561 = vrot.lane.b32.xlu0 %v1520, 64
        %v1562 = vpop.permute.xlu0 %1561
        %1563 = vrot.lane.b32.xlu0 %v1521, 64
        %v1564 = vpop.permute.xlu0 %1563
        %1565 = vrot.lane.b32.xlu0 %v1522, 64
        %v1566 = vpop.permute.xlu0 %1565
        %1567 = vrot.lane.b32.xlu0 %v1523, 64
        %v1568 = vpop.permute.xlu0 %1567
        %1569 = vrot.lane.b32.xlu0 %v1524, 64
        %v1570 = vpop.permute.xlu0 %1569
        %1571 = vrot.lane.b32.xlu0 %v1525, 64
        %v1572 = vpop.permute.xlu0 %1571
        %1573 = vrot.lane.b32.xlu0 %v1526, 64
        %v1574 = vpop.permute.xlu0 %1573
        %vm1575 = vcmask 130048
        %v1577 = vsel %vm1575, %v1536, 0
        %v1580 = vsel %vm1575, %v1538, 0
        %v1583 = vsel %vm1575, %v1540, 0
        %v1586 = vsel %vm1575, %v1542, 0
        %v1589 = vsel %vm1575, %v1544, 0
        %v1592 = vsel %vm1575, %v1546, 0
        %v1595 = vsel %vm1575, %v1548, 0
        %v1598 = vsel %vm1575, %v1550, 0
        %v1601 = vsel %vm1575, %v1560, 0
        %v1604 = vsel %vm1575, %v1562, 0
        %v1607 = vsel %vm1575, %v1564, 0
        %v1610 = vsel %vm1575, %v1566, 0
        %v1613 = vsel %vm1575, %v1568, 0
        %v1616 = vsel %vm1575, %v1570, 0
        %v1619 = vsel %vm1575, %v1572, 0
        %v1622 = vsel %vm1575, %v1574, 0
        %1624 = vmatprep.subr.bf16.mxu0 0
        %1625 = vmatpush1.bf16.xpose.msra.mxu0 %v1622
        %1626 = vmatprep.subr.bf16.mxu0 0
        %1627 = vmatpush1.bf16.xpose.msra.mxu0 %v1619
        %1628 = vmatprep.subr.bf16.mxu0 0
        %1629 = vmatpush1.bf16.xpose.msra.mxu0 %v1616
        %1630 = vmatprep.subr.bf16.mxu0 0
        %1631 = vmatpush1.bf16.xpose.msra.mxu0 %v1613
        %1632 = vmatprep.subr.bf16.mxu0 0
        %1633 = vmatpush1.bf16.xpose.msra.mxu0 %v1610
        %1634 = vmatprep.subr.bf16.mxu0 0
        %1635 = vmatpush1.bf16.xpose.msra.mxu0 %v1607
        %1636 = vmatprep.subr.bf16.mxu0 0
        %1637 = vmatpush1.bf16.xpose.msra.mxu0 %v1604
        %1638 = vmatprep.subr.bf16.mxu0 0
        %1639 = vmatpush1.bf16.xpose.msra.mxu0 %v1601
        %1640 = vmatprep.subr.bf16.mxu0 0
        %1641 = vmatpush2.bf16.xpose.msra.mxu0 0
        %1642 = vmatprep.subr.bf16.mxu0 0
        %1643 = vmatpush2.bf16.xpose.msra.mxu0 0
        %1644 = vmatprep.subr.bf16.mxu0 0
        %1645 = vmatpush2.bf16.xpose.msra.mxu0 0
        %1646 = vmatprep.subr.bf16.mxu0 0
        %1647 = vmatpush2.bf16.xpose.msra.mxu0 0
        %1648 = vmatprep.subr.bf16.mxu0 0
        %1649 = vmatpush2.bf16.xpose.msra.mxu0 0
        %1650 = vmatprep.subr.bf16.mxu0 0
        %1651 = vmatpush2.bf16.xpose.msra.mxu0 0
        %1652 = vmatprep.subr.bf16.mxu0 0
        %1653 = vmatpush2.bf16.xpose.msra.mxu0 0
        %1654 = vmatprep.subr.bf16.mxu0 0
        %1655 = vmatpush2.bf16.xpose.msra.mxu0 0
        %1656 = vmatprep.mubr.bf16.mxu0 0
        %1657 = vmatmul.mubr.bf16.gmra.mxu0 %v1577
        %v1658 = vpop.f32.mrf.mxu0
        %v1659 = vadd.f32 0.0, %v1658
        %v1660 = vpop.f32.mrf.mxu0
        %v1661 = vpop.f32.mrf.mxu0
        %v1662 = vadd.f32 0.0, %v1661
        %v1663 = vpop.f32.mrf.mxu0
        %1664 = vmatprep.mubr.bf16.mxu0 0
        %1665 = vmatmul.mubr.bf16.gmra.mxu0 %v1580
        %v1666 = vpop.f32.mrf.mxu0
        %v1667 = vadd.f32 0.0, %v1666
        %v1668 = vpop.f32.mrf.mxu0
        %v1669 = vpop.f32.mrf.mxu0
        %v1670 = vadd.f32 0.0, %v1669
        %v1671 = vpop.f32.mrf.mxu0
        %1672 = vmatprep.mubr.bf16.mxu0 0
        %1673 = vmatmul.mubr.bf16.gmra.mxu0 %v1583
        %v1674 = vpop.f32.mrf.mxu0
        %v1675 = vadd.f32 0.0, %v1674
        %v1676 = vpop.f32.mrf.mxu0
        %v1677 = vpop.f32.mrf.mxu0
        %v1678 = vadd.f32 0.0, %v1677
        %v1679 = vpop.f32.mrf.mxu0
        %1680 = vmatprep.mubr.bf16.mxu0 0
        %1681 = vmatmul.mubr.bf16.gmra.mxu0 %v1586
        %v1682 = vpop.f32.mrf.mxu0
        %v1683 = vadd.f32 0.0, %v1682
        %v1684 = vpop.f32.mrf.mxu0
        %v1685 = vpop.f32.mrf.mxu0
        %v1686 = vadd.f32 0.0, %v1685
        %v1687 = vpop.f32.mrf.mxu0
        %1688 = vmatprep.mubr.bf16.mxu0 0
        %1689 = vmatmul.mubr.bf16.gmra.mxu0 %v1589
        %v1690 = vpop.f32.mrf.mxu0
        %v1691 = vadd.f32 0.0, %v1690
        %v1692 = vpop.f32.mrf.mxu0
        %v1693 = vpop.f32.mrf.mxu0
        %v1694 = vadd.f32 0.0, %v1693
        %v1695 = vpop.f32.mrf.mxu0
        %1696 = vmatprep.mubr.bf16.mxu0 0
        %1697 = vmatmul.mubr.bf16.gmra.mxu0 %v1592
        %v1698 = vpop.f32.mrf.mxu0
        %v1699 = vadd.f32 0.0, %v1698
        %v1700 = vpop.f32.mrf.mxu0
        %v1701 = vpop.f32.mrf.mxu0
        %v1702 = vadd.f32 0.0, %v1701
        %v1703 = vpop.f32.mrf.mxu0
        %1704 = vmatprep.mubr.bf16.mxu0 0
        %1705 = vmatmul.mubr.bf16.gmra.mxu0 %v1595
        %v1706 = vpop.f32.mrf.mxu0
        %v1707 = vadd.f32 0.0, %v1706
        %v1708 = vpop.f32.mrf.mxu0
        %v1709 = vpop.f32.mrf.mxu0
        %v1710 = vadd.f32 0.0, %v1709
        %v1711 = vpop.f32.mrf.mxu0
        %1712 = vmatprep.mubr.bf16.mxu0 0
        %1713 = vmatmul.mubr.bf16.gmra.mxu0 %v1598
        %v1714 = vpop.f32.mrf.mxu0
        %v1715 = vadd.f32 0.0, %v1714
        %v1716 = vpop.f32.mrf.mxu0
        %v1717 = vpop.f32.mrf.mxu0
        %v1718 = vadd.f32 0.0, %v1717
        %v1719 = vpop.f32.mrf.mxu0
        %1720 = vdwg.mxu0
        %v1722 = vsel %vm1575, %v1431, 0
        %v1725 = vsel %vm1575, %v1432, 0
        %v1728 = vsel %vm1575, %v1433, 0
        %v1731 = vsel %vm1575, %v1434, 0
        %v1734 = vsel %vm1575, %v1435, 0
        %v1737 = vsel %vm1575, %v1436, 0
        %v1740 = vsel %vm1575, %v1437, 0
        %v1743 = vsel %vm1575, %v1438, 0
        %v1746 = vsel %vm1575, %v1519, 0
        %v1749 = vsel %vm1575, %v1520, 0
        %v1752 = vsel %vm1575, %v1521, 0
        %v1755 = vsel %vm1575, %v1522, 0
        %v1758 = vsel %vm1575, %v1523, 0
        %v1761 = vsel %vm1575, %v1524, 0
        %v1764 = vsel %vm1575, %v1525, 0
        %v1767 = vsel %vm1575, %v1526, 0
        %1769 = vmatprep.subr.bf16.mxu0 0
        %1770 = vmatpush1.bf16.xpose.msra.mxu0 %v1767
        %1771 = vmatprep.subr.bf16.mxu0 0
        %1772 = vmatpush1.bf16.xpose.msra.mxu0 %v1764
        %1773 = vmatprep.subr.bf16.mxu0 0
        %1774 = vmatpush1.bf16.xpose.msra.mxu0 %v1761
        %1775 = vmatprep.subr.bf16.mxu0 0
        %1776 = vmatpush1.bf16.xpose.msra.mxu0 %v1758
        %1777 = vmatprep.subr.bf16.mxu0 0
        %1778 = vmatpush1.bf16.xpose.msra.mxu0 %v1755
        %1779 = vmatprep.subr.bf16.mxu0 0
        %1780 = vmatpush1.bf16.xpose.msra.mxu0 %v1752
        %1781 = vmatprep.subr.bf16.mxu0 0
        %1782 = vmatpush1.bf16.xpose.msra.mxu0 %v1749
        %1783 = vmatprep.subr.bf16.mxu0 0
        %1784 = vmatpush1.bf16.xpose.msra.mxu0 %v1746
        %1785 = vmatprep.subr.bf16.mxu0 0
        %1786 = vmatpush2.bf16.xpose.msra.mxu0 0
        %1787 = vmatprep.subr.bf16.mxu0 0
        %1788 = vmatpush2.bf16.xpose.msra.mxu0 0
        %1789 = vmatprep.subr.bf16.mxu0 0
        %1790 = vmatpush2.bf16.xpose.msra.mxu0 0
        %1791 = vmatprep.subr.bf16.mxu0 0
        %1792 = vmatpush2.bf16.xpose.msra.mxu0 0
        %1793 = vmatprep.subr.bf16.mxu0 0
        %1794 = vmatpush2.bf16.xpose.msra.mxu0 0
        %1795 = vmatprep.subr.bf16.mxu0 0
        %1796 = vmatpush2.bf16.xpose.msra.mxu0 0
        %1797 = vmatprep.subr.bf16.mxu0 0
        %1798 = vmatpush2.bf16.xpose.msra.mxu0 0
        %1799 = vmatprep.subr.bf16.mxu0 0
        %1800 = vmatpush2.bf16.xpose.msra.mxu0 0
        %1801 = vmatprep.mubr.bf16.mxu0 0
        %1802 = vmatmul.mubr.bf16.gmra.mxu0 %v1722
        %v1803 = vpop.f32.mrf.mxu0
        %v1804 = vadd.f32 %v1659, %v1803
        %v1805 = vpop.f32.mrf.mxu0
        %v1806 = vpop.f32.mrf.mxu0
        %v1807 = vadd.f32 %v1662, %v1806
        %v1808 = vpop.f32.mrf.mxu0
        %1809 = vmatprep.mubr.bf16.mxu0 0
        %1810 = vmatmul.mubr.bf16.gmra.mxu0 %v1725
        %v1811 = vpop.f32.mrf.mxu0
        %v1812 = vadd.f32 %v1667, %v1811
        %v1813 = vpop.f32.mrf.mxu0
        %v1814 = vpop.f32.mrf.mxu0
        %v1815 = vadd.f32 %v1670, %v1814
        %v1816 = vpop.f32.mrf.mxu0
        %1817 = vmatprep.mubr.bf16.mxu0 0
        %1818 = vmatmul.mubr.bf16.gmra.mxu0 %v1728
        %v1819 = vpop.f32.mrf.mxu0
        %v1820 = vadd.f32 %v1675, %v1819
        %v1821 = vpop.f32.mrf.mxu0
        %v1822 = vpop.f32.mrf.mxu0
        %v1823 = vadd.f32 %v1678, %v1822
        %v1824 = vpop.f32.mrf.mxu0
        %1825 = vmatprep.mubr.bf16.mxu0 0
        %1826 = vmatmul.mubr.bf16.gmra.mxu0 %v1731
        %v1827 = vpop.f32.mrf.mxu0
        %v1828 = vadd.f32 %v1683, %v1827
        %v1829 = vpop.f32.mrf.mxu0
        %v1830 = vpop.f32.mrf.mxu0
        %v1831 = vadd.f32 %v1686, %v1830
        %v1832 = vpop.f32.mrf.mxu0
        %1833 = vmatprep.mubr.bf16.mxu0 0
        %1834 = vmatmul.mubr.bf16.gmra.mxu0 %v1734
        %v1835 = vpop.f32.mrf.mxu0
        %v1836 = vadd.f32 %v1691, %v1835
        %v1837 = vpop.f32.mrf.mxu0
        %v1838 = vpop.f32.mrf.mxu0
        %v1839 = vadd.f32 %v1694, %v1838
        %v1840 = vpop.f32.mrf.mxu0
        %1841 = vmatprep.mubr.bf16.mxu0 0
        %1842 = vmatmul.mubr.bf16.gmra.mxu0 %v1737
        %v1843 = vpop.f32.mrf.mxu0
        %v1844 = vadd.f32 %v1699, %v1843
        %v1845 = vpop.f32.mrf.mxu0
        %v1846 = vpop.f32.mrf.mxu0
        %v1847 = vadd.f32 %v1702, %v1846
        %v1848 = vpop.f32.mrf.mxu0
        %1849 = vmatprep.mubr.bf16.mxu0 0
        %1850 = vmatmul.mubr.bf16.gmra.mxu0 %v1740
        %v1851 = vpop.f32.mrf.mxu0
        %v1852 = vadd.f32 %v1707, %v1851
        %v1853 = vpop.f32.mrf.mxu0
        %v1854 = vpop.f32.mrf.mxu0
        %v1855 = vadd.f32 %v1710, %v1854
        %v1856 = vpop.f32.mrf.mxu0
        %1857 = vmatprep.mubr.bf16.mxu0 0
        %1858 = vmatmul.mubr.bf16.gmra.mxu0 %v1743
        %v1859 = vpop.f32.mrf.mxu0
        %v1860 = vadd.f32 %v1715, %v1859
        %v1861 = vpop.f32.mrf.mxu0
        %v1862 = vpop.f32.mrf.mxu0
        %v1863 = vadd.f32 %v1718, %v1862
        %v1864 = vpop.f32.mrf.mxu0
        %1865 = vdwg.mxu0
        %v1866 = vmul.f32 %v1804, 0.17677669
        %v1867 = vmul.f32 %v1807, 0.17677669
        %v1868 = vmul.f32 %v1812, 0.17677669
        %v1869 = vmul.f32 %v1815, 0.17677669
        %v1870 = vmul.f32 %v1820, 0.17677669
        %v1871 = vmul.f32 %v1823, 0.17677669
        %v1872 = vmul.f32 %v1828, 0.17677669
        %v1873 = vmul.f32 %v1831, 0.17677669
        %v1874 = vmul.f32 %v1836, 0.17677669
        %v1875 = vmul.f32 %v1839, 0.17677669
        %v1876 = vmul.f32 %v1844, 0.17677669
        %v1877 = vmul.f32 %v1847, 0.17677669
        %v1878 = vmul.f32 %v1852, 0.17677669
        %v1879 = vmul.f32 %v1855, 0.17677669
        %v1880 = vmul.f32 %v1860, 0.17677669
        %v1881 = vmul.f32 %v1863, 0.17677669
        %1882 = vmax.xlane.f32.xlu0 %v1866
        %v1883 = vpop.xlane.xlu0 %1882
        %1884 = vmax.xlane.f32.xlu0 %v1867
        %v1885 = vpop.xlane.xlu0 %1884
        %1886 = vmax.xlane.f32.xlu0 %v1868
        %v1887 = vpop.xlane.xlu0 %1886
        %1888 = vmax.xlane.f32.xlu0 %v1869
        %v1889 = vpop.xlane.xlu0 %1888
        %1890 = vmax.xlane.f32.xlu0 %v1870
        %v1891 = vpop.xlane.xlu0 %1890
        %1892 = vmax.xlane.f32.xlu0 %v1871
        %v1893 = vpop.xlane.xlu0 %1892
        %1894 = vmax.xlane.f32.xlu0 %v1872
        %v1895 = vpop.xlane.xlu0 %1894
        %1896 = vmax.xlane.f32.xlu0 %v1873
        %v1897 = vpop.xlane.xlu0 %1896
        %1898 = vmax.xlane.f32.xlu0 %v1874
        %v1899 = vpop.xlane.xlu0 %1898
        %1900 = vmax.xlane.f32.xlu0 %v1875
        %v1901 = vpop.xlane.xlu0 %1900
        %1902 = vmax.xlane.f32.xlu0 %v1876
        %v1903 = vpop.xlane.xlu0 %1902
        %1904 = vmax.xlane.f32.xlu0 %v1877
        %v1905 = vpop.xlane.xlu0 %1904
        %1906 = vmax.xlane.f32.xlu0 %v1878
        %v1907 = vpop.xlane.xlu0 %1906
        %1908 = vmax.xlane.f32.xlu0 %v1879
        %v1909 = vpop.xlane.xlu0 %1908
        %1910 = vmax.xlane.f32.xlu0 %v1880
        %v1911 = vpop.xlane.xlu0 %1910
        %1912 = vmax.xlane.f32.xlu0 %v1881
        %v1913 = vpop.xlane.xlu0 %1912
        %v1914 = vsub.f32 %v1866, %v1883
        %v1915 = vsub.f32 %v1867, %v1885
        %v1916 = vsub.f32 %v1868, %v1887
        %v1917 = vsub.f32 %v1869, %v1889
        %v1918 = vsub.f32 %v1870, %v1891
        %v1919 = vsub.f32 %v1871, %v1893
        %v1920 = vsub.f32 %v1872, %v1895
        %v1921 = vsub.f32 %v1873, %v1897
        %v1922 = vsub.f32 %v1874, %v1899
        %v1923 = vsub.f32 %v1875, %v1901
        %v1924 = vsub.f32 %v1876, %v1903
        %v1925 = vsub.f32 %v1877, %v1905
        %v1926 = vsub.f32 %v1878, %v1907
        %v1927 = vsub.f32 %v1879, %v1909
        %v1928 = vsub.f32 %v1880, %v1911
        %v1929 = vsub.f32 %v1881, %v1913
        %v1930 = vmul.f32 %v1914, 1.442695
        %v1931 = vpow.pop %v1930
        %v1932 = vmul.f32 %v1915, 1.442695
        %v1933 = vpow.pop %v1932
        %v1934 = vmul.f32 %v1916, 1.442695
        %v1935 = vpow.pop %v1934
        %v1936 = vmul.f32 %v1917, 1.442695
        %v1937 = vpow.pop %v1936
        %v1938 = vmul.f32 %v1918, 1.442695
        %v1939 = vpow.pop %v1938
        %v1940 = vmul.f32 %v1919, 1.442695
        %v1941 = vpow.pop %v1940
        %v1942 = vmul.f32 %v1920, 1.442695
        %v1943 = vpow.pop %v1942
        %v1944 = vmul.f32 %v1921, 1.442695
        %v1945 = vpow.pop %v1944
        %v1946 = vmul.f32 %v1922, 1.442695
        %v1947 = vpow.pop %v1946
        %v1948 = vmul.f32 %v1923, 1.442695
        %v1949 = vpow.pop %v1948
        %v1950 = vmul.f32 %v1924, 1.442695
        %v1951 = vpow.pop %v1950
        %v1952 = vmul.f32 %v1925, 1.442695
        %v1953 = vpow.pop %v1952
        %v1954 = vmul.f32 %v1926, 1.442695
        %v1955 = vpow.pop %v1954
        %v1956 = vmul.f32 %v1927, 1.442695
        %v1957 = vpow.pop %v1956
        %v1958 = vmul.f32 %v1928, 1.442695
        %v1959 = vpow.pop %v1958
        %v1960 = vmul.f32 %v1929, 1.442695
        %v1961 = vpow.pop %v1960
        %1962 = vadd.xlane.f32.xlu0 %v1931
        %v1963 = vpop.xlane.xlu0 %1962
        %1964 = vadd.xlane.f32.xlu0 %v1933
        %v1965 = vpop.xlane.xlu0 %1964
        %1966 = vadd.xlane.f32.xlu0 %v1935
        %v1967 = vpop.xlane.xlu0 %1966
        %1968 = vadd.xlane.f32.xlu0 %v1937
        %v1969 = vpop.xlane.xlu0 %1968
        %1970 = vadd.xlane.f32.xlu0 %v1939
        %v1971 = vpop.xlane.xlu0 %1970
        %1972 = vadd.xlane.f32.xlu0 %v1941
        %v1973 = vpop.xlane.xlu0 %1972
        %1974 = vadd.xlane.f32.xlu0 %v1943
        %v1975 = vpop.xlane.xlu0 %1974
        %1976 = vadd.xlane.f32.xlu0 %v1945
        %v1977 = vpop.xlane.xlu0 %1976
        %1978 = vadd.xlane.f32.xlu0 %v1947
        %v1979 = vpop.xlane.xlu0 %1978
        %1980 = vadd.xlane.f32.xlu0 %v1949
        %v1981 = vpop.xlane.xlu0 %1980
        %1982 = vadd.xlane.f32.xlu0 %v1951
        %v1983 = vpop.xlane.xlu0 %1982
        %1984 = vadd.xlane.f32.xlu0 %v1953
        %v1985 = vpop.xlane.xlu0 %1984
        %1986 = vadd.xlane.f32.xlu0 %v1955
        %v1987 = vpop.xlane.xlu0 %1986
        %1988 = vadd.xlane.f32.xlu0 %v1957
        %v1989 = vpop.xlane.xlu0 %1988
        %1990 = vadd.xlane.f32.xlu0 %v1959
        %v1991 = vpop.xlane.xlu0 %1990
        %1992 = vadd.xlane.f32.xlu0 %v1961
        %v1993 = vpop.xlane.xlu0 %1992
        %v1994 = vrcp.pop %v1963
        %v1995 = vrcp.pop %v1965
        %v1996 = vrcp.pop %v1967
        %v1997 = vrcp.pop %v1969
        %v1998 = vrcp.pop %v1971
        %v1999 = vrcp.pop %v1973
        %v2000 = vrcp.pop %v1975
        %v2001 = vrcp.pop %v1977
        %v2002 = vrcp.pop %v1979
        %v2003 = vrcp.pop %v1981
        %v2004 = vrcp.pop %v1983
        %v2005 = vrcp.pop %v1985
        %v2006 = vrcp.pop %v1987
        %v2007 = vrcp.pop %v1989
        %v2008 = vrcp.pop %v1991
        %v2009 = vrcp.pop %v1993
        %v2010 = vmul.f32 %v1931, %v1994
        %v2011 = vmul.f32 %v1933, %v1995
        %v2012 = vmul.f32 %v1935, %v1996
        %v2013 = vmul.f32 %v1937, %v1997
        %v2014 = vmul.f32 %v1939, %v1998
        %v2015 = vmul.f32 %v1941, %v1999
        %v2016 = vmul.f32 %v1943, %v2000
        %v2017 = vmul.f32 %v1945, %v2001
        %v2018 = vmul.f32 %v1947, %v2002
        %v2019 = vmul.f32 %v1949, %v2003
        %v2020 = vmul.f32 %v1951, %v2004
        %v2021 = vmul.f32 %v1953, %v2005
        %v2022 = vmul.f32 %v1955, %v2006
        %v2023 = vmul.f32 %v1957, %v2007
        %v2024 = vmul.f32 %v1959, %v2008
        %v2025 = vmul.f32 %v1961, %v2009
        %v2026 = vpack.c.bf16 %v2011, %v2010
        %v2027 = vpack.c.bf16 %v2013, %v2012
        %v2028 = vpack.c.bf16 %v2015, %v2014
        %v2029 = vpack.c.bf16 %v2017, %v2016
        %v2030 = vpack.c.bf16 %v2019, %v2018
        %v2031 = vpack.c.bf16 %v2021, %v2020
        %v2032 = vpack.c.bf16 %v2023, %v2022
        %v2033 = vpack.c.bf16 %v2025, %v2024
        %2034 = vmatprep.subr.bf16.mxu0 0
        %2035 = vmatpush1.bf16.msra.mxu0 %v1350
        %2036 = vmatprep.subr.bf16.mxu0 0
        %2037 = vmatpush1.bf16.msra.mxu0 %v1349
        %2038 = vmatprep.subr.bf16.mxu0 0
        %2039 = vmatpush1.bf16.msra.mxu0 %v1348
        %2040 = vmatprep.subr.bf16.mxu0 0
        %2041 = vmatpush1.bf16.msra.mxu0 %v1347
        %2042 = vmatprep.subr.bf16.mxu0 0
        %2043 = vmatpush1.bf16.msra.mxu0 %v1346
        %2044 = vmatprep.subr.bf16.mxu0 0
        %2045 = vmatpush1.bf16.msra.mxu0 %v1345
        %2046 = vmatprep.subr.bf16.mxu0 0
        %2047 = vmatpush1.bf16.msra.mxu0 %v1344
        %2048 = vmatprep.subr.bf16.mxu0 0
        %2049 = vmatpush1.bf16.msra.mxu0 %v1343
        %2050 = vmatprep.subr.bf16.mxu0 0
        %2051 = vmatpush2.bf16.msra.mxu0 0
        %2052 = vmatprep.subr.bf16.mxu0 0
        %2053 = vmatpush2.bf16.msra.mxu0 0
        %2054 = vmatprep.subr.bf16.mxu0 0
        %2055 = vmatpush2.bf16.msra.mxu0 0
        %2056 = vmatprep.subr.bf16.mxu0 0
        %2057 = vmatpush2.bf16.msra.mxu0 0
        %2058 = vmatprep.subr.bf16.mxu0 0
        %2059 = vmatpush2.bf16.msra.mxu0 0
        %2060 = vmatprep.subr.bf16.mxu0 0
        %2061 = vmatpush2.bf16.msra.mxu0 0
        %2062 = vmatprep.subr.bf16.mxu0 0
        %2063 = vmatpush2.bf16.msra.mxu0 0
        %2064 = vmatprep.subr.bf16.mxu0 0
        %2065 = vmatpush2.bf16.msra.mxu0 0
        %2066 = vmatprep.mubr.bf16.mxu0 0
        %2067 = vmatmul.mubr.bf16.gmra.mxu0 %v2026
        %v2068 = vpop.f32.mrf.mxu0
        %v2069 = vadd.f32 0.0, %v2068
        %v2070 = vpop.f32.mrf.mxu0
        %v2071 = vpop.f32.mrf.mxu0
        %v2072 = vadd.f32 0.0, %v2071
        %v2073 = vpop.f32.mrf.mxu0
        %2074 = vmatprep.mubr.bf16.mxu0 0
        %2075 = vmatmul.mubr.bf16.gmra.mxu0 %v2027
        %v2076 = vpop.f32.mrf.mxu0
        %v2077 = vadd.f32 0.0, %v2076
        %v2078 = vpop.f32.mrf.mxu0
        %v2079 = vpop.f32.mrf.mxu0
        %v2080 = vadd.f32 0.0, %v2079
        %v2081 = vpop.f32.mrf.mxu0
        %2082 = vmatprep.mubr.bf16.mxu0 0
        %2083 = vmatmul.mubr.bf16.gmra.mxu0 %v2028
        %v2084 = vpop.f32.mrf.mxu0
        %v2085 = vadd.f32 0.0, %v2084
        %v2086 = vpop.f32.mrf.mxu0
        %v2087 = vpop.f32.mrf.mxu0
        %v2088 = vadd.f32 0.0, %v2087
        %v2089 = vpop.f32.mrf.mxu0
        %2090 = vmatprep.mubr.bf16.mxu0 0
        %2091 = vmatmul.mubr.bf16.gmra.mxu0 %v2029
        %v2092 = vpop.f32.mrf.mxu0
        %v2093 = vadd.f32 0.0, %v2092
        %v2094 = vpop.f32.mrf.mxu0
        %v2095 = vpop.f32.mrf.mxu0
        %v2096 = vadd.f32 0.0, %v2095
        %v2097 = vpop.f32.mrf.mxu0
        %2098 = vmatprep.mubr.bf16.mxu0 0
        %2099 = vmatmul.mubr.bf16.gmra.mxu0 %v2030
        %v2100 = vpop.f32.mrf.mxu0
        %v2101 = vadd.f32 0.0, %v2100
        %v2102 = vpop.f32.mrf.mxu0
        %v2103 = vpop.f32.mrf.mxu0
        %v2104 = vadd.f32 0.0, %v2103
        %v2105 = vpop.f32.mrf.mxu0
        %2106 = vmatprep.mubr.bf16.mxu0 0
        %2107 = vmatmul.mubr.bf16.gmra.mxu0 %v2031
        %v2108 = vpop.f32.mrf.mxu0
        %v2109 = vadd.f32 0.0, %v2108
        %v2110 = vpop.f32.mrf.mxu0
        %v2111 = vpop.f32.mrf.mxu0
        %v2112 = vadd.f32 0.0, %v2111
        %v2113 = vpop.f32.mrf.mxu0
        %2114 = vmatprep.mubr.bf16.mxu0 0
        %2115 = vmatmul.mubr.bf16.gmra.mxu0 %v2032
        %v2116 = vpop.f32.mrf.mxu0
        %v2117 = vadd.f32 0.0, %v2116
        %v2118 = vpop.f32.mrf.mxu0
        %v2119 = vpop.f32.mrf.mxu0
        %v2120 = vadd.f32 0.0, %v2119
        %v2121 = vpop.f32.mrf.mxu0
        %2122 = vmatprep.mubr.bf16.mxu0 0
        %2123 = vmatmul.mubr.bf16.gmra.mxu0 %v2033
        %v2124 = vpop.f32.mrf.mxu0
        %v2125 = vadd.f32 0.0, %v2124
        %v2126 = vpop.f32.mrf.mxu0
        %v2127 = vpop.f32.mrf.mxu0
        %v2128 = vadd.f32 0.0, %v2127
        %v2129 = vpop.f32.mrf.mxu0
        %2130 = vdwg.mxu0
        %v2131 = vpack.c.bf16 %v2072, %v2069
        %v2132 = vpack.c.bf16 %v2080, %v2077
        %v2133 = vpack.c.bf16 %v2088, %v2085
        %v2134 = vpack.c.bf16 %v2096, %v2093
        %v2135 = vpack.c.bf16 %v2104, %v2101
        %v2136 = vpack.c.bf16 %v2112, %v2109
        %v2137 = vpack.c.bf16 %v2120, %v2117
        %v2138 = vpack.c.bf16 %v2128, %v2125
        %v2147 = vunpack.c.l.b16 %v2131
        %v2148 = vunpack.c.h.b16 %v2131
        %v2149 = vunpack.c.l.b16 %v2132
        %v2150 = vunpack.c.h.b16 %v2132
        %v2151 = vunpack.c.l.b16 %v2133
        %v2152 = vunpack.c.h.b16 %v2133
        %v2153 = vunpack.c.l.b16 %v2134
        %v2154 = vunpack.c.h.b16 %v2134
        %v2155 = vunpack.c.l.b16 %v2135
        %v2156 = vunpack.c.h.b16 %v2135
        %v2157 = vunpack.c.l.b16 %v2136
        %v2158 = vunpack.c.h.b16 %v2136
        %v2159 = vunpack.c.l.b16 %v2137
        %v2160 = vunpack.c.h.b16 %v2137
        %v2161 = vunpack.c.l.b16 %v2138
        %v2162 = vunpack.c.h.b16 %v2138
        %v2163 = vpack.c.b16 %v2147, %v2147
        %v2164 = vpack.c.b16 %v2148, %v2148
        %v2165 = vpack.c.b16 %v2149, %v2149
        %v2166 = vpack.c.b16 %v2150, %v2150
        %v2167 = vpack.c.b16 %v2151, %v2151
        %v2168 = vpack.c.b16 %v2152, %v2152
        %v2169 = vpack.c.b16 %v2153, %v2153
        %v2170 = vpack.c.b16 %v2154, %v2154
        %v2171 = vpack.c.b16 %v2155, %v2155
        %v2172 = vpack.c.b16 %v2156, %v2156
        %v2173 = vpack.c.b16 %v2157, %v2157
        %v2174 = vpack.c.b16 %v2158, %v2158
        %v2175 = vpack.c.b16 %v2159, %v2159
        %v2176 = vpack.c.b16 %v2160, %v2160
        %v2177 = vpack.c.b16 %v2161, %v2161
        %v2178 = vpack.c.b16 %v2162, %v2162
        %vm2195 = vcmask 257024
        %2196 = vst.msk [vmem:[#allocation2] sm:$0xf] %vm2195, %v2163
        %2197 = vst.msk [vmem:[#allocation2 + $0x4] sm:$0xf] %vm2195, %v2164
        %2198 = vst.msk [vmem:[#allocation2 + $0x8] sm:$0xf] %vm2195, %v2165
        %2199 = vst.msk [vmem:[#allocation2 + $0xc] sm:$0xf] %vm2195, %v2166
        %2200 = vst.msk [vmem:[#allocation2 + $0x10] sm:$0xf] %vm2195, %v2167
        %2201 = vst.msk [vmem:[#allocation2 + $0x14] sm:$0xf] %vm2195, %v2168
        %2202 = vst.msk [vmem:[#allocation2 + $0x18] sm:$0xf] %vm2195, %v2169
        %2203 = vst.msk [vmem:[#allocation2 + $0x1c] sm:$0xf] %vm2195, %v2170
        %2204 = vst.msk [vmem:[#allocation2 + $0x20] sm:$0xf] %vm2195, %v2171
        %2205 = vst.msk [vmem:[#allocation2 + $0x24] sm:$0xf] %vm2195, %v2172
        %2206 = vst.msk [vmem:[#allocation2 + $0x28] sm:$0xf] %vm2195, %v2173
        %2207 = vst.msk [vmem:[#allocation2 + $0x2c] sm:$0xf] %vm2195, %v2174
        %2208 = vst.msk [vmem:[#allocation2 + $0x30] sm:$0xf] %vm2195, %v2175
        %2209 = vst.msk [vmem:[#allocation2 + $0x34] sm:$0xf] %vm2195, %v2176
        %2210 = vst.msk [vmem:[#allocation2 + $0x38] sm:$0xf] %vm2195, %v2177
        %2211 = vst.msk [vmem:[#allocation2 + $0x3c] sm:$0xf] %vm2195, %v2178
        %2212 = vrot.lane.b32.xlu0 %v1431, 48
        %v2213 = vpop.permute.xlu0 %2212
        %2214 = vrot.lane.b32.xlu0 %v1432, 48
        %v2215 = vpop.permute.xlu0 %2214
        %2216 = vrot.lane.b32.xlu0 %v1433, 48
        %v2217 = vpop.permute.xlu0 %2216
        %2218 = vrot.lane.b32.xlu0 %v1434, 48
        %v2219 = vpop.permute.xlu0 %2218
        %2220 = vrot.lane.b32.xlu0 %v1435, 48
        %v2221 = vpop.permute.xlu0 %2220
        %2222 = vrot.lane.b32.xlu0 %v1436, 48
        %v2223 = vpop.permute.xlu0 %2222
        %2224 = vrot.lane.b32.xlu0 %v1437, 48
        %v2225 = vpop.permute.xlu0 %2224
        %2226 = vrot.lane.b32.xlu0 %v1438, 48
        %v2227 = vpop.permute.xlu0 %2226
        %2228 = vrot.lane.b32.xlu0 %v1519, 48
        %v2229 = vpop.permute.xlu0 %2228
        %2230 = vrot.lane.b32.xlu0 %v1520, 48
        %v2231 = vpop.permute.xlu0 %2230
        %2232 = vrot.lane.b32.xlu0 %v1521, 48
        %v2233 = vpop.permute.xlu0 %2232
        %2234 = vrot.lane.b32.xlu0 %v1522, 48
        %v2235 = vpop.permute.xlu0 %2234
        %2236 = vrot.lane.b32.xlu0 %v1523, 48
        %v2237 = vpop.permute.xlu0 %2236
        %2238 = vrot.lane.b32.xlu0 %v1524, 48
        %v2239 = vpop.permute.xlu0 %2238
        %2240 = vrot.lane.b32.xlu0 %v1525, 48
        %v2241 = vpop.permute.xlu0 %2240
        %2242 = vrot.lane.b32.xlu0 %v1526, 48
        %v2243 = vpop.permute.xlu0 %2242
        %v2245 = vsel %vm1575, %v2213, 0
        %v2248 = vsel %vm1575, %v2215, 0
        %v2251 = vsel %vm1575, %v2217, 0
        %v2254 = vsel %vm1575, %v2219, 0
        %v2257 = vsel %vm1575, %v2221, 0
        %v2260 = vsel %vm1575, %v2223, 0
        %v2263 = vsel %vm1575, %v2225, 0
        %v2266 = vsel %vm1575, %v2227, 0
        %v2269 = vsel %vm1575, %v2229, 0
        %v2272 = vsel %vm1575, %v2231, 0
        %v2275 = vsel %vm1575, %v2233, 0
        %v2278 = vsel %vm1575, %v2235, 0
        %v2281 = vsel %vm1575, %v2237, 0
        %v2284 = vsel %vm1575, %v2239, 0
        %v2287 = vsel %vm1575, %v2241, 0
        %v2290 = vsel %vm1575, %v2243, 0
        %2292 = vmatprep.subr.bf16.mxu0 0
        %2293 = vmatpush1.bf16.xpose.msra.mxu0 %v2290
        %2294 = vmatprep.subr.bf16.mxu0 0
        %2295 = vmatpush1.bf16.xpose.msra.mxu0 %v2287
        %2296 = vmatprep.subr.bf16.mxu0 0
        %2297 = vmatpush1.bf16.xpose.msra.mxu0 %v2284
        %2298 = vmatprep.subr.bf16.mxu0 0
        %2299 = vmatpush1.bf16.xpose.msra.mxu0 %v2281
        %2300 = vmatprep.subr.bf16.mxu0 0
        %2301 = vmatpush1.bf16.xpose.msra.mxu0 %v2278
        %2302 = vmatprep.subr.bf16.mxu0 0
        %2303 = vmatpush1.bf16.xpose.msra.mxu0 %v2275
        %2304 = vmatprep.subr.bf16.mxu0 0
        %2305 = vmatpush1.bf16.xpose.msra.mxu0 %v2272
        %2306 = vmatprep.subr.bf16.mxu0 0
        %2307 = vmatpush1.bf16.xpose.msra.mxu0 %v2269
        %2308 = vmatprep.subr.bf16.mxu0 0
        %2309 = vmatpush2.bf16.xpose.msra.mxu0 0
        %2310 = vmatprep.subr.bf16.mxu0 0
        %2311 = vmatpush2.bf16.xpose.msra.mxu0 0
        %2312 = vmatprep.subr.bf16.mxu0 0
        %2313 = vmatpush2.bf16.xpose.msra.mxu0 0
        %2314 = vmatprep.subr.bf16.mxu0 0
        %2315 = vmatpush2.bf16.xpose.msra.mxu0 0
        %2316 = vmatprep.subr.bf16.mxu0 0
        %2317 = vmatpush2.bf16.xpose.msra.mxu0 0
        %2318 = vmatprep.subr.bf16.mxu0 0
        %2319 = vmatpush2.bf16.xpose.msra.mxu0 0
        %2320 = vmatprep.subr.bf16.mxu0 0
        %2321 = vmatpush2.bf16.xpose.msra.mxu0 0
        %2322 = vmatprep.subr.bf16.mxu0 0
        %2323 = vmatpush2.bf16.xpose.msra.mxu0 0
        %2324 = vmatprep.mubr.bf16.mxu0 0
        %2325 = vmatmul.mubr.bf16.gmra.mxu0 %v2245
        %v2326 = vpop.f32.mrf.mxu0
        %v2327 = vadd.f32 0.0, %v2326
        %v2328 = vpop.f32.mrf.mxu0
        %v2329 = vpop.f32.mrf.mxu0
        %v2330 = vadd.f32 0.0, %v2329
        %v2331 = vpop.f32.mrf.mxu0
        %2332 = vmatprep.mubr.bf16.mxu0 0
        %2333 = vmatmul.mubr.bf16.gmra.mxu0 %v2248
        %v2334 = vpop.f32.mrf.mxu0
        %v2335 = vadd.f32 0.0, %v2334
        %v2336 = vpop.f32.mrf.mxu0
        %v2337 = vpop.f32.mrf.mxu0
        %v2338 = vadd.f32 0.0, %v2337
        %v2339 = vpop.f32.mrf.mxu0
        %2340 = vmatprep.mubr.bf16.mxu0 0
        %2341 = vmatmul.mubr.bf16.gmra.mxu0 %v2251
        %v2342 = vpop.f32.mrf.mxu0
        %v2343 = vadd.f32 0.0, %v2342
        %v2344 = vpop.f32.mrf.mxu0
        %v2345 = vpop.f32.mrf.mxu0
        %v2346 = vadd.f32 0.0, %v2345
        %v2347 = vpop.f32.mrf.mxu0
        %2348 = vmatprep.mubr.bf16.mxu0 0
        %2349 = vmatmul.mubr.bf16.gmra.mxu0 %v2254
        %v2350 = vpop.f32.mrf.mxu0
        %v2351 = vadd.f32 0.0, %v2350
        %v2352 = vpop.f32.mrf.mxu0
        %v2353 = vpop.f32.mrf.mxu0
        %v2354 = vadd.f32 0.0, %v2353
        %v2355 = vpop.f32.mrf.mxu0
        %2356 = vmatprep.mubr.bf16.mxu0 0
        %2357 = vmatmul.mubr.bf16.gmra.mxu0 %v2257
        %v2358 = vpop.f32.mrf.mxu0
        %v2359 = vadd.f32 0.0, %v2358
        %v2360 = vpop.f32.mrf.mxu0
        %v2361 = vpop.f32.mrf.mxu0
        %v2362 = vadd.f32 0.0, %v2361
        %v2363 = vpop.f32.mrf.mxu0
        %2364 = vmatprep.mubr.bf16.mxu0 0
        %2365 = vmatmul.mubr.bf16.gmra.mxu0 %v2260
        %v2366 = vpop.f32.mrf.mxu0
        %v2367 = vadd.f32 0.0, %v2366
        %v2368 = vpop.f32.mrf.mxu0
        %v2369 = vpop.f32.mrf.mxu0
        %v2370 = vadd.f32 0.0, %v2369
        %v2371 = vpop.f32.mrf.mxu0
        %2372 = vmatprep.mubr.bf16.mxu0 0
        %2373 = vmatmul.mubr.bf16.gmra.mxu0 %v2263
        %v2374 = vpop.f32.mrf.mxu0
        %v2375 = vadd.f32 0.0, %v2374
        %v2376 = vpop.f32.mrf.mxu0
        %v2377 = vpop.f32.mrf.mxu0
        %v2378 = vadd.f32 0.0, %v2377
        %v2379 = vpop.f32.mrf.mxu0
        %2380 = vmatprep.mubr.bf16.mxu0 0
        %2381 = vmatmul.mubr.bf16.gmra.mxu0 %v2266
        %v2382 = vpop.f32.mrf.mxu0
        %v2383 = vadd.f32 0.0, %v2382
        %v2384 = vpop.f32.mrf.mxu0
        %v2385 = vpop.f32.mrf.mxu0
        %v2386 = vadd.f32 0.0, %v2385
        %v2387 = vpop.f32.mrf.mxu0
        %2388 = vdwg.mxu0
        %2389 = vrot.lane.b32.xlu0 %v1431, 112
        %v2390 = vpop.permute.xlu0 %2389
        %2391 = vrot.lane.b32.xlu0 %v1432, 112
        %v2392 = vpop.permute.xlu0 %2391
        %2393 = vrot.lane.b32.xlu0 %v1433, 112
        %v2394 = vpop.permute.xlu0 %2393
        %2395 = vrot.lane.b32.xlu0 %v1434, 112
        %v2396 = vpop.permute.xlu0 %2395
        %2397 = vrot.lane.b32.xlu0 %v1435, 112
        %v2398 = vpop.permute.xlu0 %2397
        %2399 = vrot.lane.b32.xlu0 %v1436, 112
        %v2400 = vpop.permute.xlu0 %2399
        %2401 = vrot.lane.b32.xlu0 %v1437, 112
        %v2402 = vpop.permute.xlu0 %2401
        %2403 = vrot.lane.b32.xlu0 %v1438, 112
        %v2404 = vpop.permute.xlu0 %2403
        %2405 = vrot.lane.b32.xlu0 %v1519, 112
        %v2406 = vpop.permute.xlu0 %2405
        %2407 = vrot.lane.b32.xlu0 %v1520, 112
        %v2408 = vpop.permute.xlu0 %2407
        %2409 = vrot.lane.b32.xlu0 %v1521, 112
        %v2410 = vpop.permute.xlu0 %2409
        %2411 = vrot.lane.b32.xlu0 %v1522, 112
        %v2412 = vpop.permute.xlu0 %2411
        %2413 = vrot.lane.b32.xlu0 %v1523, 112
        %v2414 = vpop.permute.xlu0 %2413
        %2415 = vrot.lane.b32.xlu0 %v1524, 112
        %v2416 = vpop.permute.xlu0 %2415
        %2417 = vrot.lane.b32.xlu0 %v1525, 112
        %v2418 = vpop.permute.xlu0 %2417
        %2419 = vrot.lane.b32.xlu0 %v1526, 112
        %v2420 = vpop.permute.xlu0 %2419
        %v2422 = vsel %vm1575, %v2390, 0
        %v2425 = vsel %vm1575, %v2392, 0
        %v2428 = vsel %vm1575, %v2394, 0
        %v2431 = vsel %vm1575, %v2396, 0
        %v2434 = vsel %vm1575, %v2398, 0
        %v2437 = vsel %vm1575, %v2400, 0
        %v2440 = vsel %vm1575, %v2402, 0
        %v2443 = vsel %vm1575, %v2404, 0
        %v2446 = vsel %vm1575, %v2406, 0
        %v2449 = vsel %vm1575, %v2408, 0
        %v2452 = vsel %vm1575, %v2410, 0
        %v2455 = vsel %vm1575, %v2412, 0
        %v2458 = vsel %vm1575, %v2414, 0
        %v2461 = vsel %vm1575, %v2416, 0
        %v2464 = vsel %vm1575, %v2418, 0
        %v2467 = vsel %vm1575, %v2420, 0
        %2469 = vmatprep.subr.bf16.mxu0 0
        %2470 = vmatpush1.bf16.xpose.msra.mxu0 %v2467
        %2471 = vmatprep.subr.bf16.mxu0 0
        %2472 = vmatpush1.bf16.xpose.msra.mxu0 %v2464
        %2473 = vmatprep.subr.bf16.mxu0 0
        %2474 = vmatpush1.bf16.xpose.msra.mxu0 %v2461
        %2475 = vmatprep.subr.bf16.mxu0 0
        %2476 = vmatpush1.bf16.xpose.msra.mxu0 %v2458
        %2477 = vmatprep.subr.bf16.mxu0 0
        %2478 = vmatpush1.bf16.xpose.msra.mxu0 %v2455
        %2479 = vmatprep.subr.bf16.mxu0 0
        %2480 = vmatpush1.bf16.xpose.msra.mxu0 %v2452
        %2481 = vmatprep.subr.bf16.mxu0 0
        %2482 = vmatpush1.bf16.xpose.msra.mxu0 %v2449
        %2483 = vmatprep.subr.bf16.mxu0 0
        %2484 = vmatpush1.bf16.xpose.msra.mxu0 %v2446
        %2485 = vmatprep.subr.bf16.mxu0 0
        %2486 = vmatpush2.bf16.xpose.msra.mxu0 0
        %2487 = vmatprep.subr.bf16.mxu0 0
        %2488 = vmatpush2.bf16.xpose.msra.mxu0 0
        %2489 = vmatprep.subr.bf16.mxu0 0
        %2490 = vmatpush2.bf16.xpose.msra.mxu0 0
        %2491 = vmatprep.subr.bf16.mxu0 0
        %2492 = vmatpush2.bf16.xpose.msra.mxu0 0
        %2493 = vmatprep.subr.bf16.mxu0 0
        %2494 = vmatpush2.bf16.xpose.msra.mxu0 0
        %2495 = vmatprep.subr.bf16.mxu0 0
        %2496 = vmatpush2.bf16.xpose.msra.mxu0 0
        %2497 = vmatprep.subr.bf16.mxu0 0
        %2498 = vmatpush2.bf16.xpose.msra.mxu0 0
        %2499 = vmatprep.subr.bf16.mxu0 0
        %2500 = vmatpush2.bf16.xpose.msra.mxu0 0
        %2501 = vmatprep.mubr.bf16.mxu0 0
        %2502 = vmatmul.mubr.bf16.gmra.mxu0 %v2422
        %v2503 = vpop.f32.mrf.mxu0
        %v2504 = vadd.f32 %v2327, %v2503
        %v2505 = vpop.f32.mrf.mxu0
        %v2506 = vpop.f32.mrf.mxu0
        %v2507 = vadd.f32 %v2330, %v2506
        %v2508 = vpop.f32.mrf.mxu0
        %2509 = vmatprep.mubr.bf16.mxu0 0
        %2510 = vmatmul.mubr.bf16.gmra.mxu0 %v2425
        %v2511 = vpop.f32.mrf.mxu0
        %v2512 = vadd.f32 %v2335, %v2511
        %v2513 = vpop.f32.mrf.mxu0
        %v2514 = vpop.f32.mrf.mxu0
        %v2515 = vadd.f32 %v2338, %v2514
        %v2516 = vpop.f32.mrf.mxu0
        %2517 = vmatprep.mubr.bf16.mxu0 0
        %2518 = vmatmul.mubr.bf16.gmra.mxu0 %v2428
        %v2519 = vpop.f32.mrf.mxu0
        %v2520 = vadd.f32 %v2343, %v2519
        %v2521 = vpop.f32.mrf.mxu0
        %v2522 = vpop.f32.mrf.mxu0
        %v2523 = vadd.f32 %v2346, %v2522
        %v2524 = vpop.f32.mrf.mxu0
        %2525 = vmatprep.mubr.bf16.mxu0 0
        %2526 = vmatmul.mubr.bf16.gmra.mxu0 %v2431
        %v2527 = vpop.f32.mrf.mxu0
        %v2528 = vadd.f32 %v2351, %v2527
        %v2529 = vpop.f32.mrf.mxu0
        %v2530 = vpop.f32.mrf.mxu0
        %v2531 = vadd.f32 %v2354, %v2530
        %v2532 = vpop.f32.mrf.mxu0
        %2533 = vmatprep.mubr.bf16.mxu0 0
        %2534 = vmatmul.mubr.bf16.gmra.mxu0 %v2434
        %v2535 = vpop.f32.mrf.mxu0
        %v2536 = vadd.f32 %v2359, %v2535
        %v2537 = vpop.f32.mrf.mxu0
        %v2538 = vpop.f32.mrf.mxu0
        %v2539 = vadd.f32 %v2362, %v2538
        %v2540 = vpop.f32.mrf.mxu0
        %2541 = vmatprep.mubr.bf16.mxu0 0
        %2542 = vmatmul.mubr.bf16.gmra.mxu0 %v2437
        %v2543 = vpop.f32.mrf.mxu0
        %v2544 = vadd.f32 %v2367, %v2543
        %v2545 = vpop.f32.mrf.mxu0
        %v2546 = vpop.f32.mrf.mxu0
        %v2547 = vadd.f32 %v2370, %v2546
        %v2548 = vpop.f32.mrf.mxu0
        %2549 = vmatprep.mubr.bf16.mxu0 0
        %2550 = vmatmul.mubr.bf16.gmra.mxu0 %v2440
        %v2551 = vpop.f32.mrf.mxu0
        %v2552 = vadd.f32 %v2375, %v2551
        %v2553 = vpop.f32.mrf.mxu0
        %v2554 = vpop.f32.mrf.mxu0
        %v2555 = vadd.f32 %v2378, %v2554
        %v2556 = vpop.f32.mrf.mxu0
        %2557 = vmatprep.mubr.bf16.mxu0 0
        %2558 = vmatmul.mubr.bf16.gmra.mxu0 %v2443
        %v2559 = vpop.f32.mrf.mxu0
        %v2560 = vadd.f32 %v2383, %v2559
        %v2561 = vpop.f32.mrf.mxu0
        %v2562 = vpop.f32.mrf.mxu0
        %v2563 = vadd.f32 %v2386, %v2562
        %v2564 = vpop.f32.mrf.mxu0
        %2565 = vdwg.mxu0
        %v2566 = vmul.f32 %v2504, 0.17677669
        %v2567 = vmul.f32 %v2507, 0.17677669
        %v2568 = vmul.f32 %v2512, 0.17677669
        %v2569 = vmul.f32 %v2515, 0.17677669
        %v2570 = vmul.f32 %v2520, 0.17677669
        %v2571 = vmul.f32 %v2523, 0.17677669
        %v2572 = vmul.f32 %v2528, 0.17677669
        %v2573 = vmul.f32 %v2531, 0.17677669
        %v2574 = vmul.f32 %v2536, 0.17677669
        %v2575 = vmul.f32 %v2539, 0.17677669
        %v2576 = vmul.f32 %v2544, 0.17677669
        %v2577 = vmul.f32 %v2547, 0.17677669
        %v2578 = vmul.f32 %v2552, 0.17677669
        %v2579 = vmul.f32 %v2555, 0.17677669
        %v2580 = vmul.f32 %v2560, 0.17677669
        %v2581 = vmul.f32 %v2563, 0.17677669
        %2582 = vmax.xlane.f32.xlu0 %v2566
        %v2583 = vpop.xlane.xlu0 %2582
        %2584 = vmax.xlane.f32.xlu0 %v2567
        %v2585 = vpop.xlane.xlu0 %2584
        %2586 = vmax.xlane.f32.xlu0 %v2568
        %v2587 = vpop.xlane.xlu0 %2586
        %2588 = vmax.xlane.f32.xlu0 %v2569
        %v2589 = vpop.xlane.xlu0 %2588
        %2590 = vmax.xlane.f32.xlu0 %v2570
        %v2591 = vpop.xlane.xlu0 %2590
        %2592 = vmax.xlane.f32.xlu0 %v2571
        %v2593 = vpop.xlane.xlu0 %2592
        %2594 = vmax.xlane.f32.xlu0 %v2572
        %v2595 = vpop.xlane.xlu0 %2594
        %2596 = vmax.xlane.f32.xlu0 %v2573
        %v2597 = vpop.xlane.xlu0 %2596
        %2598 = vmax.xlane.f32.xlu0 %v2574
        %v2599 = vpop.xlane.xlu0 %2598
        %2600 = vmax.xlane.f32.xlu0 %v2575
        %v2601 = vpop.xlane.xlu0 %2600
        %2602 = vmax.xlane.f32.xlu0 %v2576
        %v2603 = vpop.xlane.xlu0 %2602
        %2604 = vmax.xlane.f32.xlu0 %v2577
        %v2605 = vpop.xlane.xlu0 %2604
        %2606 = vmax.xlane.f32.xlu0 %v2578
        %v2607 = vpop.xlane.xlu0 %2606
        %2608 = vmax.xlane.f32.xlu0 %v2579
        %v2609 = vpop.xlane.xlu0 %2608
        %2610 = vmax.xlane.f32.xlu0 %v2580
        %v2611 = vpop.xlane.xlu0 %2610
        %2612 = vmax.xlane.f32.xlu0 %v2581
        %v2613 = vpop.xlane.xlu0 %2612
        %v2614 = vsub.f32 %v2566, %v2583
        %v2615 = vsub.f32 %v2567, %v2585
        %v2616 = vsub.f32 %v2568, %v2587
        %v2617 = vsub.f32 %v2569, %v2589
        %v2618 = vsub.f32 %v2570, %v2591
        %v2619 = vsub.f32 %v2571, %v2593
        %v2620 = vsub.f32 %v2572, %v2595
        %v2621 = vsub.f32 %v2573, %v2597
        %v2622 = vsub.f32 %v2574, %v2599
        %v2623 = vsub.f32 %v2575, %v2601
        %v2624 = vsub.f32 %v2576, %v2603
        %v2625 = vsub.f32 %v2577, %v2605
        %v2626 = vsub.f32 %v2578, %v2607
        %v2627 = vsub.f32 %v2579, %v2609
        %v2628 = vsub.f32 %v2580, %v2611
        %v2629 = vsub.f32 %v2581, %v2613
        %v2630 = vmul.f32 %v2614, 1.442695
        %v2631 = vpow.pop %v2630
        %v2632 = vmul.f32 %v2615, 1.442695
        %v2633 = vpow.pop %v2632
        %v2634 = vmul.f32 %v2616, 1.442695
        %v2635 = vpow.pop %v2634
        %v2636 = vmul.f32 %v2617, 1.442695
        %v2637 = vpow.pop %v2636
        %v2638 = vmul.f32 %v2618, 1.442695
        %v2639 = vpow.pop %v2638
        %v2640 = vmul.f32 %v2619, 1.442695
        %v2641 = vpow.pop %v2640
        %v2642 = vmul.f32 %v2620, 1.442695
        %v2643 = vpow.pop %v2642
        %v2644 = vmul.f32 %v2621, 1.442695
        %v2645 = vpow.pop %v2644
        %v2646 = vmul.f32 %v2622, 1.442695
        %v2647 = vpow.pop %v2646
        %v2648 = vmul.f32 %v2623, 1.442695
        %v2649 = vpow.pop %v2648
        %v2650 = vmul.f32 %v2624, 1.442695
        %v2651 = vpow.pop %v2650
        %v2652 = vmul.f32 %v2625, 1.442695
        %v2653 = vpow.pop %v2652
        %v2654 = vmul.f32 %v2626, 1.442695
        %v2655 = vpow.pop %v2654
        %v2656 = vmul.f32 %v2627, 1.442695
        %v2657 = vpow.pop %v2656
        %v2658 = vmul.f32 %v2628, 1.442695
        %v2659 = vpow.pop %v2658
        %v2660 = vmul.f32 %v2629, 1.442695
        %v2661 = vpow.pop %v2660
        %2662 = vadd.xlane.f32.xlu0 %v2631
        %v2663 = vpop.xlane.xlu0 %2662
        %2664 = vadd.xlane.f32.xlu0 %v2633
        %v2665 = vpop.xlane.xlu0 %2664
        %2666 = vadd.xlane.f32.xlu0 %v2635
        %v2667 = vpop.xlane.xlu0 %2666
        %2668 = vadd.xlane.f32.xlu0 %v2637
        %v2669 = vpop.xlane.xlu0 %2668
        %2670 = vadd.xlane.f32.xlu0 %v2639
        %v2671 = vpop.xlane.xlu0 %2670
        %2672 = vadd.xlane.f32.xlu0 %v2641
        %v2673 = vpop.xlane.xlu0 %2672
        %2674 = vadd.xlane.f32.xlu0 %v2643
        %v2675 = vpop.xlane.xlu0 %2674
        %2676 = vadd.xlane.f32.xlu0 %v2645
        %v2677 = vpop.xlane.xlu0 %2676
        %2678 = vadd.xlane.f32.xlu0 %v2647
        %v2679 = vpop.xlane.xlu0 %2678
        %2680 = vadd.xlane.f32.xlu0 %v2649
        %v2681 = vpop.xlane.xlu0 %2680
        %2682 = vadd.xlane.f32.xlu0 %v2651
        %v2683 = vpop.xlane.xlu0 %2682
        %2684 = vadd.xlane.f32.xlu0 %v2653
        %v2685 = vpop.xlane.xlu0 %2684
        %2686 = vadd.xlane.f32.xlu0 %v2655
        %v2687 = vpop.xlane.xlu0 %2686
        %2688 = vadd.xlane.f32.xlu0 %v2657
        %v2689 = vpop.xlane.xlu0 %2688
        %2690 = vadd.xlane.f32.xlu0 %v2659
        %v2691 = vpop.xlane.xlu0 %2690
        %2692 = vadd.xlane.f32.xlu0 %v2661
        %v2693 = vpop.xlane.xlu0 %2692
        %v2694 = vrcp.pop %v2663
        %v2695 = vrcp.pop %v2665
        %v2696 = vrcp.pop %v2667
        %v2697 = vrcp.pop %v2669
        %v2698 = vrcp.pop %v2671
        %v2699 = vrcp.pop %v2673
        %v2700 = vrcp.pop %v2675
        %v2701 = vrcp.pop %v2677
        %v2702 = vrcp.pop %v2679
        %v2703 = vrcp.pop %v2681
        %v2704 = vrcp.pop %v2683
        %v2705 = vrcp.pop %v2685
        %v2706 = vrcp.pop %v2687
        %v2707 = vrcp.pop %v2689
        %v2708 = vrcp.pop %v2691
        %v2709 = vrcp.pop %v2693
        %v2710 = vmul.f32 %v2631, %v2694
        %v2711 = vmul.f32 %v2633, %v2695
        %v2712 = vmul.f32 %v2635, %v2696
        %v2713 = vmul.f32 %v2637, %v2697
        %v2714 = vmul.f32 %v2639, %v2698
        %v2715 = vmul.f32 %v2641, %v2699
        %v2716 = vmul.f32 %v2643, %v2700
        %v2717 = vmul.f32 %v2645, %v2701
        %v2718 = vmul.f32 %v2647, %v2702
        %v2719 = vmul.f32 %v2649, %v2703
        %v2720 = vmul.f32 %v2651, %v2704
        %v2721 = vmul.f32 %v2653, %v2705
        %v2722 = vmul.f32 %v2655, %v2706
        %v2723 = vmul.f32 %v2657, %v2707
        %v2724 = vmul.f32 %v2659, %v2708
        %v2725 = vmul.f32 %v2661, %v2709
        %v2726 = vpack.c.bf16 %v2711, %v2710
        %v2727 = vpack.c.bf16 %v2713, %v2712
        %v2728 = vpack.c.bf16 %v2715, %v2714
        %v2729 = vpack.c.bf16 %v2717, %v2716
        %v2730 = vpack.c.bf16 %v2719, %v2718
        %v2731 = vpack.c.bf16 %v2721, %v2720
        %v2732 = vpack.c.bf16 %v2723, %v2722
        %v2733 = vpack.c.bf16 %v2725, %v2724
        %2742 = vrot.lane.b32.xlu0 %v1343, 96
        %v2743 = vpop.permute.xlu0 %2742
        %2744 = vrot.lane.b32.xlu0 %v1344, 96
        %v2745 = vpop.permute.xlu0 %2744
        %2746 = vrot.lane.b32.xlu0 %v1345, 96
        %v2747 = vpop.permute.xlu0 %2746
        %2748 = vrot.lane.b32.xlu0 %v1346, 96
        %v2749 = vpop.permute.xlu0 %2748
        %2750 = vrot.lane.b32.xlu0 %v1347, 96
        %v2751 = vpop.permute.xlu0 %2750
        %2752 = vrot.lane.b32.xlu0 %v1348, 96
        %v2753 = vpop.permute.xlu0 %2752
        %2754 = vrot.lane.b32.xlu0 %v1349, 96
        %v2755 = vpop.permute.xlu0 %2754
        %2756 = vrot.lane.b32.xlu0 %v1350, 96
        %v2757 = vpop.permute.xlu0 %2756
        %2766 = vmatprep.subr.bf16.mxu0 0
        %2767 = vmatpush1.bf16.msra.mxu0 %v2757
        %2768 = vmatprep.subr.bf16.mxu0 0
        %2769 = vmatpush1.bf16.msra.mxu0 %v2755
        %2770 = vmatprep.subr.bf16.mxu0 0
        %2771 = vmatpush1.bf16.msra.mxu0 %v2753
        %2772 = vmatprep.subr.bf16.mxu0 0
        %2773 = vmatpush1.bf16.msra.mxu0 %v2751
        %2774 = vmatprep.subr.bf16.mxu0 0
        %2775 = vmatpush1.bf16.msra.mxu0 %v2749
        %2776 = vmatprep.subr.bf16.mxu0 0
        %2777 = vmatpush1.bf16.msra.mxu0 %v2747
        %2778 = vmatprep.subr.bf16.mxu0 0
        %2779 = vmatpush1.bf16.msra.mxu0 %v2745
        %2780 = vmatprep.subr.bf16.mxu0 0
        %2781 = vmatpush1.bf16.msra.mxu0 %v2743
        %2782 = vmatprep.subr.bf16.mxu0 0
        %2783 = vmatpush2.bf16.msra.mxu0 0
        %2784 = vmatprep.subr.bf16.mxu0 0
        %2785 = vmatpush2.bf16.msra.mxu0 0
        %2786 = vmatprep.subr.bf16.mxu0 0
        %2787 = vmatpush2.bf16.msra.mxu0 0
        %2788 = vmatprep.subr.bf16.mxu0 0
        %2789 = vmatpush2.bf16.msra.mxu0 0
        %2790 = vmatprep.subr.bf16.mxu0 0
        %2791 = vmatpush2.bf16.msra.mxu0 0
        %2792 = vmatprep.subr.bf16.mxu0 0
        %2793 = vmatpush2.bf16.msra.mxu0 0
        %2794 = vmatprep.subr.bf16.mxu0 0
        %2795 = vmatpush2.bf16.msra.mxu0 0
        %2796 = vmatprep.subr.bf16.mxu0 0
        %2797 = vmatpush2.bf16.msra.mxu0 0
        %2798 = vmatprep.mubr.bf16.mxu0 0
        %2799 = vmatmul.mubr.bf16.gmra.mxu0 %v2726
        %v2800 = vpop.f32.mrf.mxu0
        %v2801 = vadd.f32 0.0, %v2800
        %v2802 = vpop.f32.mrf.mxu0
        %v2803 = vpop.f32.mrf.mxu0
        %v2804 = vadd.f32 0.0, %v2803
        %v2805 = vpop.f32.mrf.mxu0
        %2806 = vmatprep.mubr.bf16.mxu0 0
        %2807 = vmatmul.mubr.bf16.gmra.mxu0 %v2727
        %v2808 = vpop.f32.mrf.mxu0
        %v2809 = vadd.f32 0.0, %v2808
        %v2810 = vpop.f32.mrf.mxu0
        %v2811 = vpop.f32.mrf.mxu0
        %v2812 = vadd.f32 0.0, %v2811
        %v2813 = vpop.f32.mrf.mxu0
        %2814 = vmatprep.mubr.bf16.mxu0 0
        %2815 = vmatmul.mubr.bf16.gmra.mxu0 %v2728
        %v2816 = vpop.f32.mrf.mxu0
        %v2817 = vadd.f32 0.0, %v2816
        %v2818 = vpop.f32.mrf.mxu0
        %v2819 = vpop.f32.mrf.mxu0
        %v2820 = vadd.f32 0.0, %v2819
        %v2821 = vpop.f32.mrf.mxu0
        %2822 = vmatprep.mubr.bf16.mxu0 0
        %2823 = vmatmul.mubr.bf16.gmra.mxu0 %v2729
        %v2824 = vpop.f32.mrf.mxu0
        %v2825 = vadd.f32 0.0, %v2824
        %v2826 = vpop.f32.mrf.mxu0
        %v2827 = vpop.f32.mrf.mxu0
        %v2828 = vadd.f32 0.0, %v2827
        %v2829 = vpop.f32.mrf.mxu0
        %2830 = vmatprep.mubr.bf16.mxu0 0
        %2831 = vmatmul.mubr.bf16.gmra.mxu0 %v2730
        %v2832 = vpop.f32.mrf.mxu0
        %v2833 = vadd.f32 0.0, %v2832
        %v2834 = vpop.f32.mrf.mxu0
        %v2835 = vpop.f32.mrf.mxu0
        %v2836 = vadd.f32 0.0, %v2835
        %v2837 = vpop.f32.mrf.mxu0
        %2838 = vmatprep.mubr.bf16.mxu0 0
        %2839 = vmatmul.mubr.bf16.gmra.mxu0 %v2731
        %v2840 = vpop.f32.mrf.mxu0
        %v2841 = vadd.f32 0.0, %v2840
        %v2842 = vpop.f32.mrf.mxu0
        %v2843 = vpop.f32.mrf.mxu0
        %v2844 = vadd.f32 0.0, %v2843
        %v2845 = vpop.f32.mrf.mxu0
        %2846 = vmatprep.mubr.bf16.mxu0 0
        %2847 = vmatmul.mubr.bf16.gmra.mxu0 %v2732
        %v2848 = vpop.f32.mrf.mxu0
        %v2849 = vadd.f32 0.0, %v2848
        %v2850 = vpop.f32.mrf.mxu0
        %v2851 = vpop.f32.mrf.mxu0
        %v2852 = vadd.f32 0.0, %v2851
        %v2853 = vpop.f32.mrf.mxu0
        %2854 = vmatprep.mubr.bf16.mxu0 0
        %2855 = vmatmul.mubr.bf16.gmra.mxu0 %v2733
        %v2856 = vpop.f32.mrf.mxu0
        %v2857 = vadd.f32 0.0, %v2856
        %v2858 = vpop.f32.mrf.mxu0
        %v2859 = vpop.f32.mrf.mxu0
        %v2860 = vadd.f32 0.0, %v2859
        %v2861 = vpop.f32.mrf.mxu0
        %2862 = vdwg.mxu0
        %v2863 = vpack.c.bf16 %v2804, %v2801
        %v2864 = vpack.c.bf16 %v2812, %v2809
        %v2865 = vpack.c.bf16 %v2820, %v2817
        %v2866 = vpack.c.bf16 %v2828, %v2825
        %v2867 = vpack.c.bf16 %v2836, %v2833
        %v2868 = vpack.c.bf16 %v2844, %v2841
        %v2869 = vpack.c.bf16 %v2852, %v2849
        %v2870 = vpack.c.bf16 %v2860, %v2857
        %v2879 = vunpack.c.l.b16 %v2863
        %v2880 = vunpack.c.h.b16 %v2863
        %v2881 = vunpack.c.l.b16 %v2864
        %v2882 = vunpack.c.h.b16 %v2864
        %v2883 = vunpack.c.l.b16 %v2865
        %v2884 = vunpack.c.h.b16 %v2865
        %v2885 = vunpack.c.l.b16 %v2866
        %v2886 = vunpack.c.h.b16 %v2866
        %v2887 = vunpack.c.l.b16 %v2867
        %v2888 = vunpack.c.h.b16 %v2867
        %v2889 = vunpack.c.l.b16 %v2868
        %v2890 = vunpack.c.h.b16 %v2868
        %v2891 = vunpack.c.l.b16 %v2869
        %v2892 = vunpack.c.h.b16 %v2869
        %v2893 = vunpack.c.l.b16 %v2870
        %v2894 = vunpack.c.h.b16 %v2870
        %v2895 = vpack.c.b16 %v2879, %v2879
        %v2896 = vpack.c.b16 %v2880, %v2880
        %v2897 = vpack.c.b16 %v2881, %v2881
        %v2898 = vpack.c.b16 %v2882, %v2882
        %v2899 = vpack.c.b16 %v2883, %v2883
        %v2900 = vpack.c.b16 %v2884, %v2884
        %v2901 = vpack.c.b16 %v2885, %v2885
        %v2902 = vpack.c.b16 %v2886, %v2886
        %v2903 = vpack.c.b16 %v2887, %v2887
        %v2904 = vpack.c.b16 %v2888, %v2888
        %v2905 = vpack.c.b16 %v2889, %v2889
        %v2906 = vpack.c.b16 %v2890, %v2890
        %v2907 = vpack.c.b16 %v2891, %v2891
        %v2908 = vpack.c.b16 %v2892, %v2892
        %v2909 = vpack.c.b16 %v2893, %v2893
        %v2910 = vpack.c.b16 %v2894, %v2894
        %2911 = vrot.lane.b32.xlu0 %v2895, 32
        %v2912 = vpop.permute.xlu0 %2911
        %2913 = vrot.lane.b32.xlu0 %v2896, 32
        %v2914 = vpop.permute.xlu0 %2913
        %2915 = vrot.lane.b32.xlu0 %v2897, 32
        %v2916 = vpop.permute.xlu0 %2915
        %2917 = vrot.lane.b32.xlu0 %v2898, 32
        %v2918 = vpop.permute.xlu0 %2917
        %2919 = vrot.lane.b32.xlu0 %v2899, 32
        %v2920 = vpop.permute.xlu0 %2919
        %2921 = vrot.lane.b32.xlu0 %v2900, 32
        %v2922 = vpop.permute.xlu0 %2921
        %2923 = vrot.lane.b32.xlu0 %v2901, 32
        %v2924 = vpop.permute.xlu0 %2923
        %2925 = vrot.lane.b32.xlu0 %v2902, 32
        %v2926 = vpop.permute.xlu0 %2925
        %2927 = vrot.lane.b32.xlu0 %v2903, 32
        %v2928 = vpop.permute.xlu0 %2927
        %2929 = vrot.lane.b32.xlu0 %v2904, 32
        %v2930 = vpop.permute.xlu0 %2929
        %2931 = vrot.lane.b32.xlu0 %v2905, 32
        %v2932 = vpop.permute.xlu0 %2931
        %2933 = vrot.lane.b32.xlu0 %v2906, 32
        %v2934 = vpop.permute.xlu0 %2933
        %2935 = vrot.lane.b32.xlu0 %v2907, 32
        %v2936 = vpop.permute.xlu0 %2935
        %2937 = vrot.lane.b32.xlu0 %v2908, 32
        %v2938 = vpop.permute.xlu0 %2937
        %2939 = vrot.lane.b32.xlu0 %v2909, 32
        %v2940 = vpop.permute.xlu0 %2939
        %2941 = vrot.lane.b32.xlu0 %v2910, 32
        %v2942 = vpop.permute.xlu0 %2941
        %vm2959 = vcmask 519424
        %2960 = vst.msk [vmem:[#allocation2] sm:$0xf] %vm2959, %v2912
        %2961 = vst.msk [vmem:[#allocation2 + $0x4] sm:$0xf] %vm2959, %v2914
        %2962 = vst.msk [vmem:[#allocation2 + $0x8] sm:$0xf] %vm2959, %v2916
        %2963 = vst.msk [vmem:[#allocation2 + $0xc] sm:$0xf] %vm2959, %v2918
        %2964 = vst.msk [vmem:[#allocation2 + $0x10] sm:$0xf] %vm2959, %v2920
        %2965 = vst.msk [vmem:[#allocation2 + $0x14] sm:$0xf] %vm2959, %v2922
        %2966 = vst.msk [vmem:[#allocation2 + $0x18] sm:$0xf] %vm2959, %v2924
        %2967 = vst.msk [vmem:[#allocation2 + $0x1c] sm:$0xf] %vm2959, %v2926
        %2968 = vst.msk [vmem:[#allocation2 + $0x20] sm:$0xf] %vm2959, %v2928
        %2969 = vst.msk [vmem:[#allocation2 + $0x24] sm:$0xf] %vm2959, %v2930
        %2970 = vst.msk [vmem:[#allocation2 + $0x28] sm:$0xf] %vm2959, %v2932
        %2971 = vst.msk [vmem:[#allocation2 + $0x2c] sm:$0xf] %vm2959, %v2934
        %2972 = vst.msk [vmem:[#allocation2 + $0x30] sm:$0xf] %vm2959, %v2936
        %2973 = vst.msk [vmem:[#allocation2 + $0x34] sm:$0xf] %vm2959, %v2938
        %2974 = vst.msk [vmem:[#allocation2 + $0x38] sm:$0xf] %vm2959, %v2940
        %2975 = vst.msk [vmem:[#allocation2 + $0x3c] sm:$0xf] %vm2959, %v2942
        %2976 = vrot.lane.b32.xlu0 %v1431, 32
        %v2977 = vpop.permute.xlu0 %2976
        %2978 = vrot.lane.b32.xlu0 %v1432, 32
        %v2979 = vpop.permute.xlu0 %2978
        %2980 = vrot.lane.b32.xlu0 %v1433, 32
        %v2981 = vpop.permute.xlu0 %2980
        %2982 = vrot.lane.b32.xlu0 %v1434, 32
        %v2983 = vpop.permute.xlu0 %2982
        %2984 = vrot.lane.b32.xlu0 %v1435, 32
        %v2985 = vpop.permute.xlu0 %2984
        %2986 = vrot.lane.b32.xlu0 %v1436, 32
        %v2987 = vpop.permute.xlu0 %2986
        %2988 = vrot.lane.b32.xlu0 %v1437, 32
        %v2989 = vpop.permute.xlu0 %2988
        %2990 = vrot.lane.b32.xlu0 %v1438, 32
        %v2991 = vpop.permute.xlu0 %2990
        %2992 = vrot.lane.b32.xlu0 %v1519, 32
        %v2993 = vpop.permute.xlu0 %2992
        %2994 = vrot.lane.b32.xlu0 %v1520, 32
        %v2995 = vpop.permute.xlu0 %2994
        %2996 = vrot.lane.b32.xlu0 %v1521, 32
        %v2997 = vpop.permute.xlu0 %2996
        %2998 = vrot.lane.b32.xlu0 %v1522, 32
        %v2999 = vpop.permute.xlu0 %2998
        %3000 = vrot.lane.b32.xlu0 %v1523, 32
        %v3001 = vpop.permute.xlu0 %3000
        %3002 = vrot.lane.b32.xlu0 %v1524, 32
        %v3003 = vpop.permute.xlu0 %3002
        %3004 = vrot.lane.b32.xlu0 %v1525, 32
        %v3005 = vpop.permute.xlu0 %3004
        %3006 = vrot.lane.b32.xlu0 %v1526, 32
        %v3007 = vpop.permute.xlu0 %3006
        %v3009 = vsel %vm1575, %v2977, 0
        %v3012 = vsel %vm1575, %v2979, 0
        %v3015 = vsel %vm1575, %v2981, 0
        %v3018 = vsel %vm1575, %v2983, 0
        %v3021 = vsel %vm1575, %v2985, 0
        %v3024 = vsel %vm1575, %v2987, 0
        %v3027 = vsel %vm1575, %v2989, 0
        %v3030 = vsel %vm1575, %v2991, 0
        %v3033 = vsel %vm1575, %v2993, 0
        %v3036 = vsel %vm1575, %v2995, 0
        %v3039 = vsel %vm1575, %v2997, 0
        %v3042 = vsel %vm1575, %v2999, 0
        %v3045 = vsel %vm1575, %v3001, 0
        %v3048 = vsel %vm1575, %v3003, 0
        %v3051 = vsel %vm1575, %v3005, 0
        %v3054 = vsel %vm1575, %v3007, 0
        %3056 = vmatprep.subr.bf16.mxu0 0
        %3057 = vmatpush1.bf16.xpose.msra.mxu0 %v3054
        %3058 = vmatprep.subr.bf16.mxu0 0
        %3059 = vmatpush1.bf16.xpose.msra.mxu0 %v3051
        %3060 = vmatprep.subr.bf16.mxu0 0
        %3061 = vmatpush1.bf16.xpose.msra.mxu0 %v3048
        %3062 = vmatprep.subr.bf16.mxu0 0
        %3063 = vmatpush1.bf16.xpose.msra.mxu0 %v3045
        %3064 = vmatprep.subr.bf16.mxu0 0
        %3065 = vmatpush1.bf16.xpose.msra.mxu0 %v3042
        %3066 = vmatprep.subr.bf16.mxu0 0
        %3067 = vmatpush1.bf16.xpose.msra.mxu0 %v3039
        %3068 = vmatprep.subr.bf16.mxu0 0
        %3069 = vmatpush1.bf16.xpose.msra.mxu0 %v3036
        %3070 = vmatprep.subr.bf16.mxu0 0
        %3071 = vmatpush1.bf16.xpose.msra.mxu0 %v3033
        %3072 = vmatprep.subr.bf16.mxu0 0
        %3073 = vmatpush2.bf16.xpose.msra.mxu0 0
        %3074 = vmatprep.subr.bf16.mxu0 0
        %3075 = vmatpush2.bf16.xpose.msra.mxu0 0
        %3076 = vmatprep.subr.bf16.mxu0 0
        %3077 = vmatpush2.bf16.xpose.msra.mxu0 0
        %3078 = vmatprep.subr.bf16.mxu0 0
        %3079 = vmatpush2.bf16.xpose.msra.mxu0 0
        %3080 = vmatprep.subr.bf16.mxu0 0
        %3081 = vmatpush2.bf16.xpose.msra.mxu0 0
        %3082 = vmatprep.subr.bf16.mxu0 0
        %3083 = vmatpush2.bf16.xpose.msra.mxu0 0
        %3084 = vmatprep.subr.bf16.mxu0 0
        %3085 = vmatpush2.bf16.xpose.msra.mxu0 0
        %3086 = vmatprep.subr.bf16.mxu0 0
        %3087 = vmatpush2.bf16.xpose.msra.mxu0 0
        %3088 = vmatprep.mubr.bf16.mxu0 0
        %3089 = vmatmul.mubr.bf16.gmra.mxu0 %v3009
        %v3090 = vpop.f32.mrf.mxu0
        %v3091 = vadd.f32 0.0, %v3090
        %v3092 = vpop.f32.mrf.mxu0
        %v3093 = vpop.f32.mrf.mxu0
        %v3094 = vadd.f32 0.0, %v3093
        %v3095 = vpop.f32.mrf.mxu0
        %3096 = vmatprep.mubr.bf16.mxu0 0
        %3097 = vmatmul.mubr.bf16.gmra.mxu0 %v3012
        %v3098 = vpop.f32.mrf.mxu0
        %v3099 = vadd.f32 0.0, %v3098
        %v3100 = vpop.f32.mrf.mxu0
        %v3101 = vpop.f32.mrf.mxu0
        %v3102 = vadd.f32 0.0, %v3101
        %v3103 = vpop.f32.mrf.mxu0
        %3104 = vmatprep.mubr.bf16.mxu0 0
        %3105 = vmatmul.mubr.bf16.gmra.mxu0 %v3015
        %v3106 = vpop.f32.mrf.mxu0
        %v3107 = vadd.f32 0.0, %v3106
        %v3108 = vpop.f32.mrf.mxu0
        %v3109 = vpop.f32.mrf.mxu0
        %v3110 = vadd.f32 0.0, %v3109
        %v3111 = vpop.f32.mrf.mxu0
        %3112 = vmatprep.mubr.bf16.mxu0 0
        %3113 = vmatmul.mubr.bf16.gmra.mxu0 %v3018
        %v3114 = vpop.f32.mrf.mxu0
        %v3115 = vadd.f32 0.0, %v3114
        %v3116 = vpop.f32.mrf.mxu0
        %v3117 = vpop.f32.mrf.mxu0
        %v3118 = vadd.f32 0.0, %v3117
        %v3119 = vpop.f32.mrf.mxu0
        %3120 = vmatprep.mubr.bf16.mxu0 0
        %3121 = vmatmul.mubr.bf16.gmra.mxu0 %v3021
        %v3122 = vpop.f32.mrf.mxu0
        %v3123 = vadd.f32 0.0, %v3122
        %v3124 = vpop.f32.mrf.mxu0
        %v3125 = vpop.f32.mrf.mxu0
        %v3126 = vadd.f32 0.0, %v3125
        %v3127 = vpop.f32.mrf.mxu0
        %3128 = vmatprep.mubr.bf16.mxu0 0
        %3129 = vmatmul.mubr.bf16.gmra.mxu0 %v3024
        %v3130 = vpop.f32.mrf.mxu0
        %v3131 = vadd.f32 0.0, %v3130
        %v3132 = vpop.f32.mrf.mxu0
        %v3133 = vpop.f32.mrf.mxu0
        %v3134 = vadd.f32 0.0, %v3133
        %v3135 = vpop.f32.mrf.mxu0
        %3136 = vmatprep.mubr.bf16.mxu0 0
        %3137 = vmatmul.mubr.bf16.gmra.mxu0 %v3027
        %v3138 = vpop.f32.mrf.mxu0
        %v3139 = vadd.f32 0.0, %v3138
        %v3140 = vpop.f32.mrf.mxu0
        %v3141 = vpop.f32.mrf.mxu0
        %v3142 = vadd.f32 0.0, %v3141
        %v3143 = vpop.f32.mrf.mxu0
        %3144 = vmatprep.mubr.bf16.mxu0 0
        %3145 = vmatmul.mubr.bf16.gmra.mxu0 %v3030
        %v3146 = vpop.f32.mrf.mxu0
        %v3147 = vadd.f32 0.0, %v3146
        %v3148 = vpop.f32.mrf.mxu0
        %v3149 = vpop.f32.mrf.mxu0
        %v3150 = vadd.f32 0.0, %v3149
        %v3151 = vpop.f32.mrf.mxu0
        %3152 = vdwg.mxu0
        %3153 = vrot.lane.b32.xlu0 %v1431, 96
        %v3154 = vpop.permute.xlu0 %3153
        %3155 = vrot.lane.b32.xlu0 %v1432, 96
        %v3156 = vpop.permute.xlu0 %3155
        %3157 = vrot.lane.b32.xlu0 %v1433, 96
        %v3158 = vpop.permute.xlu0 %3157
        %3159 = vrot.lane.b32.xlu0 %v1434, 96
        %v3160 = vpop.permute.xlu0 %3159
        %3161 = vrot.lane.b32.xlu0 %v1435, 96
        %v3162 = vpop.permute.xlu0 %3161
        %3163 = vrot.lane.b32.xlu0 %v1436, 96
        %v3164 = vpop.permute.xlu0 %3163
        %3165 = vrot.lane.b32.xlu0 %v1437, 96
        %v3166 = vpop.permute.xlu0 %3165
        %3167 = vrot.lane.b32.xlu0 %v1438, 96
        %v3168 = vpop.permute.xlu0 %3167
        %3169 = vrot.lane.b32.xlu0 %v1519, 96
        %v3170 = vpop.permute.xlu0 %3169
        %3171 = vrot.lane.b32.xlu0 %v1520, 96
        %v3172 = vpop.permute.xlu0 %3171
        %3173 = vrot.lane.b32.xlu0 %v1521, 96
        %v3174 = vpop.permute.xlu0 %3173
        %3175 = vrot.lane.b32.xlu0 %v1522, 96
        %v3176 = vpop.permute.xlu0 %3175
        %3177 = vrot.lane.b32.xlu0 %v1523, 96
        %v3178 = vpop.permute.xlu0 %3177
        %3179 = vrot.lane.b32.xlu0 %v1524, 96
        %v3180 = vpop.permute.xlu0 %3179
        %3181 = vrot.lane.b32.xlu0 %v1525, 96
        %v3182 = vpop.permute.xlu0 %3181
        %3183 = vrot.lane.b32.xlu0 %v1526, 96
        %v3184 = vpop.permute.xlu0 %3183
        %v3186 = vsel %vm1575, %v3154, 0
        %v3189 = vsel %vm1575, %v3156, 0
        %v3192 = vsel %vm1575, %v3158, 0
        %v3195 = vsel %vm1575, %v3160, 0
        %v3198 = vsel %vm1575, %v3162, 0
        %v3201 = vsel %vm1575, %v3164, 0
        %v3204 = vsel %vm1575, %v3166, 0
        %v3207 = vsel %vm1575, %v3168, 0
        %v3210 = vsel %vm1575, %v3170, 0
        %v3213 = vsel %vm1575, %v3172, 0
        %v3216 = vsel %vm1575, %v3174, 0
        %v3219 = vsel %vm1575, %v3176, 0
        %v3222 = vsel %vm1575, %v3178, 0
        %v3225 = vsel %vm1575, %v3180, 0
        %v3228 = vsel %vm1575, %v3182, 0
        %v3231 = vsel %vm1575, %v3184, 0
        %3233 = vmatprep.subr.bf16.mxu0 0
        %3234 = vmatpush1.bf16.xpose.msra.mxu0 %v3231
        %3235 = vmatprep.subr.bf16.mxu0 0
        %3236 = vmatpush1.bf16.xpose.msra.mxu0 %v3228
        %3237 = vmatprep.subr.bf16.mxu0 0
        %3238 = vmatpush1.bf16.xpose.msra.mxu0 %v3225
        %3239 = vmatprep.subr.bf16.mxu0 0
        %3240 = vmatpush1.bf16.xpose.msra.mxu0 %v3222
        %3241 = vmatprep.subr.bf16.mxu0 0
        %3242 = vmatpush1.bf16.xpose.msra.mxu0 %v3219
        %3243 = vmatprep.subr.bf16.mxu0 0
        %3244 = vmatpush1.bf16.xpose.msra.mxu0 %v3216
        %3245 = vmatprep.subr.bf16.mxu0 0
        %3246 = vmatpush1.bf16.xpose.msra.mxu0 %v3213
        %3247 = vmatprep.subr.bf16.mxu0 0
        %3248 = vmatpush1.bf16.xpose.msra.mxu0 %v3210
        %3249 = vmatprep.subr.bf16.mxu0 0
        %3250 = vmatpush2.bf16.xpose.msra.mxu0 0
        %3251 = vmatprep.subr.bf16.mxu0 0
        %3252 = vmatpush2.bf16.xpose.msra.mxu0 0
        %3253 = vmatprep.subr.bf16.mxu0 0
        %3254 = vmatpush2.bf16.xpose.msra.mxu0 0
        %3255 = vmatprep.subr.bf16.mxu0 0
        %3256 = vmatpush2.bf16.xpose.msra.mxu0 0
        %3257 = vmatprep.subr.bf16.mxu0 0
        %3258 = vmatpush2.bf16.xpose.msra.mxu0 0
        %3259 = vmatprep.subr.bf16.mxu0 0
        %3260 = vmatpush2.bf16.xpose.msra.mxu0 0
        %3261 = vmatprep.subr.bf16.mxu0 0
        %3262 = vmatpush2.bf16.xpose.msra.mxu0 0
        %3263 = vmatprep.subr.bf16.mxu0 0
        %3264 = vmatpush2.bf16.xpose.msra.mxu0 0
        %3265 = vmatprep.mubr.bf16.mxu0 0
        %3266 = vmatmul.mubr.bf16.gmra.mxu0 %v3186
        %v3267 = vpop.f32.mrf.mxu0
        %v3268 = vadd.f32 %v3091, %v3267
        %v3269 = vpop.f32.mrf.mxu0
        %v3270 = vpop.f32.mrf.mxu0
        %v3271 = vadd.f32 %v3094, %v3270
        %v3272 = vpop.f32.mrf.mxu0
        %3273 = vmatprep.mubr.bf16.mxu0 0
        %3274 = vmatmul.mubr.bf16.gmra.mxu0 %v3189
        %v3275 = vpop.f32.mrf.mxu0
        %v3276 = vadd.f32 %v3099, %v3275
        %v3277 = vpop.f32.mrf.mxu0
        %v3278 = vpop.f32.mrf.mxu0
        %v3279 = vadd.f32 %v3102, %v3278
        %v3280 = vpop.f32.mrf.mxu0
        %3281 = vmatprep.mubr.bf16.mxu0 0
        %3282 = vmatmul.mubr.bf16.gmra.mxu0 %v3192
        %v3283 = vpop.f32.mrf.mxu0
        %v3284 = vadd.f32 %v3107, %v3283
        %v3285 = vpop.f32.mrf.mxu0
        %v3286 = vpop.f32.mrf.mxu0
        %v3287 = vadd.f32 %v3110, %v3286
        %v3288 = vpop.f32.mrf.mxu0
        %3289 = vmatprep.mubr.bf16.mxu0 0
        %3290 = vmatmul.mubr.bf16.gmra.mxu0 %v3195
        %v3291 = vpop.f32.mrf.mxu0
        %v3292 = vadd.f32 %v3115, %v3291
        %v3293 = vpop.f32.mrf.mxu0
        %v3294 = vpop.f32.mrf.mxu0
        %v3295 = vadd.f32 %v3118, %v3294
        %v3296 = vpop.f32.mrf.mxu0
        %3297 = vmatprep.mubr.bf16.mxu0 0
        %3298 = vmatmul.mubr.bf16.gmra.mxu0 %v3198
        %v3299 = vpop.f32.mrf.mxu0
        %v3300 = vadd.f32 %v3123, %v3299
        %v3301 = vpop.f32.mrf.mxu0
        %v3302 = vpop.f32.mrf.mxu0
        %v3303 = vadd.f32 %v3126, %v3302
        %v3304 = vpop.f32.mrf.mxu0
        %3305 = vmatprep.mubr.bf16.mxu0 0
        %3306 = vmatmul.mubr.bf16.gmra.mxu0 %v3201
        %v3307 = vpop.f32.mrf.mxu0
        %v3308 = vadd.f32 %v3131, %v3307
        %v3309 = vpop.f32.mrf.mxu0
        %v3310 = vpop.f32.mrf.mxu0
        %v3311 = vadd.f32 %v3134, %v3310
        %v3312 = vpop.f32.mrf.mxu0
        %3313 = vmatprep.mubr.bf16.mxu0 0
        %3314 = vmatmul.mubr.bf16.gmra.mxu0 %v3204
        %v3315 = vpop.f32.mrf.mxu0
        %v3316 = vadd.f32 %v3139, %v3315
        %v3317 = vpop.f32.mrf.mxu0
        %v3318 = vpop.f32.mrf.mxu0
        %v3319 = vadd.f32 %v3142, %v3318
        %v3320 = vpop.f32.mrf.mxu0
        %3321 = vmatprep.mubr.bf16.mxu0 0
        %3322 = vmatmul.mubr.bf16.gmra.mxu0 %v3207
        %v3323 = vpop.f32.mrf.mxu0
        %v3324 = vadd.f32 %v3147, %v3323
        %v3325 = vpop.f32.mrf.mxu0
        %v3326 = vpop.f32.mrf.mxu0
        %v3327 = vadd.f32 %v3150, %v3326
        %v3328 = vpop.f32.mrf.mxu0
        %3329 = vdwg.mxu0
        %v3330 = vmul.f32 %v3268, 0.17677669
        %v3331 = vmul.f32 %v3271, 0.17677669
        %v3332 = vmul.f32 %v3276, 0.17677669
        %v3333 = vmul.f32 %v3279, 0.17677669
        %v3334 = vmul.f32 %v3284, 0.17677669
        %v3335 = vmul.f32 %v3287, 0.17677669
        %v3336 = vmul.f32 %v3292, 0.17677669
        %v3337 = vmul.f32 %v3295, 0.17677669
        %v3338 = vmul.f32 %v3300, 0.17677669
        %v3339 = vmul.f32 %v3303, 0.17677669
        %v3340 = vmul.f32 %v3308, 0.17677669
        %v3341 = vmul.f32 %v3311, 0.17677669
        %v3342 = vmul.f32 %v3316, 0.17677669
        %v3343 = vmul.f32 %v3319, 0.17677669
        %v3344 = vmul.f32 %v3324, 0.17677669
        %v3345 = vmul.f32 %v3327, 0.17677669
        %3346 = vmax.xlane.f32.xlu0 %v3330
        %v3347 = vpop.xlane.xlu0 %3346
        %3348 = vmax.xlane.f32.xlu0 %v3331
        %v3349 = vpop.xlane.xlu0 %3348
        %3350 = vmax.xlane.f32.xlu0 %v3332
        %v3351 = vpop.xlane.xlu0 %3350
        %3352 = vmax.xlane.f32.xlu0 %v3333
        %v3353 = vpop.xlane.xlu0 %3352
        %3354 = vmax.xlane.f32.xlu0 %v3334
        %v3355 = vpop.xlane.xlu0 %3354
        %3356 = vmax.xlane.f32.xlu0 %v3335
        %v3357 = vpop.xlane.xlu0 %3356
        %3358 = vmax.xlane.f32.xlu0 %v3336
        %v3359 = vpop.xlane.xlu0 %3358
        %3360 = vmax.xlane.f32.xlu0 %v3337
        %v3361 = vpop.xlane.xlu0 %3360
        %3362 = vmax.xlane.f32.xlu0 %v3338
        %v3363 = vpop.xlane.xlu0 %3362
        %3364 = vmax.xlane.f32.xlu0 %v3339
        %v3365 = vpop.xlane.xlu0 %3364
        %3366 = vmax.xlane.f32.xlu0 %v3340
        %v3367 = vpop.xlane.xlu0 %3366
        %3368 = vmax.xlane.f32.xlu0 %v3341
        %v3369 = vpop.xlane.xlu0 %3368
        %3370 = vmax.xlane.f32.xlu0 %v3342
        %v3371 = vpop.xlane.xlu0 %3370
        %3372 = vmax.xlane.f32.xlu0 %v3343
        %v3373 = vpop.xlane.xlu0 %3372
        %3374 = vmax.xlane.f32.xlu0 %v3344
        %v3375 = vpop.xlane.xlu0 %3374
        %3376 = vmax.xlane.f32.xlu0 %v3345
        %v3377 = vpop.xlane.xlu0 %3376
        %v3378 = vsub.f32 %v3330, %v3347
        %v3379 = vsub.f32 %v3331, %v3349
        %v3380 = vsub.f32 %v3332, %v3351
        %v3381 = vsub.f32 %v3333, %v3353
        %v3382 = vsub.f32 %v3334, %v3355
        %v3383 = vsub.f32 %v3335, %v3357
        %v3384 = vsub.f32 %v3336, %v3359
        %v3385 = vsub.f32 %v3337, %v3361
        %v3386 = vsub.f32 %v3338, %v3363
        %v3387 = vsub.f32 %v3339, %v3365
        %v3388 = vsub.f32 %v3340, %v3367
        %v3389 = vsub.f32 %v3341, %v3369
        %v3390 = vsub.f32 %v3342, %v3371
        %v3391 = vsub.f32 %v3343, %v3373
        %v3392 = vsub.f32 %v3344, %v3375
        %v3393 = vsub.f32 %v3345, %v3377
        %v3394 = vmul.f32 %v3378, 1.442695
        %v3395 = vpow.pop %v3394
        %v3396 = vmul.f32 %v3379, 1.442695
        %v3397 = vpow.pop %v3396
        %v3398 = vmul.f32 %v3380, 1.442695
        %v3399 = vpow.pop %v3398
        %v3400 = vmul.f32 %v3381, 1.442695
        %v3401 = vpow.pop %v3400
        %v3402 = vmul.f32 %v3382, 1.442695
        %v3403 = vpow.pop %v3402
        %v3404 = vmul.f32 %v3383, 1.442695
        %v3405 = vpow.pop %v3404
        %v3406 = vmul.f32 %v3384, 1.442695
        %v3407 = vpow.pop %v3406
        %v3408 = vmul.f32 %v3385, 1.442695
        %v3409 = vpow.pop %v3408
        %v3410 = vmul.f32 %v3386, 1.442695
        %v3411 = vpow.pop %v3410
        %v3412 = vmul.f32 %v3387, 1.442695
        %v3413 = vpow.pop %v3412
        %v3414 = vmul.f32 %v3388, 1.442695
        %v3415 = vpow.pop %v3414
        %v3416 = vmul.f32 %v3389, 1.442695
        %v3417 = vpow.pop %v3416
        %v3418 = vmul.f32 %v3390, 1.442695
        %v3419 = vpow.pop %v3418
        %v3420 = vmul.f32 %v3391, 1.442695
        %v3421 = vpow.pop %v3420
        %v3422 = vmul.f32 %v3392, 1.442695
        %v3423 = vpow.pop %v3422
        %v3424 = vmul.f32 %v3393, 1.442695
        %v3425 = vpow.pop %v3424
        %3426 = vadd.xlane.f32.xlu0 %v3395
        %v3427 = vpop.xlane.xlu0 %3426
        %3428 = vadd.xlane.f32.xlu0 %v3397
        %v3429 = vpop.xlane.xlu0 %3428
        %3430 = vadd.xlane.f32.xlu0 %v3399
        %v3431 = vpop.xlane.xlu0 %3430
        %3432 = vadd.xlane.f32.xlu0 %v3401
        %v3433 = vpop.xlane.xlu0 %3432
        %3434 = vadd.xlane.f32.xlu0 %v3403
        %v3435 = vpop.xlane.xlu0 %3434
        %3436 = vadd.xlane.f32.xlu0 %v3405
        %v3437 = vpop.xlane.xlu0 %3436
        %3438 = vadd.xlane.f32.xlu0 %v3407
        %v3439 = vpop.xlane.xlu0 %3438
        %3440 = vadd.xlane.f32.xlu0 %v3409
        %v3441 = vpop.xlane.xlu0 %3440
        %3442 = vadd.xlane.f32.xlu0 %v3411
        %v3443 = vpop.xlane.xlu0 %3442
        %3444 = vadd.xlane.f32.xlu0 %v3413
        %v3445 = vpop.xlane.xlu0 %3444
        %3446 = vadd.xlane.f32.xlu0 %v3415
        %v3447 = vpop.xlane.xlu0 %3446
        %3448 = vadd.xlane.f32.xlu0 %v3417
        %v3449 = vpop.xlane.xlu0 %3448
        %3450 = vadd.xlane.f32.xlu0 %v3419
        %v3451 = vpop.xlane.xlu0 %3450
        %3452 = vadd.xlane.f32.xlu0 %v3421
        %v3453 = vpop.xlane.xlu0 %3452
        %3454 = vadd.xlane.f32.xlu0 %v3423
        %v3455 = vpop.xlane.xlu0 %3454
        %3456 = vadd.xlane.f32.xlu0 %v3425
        %v3457 = vpop.xlane.xlu0 %3456
        %v3458 = vrcp.pop %v3427
        %v3459 = vrcp.pop %v3429
        %v3460 = vrcp.pop %v3431
        %v3461 = vrcp.pop %v3433
        %v3462 = vrcp.pop %v3435
        %v3463 = vrcp.pop %v3437
        %v3464 = vrcp.pop %v3439
        %v3465 = vrcp.pop %v3441
        %v3466 = vrcp.pop %v3443
        %v3467 = vrcp.pop %v3445
        %v3468 = vrcp.pop %v3447
        %v3469 = vrcp.pop %v3449
        %v3470 = vrcp.pop %v3451
        %v3471 = vrcp.pop %v3453
        %v3472 = vrcp.pop %v3455
        %v3473 = vrcp.pop %v3457
        %v3474 = vmul.f32 %v3395, %v3458
        %v3475 = vmul.f32 %v3397, %v3459
        %v3476 = vmul.f32 %v3399, %v3460
        %v3477 = vmul.f32 %v3401, %v3461
        %v3478 = vmul.f32 %v3403, %v3462
        %v3479 = vmul.f32 %v3405, %v3463
        %v3480 = vmul.f32 %v3407, %v3464
        %v3481 = vmul.f32 %v3409, %v3465
        %v3482 = vmul.f32 %v3411, %v3466
        %v3483 = vmul.f32 %v3413, %v3467
        %v3484 = vmul.f32 %v3415, %v3468
        %v3485 = vmul.f32 %v3417, %v3469
        %v3486 = vmul.f32 %v3419, %v3470
        %v3487 = vmul.f32 %v3421, %v3471
        %v3488 = vmul.f32 %v3423, %v3472
        %v3489 = vmul.f32 %v3425, %v3473
        %v3490 = vpack.c.bf16 %v3475, %v3474
        %v3491 = vpack.c.bf16 %v3477, %v3476
        %v3492 = vpack.c.bf16 %v3479, %v3478
        %v3493 = vpack.c.bf16 %v3481, %v3480
        %v3494 = vpack.c.bf16 %v3483, %v3482
        %v3495 = vpack.c.bf16 %v3485, %v3484
        %v3496 = vpack.c.bf16 %v3487, %v3486
        %v3497 = vpack.c.bf16 %v3489, %v3488
        %3498 = vrot.lane.b32.xlu0 %v1343, 64
        %v3499 = vpop.permute.xlu0 %3498
        %3500 = vrot.lane.b32.xlu0 %v1344, 64
        %v3501 = vpop.permute.xlu0 %3500
        %3502 = vrot.lane.b32.xlu0 %v1345, 64
        %v3503 = vpop.permute.xlu0 %3502
        %3504 = vrot.lane.b32.xlu0 %v1346, 64
        %v3505 = vpop.permute.xlu0 %3504
        %3506 = vrot.lane.b32.xlu0 %v1347, 64
        %v3507 = vpop.permute.xlu0 %3506
        %3508 = vrot.lane.b32.xlu0 %v1348, 64
        %v3509 = vpop.permute.xlu0 %3508
        %3510 = vrot.lane.b32.xlu0 %v1349, 64
        %v3511 = vpop.permute.xlu0 %3510
        %3512 = vrot.lane.b32.xlu0 %v1350, 64
        %v3513 = vpop.permute.xlu0 %3512
        %3522 = vmatprep.subr.bf16.mxu0 0
        %3523 = vmatpush1.bf16.msra.mxu0 %v3513
        %3524 = vmatprep.subr.bf16.mxu0 0
        %3525 = vmatpush1.bf16.msra.mxu0 %v3511
        %3526 = vmatprep.subr.bf16.mxu0 0
        %3527 = vmatpush1.bf16.msra.mxu0 %v3509
        %3528 = vmatprep.subr.bf16.mxu0 0
        %3529 = vmatpush1.bf16.msra.mxu0 %v3507
        %3530 = vmatprep.subr.bf16.mxu0 0
        %3531 = vmatpush1.bf16.msra.mxu0 %v3505
        %3532 = vmatprep.subr.bf16.mxu0 0
        %3533 = vmatpush1.bf16.msra.mxu0 %v3503
        %3534 = vmatprep.subr.bf16.mxu0 0
        %3535 = vmatpush1.bf16.msra.mxu0 %v3501
        %3536 = vmatprep.subr.bf16.mxu0 0
        %3537 = vmatpush1.bf16.msra.mxu0 %v3499
        %3538 = vmatprep.subr.bf16.mxu0 0
        %3539 = vmatpush2.bf16.msra.mxu0 0
        %3540 = vmatprep.subr.bf16.mxu0 0
        %3541 = vmatpush2.bf16.msra.mxu0 0
        %3542 = vmatprep.subr.bf16.mxu0 0
        %3543 = vmatpush2.bf16.msra.mxu0 0
        %3544 = vmatprep.subr.bf16.mxu0 0
        %3545 = vmatpush2.bf16.msra.mxu0 0
        %3546 = vmatprep.subr.bf16.mxu0 0
        %3547 = vmatpush2.bf16.msra.mxu0 0
        %3548 = vmatprep.subr.bf16.mxu0 0
        %3549 = vmatpush2.bf16.msra.mxu0 0
        %3550 = vmatprep.subr.bf16.mxu0 0
        %3551 = vmatpush2.bf16.msra.mxu0 0
        %3552 = vmatprep.subr.bf16.mxu0 0
        %3553 = vmatpush2.bf16.msra.mxu0 0
        %3554 = vmatprep.mubr.bf16.mxu0 0
        %3555 = vmatmul.mubr.bf16.gmra.mxu0 %v3490
        %v3556 = vpop.f32.mrf.mxu0
        %v3557 = vadd.f32 0.0, %v3556
        %v3558 = vpop.f32.mrf.mxu0
        %v3559 = vpop.f32.mrf.mxu0
        %v3560 = vadd.f32 0.0, %v3559
        %v3561 = vpop.f32.mrf.mxu0
        %3562 = vmatprep.mubr.bf16.mxu0 0
        %3563 = vmatmul.mubr.bf16.gmra.mxu0 %v3491
        %v3564 = vpop.f32.mrf.mxu0
        %v3565 = vadd.f32 0.0, %v3564
        %v3566 = vpop.f32.mrf.mxu0
        %v3567 = vpop.f32.mrf.mxu0
        %v3568 = vadd.f32 0.0, %v3567
        %v3569 = vpop.f32.mrf.mxu0
        %3570 = vmatprep.mubr.bf16.mxu0 0
        %3571 = vmatmul.mubr.bf16.gmra.mxu0 %v3492
        %v3572 = vpop.f32.mrf.mxu0
        %v3573 = vadd.f32 0.0, %v3572
        %v3574 = vpop.f32.mrf.mxu0
        %v3575 = vpop.f32.mrf.mxu0
        %v3576 = vadd.f32 0.0, %v3575
        %v3577 = vpop.f32.mrf.mxu0
        %3578 = vmatprep.mubr.bf16.mxu0 0
        %3579 = vmatmul.mubr.bf16.gmra.mxu0 %v3493
        %v3580 = vpop.f32.mrf.mxu0
        %v3581 = vadd.f32 0.0, %v3580
        %v3582 = vpop.f32.mrf.mxu0
        %v3583 = vpop.f32.mrf.mxu0
        %v3584 = vadd.f32 0.0, %v3583
        %v3585 = vpop.f32.mrf.mxu0
        %3586 = vmatprep.mubr.bf16.mxu0 0
        %3587 = vmatmul.mubr.bf16.gmra.mxu0 %v3494
        %v3588 = vpop.f32.mrf.mxu0
        %v3589 = vadd.f32 0.0, %v3588
        %v3590 = vpop.f32.mrf.mxu0
        %v3591 = vpop.f32.mrf.mxu0
        %v3592 = vadd.f32 0.0, %v3591
        %v3593 = vpop.f32.mrf.mxu0
        %3594 = vmatprep.mubr.bf16.mxu0 0
        %3595 = vmatmul.mubr.bf16.gmra.mxu0 %v3495
        %v3596 = vpop.f32.mrf.mxu0
        %v3597 = vadd.f32 0.0, %v3596
        %v3598 = vpop.f32.mrf.mxu0
        %v3599 = vpop.f32.mrf.mxu0
        %v3600 = vadd.f32 0.0, %v3599
        %v3601 = vpop.f32.mrf.mxu0
        %3602 = vmatprep.mubr.bf16.mxu0 0
        %3603 = vmatmul.mubr.bf16.gmra.mxu0 %v3496
        %v3604 = vpop.f32.mrf.mxu0
        %v3605 = vadd.f32 0.0, %v3604
        %v3606 = vpop.f32.mrf.mxu0
        %v3607 = vpop.f32.mrf.mxu0
        %v3608 = vadd.f32 0.0, %v3607
        %v3609 = vpop.f32.mrf.mxu0
        %3610 = vmatprep.mubr.bf16.mxu0 0
        %3611 = vmatmul.mubr.bf16.gmra.mxu0 %v3497
        %v3612 = vpop.f32.mrf.mxu0
        %v3613 = vadd.f32 0.0, %v3612
        %v3614 = vpop.f32.mrf.mxu0
        %v3615 = vpop.f32.mrf.mxu0
        %v3616 = vadd.f32 0.0, %v3615
        %v3617 = vpop.f32.mrf.mxu0
        %3618 = vdwg.mxu0
        %v3619 = vpack.c.bf16 %v3560, %v3557
        %v3620 = vpack.c.bf16 %v3568, %v3565
        %v3621 = vpack.c.bf16 %v3576, %v3573
        %v3622 = vpack.c.bf16 %v3584, %v3581
        %v3623 = vpack.c.bf16 %v3592, %v3589
        %v3624 = vpack.c.bf16 %v3600, %v3597
        %v3625 = vpack.c.bf16 %v3608, %v3605
        %v3626 = vpack.c.bf16 %v3616, %v3613
        %v3635 = vunpack.c.l.b16 %v3619
        %v3636 = vunpack.c.h.b16 %v3619
        %v3637 = vunpack.c.l.b16 %v3620
        %v3638 = vunpack.c.h.b16 %v3620
        %v3639 = vunpack.c.l.b16 %v3621
        %v3640 = vunpack.c.h.b16 %v3621
        %v3641 = vunpack.c.l.b16 %v3622
        %v3642 = vunpack.c.h.b16 %v3622
        %v3643 = vunpack.c.l.b16 %v3623
        %v3644 = vunpack.c.h.b16 %v3623
        %v3645 = vunpack.c.l.b16 %v3624
        %v3646 = vunpack.c.h.b16 %v3624
        %v3647 = vunpack.c.l.b16 %v3625
        %v3648 = vunpack.c.h.b16 %v3625
        %v3649 = vunpack.c.l.b16 %v3626
        %v3650 = vunpack.c.h.b16 %v3626
        %v3651 = vpack.c.b16 %v3635, %v3635
        %v3652 = vpack.c.b16 %v3636, %v3636
        %v3653 = vpack.c.b16 %v3637, %v3637
        %v3654 = vpack.c.b16 %v3638, %v3638
        %v3655 = vpack.c.b16 %v3639, %v3639
        %v3656 = vpack.c.b16 %v3640, %v3640
        %v3657 = vpack.c.b16 %v3641, %v3641
        %v3658 = vpack.c.b16 %v3642, %v3642
        %v3659 = vpack.c.b16 %v3643, %v3643
        %v3660 = vpack.c.b16 %v3644, %v3644
        %v3661 = vpack.c.b16 %v3645, %v3645
        %v3662 = vpack.c.b16 %v3646, %v3646
        %v3663 = vpack.c.b16 %v3647, %v3647
        %v3664 = vpack.c.b16 %v3648, %v3648
        %v3665 = vpack.c.b16 %v3649, %v3649
        %v3666 = vpack.c.b16 %v3650, %v3650
        %3667 = vrot.lane.b32.xlu0 %v3651, 64
        %v3668 = vpop.permute.xlu0 %3667
        %3669 = vrot.lane.b32.xlu0 %v3652, 64
        %v3670 = vpop.permute.xlu0 %3669
        %3671 = vrot.lane.b32.xlu0 %v3653, 64
        %v3672 = vpop.permute.xlu0 %3671
        %3673 = vrot.lane.b32.xlu0 %v3654, 64
        %v3674 = vpop.permute.xlu0 %3673
        %3675 = vrot.lane.b32.xlu0 %v3655, 64
        %v3676 = vpop.permute.xlu0 %3675
        %3677 = vrot.lane.b32.xlu0 %v3656, 64
        %v3678 = vpop.permute.xlu0 %3677
        %3679 = vrot.lane.b32.xlu0 %v3657, 64
        %v3680 = vpop.permute.xlu0 %3679
        %3681 = vrot.lane.b32.xlu0 %v3658, 64
        %v3682 = vpop.permute.xlu0 %3681
        %3683 = vrot.lane.b32.xlu0 %v3659, 64
        %v3684 = vpop.permute.xlu0 %3683
        %3685 = vrot.lane.b32.xlu0 %v3660, 64
        %v3686 = vpop.permute.xlu0 %3685
        %3687 = vrot.lane.b32.xlu0 %v3661, 64
        %v3688 = vpop.permute.xlu0 %3687
        %3689 = vrot.lane.b32.xlu0 %v3662, 64
        %v3690 = vpop.permute.xlu0 %3689
        %3691 = vrot.lane.b32.xlu0 %v3663, 64
        %v3692 = vpop.permute.xlu0 %3691
        %3693 = vrot.lane.b32.xlu0 %v3664, 64
        %v3694 = vpop.permute.xlu0 %3693
        %3695 = vrot.lane.b32.xlu0 %v3665, 64
        %v3696 = vpop.permute.xlu0 %3695
        %3697 = vrot.lane.b32.xlu0 %v3666, 64
        %v3698 = vpop.permute.xlu0 %3697
        %vm3715 = vcmask 781824
        %3716 = vst.msk [vmem:[#allocation2] sm:$0xf] %vm3715, %v3668
        %3717 = vst.msk [vmem:[#allocation2 + $0x4] sm:$0xf] %vm3715, %v3670
        %3718 = vst.msk [vmem:[#allocation2 + $0x8] sm:$0xf] %vm3715, %v3672
        %3719 = vst.msk [vmem:[#allocation2 + $0xc] sm:$0xf] %vm3715, %v3674
        %3720 = vst.msk [vmem:[#allocation2 + $0x10] sm:$0xf] %vm3715, %v3676
        %3721 = vst.msk [vmem:[#allocation2 + $0x14] sm:$0xf] %vm3715, %v3678
        %3722 = vst.msk [vmem:[#allocation2 + $0x18] sm:$0xf] %vm3715, %v3680
        %3723 = vst.msk [vmem:[#allocation2 + $0x1c] sm:$0xf] %vm3715, %v3682
        %3724 = vst.msk [vmem:[#allocation2 + $0x20] sm:$0xf] %vm3715, %v3684
        %3725 = vst.msk [vmem:[#allocation2 + $0x24] sm:$0xf] %vm3715, %v3686
        %3726 = vst.msk [vmem:[#allocation2 + $0x28] sm:$0xf] %vm3715, %v3688
        %3727 = vst.msk [vmem:[#allocation2 + $0x2c] sm:$0xf] %vm3715, %v3690
        %3728 = vst.msk [vmem:[#allocation2 + $0x30] sm:$0xf] %vm3715, %v3692
        %3729 = vst.msk [vmem:[#allocation2 + $0x34] sm:$0xf] %vm3715, %v3694
        %3730 = vst.msk [vmem:[#allocation2 + $0x38] sm:$0xf] %vm3715, %v3696
        %3731 = vst.msk [vmem:[#allocation2 + $0x3c] sm:$0xf] %vm3715, %v3698
        %3732 = vrot.lane.b32.xlu0 %v1431, 16
        %v3733 = vpop.permute.xlu0 %3732
        %3734 = vrot.lane.b32.xlu0 %v1432, 16
        %v3735 = vpop.permute.xlu0 %3734
        %3736 = vrot.lane.b32.xlu0 %v1433, 16
        %v3737 = vpop.permute.xlu0 %3736
        %3738 = vrot.lane.b32.xlu0 %v1434, 16
        %v3739 = vpop.permute.xlu0 %3738
        %3740 = vrot.lane.b32.xlu0 %v1435, 16
        %v3741 = vpop.permute.xlu0 %3740
        %3742 = vrot.lane.b32.xlu0 %v1436, 16
        %v3743 = vpop.permute.xlu0 %3742
        %3744 = vrot.lane.b32.xlu0 %v1437, 16
        %v3745 = vpop.permute.xlu0 %3744
        %3746 = vrot.lane.b32.xlu0 %v1438, 16
        %v3747 = vpop.permute.xlu0 %3746
        %3748 = vrot.lane.b32.xlu0 %v1519, 16
        %v3749 = vpop.permute.xlu0 %3748
        %3750 = vrot.lane.b32.xlu0 %v1520, 16
        %v3751 = vpop.permute.xlu0 %3750
        %3752 = vrot.lane.b32.xlu0 %v1521, 16
        %v3753 = vpop.permute.xlu0 %3752
        %3754 = vrot.lane.b32.xlu0 %v1522, 16
        %v3755 = vpop.permute.xlu0 %3754
        %3756 = vrot.lane.b32.xlu0 %v1523, 16
        %v3757 = vpop.permute.xlu0 %3756
        %3758 = vrot.lane.b32.xlu0 %v1524, 16
        %v3759 = vpop.permute.xlu0 %3758
        %3760 = vrot.lane.b32.xlu0 %v1525, 16
        %v3761 = vpop.permute.xlu0 %3760
        %3762 = vrot.lane.b32.xlu0 %v1526, 16
        %v3763 = vpop.permute.xlu0 %3762
        %v3765 = vsel %vm1575, %v3733, 0
        %v3768 = vsel %vm1575, %v3735, 0
        %v3771 = vsel %vm1575, %v3737, 0
        %v3774 = vsel %vm1575, %v3739, 0
        %v3777 = vsel %vm1575, %v3741, 0
        %v3780 = vsel %vm1575, %v3743, 0
        %v3783 = vsel %vm1575, %v3745, 0
        %v3786 = vsel %vm1575, %v3747, 0
        %v3789 = vsel %vm1575, %v3749, 0
        %v3792 = vsel %vm1575, %v3751, 0
        %v3795 = vsel %vm1575, %v3753, 0
        %v3798 = vsel %vm1575, %v3755, 0
        %v3801 = vsel %vm1575, %v3757, 0
        %v3804 = vsel %vm1575, %v3759, 0
        %v3807 = vsel %vm1575, %v3761, 0
        %v3810 = vsel %vm1575, %v3763, 0
        %3812 = vmatprep.subr.bf16.mxu0 0
        %3813 = vmatpush1.bf16.xpose.msra.mxu0 %v3810
        %3814 = vmatprep.subr.bf16.mxu0 0
        %3815 = vmatpush1.bf16.xpose.msra.mxu0 %v3807
        %3816 = vmatprep.subr.bf16.mxu0 0
        %3817 = vmatpush1.bf16.xpose.msra.mxu0 %v3804
        %3818 = vmatprep.subr.bf16.mxu0 0
        %3819 = vmatpush1.bf16.xpose.msra.mxu0 %v3801
        %3820 = vmatprep.subr.bf16.mxu0 0
        %3821 = vmatpush1.bf16.xpose.msra.mxu0 %v3798
        %3822 = vmatprep.subr.bf16.mxu0 0
        %3823 = vmatpush1.bf16.xpose.msra.mxu0 %v3795
        %3824 = vmatprep.subr.bf16.mxu0 0
        %3825 = vmatpush1.bf16.xpose.msra.mxu0 %v3792
        %3826 = vmatprep.subr.bf16.mxu0 0
        %3827 = vmatpush1.bf16.xpose.msra.mxu0 %v3789
        %3828 = vmatprep.subr.bf16.mxu0 0
        %3829 = vmatpush2.bf16.xpose.msra.mxu0 0
        %3830 = vmatprep.subr.bf16.mxu0 0
        %3831 = vmatpush2.bf16.xpose.msra.mxu0 0
        %3832 = vmatprep.subr.bf16.mxu0 0
        %3833 = vmatpush2.bf16.xpose.msra.mxu0 0
        %3834 = vmatprep.subr.bf16.mxu0 0
        %3835 = vmatpush2.bf16.xpose.msra.mxu0 0
        %3836 = vmatprep.subr.bf16.mxu0 0
        %3837 = vmatpush2.bf16.xpose.msra.mxu0 0
        %3838 = vmatprep.subr.bf16.mxu0 0
        %3839 = vmatpush2.bf16.xpose.msra.mxu0 0
        %3840 = vmatprep.subr.bf16.mxu0 0
        %3841 = vmatpush2.bf16.xpose.msra.mxu0 0
        %3842 = vmatprep.subr.bf16.mxu0 0
        %3843 = vmatpush2.bf16.xpose.msra.mxu0 0
        %3844 = vmatprep.mubr.bf16.mxu0 0
        %3845 = vmatmul.mubr.bf16.gmra.mxu0 %v3765
        %v3846 = vpop.f32.mrf.mxu0
        %v3847 = vadd.f32 0.0, %v3846
        %v3848 = vpop.f32.mrf.mxu0
        %v3849 = vpop.f32.mrf.mxu0
        %v3850 = vadd.f32 0.0, %v3849
        %v3851 = vpop.f32.mrf.mxu0
        %3852 = vmatprep.mubr.bf16.mxu0 0
        %3853 = vmatmul.mubr.bf16.gmra.mxu0 %v3768
        %v3854 = vpop.f32.mrf.mxu0
        %v3855 = vadd.f32 0.0, %v3854
        %v3856 = vpop.f32.mrf.mxu0
        %v3857 = vpop.f32.mrf.mxu0
        %v3858 = vadd.f32 0.0, %v3857
        %v3859 = vpop.f32.mrf.mxu0
        %3860 = vmatprep.mubr.bf16.mxu0 0
        %3861 = vmatmul.mubr.bf16.gmra.mxu0 %v3771
        %v3862 = vpop.f32.mrf.mxu0
        %v3863 = vadd.f32 0.0, %v3862
        %v3864 = vpop.f32.mrf.mxu0
        %v3865 = vpop.f32.mrf.mxu0
        %v3866 = vadd.f32 0.0, %v3865
        %v3867 = vpop.f32.mrf.mxu0
        %3868 = vmatprep.mubr.bf16.mxu0 0
        %3869 = vmatmul.mubr.bf16.gmra.mxu0 %v3774
        %v3870 = vpop.f32.mrf.mxu0
        %v3871 = vadd.f32 0.0, %v3870
        %v3872 = vpop.f32.mrf.mxu0
        %v3873 = vpop.f32.mrf.mxu0
        %v3874 = vadd.f32 0.0, %v3873
        %v3875 = vpop.f32.mrf.mxu0
        %3876 = vmatprep.mubr.bf16.mxu0 0
        %3877 = vmatmul.mubr.bf16.gmra.mxu0 %v3777
        %v3878 = vpop.f32.mrf.mxu0
        %v3879 = vadd.f32 0.0, %v3878
        %v3880 = vpop.f32.mrf.mxu0
        %v3881 = vpop.f32.mrf.mxu0
        %v3882 = vadd.f32 0.0, %v3881
        %v3883 = vpop.f32.mrf.mxu0
        %3884 = vmatprep.mubr.bf16.mxu0 0
        %3885 = vmatmul.mubr.bf16.gmra.mxu0 %v3780
        %v3886 = vpop.f32.mrf.mxu0
        %v3887 = vadd.f32 0.0, %v3886
        %v3888 = vpop.f32.mrf.mxu0
        %v3889 = vpop.f32.mrf.mxu0
        %v3890 = vadd.f32 0.0, %v3889
        %v3891 = vpop.f32.mrf.mxu0
        %3892 = vmatprep.mubr.bf16.mxu0 0
        %3893 = vmatmul.mubr.bf16.gmra.mxu0 %v3783
        %v3894 = vpop.f32.mrf.mxu0
        %v3895 = vadd.f32 0.0, %v3894
        %v3896 = vpop.f32.mrf.mxu0
        %v3897 = vpop.f32.mrf.mxu0
        %v3898 = vadd.f32 0.0, %v3897
        %v3899 = vpop.f32.mrf.mxu0
        %3900 = vmatprep.mubr.bf16.mxu0 0
        %3901 = vmatmul.mubr.bf16.gmra.mxu0 %v3786
        %v3902 = vpop.f32.mrf.mxu0
        %v3903 = vadd.f32 0.0, %v3902
        %v3904 = vpop.f32.mrf.mxu0
        %v3905 = vpop.f32.mrf.mxu0
        %v3906 = vadd.f32 0.0, %v3905
        %v3907 = vpop.f32.mrf.mxu0
        %3908 = vdwg.mxu0
        %3909 = vrot.lane.b32.xlu0 %v1431, 80
        %v3910 = vpop.permute.xlu0 %3909
        %3911 = vrot.lane.b32.xlu0 %v1432, 80
        %v3912 = vpop.permute.xlu0 %3911
        %3913 = vrot.lane.b32.xlu0 %v1433, 80
        %v3914 = vpop.permute.xlu0 %3913
        %3915 = vrot.lane.b32.xlu0 %v1434, 80
        %v3916 = vpop.permute.xlu0 %3915
        %3917 = vrot.lane.b32.xlu0 %v1435, 80
        %v3918 = vpop.permute.xlu0 %3917
        %3919 = vrot.lane.b32.xlu0 %v1436, 80
        %v3920 = vpop.permute.xlu0 %3919
        %3921 = vrot.lane.b32.xlu0 %v1437, 80
        %v3922 = vpop.permute.xlu0 %3921
        %3923 = vrot.lane.b32.xlu0 %v1438, 80
        %v3924 = vpop.permute.xlu0 %3923
        %3925 = vrot.lane.b32.xlu0 %v1519, 80
        %v3926 = vpop.permute.xlu0 %3925
        %3927 = vrot.lane.b32.xlu0 %v1520, 80
        %v3928 = vpop.permute.xlu0 %3927
        %3929 = vrot.lane.b32.xlu0 %v1521, 80
        %v3930 = vpop.permute.xlu0 %3929
        %3931 = vrot.lane.b32.xlu0 %v1522, 80
        %v3932 = vpop.permute.xlu0 %3931
        %3933 = vrot.lane.b32.xlu0 %v1523, 80
        %v3934 = vpop.permute.xlu0 %3933
        %3935 = vrot.lane.b32.xlu0 %v1524, 80
        %v3936 = vpop.permute.xlu0 %3935
        %3937 = vrot.lane.b32.xlu0 %v1525, 80
        %v3938 = vpop.permute.xlu0 %3937
        %3939 = vrot.lane.b32.xlu0 %v1526, 80
        %v3940 = vpop.permute.xlu0 %3939
        %v3942 = vsel %vm1575, %v3910, 0
        %v3945 = vsel %vm1575, %v3912, 0
        %v3948 = vsel %vm1575, %v3914, 0
        %v3951 = vsel %vm1575, %v3916, 0
        %v3954 = vsel %vm1575, %v3918, 0
        %v3957 = vsel %vm1575, %v3920, 0
        %v3960 = vsel %vm1575, %v3922, 0
        %v3963 = vsel %vm1575, %v3924, 0
        %v3966 = vsel %vm1575, %v3926, 0
        %v3969 = vsel %vm1575, %v3928, 0
        %v3972 = vsel %vm1575, %v3930, 0
        %v3975 = vsel %vm1575, %v3932, 0
        %v3978 = vsel %vm1575, %v3934, 0
        %v3981 = vsel %vm1575, %v3936, 0
        %v3984 = vsel %vm1575, %v3938, 0
        %v3987 = vsel %vm1575, %v3940, 0
        %3989 = vmatprep.subr.bf16.mxu0 0
        %3990 = vmatpush1.bf16.xpose.msra.mxu0 %v3987
        %3991 = vmatprep.subr.bf16.mxu0 0
        %3992 = vmatpush1.bf16.xpose.msra.mxu0 %v3984
        %3993 = vmatprep.subr.bf16.mxu0 0
        %3994 = vmatpush1.bf16.xpose.msra.mxu0 %v3981
        %3995 = vmatprep.subr.bf16.mxu0 0
        %3996 = vmatpush1.bf16.xpose.msra.mxu0 %v3978
        %3997 = vmatprep.subr.bf16.mxu0 0
        %3998 = vmatpush1.bf16.xpose.msra.mxu0 %v3975
        %3999 = vmatprep.subr.bf16.mxu0 0
        %4000 = vmatpush1.bf16.xpose.msra.mxu0 %v3972
        %4001 = vmatprep.subr.bf16.mxu0 0
        %4002 = vmatpush1.bf16.xpose.msra.mxu0 %v3969
        %4003 = vmatprep.subr.bf16.mxu0 0
        %4004 = vmatpush1.bf16.xpose.msra.mxu0 %v3966
        %4005 = vmatprep.subr.bf16.mxu0 0
        %4006 = vmatpush2.bf16.xpose.msra.mxu0 0
        %4007 = vmatprep.subr.bf16.mxu0 0
        %4008 = vmatpush2.bf16.xpose.msra.mxu0 0
        %4009 = vmatprep.subr.bf16.mxu0 0
        %4010 = vmatpush2.bf16.xpose.msra.mxu0 0
        %4011 = vmatprep.subr.bf16.mxu0 0
        %4012 = vmatpush2.bf16.xpose.msra.mxu0 0
        %4013 = vmatprep.subr.bf16.mxu0 0
        %4014 = vmatpush2.bf16.xpose.msra.mxu0 0
        %4015 = vmatprep.subr.bf16.mxu0 0
        %4016 = vmatpush2.bf16.xpose.msra.mxu0 0
        %4017 = vmatprep.subr.bf16.mxu0 0
        %4018 = vmatpush2.bf16.xpose.msra.mxu0 0
        %4019 = vmatprep.subr.bf16.mxu0 0
        %4020 = vmatpush2.bf16.xpose.msra.mxu0 0
        %4021 = vmatprep.mubr.bf16.mxu0 0
        %4022 = vmatmul.mubr.bf16.gmra.mxu0 %v3942
        %v4023 = vpop.f32.mrf.mxu0
        %v4024 = vadd.f32 %v3847, %v4023
        %v4025 = vpop.f32.mrf.mxu0
        %v4026 = vpop.f32.mrf.mxu0
        %v4027 = vadd.f32 %v3850, %v4026
        %v4028 = vpop.f32.mrf.mxu0
        %4029 = vmatprep.mubr.bf16.mxu0 0
        %4030 = vmatmul.mubr.bf16.gmra.mxu0 %v3945
        %v4031 = vpop.f32.mrf.mxu0
        %v4032 = vadd.f32 %v3855, %v4031
        %v4033 = vpop.f32.mrf.mxu0
        %v4034 = vpop.f32.mrf.mxu0
        %v4035 = vadd.f32 %v3858, %v4034
        %v4036 = vpop.f32.mrf.mxu0
        %4037 = vmatprep.mubr.bf16.mxu0 0
        %4038 = vmatmul.mubr.bf16.gmra.mxu0 %v3948
        %v4039 = vpop.f32.mrf.mxu0
        %v4040 = vadd.f32 %v3863, %v4039
        %v4041 = vpop.f32.mrf.mxu0
        %v4042 = vpop.f32.mrf.mxu0
        %v4043 = vadd.f32 %v3866, %v4042
        %v4044 = vpop.f32.mrf.mxu0
        %4045 = vmatprep.mubr.bf16.mxu0 0
        %4046 = vmatmul.mubr.bf16.gmra.mxu0 %v3951
        %v4047 = vpop.f32.mrf.mxu0
        %v4048 = vadd.f32 %v3871, %v4047
        %v4049 = vpop.f32.mrf.mxu0
        %v4050 = vpop.f32.mrf.mxu0
        %v4051 = vadd.f32 %v3874, %v4050
        %v4052 = vpop.f32.mrf.mxu0
        %4053 = vmatprep.mubr.bf16.mxu0 0
        %4054 = vmatmul.mubr.bf16.gmra.mxu0 %v3954
        %v4055 = vpop.f32.mrf.mxu0
        %v4056 = vadd.f32 %v3879, %v4055
        %v4057 = vpop.f32.mrf.mxu0
        %v4058 = vpop.f32.mrf.mxu0
        %v4059 = vadd.f32 %v3882, %v4058
        %v4060 = vpop.f32.mrf.mxu0
        %4061 = vmatprep.mubr.bf16.mxu0 0
        %4062 = vmatmul.mubr.bf16.gmra.mxu0 %v3957
        %v4063 = vpop.f32.mrf.mxu0
        %v4064 = vadd.f32 %v3887, %v4063
        %v4065 = vpop.f32.mrf.mxu0
        %v4066 = vpop.f32.mrf.mxu0
        %v4067 = vadd.f32 %v3890, %v4066
        %v4068 = vpop.f32.mrf.mxu0
        %4069 = vmatprep.mubr.bf16.mxu0 0
        %4070 = vmatmul.mubr.bf16.gmra.mxu0 %v3960
        %v4071 = vpop.f32.mrf.mxu0
        %v4072 = vadd.f32 %v3895, %v4071
        %v4073 = vpop.f32.mrf.mxu0
        %v4074 = vpop.f32.mrf.mxu0
        %v4075 = vadd.f32 %v3898, %v4074
        %v4076 = vpop.f32.mrf.mxu0
        %4077 = vmatprep.mubr.bf16.mxu0 0
        %4078 = vmatmul.mubr.bf16.gmra.mxu0 %v3963
        %v4079 = vpop.f32.mrf.mxu0
        %v4080 = vadd.f32 %v3903, %v4079
        %v4081 = vpop.f32.mrf.mxu0
        %v4082 = vpop.f32.mrf.mxu0
        %v4083 = vadd.f32 %v3906, %v4082
        %v4084 = vpop.f32.mrf.mxu0
        %4085 = vdwg.mxu0
        %v4086 = vmul.f32 %v4024, 0.17677669
        %v4087 = vmul.f32 %v4027, 0.17677669
        %v4088 = vmul.f32 %v4032, 0.17677669
        %v4089 = vmul.f32 %v4035, 0.17677669
        %v4090 = vmul.f32 %v4040, 0.17677669
        %v4091 = vmul.f32 %v4043, 0.17677669
        %v4092 = vmul.f32 %v4048, 0.17677669
        %v4093 = vmul.f32 %v4051, 0.17677669
        %v4094 = vmul.f32 %v4056, 0.17677669
        %v4095 = vmul.f32 %v4059, 0.17677669
        %v4096 = vmul.f32 %v4064, 0.17677669
        %v4097 = vmul.f32 %v4067, 0.17677669
        %v4098 = vmul.f32 %v4072, 0.17677669
        %v4099 = vmul.f32 %v4075, 0.17677669
        %v4100 = vmul.f32 %v4080, 0.17677669
        %v4101 = vmul.f32 %v4083, 0.17677669
        %4102 = vmax.xlane.f32.xlu0 %v4086
        %v4103 = vpop.xlane.xlu0 %4102
        %4104 = vmax.xlane.f32.xlu0 %v4087
        %v4105 = vpop.xlane.xlu0 %4104
        %4106 = vmax.xlane.f32.xlu0 %v4088
        %v4107 = vpop.xlane.xlu0 %4106
        %4108 = vmax.xlane.f32.xlu0 %v4089
        %v4109 = vpop.xlane.xlu0 %4108
        %4110 = vmax.xlane.f32.xlu0 %v4090
        %v4111 = vpop.xlane.xlu0 %4110
        %4112 = vmax.xlane.f32.xlu0 %v4091
        %v4113 = vpop.xlane.xlu0 %4112
        %4114 = vmax.xlane.f32.xlu0 %v4092
        %v4115 = vpop.xlane.xlu0 %4114
        %4116 = vmax.xlane.f32.xlu0 %v4093
        %v4117 = vpop.xlane.xlu0 %4116
        %4118 = vmax.xlane.f32.xlu0 %v4094
        %v4119 = vpop.xlane.xlu0 %4118
        %4120 = vmax.xlane.f32.xlu0 %v4095
        %v4121 = vpop.xlane.xlu0 %4120
        %4122 = vmax.xlane.f32.xlu0 %v4096
        %v4123 = vpop.xlane.xlu0 %4122
        %4124 = vmax.xlane.f32.xlu0 %v4097
        %v4125 = vpop.xlane.xlu0 %4124
        %4126 = vmax.xlane.f32.xlu0 %v4098
        %v4127 = vpop.xlane.xlu0 %4126
        %4128 = vmax.xlane.f32.xlu0 %v4099
        %v4129 = vpop.xlane.xlu0 %4128
        %4130 = vmax.xlane.f32.xlu0 %v4100
        %v4131 = vpop.xlane.xlu0 %4130
        %4132 = vmax.xlane.f32.xlu0 %v4101
        %v4133 = vpop.xlane.xlu0 %4132
        %v4134 = vsub.f32 %v4086, %v4103
        %v4135 = vsub.f32 %v4087, %v4105
        %v4136 = vsub.f32 %v4088, %v4107
        %v4137 = vsub.f32 %v4089, %v4109
        %v4138 = vsub.f32 %v4090, %v4111
        %v4139 = vsub.f32 %v4091, %v4113
        %v4140 = vsub.f32 %v4092, %v4115
        %v4141 = vsub.f32 %v4093, %v4117
        %v4142 = vsub.f32 %v4094, %v4119
        %v4143 = vsub.f32 %v4095, %v4121
        %v4144 = vsub.f32 %v4096, %v4123
        %v4145 = vsub.f32 %v4097, %v4125
        %v4146 = vsub.f32 %v4098, %v4127
        %v4147 = vsub.f32 %v4099, %v4129
        %v4148 = vsub.f32 %v4100, %v4131
        %v4149 = vsub.f32 %v4101, %v4133
        %v4150 = vmul.f32 %v4134, 1.442695
        %v4151 = vpow.pop %v4150
        %v4152 = vmul.f32 %v4135, 1.442695
        %v4153 = vpow.pop %v4152
        %v4154 = vmul.f32 %v4136, 1.442695
        %v4155 = vpow.pop %v4154
        %v4156 = vmul.f32 %v4137, 1.442695
        %v4157 = vpow.pop %v4156
        %v4158 = vmul.f32 %v4138, 1.442695
        %v4159 = vpow.pop %v4158
        %v4160 = vmul.f32 %v4139, 1.442695
        %v4161 = vpow.pop %v4160
        %v4162 = vmul.f32 %v4140, 1.442695
        %v4163 = vpow.pop %v4162
        %v4164 = vmul.f32 %v4141, 1.442695
        %v4165 = vpow.pop %v4164
        %v4166 = vmul.f32 %v4142, 1.442695
        %v4167 = vpow.pop %v4166
        %v4168 = vmul.f32 %v4143, 1.442695
        %v4169 = vpow.pop %v4168
        %v4170 = vmul.f32 %v4144, 1.442695
        %v4171 = vpow.pop %v4170
        %v4172 = vmul.f32 %v4145, 1.442695
        %v4173 = vpow.pop %v4172
        %v4174 = vmul.f32 %v4146, 1.442695
        %v4175 = vpow.pop %v4174
        %v4176 = vmul.f32 %v4147, 1.442695
        %v4177 = vpow.pop %v4176
        %v4178 = vmul.f32 %v4148, 1.442695
        %v4179 = vpow.pop %v4178
        %v4180 = vmul.f32 %v4149, 1.442695
        %v4181 = vpow.pop %v4180
        %4182 = vadd.xlane.f32.xlu0 %v4151
        %v4183 = vpop.xlane.xlu0 %4182
        %4184 = vadd.xlane.f32.xlu0 %v4153
        %v4185 = vpop.xlane.xlu0 %4184
        %4186 = vadd.xlane.f32.xlu0 %v4155
        %v4187 = vpop.xlane.xlu0 %4186
        %4188 = vadd.xlane.f32.xlu0 %v4157
        %v4189 = vpop.xlane.xlu0 %4188
        %4190 = vadd.xlane.f32.xlu0 %v4159
        %v4191 = vpop.xlane.xlu0 %4190
        %4192 = vadd.xlane.f32.xlu0 %v4161
        %v4193 = vpop.xlane.xlu0 %4192
        %4194 = vadd.xlane.f32.xlu0 %v4163
        %v4195 = vpop.xlane.xlu0 %4194
        %4196 = vadd.xlane.f32.xlu0 %v4165
        %v4197 = vpop.xlane.xlu0 %4196
        %4198 = vadd.xlane.f32.xlu0 %v4167
        %v4199 = vpop.xlane.xlu0 %4198
        %4200 = vadd.xlane.f32.xlu0 %v4169
        %v4201 = vpop.xlane.xlu0 %4200
        %4202 = vadd.xlane.f32.xlu0 %v4171
        %v4203 = vpop.xlane.xlu0 %4202
        %4204 = vadd.xlane.f32.xlu0 %v4173
        %v4205 = vpop.xlane.xlu0 %4204
        %4206 = vadd.xlane.f32.xlu0 %v4175
        %v4207 = vpop.xlane.xlu0 %4206
        %4208 = vadd.xlane.f32.xlu0 %v4177
        %v4209 = vpop.xlane.xlu0 %4208
        %4210 = vadd.xlane.f32.xlu0 %v4179
        %v4211 = vpop.xlane.xlu0 %4210
        %4212 = vadd.xlane.f32.xlu0 %v4181
        %v4213 = vpop.xlane.xlu0 %4212
        %v4214 = vrcp.pop %v4183
        %v4215 = vrcp.pop %v4185
        %v4216 = vrcp.pop %v4187
        %v4217 = vrcp.pop %v4189
        %v4218 = vrcp.pop %v4191
        %v4219 = vrcp.pop %v4193
        %v4220 = vrcp.pop %v4195
        %v4221 = vrcp.pop %v4197
        %v4222 = vrcp.pop %v4199
        %v4223 = vrcp.pop %v4201
        %v4224 = vrcp.pop %v4203
        %v4225 = vrcp.pop %v4205
        %v4226 = vrcp.pop %v4207
        %v4227 = vrcp.pop %v4209
        %v4228 = vrcp.pop %v4211
        %v4229 = vrcp.pop %v4213
        %v4230 = vmul.f32 %v4151, %v4214
        %v4231 = vmul.f32 %v4153, %v4215
        %v4232 = vmul.f32 %v4155, %v4216
        %v4233 = vmul.f32 %v4157, %v4217
        %v4234 = vmul.f32 %v4159, %v4218
        %v4235 = vmul.f32 %v4161, %v4219
        %v4236 = vmul.f32 %v4163, %v4220
        %v4237 = vmul.f32 %v4165, %v4221
        %v4238 = vmul.f32 %v4167, %v4222
        %v4239 = vmul.f32 %v4169, %v4223
        %v4240 = vmul.f32 %v4171, %v4224
        %v4241 = vmul.f32 %v4173, %v4225
        %v4242 = vmul.f32 %v4175, %v4226
        %v4243 = vmul.f32 %v4177, %v4227
        %v4244 = vmul.f32 %v4179, %v4228
        %v4245 = vmul.f32 %v4181, %v4229
        %v4246 = vpack.c.bf16 %v4231, %v4230
        %v4247 = vpack.c.bf16 %v4233, %v4232
        %v4248 = vpack.c.bf16 %v4235, %v4234
        %v4249 = vpack.c.bf16 %v4237, %v4236
        %v4250 = vpack.c.bf16 %v4239, %v4238
        %v4251 = vpack.c.bf16 %v4241, %v4240
        %v4252 = vpack.c.bf16 %v4243, %v4242
        %v4253 = vpack.c.bf16 %v4245, %v4244
        %4254 = vrot.lane.b32.xlu0 %v1343, 32
        %v4255 = vpop.permute.xlu0 %4254
        %4256 = vrot.lane.b32.xlu0 %v1344, 32
        %v4257 = vpop.permute.xlu0 %4256
        %4258 = vrot.lane.b32.xlu0 %v1345, 32
        %v4259 = vpop.permute.xlu0 %4258
        %4260 = vrot.lane.b32.xlu0 %v1346, 32
        %v4261 = vpop.permute.xlu0 %4260
        %4262 = vrot.lane.b32.xlu0 %v1347, 32
        %v4263 = vpop.permute.xlu0 %4262
        %4264 = vrot.lane.b32.xlu0 %v1348, 32
        %v4265 = vpop.permute.xlu0 %4264
        %4266 = vrot.lane.b32.xlu0 %v1349, 32
        %v4267 = vpop.permute.xlu0 %4266
        %4268 = vrot.lane.b32.xlu0 %v1350, 32
        %v4269 = vpop.permute.xlu0 %4268
        %4278 = vmatprep.subr.bf16.mxu0 0
        %4279 = vmatpush1.bf16.msra.mxu0 %v4269
        %4280 = vmatprep.subr.bf16.mxu0 0
        %4281 = vmatpush1.bf16.msra.mxu0 %v4267
        %4282 = vmatprep.subr.bf16.mxu0 0
        %4283 = vmatpush1.bf16.msra.mxu0 %v4265
        %4284 = vmatprep.subr.bf16.mxu0 0
        %4285 = vmatpush1.bf16.msra.mxu0 %v4263
        %4286 = vmatprep.subr.bf16.mxu0 0
        %4287 = vmatpush1.bf16.msra.mxu0 %v4261
        %4288 = vmatprep.subr.bf16.mxu0 0
        %4289 = vmatpush1.bf16.msra.mxu0 %v4259
        %4290 = vmatprep.subr.bf16.mxu0 0
        %4291 = vmatpush1.bf16.msra.mxu0 %v4257
        %4292 = vmatprep.subr.bf16.mxu0 0
        %4293 = vmatpush1.bf16.msra.mxu0 %v4255
        %4294 = vmatprep.subr.bf16.mxu0 0
        %4295 = vmatpush2.bf16.msra.mxu0 0
        %4296 = vmatprep.subr.bf16.mxu0 0
        %4297 = vmatpush2.bf16.msra.mxu0 0
        %4298 = vmatprep.subr.bf16.mxu0 0
        %4299 = vmatpush2.bf16.msra.mxu0 0
        %4300 = vmatprep.subr.bf16.mxu0 0
        %4301 = vmatpush2.bf16.msra.mxu0 0
        %4302 = vmatprep.subr.bf16.mxu0 0
        %4303 = vmatpush2.bf16.msra.mxu0 0
        %4304 = vmatprep.subr.bf16.mxu0 0
        %4305 = vmatpush2.bf16.msra.mxu0 0
        %4306 = vmatprep.subr.bf16.mxu0 0
        %4307 = vmatpush2.bf16.msra.mxu0 0
        %4308 = vmatprep.subr.bf16.mxu0 0
        %4309 = vmatpush2.bf16.msra.mxu0 0
        %4310 = vmatprep.mubr.bf16.mxu0 0
        %4311 = vmatmul.mubr.bf16.gmra.mxu0 %v4246
        %v4312 = vpop.f32.mrf.mxu0
        %v4313 = vadd.f32 0.0, %v4312
        %v4314 = vpop.f32.mrf.mxu0
        %v4315 = vpop.f32.mrf.mxu0
        %v4316 = vadd.f32 0.0, %v4315
        %v4317 = vpop.f32.mrf.mxu0
        %4318 = vmatprep.mubr.bf16.mxu0 0
        %4319 = vmatmul.mubr.bf16.gmra.mxu0 %v4247
        %v4320 = vpop.f32.mrf.mxu0
        %v4321 = vadd.f32 0.0, %v4320
        %v4322 = vpop.f32.mrf.mxu0
        %v4323 = vpop.f32.mrf.mxu0
        %v4324 = vadd.f32 0.0, %v4323
        %v4325 = vpop.f32.mrf.mxu0
        %4326 = vmatprep.mubr.bf16.mxu0 0
        %4327 = vmatmul.mubr.bf16.gmra.mxu0 %v4248
        %v4328 = vpop.f32.mrf.mxu0
        %v4329 = vadd.f32 0.0, %v4328
        %v4330 = vpop.f32.mrf.mxu0
        %v4331 = vpop.f32.mrf.mxu0
        %v4332 = vadd.f32 0.0, %v4331
        %v4333 = vpop.f32.mrf.mxu0
        %4334 = vmatprep.mubr.bf16.mxu0 0
        %4335 = vmatmul.mubr.bf16.gmra.mxu0 %v4249
        %v4336 = vpop.f32.mrf.mxu0
        %v4337 = vadd.f32 0.0, %v4336
        %v4338 = vpop.f32.mrf.mxu0
        %v4339 = vpop.f32.mrf.mxu0
        %v4340 = vadd.f32 0.0, %v4339
        %v4341 = vpop.f32.mrf.mxu0
        %4342 = vmatprep.mubr.bf16.mxu0 0
        %4343 = vmatmul.mubr.bf16.gmra.mxu0 %v4250
        %v4344 = vpop.f32.mrf.mxu0
        %v4345 = vadd.f32 0.0, %v4344
        %v4346 = vpop.f32.mrf.mxu0
        %v4347 = vpop.f32.mrf.mxu0
        %v4348 = vadd.f32 0.0, %v4347
        %v4349 = vpop.f32.mrf.mxu0
        %4350 = vmatprep.mubr.bf16.mxu0 0
        %4351 = vmatmul.mubr.bf16.gmra.mxu0 %v4251
        %v4352 = vpop.f32.mrf.mxu0
        %v4353 = vadd.f32 0.0, %v4352
        %v4354 = vpop.f32.mrf.mxu0
        %v4355 = vpop.f32.mrf.mxu0
        %v4356 = vadd.f32 0.0, %v4355
        %v4357 = vpop.f32.mrf.mxu0
        %4358 = vmatprep.mubr.bf16.mxu0 0
        %4359 = vmatmul.mubr.bf16.gmra.mxu0 %v4252
        %v4360 = vpop.f32.mrf.mxu0
        %v4361 = vadd.f32 0.0, %v4360
        %v4362 = vpop.f32.mrf.mxu0
        %v4363 = vpop.f32.mrf.mxu0
        %v4364 = vadd.f32 0.0, %v4363
        %v4365 = vpop.f32.mrf.mxu0
        %4366 = vmatprep.mubr.bf16.mxu0 0
        %4367 = vmatmul.mubr.bf16.gmra.mxu0 %v4253
        %v4368 = vpop.f32.mrf.mxu0
        %v4369 = vadd.f32 0.0, %v4368
        %v4370 = vpop.f32.mrf.mxu0
        %v4371 = vpop.f32.mrf.mxu0
        %v4372 = vadd.f32 0.0, %v4371
        %v4373 = vpop.f32.mrf.mxu0
        %4374 = vdwg.mxu0
        %v4375 = vpack.c.bf16 %v4316, %v4313
        %v4376 = vpack.c.bf16 %v4324, %v4321
        %v4377 = vpack.c.bf16 %v4332, %v4329
        %v4378 = vpack.c.bf16 %v4340, %v4337
        %v4379 = vpack.c.bf16 %v4348, %v4345
        %v4380 = vpack.c.bf16 %v4356, %v4353
        %v4381 = vpack.c.bf16 %v4364, %v4361
        %v4382 = vpack.c.bf16 %v4372, %v4369
        %v4391 = vunpack.c.l.b16 %v4375
        %v4392 = vunpack.c.h.b16 %v4375
        %v4393 = vunpack.c.l.b16 %v4376
        %v4394 = vunpack.c.h.b16 %v4376
        %v4395 = vunpack.c.l.b16 %v4377
        %v4396 = vunpack.c.h.b16 %v4377
        %v4397 = vunpack.c.l.b16 %v4378
        %v4398 = vunpack.c.h.b16 %v4378
        %v4399 = vunpack.c.l.b16 %v4379
        %v4400 = vunpack.c.h.b16 %v4379
        %v4401 = vunpack.c.l.b16 %v4380
        %v4402 = vunpack.c.h.b16 %v4380
        %v4403 = vunpack.c.l.b16 %v4381
        %v4404 = vunpack.c.h.b16 %v4381
        %v4405 = vunpack.c.l.b16 %v4382
        %v4406 = vunpack.c.h.b16 %v4382
        %v4407 = vpack.c.b16 %v4391, %v4391
        %v4408 = vpack.c.b16 %v4392, %v4392
        %v4409 = vpack.c.b16 %v4393, %v4393
        %v4410 = vpack.c.b16 %v4394, %v4394
        %v4411 = vpack.c.b16 %v4395, %v4395
        %v4412 = vpack.c.b16 %v4396, %v4396
        %v4413 = vpack.c.b16 %v4397, %v4397
        %v4414 = vpack.c.b16 %v4398, %v4398
        %v4415 = vpack.c.b16 %v4399, %v4399
        %v4416 = vpack.c.b16 %v4400, %v4400
        %v4417 = vpack.c.b16 %v4401, %v4401
        %v4418 = vpack.c.b16 %v4402, %v4402
        %v4419 = vpack.c.b16 %v4403, %v4403
        %v4420 = vpack.c.b16 %v4404, %v4404
        %v4421 = vpack.c.b16 %v4405, %v4405
        %v4422 = vpack.c.b16 %v4406, %v4406
        %4423 = vrot.lane.b32.xlu0 %v4407, 96
        %v4424 = vpop.permute.xlu0 %4423
        %4425 = vrot.lane.b32.xlu0 %v4408, 96
        %v4426 = vpop.permute.xlu0 %4425
        %4427 = vrot.lane.b32.xlu0 %v4409, 96
        %v4428 = vpop.permute.xlu0 %4427
        %4429 = vrot.lane.b32.xlu0 %v4410, 96
        %v4430 = vpop.permute.xlu0 %4429
        %4431 = vrot.lane.b32.xlu0 %v4411, 96
        %v4432 = vpop.permute.xlu0 %4431
        %4433 = vrot.lane.b32.xlu0 %v4412, 96
        %v4434 = vpop.permute.xlu0 %4433
        %4435 = vrot.lane.b32.xlu0 %v4413, 96
        %v4436 = vpop.permute.xlu0 %4435
        %4437 = vrot.lane.b32.xlu0 %v4414, 96
        %v4438 = vpop.permute.xlu0 %4437
        %4439 = vrot.lane.b32.xlu0 %v4415, 96
        %v4440 = vpop.permute.xlu0 %4439
        %4441 = vrot.lane.b32.xlu0 %v4416, 96
        %v4442 = vpop.permute.xlu0 %4441
        %4443 = vrot.lane.b32.xlu0 %v4417, 96
        %v4444 = vpop.permute.xlu0 %4443
        %4445 = vrot.lane.b32.xlu0 %v4418, 96
        %v4446 = vpop.permute.xlu0 %4445
        %4447 = vrot.lane.b32.xlu0 %v4419, 96
        %v4448 = vpop.permute.xlu0 %4447
        %4449 = vrot.lane.b32.xlu0 %v4420, 96
        %v4450 = vpop.permute.xlu0 %4449
        %4451 = vrot.lane.b32.xlu0 %v4421, 96
        %v4452 = vpop.permute.xlu0 %4451
        %4453 = vrot.lane.b32.xlu0 %v4422, 96
        %v4454 = vpop.permute.xlu0 %4453
        %vm4471 = vcmask 1044224
        %4472 = vst.msk [vmem:[#allocation2] sm:$0xf] %vm4471, %v4424
        %4473 = vst.msk [vmem:[#allocation2 + $0x4] sm:$0xf] %vm4471, %v4426
        %4474 = vst.msk [vmem:[#allocation2 + $0x8] sm:$0xf] %vm4471, %v4428
        %4475 = vst.msk [vmem:[#allocation2 + $0xc] sm:$0xf] %vm4471, %v4430
        %4476 = vst.msk [vmem:[#allocation2 + $0x10] sm:$0xf] %vm4471, %v4432
        %4477 = vst.msk [vmem:[#allocation2 + $0x14] sm:$0xf] %vm4471, %v4434
        %4478 = vst.msk [vmem:[#allocation2 + $0x18] sm:$0xf] %vm4471, %v4436
        %4479 = vst.msk [vmem:[#allocation2 + $0x1c] sm:$0xf] %vm4471, %v4438
        %4480 = vst.msk [vmem:[#allocation2 + $0x20] sm:$0xf] %vm4471, %v4440
        %4481 = vst.msk [vmem:[#allocation2 + $0x24] sm:$0xf] %vm4471, %v4442
        %4482 = vst.msk [vmem:[#allocation2 + $0x28] sm:$0xf] %vm4471, %v4444
        %4483 = vst.msk [vmem:[#allocation2 + $0x2c] sm:$0xf] %vm4471, %v4446
        %4484 = vst.msk [vmem:[#allocation2 + $0x30] sm:$0xf] %vm4471, %v4448
        %4485 = vst.msk [vmem:[#allocation2 + $0x34] sm:$0xf] %vm4471, %v4450
        %4486 = vst.msk [vmem:[#allocation2 + $0x38] sm:$0xf] %vm4471, %v4452
        %4487 = vst.msk [vmem:[#allocation2 + $0x3c] sm:$0xf] %vm4471, %v4454
        %v4488 = vld [vmem:[#allocation2] sm:$0xf]
        %v4489 = vld [vmem:[#allocation2 + $0x4] sm:$0xf]
        %v4490 = vld [vmem:[#allocation2 + $0x8] sm:$0xf]
        %v4491 = vld [vmem:[#allocation2 + $0xc] sm:$0xf]
        %v4492 = vld [vmem:[#allocation2 + $0x10] sm:$0xf]
        %v4493 = vld [vmem:[#allocation2 + $0x14] sm:$0xf]
        %v4494 = vld [vmem:[#allocation2 + $0x18] sm:$0xf]
        %v4495 = vld [vmem:[#allocation2 + $0x1c] sm:$0xf]
        %v4496 = vld [vmem:[#allocation2 + $0x20] sm:$0xf]
        %v4497 = vld [vmem:[#allocation2 + $0x24] sm:$0xf]
        %v4498 = vld [vmem:[#allocation2 + $0x28] sm:$0xf]
        %v4499 = vld [vmem:[#allocation2 + $0x2c] sm:$0xf]
        %v4500 = vld [vmem:[#allocation2 + $0x30] sm:$0xf]
        %v4501 = vld [vmem:[#allocation2 + $0x34] sm:$0xf]
        %v4502 = vld [vmem:[#allocation2 + $0x38] sm:$0xf]
        %v4503 = vld [vmem:[#allocation2 + $0x3c] sm:$0xf]
        %v4504 = vld [vmem:[#allocation8] sm:$0xf]
        %v4505 = vld [vmem:[#allocation8 + $0x4] sm:$0xf]
        %v4506 = vld [vmem:[#allocation8 + $0x8] sm:$0xf]
        %v4507 = vld [vmem:[#allocation8 + $0xc] sm:$0xf]
        %v4508 = vld [vmem:[#allocation8 + $0x10] sm:$0xf]
        %v4509 = vld [vmem:[#allocation8 + $0x14] sm:$0xf]
        %v4510 = vld [vmem:[#allocation8 + $0x18] sm:$0xf]
        %v4511 = vld [vmem:[#allocation8 + $0x1c] sm:$0xf]
        %v4512 = vld [vmem:[#allocation8 + $0x20] sm:$0xf]
        %v4513 = vld [vmem:[#allocation8 + $0x24] sm:$0xf]
        %v4514 = vld [vmem:[#allocation8 + $0x28] sm:$0xf]
        %v4515 = vld [vmem:[#allocation8 + $0x2c] sm:$0xf]
        %v4516 = vld [vmem:[#allocation8 + $0x30] sm:$0xf]
        %v4517 = vld [vmem:[#allocation8 + $0x34] sm:$0xf]
        %v4518 = vld [vmem:[#allocation8 + $0x38] sm:$0xf]
        %v4519 = vld [vmem:[#allocation8 + $0x3c] sm:$0xf]
        %v4521 = vlaneseq
        %v4522 = vshrl.u32 %v4521, 7
        %v4523 = vsub.s32 0, %v4522
        %v4524 = vrot.slane %v677, %v4523
        %v4542 = vunpack.c.l.b16 %v4488
        %v4543 = vunpack.c.l.b16 %v4489
        %v4544 = vunpack.c.l.b16 %v4490
        %v4545 = vunpack.c.l.b16 %v4491
        %v4546 = vunpack.c.l.b16 %v4492
        %v4547 = vunpack.c.l.b16 %v4493
        %v4548 = vunpack.c.l.b16 %v4494
        %v4549 = vunpack.c.l.b16 %v4495
        %v4550 = vunpack.c.l.b16 %v4496
        %v4551 = vunpack.c.l.b16 %v4497
        %v4552 = vunpack.c.l.b16 %v4498
        %v4553 = vunpack.c.l.b16 %v4499
        %v4554 = vunpack.c.l.b16 %v4500
        %v4555 = vunpack.c.l.b16 %v4501
        %v4556 = vunpack.c.l.b16 %v4502
        %v4557 = vunpack.c.l.b16 %v4503
        %v4558 = vpack.c.b16 %v4543, %v4542
        %v4559 = vpack.c.b16 %v4545, %v4544
        %v4560 = vpack.c.b16 %v4547, %v4546
        %v4561 = vpack.c.b16 %v4549, %v4548
        %v4562 = vpack.c.b16 %v4551, %v4550
        %v4563 = vpack.c.b16 %v4553, %v4552
        %v4564 = vpack.c.b16 %v4555, %v4554
        %v4565 = vpack.c.b16 %v4557, %v4556
        %v4590 = vunpack.c.l.b16 %v4504
        %v4591 = vunpack.c.l.b16 %v4505
        %v4592 = vunpack.c.l.b16 %v4506
        %v4593 = vunpack.c.l.b16 %v4507
        %v4594 = vunpack.c.l.b16 %v4508
        %v4595 = vunpack.c.l.b16 %v4509
        %v4596 = vunpack.c.l.b16 %v4510
        %v4597 = vunpack.c.l.b16 %v4511
        %v4598 = vunpack.c.l.b16 %v4512
        %v4599 = vunpack.c.l.b16 %v4513
        %v4600 = vunpack.c.l.b16 %v4514
        %v4601 = vunpack.c.l.b16 %v4515
        %v4602 = vunpack.c.l.b16 %v4516
        %v4603 = vunpack.c.l.b16 %v4517
        %v4604 = vunpack.c.l.b16 %v4518
        %v4605 = vunpack.c.l.b16 %v4519
        %v4606 = vpack.c.b16 %v4591, %v4590
        %v4607 = vpack.c.b16 %v4593, %v4592
        %v4608 = vpack.c.b16 %v4595, %v4594
        %v4609 = vpack.c.b16 %v4597, %v4596
        %v4610 = vpack.c.b16 %v4599, %v4598
        %v4611 = vpack.c.b16 %v4601, %v4600
        %v4612 = vpack.c.b16 %v4603, %v4602
        %v4613 = vpack.c.b16 %v4605, %v4604
        %4622 = vmatprep.subr.bf16.mxu0 0
        %4623 = vmatpush1.bf16.msra.mxu0 %v4613
        %4624 = vmatprep.subr.bf16.mxu0 0
        %4625 = vmatpush1.bf16.msra.mxu0 %v4612
        %4626 = vmatprep.subr.bf16.mxu0 0
        %4627 = vmatpush1.bf16.msra.mxu0 %v4611
        %4628 = vmatprep.subr.bf16.mxu0 0
        %4629 = vmatpush1.bf16.msra.mxu0 %v4610
        %4630 = vmatprep.subr.bf16.mxu0 0
        %4631 = vmatpush1.bf16.msra.mxu0 %v4609
        %4632 = vmatprep.subr.bf16.mxu0 0
        %4633 = vmatpush1.bf16.msra.mxu0 %v4608
        %4634 = vmatprep.subr.bf16.mxu0 0
        %4635 = vmatpush1.bf16.msra.mxu0 %v4607
        %4636 = vmatprep.subr.bf16.mxu0 0
        %4637 = vmatpush1.bf16.msra.mxu0 %v4606
        %4638 = vmatprep.subr.bf16.mxu0 0
        %4639 = vmatpush2.bf16.msra.mxu0 0
        %4640 = vmatprep.subr.bf16.mxu0 0
        %4641 = vmatpush2.bf16.msra.mxu0 0
        %4642 = vmatprep.subr.bf16.mxu0 0
        %4643 = vmatpush2.bf16.msra.mxu0 0
        %4644 = vmatprep.subr.bf16.mxu0 0
        %4645 = vmatpush2.bf16.msra.mxu0 0
        %4646 = vmatprep.subr.bf16.mxu0 0
        %4647 = vmatpush2.bf16.msra.mxu0 0
        %4648 = vmatprep.subr.bf16.mxu0 0
        %4649 = vmatpush2.bf16.msra.mxu0 0
        %4650 = vmatprep.subr.bf16.mxu0 0
        %4651 = vmatpush2.bf16.msra.mxu0 0
        %4652 = vmatprep.subr.bf16.mxu0 0
        %4653 = vmatpush2.bf16.msra.mxu0 0
        %4654 = vmatprep.mubr.bf16.mxu0 0
        %4655 = vmatmul.mubr.bf16.gmra.mxu0 %v4558
        %v4656 = vpop.f32.mrf.mxu0
        %v4657 = vadd.f32 %v4524, %v4656
        %v4658 = vpop.f32.mrf.mxu0
        %v4659 = vpop.f32.mrf.mxu0
        %v4660 = vadd.f32 %v4524, %v4659
        %v4661 = vpop.f32.mrf.mxu0
        %4662 = vmatprep.mubr.bf16.mxu0 0
        %4663 = vmatmul.mubr.bf16.gmra.mxu0 %v4559
        %v4664 = vpop.f32.mrf.mxu0
        %v4665 = vadd.f32 %v4524, %v4664
        %v4666 = vpop.f32.mrf.mxu0
        %v4667 = vpop.f32.mrf.mxu0
        %v4668 = vadd.f32 %v4524, %v4667
        %v4669 = vpop.f32.mrf.mxu0
        %4670 = vmatprep.mubr.bf16.mxu0 0
        %4671 = vmatmul.mubr.bf16.gmra.mxu0 %v4560
        %v4672 = vpop.f32.mrf.mxu0
        %v4673 = vadd.f32 %v4524, %v4672
        %v4674 = vpop.f32.mrf.mxu0
        %v4675 = vpop.f32.mrf.mxu0
        %v4676 = vadd.f32 %v4524, %v4675
        %v4677 = vpop.f32.mrf.mxu0
        %4678 = vmatprep.mubr.bf16.mxu0 0
        %4679 = vmatmul.mubr.bf16.gmra.mxu0 %v4561
        %v4680 = vpop.f32.mrf.mxu0
        %v4681 = vadd.f32 %v4524, %v4680
        %v4682 = vpop.f32.mrf.mxu0
        %v4683 = vpop.f32.mrf.mxu0
        %v4684 = vadd.f32 %v4524, %v4683
        %v4685 = vpop.f32.mrf.mxu0
        %4686 = vmatprep.mubr.bf16.mxu0 0
        %4687 = vmatmul.mubr.bf16.gmra.mxu0 %v4562
        %v4688 = vpop.f32.mrf.mxu0
        %v4689 = vadd.f32 %v4524, %v4688
        %v4690 = vpop.f32.mrf.mxu0
        %v4691 = vpop.f32.mrf.mxu0
        %v4692 = vadd.f32 %v4524, %v4691
        %v4693 = vpop.f32.mrf.mxu0
        %4694 = vmatprep.mubr.bf16.mxu0 0
        %4695 = vmatmul.mubr.bf16.gmra.mxu0 %v4563
        %v4696 = vpop.f32.mrf.mxu0
        %v4697 = vadd.f32 %v4524, %v4696
        %v4698 = vpop.f32.mrf.mxu0
        %v4699 = vpop.f32.mrf.mxu0
        %v4700 = vadd.f32 %v4524, %v4699
        %v4701 = vpop.f32.mrf.mxu0
        %4702 = vmatprep.mubr.bf16.mxu0 0
        %4703 = vmatmul.mubr.bf16.gmra.mxu0 %v4564
        %v4704 = vpop.f32.mrf.mxu0
        %v4705 = vadd.f32 %v4524, %v4704
        %v4706 = vpop.f32.mrf.mxu0
        %v4707 = vpop.f32.mrf.mxu0
        %v4708 = vadd.f32 %v4524, %v4707
        %v4709 = vpop.f32.mrf.mxu0
        %4710 = vmatprep.mubr.bf16.mxu0 0
        %4711 = vmatmul.mubr.bf16.gmra.mxu0 %v4565
        %v4712 = vpop.f32.mrf.mxu0
        %v4713 = vadd.f32 %v4524, %v4712
        %v4714 = vpop.f32.mrf.mxu0
        %v4715 = vpop.f32.mrf.mxu0
        %v4716 = vadd.f32 %v4524, %v4715
        %v4717 = vpop.f32.mrf.mxu0
        %4718 = vdwg.mxu0
        %v4719 = vadd.f32 %v657, %v4657
        %v4720 = vadd.f32 %v658, %v4660
        %v4721 = vadd.f32 %v659, %v4665
        %v4722 = vadd.f32 %v660, %v4668
        %v4723 = vadd.f32 %v661, %v4673
        %v4724 = vadd.f32 %v662, %v4676
        %v4725 = vadd.f32 %v663, %v4681
        %v4726 = vadd.f32 %v664, %v4684
        %v4727 = vadd.f32 %v665, %v4689
        %v4728 = vadd.f32 %v666, %v4692
        %v4729 = vadd.f32 %v667, %v4697
        %v4730 = vadd.f32 %v668, %v4700
        %v4731 = vadd.f32 %v669, %v4705
        %v4732 = vadd.f32 %v670, %v4708
        %v4733 = vadd.f32 %v671, %v4713
        %v4734 = vadd.f32 %v672, %v4716
        %4735 = vadd.xlane.f32.xlu0 %v4719
        %v4736 = vpop.xlane.xlu0 %4735
        %4737 = vadd.xlane.f32.xlu0 %v4720
        %v4738 = vpop.xlane.xlu0 %4737
        %4739 = vadd.xlane.f32.xlu0 %v4721
        %v4740 = vpop.xlane.xlu0 %4739
        %4741 = vadd.xlane.f32.xlu0 %v4722
        %v4742 = vpop.xlane.xlu0 %4741
        %4743 = vadd.xlane.f32.xlu0 %v4723
        %v4744 = vpop.xlane.xlu0 %4743
        %4745 = vadd.xlane.f32.xlu0 %v4724
        %v4746 = vpop.xlane.xlu0 %4745
        %4747 = vadd.xlane.f32.xlu0 %v4725
        %v4748 = vpop.xlane.xlu0 %4747
        %4749 = vadd.xlane.f32.xlu0 %v4726
        %v4750 = vpop.xlane.xlu0 %4749
        %4751 = vadd.xlane.f32.xlu0 %v4727
        %v4752 = vpop.xlane.xlu0 %4751
        %4753 = vadd.xlane.f32.xlu0 %v4728
        %v4754 = vpop.xlane.xlu0 %4753
        %4755 = vadd.xlane.f32.xlu0 %v4729
        %v4756 = vpop.xlane.xlu0 %4755
        %4757 = vadd.xlane.f32.xlu0 %v4730
        %v4758 = vpop.xlane.xlu0 %4757
        %4759 = vadd.xlane.f32.xlu0 %v4731
        %v4760 = vpop.xlane.xlu0 %4759
        %4761 = vadd.xlane.f32.xlu0 %v4732
        %v4762 = vpop.xlane.xlu0 %4761
        %4763 = vadd.xlane.f32.xlu0 %v4733
        %v4764 = vpop.xlane.xlu0 %4763
        %4765 = vadd.xlane.f32.xlu0 %v4734
        %v4766 = vpop.xlane.xlu0 %4765
        %v4767 = vmul.f32 %v4736, %v776
        %v4768 = vmul.f32 %v4738, %v776
        %v4769 = vmul.f32 %v4740, %v776
        %v4770 = vmul.f32 %v4742, %v776
        %v4771 = vmul.f32 %v4744, %v776
        %v4772 = vmul.f32 %v4746, %v776
        %v4773 = vmul.f32 %v4748, %v776
        %v4774 = vmul.f32 %v4750, %v776
        %v4775 = vmul.f32 %v4752, %v776
        %v4776 = vmul.f32 %v4754, %v776
        %v4777 = vmul.f32 %v4756, %v776
        %v4778 = vmul.f32 %v4758, %v776
        %v4779 = vmul.f32 %v4760, %v776
        %v4780 = vmul.f32 %v4762, %v776
        %v4781 = vmul.f32 %v4764, %v776
        %v4782 = vmul.f32 %v4766, %v776
        %v4783 = vsub.f32 %v4719, %v4767
        %v4784 = vsub.f32 %v4720, %v4768
        %v4785 = vsub.f32 %v4721, %v4769
        %v4786 = vsub.f32 %v4722, %v4770
        %v4787 = vsub.f32 %v4723, %v4771
        %v4788 = vsub.f32 %v4724, %v4772
        %v4789 = vsub.f32 %v4725, %v4773
        %v4790 = vsub.f32 %v4726, %v4774
        %v4791 = vsub.f32 %v4727, %v4775
        %v4792 = vsub.f32 %v4728, %v4776
        %v4793 = vsub.f32 %v4729, %v4777
        %v4794 = vsub.f32 %v4730, %v4778
        %v4795 = vsub.f32 %v4731, %v4779
        %v4796 = vsub.f32 %v4732, %v4780
        %v4797 = vsub.f32 %v4733, %v4781
        %v4798 = vsub.f32 %v4734, %v4782
        %v4799 = vmul.f32 %v4783, %v4783
        %v4800 = vmul.f32 %v4784, %v4784
        %v4801 = vmul.f32 %v4785, %v4785
        %v4802 = vmul.f32 %v4786, %v4786
        %v4803 = vmul.f32 %v4787, %v4787
        %v4804 = vmul.f32 %v4788, %v4788
        %v4805 = vmul.f32 %v4789, %v4789
        %v4806 = vmul.f32 %v4790, %v4790
        %v4807 = vmul.f32 %v4791, %v4791
        %v4808 = vmul.f32 %v4792, %v4792
        %v4809 = vmul.f32 %v4793, %v4793
        %v4810 = vmul.f32 %v4794, %v4794
        %v4811 = vmul.f32 %v4795, %v4795
        %v4812 = vmul.f32 %v4796, %v4796
        %v4813 = vmul.f32 %v4797, %v4797
        %v4814 = vmul.f32 %v4798, %v4798
        %4815 = vadd.xlane.f32.xlu0 %v4799
        %v4816 = vpop.xlane.xlu0 %4815
        %4817 = vadd.xlane.f32.xlu0 %v4800
        %v4818 = vpop.xlane.xlu0 %4817
        %4819 = vadd.xlane.f32.xlu0 %v4801
        %v4820 = vpop.xlane.xlu0 %4819
        %4821 = vadd.xlane.f32.xlu0 %v4802
        %v4822 = vpop.xlane.xlu0 %4821
        %4823 = vadd.xlane.f32.xlu0 %v4803
        %v4824 = vpop.xlane.xlu0 %4823
        %4825 = vadd.xlane.f32.xlu0 %v4804
        %v4826 = vpop.xlane.xlu0 %4825
        %4827 = vadd.xlane.f32.xlu0 %v4805
        %v4828 = vpop.xlane.xlu0 %4827
        %4829 = vadd.xlane.f32.xlu0 %v4806
        %v4830 = vpop.xlane.xlu0 %4829
        %4831 = vadd.xlane.f32.xlu0 %v4807
        %v4832 = vpop.xlane.xlu0 %4831
        %4833 = vadd.xlane.f32.xlu0 %v4808
        %v4834 = vpop.xlane.xlu0 %4833
        %4835 = vadd.xlane.f32.xlu0 %v4809
        %v4836 = vpop.xlane.xlu0 %4835
        %4837 = vadd.xlane.f32.xlu0 %v4810
        %v4838 = vpop.xlane.xlu0 %4837
        %4839 = vadd.xlane.f32.xlu0 %v4811
        %v4840 = vpop.xlane.xlu0 %4839
        %4841 = vadd.xlane.f32.xlu0 %v4812
        %v4842 = vpop.xlane.xlu0 %4841
        %4843 = vadd.xlane.f32.xlu0 %v4813
        %v4844 = vpop.xlane.xlu0 %4843
        %4845 = vadd.xlane.f32.xlu0 %v4814
        %v4846 = vpop.xlane.xlu0 %4845
        %v4847 = vmul.f32 %v4816, %v776
        %v4848 = vmul.f32 %v4818, %v776
        %v4849 = vmul.f32 %v4820, %v776
        %v4850 = vmul.f32 %v4822, %v776
        %v4851 = vmul.f32 %v4824, %v776
        %v4852 = vmul.f32 %v4826, %v776
        %v4853 = vmul.f32 %v4828, %v776
        %v4854 = vmul.f32 %v4830, %v776
        %v4855 = vmul.f32 %v4832, %v776
        %v4856 = vmul.f32 %v4834, %v776
        %v4857 = vmul.f32 %v4836, %v776
        %v4858 = vmul.f32 %v4838, %v776
        %v4859 = vmul.f32 %v4840, %v776
        %v4860 = vmul.f32 %v4842, %v776
        %v4861 = vmul.f32 %v4844, %v776
        %v4862 = vmul.f32 %v4846, %v776
        %v4863 = vadd.f32 %v4847, 1e-05
        %v4864 = vadd.f32 %v4848, 1e-05
        %v4865 = vadd.f32 %v4849, 1e-05
        %v4866 = vadd.f32 %v4850, 1e-05
        %v4867 = vadd.f32 %v4851, 1e-05
        %v4868 = vadd.f32 %v4852, 1e-05
        %v4869 = vadd.f32 %v4853, 1e-05
        %v4870 = vadd.f32 %v4854, 1e-05
        %v4871 = vadd.f32 %v4855, 1e-05
        %v4872 = vadd.f32 %v4856, 1e-05
        %v4873 = vadd.f32 %v4857, 1e-05
        %v4874 = vadd.f32 %v4858, 1e-05
        %v4875 = vadd.f32 %v4859, 1e-05
        %v4876 = vadd.f32 %v4860, 1e-05
        %v4877 = vadd.f32 %v4861, 1e-05
        %v4878 = vadd.f32 %v4862, 1e-05
        %v4879 = vrsqrt.pop %v4863
        %v4880 = vrsqrt.pop %v4864
        %v4881 = vrsqrt.pop %v4865
        %v4882 = vrsqrt.pop %v4866
        %v4883 = vrsqrt.pop %v4867
        %v4884 = vrsqrt.pop %v4868
        %v4885 = vrsqrt.pop %v4869
        %v4886 = vrsqrt.pop %v4870
        %v4887 = vrsqrt.pop %v4871
        %v4888 = vrsqrt.pop %v4872
        %v4889 = vrsqrt.pop %v4873
        %v4890 = vrsqrt.pop %v4874
        %v4891 = vrsqrt.pop %v4875
        %v4892 = vrsqrt.pop %v4876
        %v4893 = vrsqrt.pop %v4877
        %v4894 = vrsqrt.pop %v4878
        %v4895 = vmul.f32 %v4783, %v4879
        %v4896 = vmul.f32 %v4784, %v4880
        %v4897 = vmul.f32 %v4785, %v4881
        %v4898 = vmul.f32 %v4786, %v4882
        %v4899 = vmul.f32 %v4787, %v4883
        %v4900 = vmul.f32 %v4788, %v4884
        %v4901 = vmul.f32 %v4789, %v4885
        %v4902 = vmul.f32 %v4790, %v4886
        %v4903 = vmul.f32 %v4791, %v4887
        %v4904 = vmul.f32 %v4792, %v4888
        %v4905 = vmul.f32 %v4793, %v4889
        %v4906 = vmul.f32 %v4794, %v4890
        %v4907 = vmul.f32 %v4795, %v4891
        %v4908 = vmul.f32 %v4796, %v4892
        %v4909 = vmul.f32 %v4797, %v4893
        %v4910 = vmul.f32 %v4798, %v4894
        %v4912 = vlaneseq
        %v4913 = vshrl.u32 %v4912, 7
        %v4914 = vsub.s32 0, %v4913
        %v4915 = vrot.slane %v675, %v4914
        %v4917 = vmul.f32 %v4895, %v4915
        %v4918 = vmul.f32 %v4896, %v4915
        %v4919 = vmul.f32 %v4897, %v4915
        %v4920 = vmul.f32 %v4898, %v4915
        %v4921 = vmul.f32 %v4899, %v4915
        %v4922 = vmul.f32 %v4900, %v4915
        %v4923 = vmul.f32 %v4901, %v4915
        %v4924 = vmul.f32 %v4902, %v4915
        %v4925 = vmul.f32 %v4903, %v4915
        %v4926 = vmul.f32 %v4904, %v4915
        %v4927 = vmul.f32 %v4905, %v4915
        %v4928 = vmul.f32 %v4906, %v4915
        %v4929 = vmul.f32 %v4907, %v4915
        %v4930 = vmul.f32 %v4908, %v4915
        %v4931 = vmul.f32 %v4909, %v4915
        %v4932 = vmul.f32 %v4910, %v4915
        %v4934 = vlaneseq
        %v4935 = vshrl.u32 %v4934, 7
        %v4936 = vsub.s32 0, %v4935
        %v4937 = vrot.slane %v676, %v4936
        %v4939 = vadd.f32 %v4917, %v4937
        %v4940 = vadd.f32 %v4918, %v4937
        %v4941 = vadd.f32 %v4919, %v4937
        %v4942 = vadd.f32 %v4920, %v4937
        %v4943 = vadd.f32 %v4921, %v4937
        %v4944 = vadd.f32 %v4922, %v4937
        %v4945 = vadd.f32 %v4923, %v4937
        %v4946 = vadd.f32 %v4924, %v4937
        %v4947 = vadd.f32 %v4925, %v4937
        %v4948 = vadd.f32 %v4926, %v4937
        %v4949 = vadd.f32 %v4927, %v4937
        %v4950 = vadd.f32 %v4928, %v4937
        %v4951 = vadd.f32 %v4929, %v4937
        %v4952 = vadd.f32 %v4930, %v4937
        %v4953 = vadd.f32 %v4931, %v4937
        %v4954 = vadd.f32 %v4932, %v4937
        %v4955 = vpack.c.bf16 %v4940, %v4939
        %v4956 = vpack.c.bf16 %v4942, %v4941
        %v4957 = vpack.c.bf16 %v4944, %v4943
        %v4958 = vpack.c.bf16 %v4946, %v4945
        %v4959 = vpack.c.bf16 %v4948, %v4947
        %v4960 = vpack.c.bf16 %v4950, %v4949
        %v4961 = vpack.c.bf16 %v4952, %v4951
        %v4962 = vpack.c.bf16 %v4954, %v4953
        %v4963 = vld [vmem:[#allocation15] sm:$0xff]
        %v4964 = vld [vmem:[#allocation15 + $0x8] sm:$0xff]
        %v4965 = vld [vmem:[#allocation15 + $0x10] sm:$0xff]
        %v4966 = vld [vmem:[#allocation15 + $0x18] sm:$0xff]
        %v4967 = vld [vmem:[#allocation15 + $0x20] sm:$0xff]
        %v4968 = vld [vmem:[#allocation15 + $0x28] sm:$0xff]
        %v4969 = vld [vmem:[#allocation15 + $0x30] sm:$0xff]
        %v4970 = vld [vmem:[#allocation15 + $0x38] sm:$0xff]
        %v4971 = vld [vmem:[#allocation15 + $0x40] sm:$0xff]
        %v4972 = vld [vmem:[#allocation15 + $0x48] sm:$0xff]
        %v4973 = vld [vmem:[#allocation15 + $0x50] sm:$0xff]
        %v4974 = vld [vmem:[#allocation15 + $0x58] sm:$0xff]
        %v4975 = vld [vmem:[#allocation15 + $0x60] sm:$0xff]
        %v4976 = vld [vmem:[#allocation15 + $0x68] sm:$0xff]
        %v4977 = vld [vmem:[#allocation15 + $0x70] sm:$0xff]
        %v4978 = vld [vmem:[#allocation15 + $0x78] sm:$0xff]
        %v4980 = vlaneseq
        %v4981 = vshrl.u32 %v4980, 7
        %v4982 = vsub.s32 0, %v4981
        %v4983 = vrot.slane %v678, %v4982
        %v4984 = vlaneseq
        %v4985 = vshrl.u32 %v4984, 7
        %v4986 = vsub.s32 1, %v4985
        %v4987 = vrot.slane %v678, %v4986
        %v5006 = vunpack.c.l.b16 %v4963
        %v5007 = vunpack.c.h.b16 %v4963
        %v5008 = vunpack.c.l.b16 %v4964
        %v5009 = vunpack.c.h.b16 %v4964
        %v5010 = vunpack.c.l.b16 %v4965
        %v5011 = vunpack.c.h.b16 %v4965
        %v5012 = vunpack.c.l.b16 %v4966
        %v5013 = vunpack.c.h.b16 %v4966
        %v5014 = vunpack.c.l.b16 %v4967
        %v5015 = vunpack.c.h.b16 %v4967
        %v5016 = vunpack.c.l.b16 %v4968
        %v5017 = vunpack.c.h.b16 %v4968
        %v5018 = vunpack.c.l.b16 %v4969
        %v5019 = vunpack.c.h.b16 %v4969
        %v5020 = vunpack.c.l.b16 %v4970
        %v5021 = vunpack.c.h.b16 %v4970
        %v5022 = vunpack.c.l.b16 %v4971
        %v5023 = vunpack.c.h.b16 %v4971
        %v5024 = vunpack.c.l.b16 %v4972
        %v5025 = vunpack.c.h.b16 %v4972
        %v5026 = vunpack.c.l.b16 %v4973
        %v5027 = vunpack.c.h.b16 %v4973
        %v5028 = vunpack.c.l.b16 %v4974
        %v5029 = vunpack.c.h.b16 %v4974
        %v5030 = vunpack.c.l.b16 %v4975
        %v5031 = vunpack.c.h.b16 %v4975
        %v5032 = vunpack.c.l.b16 %v4976
        %v5033 = vunpack.c.h.b16 %v4976
        %v5034 = vunpack.c.l.b16 %v4977
        %v5035 = vunpack.c.h.b16 %v4977
        %v5036 = vunpack.c.l.b16 %v4978
        %v5037 = vunpack.c.h.b16 %v4978
        %v5038 = vpack.c.b16 %v5008, %v5006
        %v5039 = vpack.c.b16 %v5009, %v5007
        %v5040 = vpack.c.b16 %v5012, %v5010
        %v5041 = vpack.c.b16 %v5013, %v5011
        %v5042 = vpack.c.b16 %v5016, %v5014
        %v5043 = vpack.c.b16 %v5017, %v5015
        %v5044 = vpack.c.b16 %v5020, %v5018
        %v5045 = vpack.c.b16 %v5021, %v5019
        %v5046 = vpack.c.b16 %v5024, %v5022
        %v5047 = vpack.c.b16 %v5025, %v5023
        %v5048 = vpack.c.b16 %v5028, %v5026
        %v5049 = vpack.c.b16 %v5029, %v5027
        %v5050 = vpack.c.b16 %v5032, %v5030
        %v5051 = vpack.c.b16 %v5033, %v5031
        %v5052 = vpack.c.b16 %v5036, %v5034
        %v5053 = vpack.c.b16 %v5037, %v5035
        %5070 = vmatprep.subr.bf16.mxu0 %v5053
        %5071 = vmatpush1.bf16.msra.mxu0 %v5052
        %5072 = vmatprep.subr.bf16.mxu0 %v5051
        %5073 = vmatpush1.bf16.msra.mxu0 %v5050
        %5074 = vmatprep.subr.bf16.mxu0 %v5049
        %5075 = vmatpush1.bf16.msra.mxu0 %v5048
        %5076 = vmatprep.subr.bf16.mxu0 %v5047
        %5077 = vmatpush1.bf16.msra.mxu0 %v5046
        %5078 = vmatprep.subr.bf16.mxu0 %v5045
        %5079 = vmatpush1.bf16.msra.mxu0 %v5044
        %5080 = vmatprep.subr.bf16.mxu0 %v5043
        %5081 = vmatpush1.bf16.msra.mxu0 %v5042
        %5082 = vmatprep.subr.bf16.mxu0 %v5041
        %5083 = vmatpush1.bf16.msra.mxu0 %v5040
        %5084 = vmatprep.subr.bf16.mxu0 %v5039
        %5085 = vmatpush1.bf16.msra.mxu0 %v5038
        %5086 = vmatprep.subr.bf16.mxu0 0
        %5087 = vmatpush2.bf16.msra.mxu0 0
        %5088 = vmatprep.subr.bf16.mxu0 0
        %5089 = vmatpush2.bf16.msra.mxu0 0
        %5090 = vmatprep.subr.bf16.mxu0 0
        %5091 = vmatpush2.bf16.msra.mxu0 0
        %5092 = vmatprep.subr.bf16.mxu0 0
        %5093 = vmatpush2.bf16.msra.mxu0 0
        %5094 = vmatprep.subr.bf16.mxu0 0
        %5095 = vmatpush2.bf16.msra.mxu0 0
        %5096 = vmatprep.subr.bf16.mxu0 0
        %5097 = vmatpush2.bf16.msra.mxu0 0
        %5098 = vmatprep.subr.bf16.mxu0 0
        %5099 = vmatpush2.bf16.msra.mxu0 0
        %5100 = vmatprep.subr.bf16.mxu0 0
        %5101 = vmatpush2.bf16.msra.mxu0 0
        %5102 = vmatprep.mubr.bf16.mxu0 0
        %5103 = vmatmul.mubr.bf16.gmra.mxu0 %v4955
        %v5104 = vpop.f32.mrf.mxu0
        %v5105 = vadd.f32 %v4983, %v5104
        %v5106 = vpop.f32.mrf.mxu0
        %v5107 = vadd.f32 %v4987, %v5106
        %v5108 = vpop.f32.mrf.mxu0
        %v5109 = vadd.f32 %v4983, %v5108
        %v5110 = vpop.f32.mrf.mxu0
        %v5111 = vadd.f32 %v4987, %v5110
        %5112 = vmatprep.mubr.bf16.mxu0 0
        %5113 = vmatmul.mubr.bf16.gmra.mxu0 %v4956
        %v5114 = vpop.f32.mrf.mxu0
        %v5115 = vadd.f32 %v4983, %v5114
        %v5116 = vpop.f32.mrf.mxu0
        %v5117 = vadd.f32 %v4987, %v5116
        %v5118 = vpop.f32.mrf.mxu0
        %v5119 = vadd.f32 %v4983, %v5118
        %v5120 = vpop.f32.mrf.mxu0
        %v5121 = vadd.f32 %v4987, %v5120
        %5122 = vmatprep.mubr.bf16.mxu0 0
        %5123 = vmatmul.mubr.bf16.gmra.mxu0 %v4957
        %v5124 = vpop.f32.mrf.mxu0
        %v5125 = vadd.f32 %v4983, %v5124
        %v5126 = vpop.f32.mrf.mxu0
        %v5127 = vadd.f32 %v4987, %v5126
        %v5128 = vpop.f32.mrf.mxu0
        %v5129 = vadd.f32 %v4983, %v5128
        %v5130 = vpop.f32.mrf.mxu0
        %v5131 = vadd.f32 %v4987, %v5130
        %5132 = vmatprep.mubr.bf16.mxu0 0
        %5133 = vmatmul.mubr.bf16.gmra.mxu0 %v4958
        %v5134 = vpop.f32.mrf.mxu0
        %v5135 = vadd.f32 %v4983, %v5134
        %v5136 = vpop.f32.mrf.mxu0
        %v5137 = vadd.f32 %v4987, %v5136
        %v5138 = vpop.f32.mrf.mxu0
        %v5139 = vadd.f32 %v4983, %v5138
        %v5140 = vpop.f32.mrf.mxu0
        %v5141 = vadd.f32 %v4987, %v5140
        %5142 = vmatprep.mubr.bf16.mxu0 0
        %5143 = vmatmul.mubr.bf16.gmra.mxu0 %v4959
        %v5144 = vpop.f32.mrf.mxu0
        %v5145 = vadd.f32 %v4983, %v5144
        %v5146 = vpop.f32.mrf.mxu0
        %v5147 = vadd.f32 %v4987, %v5146
        %v5148 = vpop.f32.mrf.mxu0
        %v5149 = vadd.f32 %v4983, %v5148
        %v5150 = vpop.f32.mrf.mxu0
        %v5151 = vadd.f32 %v4987, %v5150
        %5152 = vmatprep.mubr.bf16.mxu0 0
        %5153 = vmatmul.mubr.bf16.gmra.mxu0 %v4960
        %v5154 = vpop.f32.mrf.mxu0
        %v5155 = vadd.f32 %v4983, %v5154
        %v5156 = vpop.f32.mrf.mxu0
        %v5157 = vadd.f32 %v4987, %v5156
        %v5158 = vpop.f32.mrf.mxu0
        %v5159 = vadd.f32 %v4983, %v5158
        %v5160 = vpop.f32.mrf.mxu0
        %v5161 = vadd.f32 %v4987, %v5160
        %5162 = vmatprep.mubr.bf16.mxu0 0
        %5163 = vmatmul.mubr.bf16.gmra.mxu0 %v4961
        %v5164 = vpop.f32.mrf.mxu0
        %v5165 = vadd.f32 %v4983, %v5164
        %v5166 = vpop.f32.mrf.mxu0
        %v5167 = vadd.f32 %v4987, %v5166
        %v5168 = vpop.f32.mrf.mxu0
        %v5169 = vadd.f32 %v4983, %v5168
        %v5170 = vpop.f32.mrf.mxu0
        %v5171 = vadd.f32 %v4987, %v5170
        %5172 = vmatprep.mubr.bf16.mxu0 0
        %5173 = vmatmul.mubr.bf16.gmra.mxu0 %v4962
        %v5174 = vpop.f32.mrf.mxu0
        %v5175 = vadd.f32 %v4983, %v5174
        %v5176 = vpop.f32.mrf.mxu0
        %v5177 = vadd.f32 %v4987, %v5176
        %v5178 = vpop.f32.mrf.mxu0
        %v5179 = vadd.f32 %v4983, %v5178
        %v5180 = vpop.f32.mrf.mxu0
        %v5181 = vadd.f32 %v4987, %v5180
        %5182 = vdwg.mxu0
        %v5183 = vmul.f32 %v5105, 0.5
        %v5184 = vmul.f32 %v5107, 0.5
        %v5185 = vmul.f32 %v5109, 0.5
        %v5186 = vmul.f32 %v5111, 0.5
        %v5187 = vmul.f32 %v5115, 0.5
        %v5188 = vmul.f32 %v5117, 0.5
        %v5189 = vmul.f32 %v5119, 0.5
        %v5190 = vmul.f32 %v5121, 0.5
        %v5191 = vmul.f32 %v5125, 0.5
        %v5192 = vmul.f32 %v5127, 0.5
        %v5193 = vmul.f32 %v5129, 0.5
        %v5194 = vmul.f32 %v5131, 0.5
        %v5195 = vmul.f32 %v5135, 0.5
        %v5196 = vmul.f32 %v5137, 0.5
        %v5197 = vmul.f32 %v5139, 0.5
        %v5198 = vmul.f32 %v5141, 0.5
        %v5199 = vmul.f32 %v5145, 0.5
        %v5200 = vmul.f32 %v5147, 0.5
        %v5201 = vmul.f32 %v5149, 0.5
        %v5202 = vmul.f32 %v5151, 0.5
        %v5203 = vmul.f32 %v5155, 0.5
        %v5204 = vmul.f32 %v5157, 0.5
        %v5205 = vmul.f32 %v5159, 0.5
        %v5206 = vmul.f32 %v5161, 0.5
        %v5207 = vmul.f32 %v5165, 0.5
        %v5208 = vmul.f32 %v5167, 0.5
        %v5209 = vmul.f32 %v5169, 0.5
        %v5210 = vmul.f32 %v5171, 0.5
        %v5211 = vmul.f32 %v5175, 0.5
        %v5212 = vmul.f32 %v5177, 0.5
        %v5213 = vmul.f32 %v5179, 0.5
        %v5214 = vmul.f32 %v5181, 0.5
        %v5215 = vmul.f32 %v5105, 0.70710677
        %v5216 = vmul.f32 %v5107, 0.70710677
        %v5217 = vmul.f32 %v5109, 0.70710677
        %v5218 = vmul.f32 %v5111, 0.70710677
        %v5219 = vmul.f32 %v5115, 0.70710677
        %v5220 = vmul.f32 %v5117, 0.70710677
        %v5221 = vmul.f32 %v5119, 0.70710677
        %v5222 = vmul.f32 %v5121, 0.70710677
        %v5223 = vmul.f32 %v5125, 0.70710677
        %v5224 = vmul.f32 %v5127, 0.70710677
        %v5225 = vmul.f32 %v5129, 0.70710677
        %v5226 = vmul.f32 %v5131, 0.70710677
        %v5227 = vmul.f32 %v5135, 0.70710677
        %v5228 = vmul.f32 %v5137, 0.70710677
        %v5229 = vmul.f32 %v5139, 0.70710677
        %v5230 = vmul.f32 %v5141, 0.70710677
        %v5231 = vmul.f32 %v5145, 0.70710677
        %v5232 = vmul.f32 %v5147, 0.70710677
        %v5233 = vmul.f32 %v5149, 0.70710677
        %v5234 = vmul.f32 %v5151, 0.70710677
        %v5235 = vmul.f32 %v5155, 0.70710677
        %v5236 = vmul.f32 %v5157, 0.70710677
        %v5237 = vmul.f32 %v5159, 0.70710677
        %v5238 = vmul.f32 %v5161, 0.70710677
        %v5239 = vmul.f32 %v5165, 0.70710677
        %v5240 = vmul.f32 %v5167, 0.70710677
        %v5241 = vmul.f32 %v5169, 0.70710677
        %v5242 = vmul.f32 %v5171, 0.70710677
        %v5243 = vmul.f32 %v5175, 0.70710677
        %v5244 = vmul.f32 %v5177, 0.70710677
        %v5245 = vmul.f32 %v5179, 0.70710677
        %v5246 = vmul.f32 %v5181, 0.70710677
        %vm5247 = vcmp.ge.f32.partialorder %v5215, 0.0
        %vm5248 = vcmp.ge.f32.partialorder %v5216, 0.0
        %vm5249 = vcmp.ge.f32.partialorder %v5217, 0.0
        %vm5250 = vcmp.ge.f32.partialorder %v5218, 0.0
        %vm5251 = vcmp.ge.f32.partialorder %v5219, 0.0
        %vm5252 = vcmp.ge.f32.partialorder %v5220, 0.0
        %vm5253 = vcmp.ge.f32.partialorder %v5221, 0.0
        %vm5254 = vcmp.ge.f32.partialorder %v5222, 0.0
        %vm5255 = vcmp.ge.f32.partialorder %v5223, 0.0
        %vm5256 = vcmp.ge.f32.partialorder %v5224, 0.0
        %vm5257 = vcmp.ge.f32.partialorder %v5225, 0.0
        %vm5258 = vcmp.ge.f32.partialorder %v5226, 0.0
        %vm5259 = vcmp.ge.f32.partialorder %v5227, 0.0
        %vm5260 = vcmp.ge.f32.partialorder %v5228, 0.0
        %vm5261 = vcmp.ge.f32.partialorder %v5229, 0.0
        %vm5262 = vcmp.ge.f32.partialorder %v5230, 0.0
        %vm5263 = vcmp.ge.f32.partialorder %v5231, 0.0
        %vm5264 = vcmp.ge.f32.partialorder %v5232, 0.0
        %vm5265 = vcmp.ge.f32.partialorder %v5233, 0.0
        %vm5266 = vcmp.ge.f32.partialorder %v5234, 0.0
        %vm5267 = vcmp.ge.f32.partialorder %v5235, 0.0
        %vm5268 = vcmp.ge.f32.partialorder %v5236, 0.0
        %vm5269 = vcmp.ge.f32.partialorder %v5237, 0.0
        %vm5270 = vcmp.ge.f32.partialorder %v5238, 0.0
        %vm5271 = vcmp.ge.f32.partialorder %v5239, 0.0
        %vm5272 = vcmp.ge.f32.partialorder %v5240, 0.0
        %vm5273 = vcmp.ge.f32.partialorder %v5241, 0.0
        %vm5274 = vcmp.ge.f32.partialorder %v5242, 0.0
        %vm5275 = vcmp.ge.f32.partialorder %v5243, 0.0
        %vm5276 = vcmp.ge.f32.partialorder %v5244, 0.0
        %vm5277 = vcmp.ge.f32.partialorder %v5245, 0.0
        %vm5278 = vcmp.ge.f32.partialorder %v5246, 0.0
        %v5279 = vsel %vm5247, 1.0, -1.0
        %v5280 = vsel %vm5248, 1.0, -1.0
        %v5281 = vsel %vm5249, 1.0, -1.0
        %v5282 = vsel %vm5250, 1.0, -1.0
        %v5283 = vsel %vm5251, 1.0, -1.0
        %v5284 = vsel %vm5252, 1.0, -1.0
        %v5285 = vsel %vm5253, 1.0, -1.0
        %v5286 = vsel %vm5254, 1.0, -1.0
        %v5287 = vsel %vm5255, 1.0, -1.0
        %v5288 = vsel %vm5256, 1.0, -1.0
        %v5289 = vsel %vm5257, 1.0, -1.0
        %v5290 = vsel %vm5258, 1.0, -1.0
        %v5291 = vsel %vm5259, 1.0, -1.0
        %v5292 = vsel %vm5260, 1.0, -1.0
        %v5293 = vsel %vm5261, 1.0, -1.0
        %v5294 = vsel %vm5262, 1.0, -1.0
        %v5295 = vsel %vm5263, 1.0, -1.0
        %v5296 = vsel %vm5264, 1.0, -1.0
        %v5297 = vsel %vm5265, 1.0, -1.0
        %v5298 = vsel %vm5266, 1.0, -1.0
        %v5299 = vsel %vm5267, 1.0, -1.0
        %v5300 = vsel %vm5268, 1.0, -1.0
        %v5301 = vsel %vm5269, 1.0, -1.0
        %v5302 = vsel %vm5270, 1.0, -1.0
        %v5303 = vsel %vm5271, 1.0, -1.0
        %v5304 = vsel %vm5272, 1.0, -1.0
        %v5305 = vsel %vm5273, 1.0, -1.0
        %v5306 = vsel %vm5274, 1.0, -1.0
        %v5307 = vsel %vm5275, 1.0, -1.0
        %v5308 = vsel %vm5276, 1.0, -1.0
        %v5309 = vsel %vm5277, 1.0, -1.0
        %v5310 = vsel %vm5278, 1.0, -1.0
        %v5311 = vand.u32 2147483647, %v5215
        %v5312 = vand.u32 2147483647, %v5216
        %v5313 = vand.u32 2147483647, %v5217
        %v5314 = vand.u32 2147483647, %v5218
        %v5315 = vand.u32 2147483647, %v5219
        %v5316 = vand.u32 2147483647, %v5220
        %v5317 = vand.u32 2147483647, %v5221
        %v5318 = vand.u32 2147483647, %v5222
        %v5319 = vand.u32 2147483647, %v5223
        %v5320 = vand.u32 2147483647, %v5224
        %v5321 = vand.u32 2147483647, %v5225
        %v5322 = vand.u32 2147483647, %v5226
        %v5323 = vand.u32 2147483647, %v5227
        %v5324 = vand.u32 2147483647, %v5228
        %v5325 = vand.u32 2147483647, %v5229
        %v5326 = vand.u32 2147483647, %v5230
        %v5327 = vand.u32 2147483647, %v5231
        %v5328 = vand.u32 2147483647, %v5232
        %v5329 = vand.u32 2147483647, %v5233
        %v5330 = vand.u32 2147483647, %v5234
        %v5331 = vand.u32 2147483647, %v5235
        %v5332 = vand.u32 2147483647, %v5236
        %v5333 = vand.u32 2147483647, %v5237
        %v5334 = vand.u32 2147483647, %v5238
        %v5335 = vand.u32 2147483647, %v5239
        %v5336 = vand.u32 2147483647, %v5240
        %v5337 = vand.u32 2147483647, %v5241
        %v5338 = vand.u32 2147483647, %v5242
        %v5339 = vand.u32 2147483647, %v5243
        %v5340 = vand.u32 2147483647, %v5244
        %v5341 = vand.u32 2147483647, %v5245
        %v5342 = vand.u32 2147483647, %v5246
        %v5343 = vmul.f32 %v5311, 0.3275911
        %v5344 = vmul.f32 %v5312, 0.3275911
        %v5345 = vmul.f32 %v5313, 0.3275911
        %v5346 = vmul.f32 %v5314, 0.3275911
        %v5347 = vmul.f32 %v5315, 0.3275911
        %v5348 = vmul.f32 %v5316, 0.3275911
        %v5349 = vmul.f32 %v5317, 0.3275911
        %v5350 = vmul.f32 %v5318, 0.3275911
        %v5351 = vmul.f32 %v5319, 0.3275911
        %v5352 = vmul.f32 %v5320, 0.3275911
        %v5353 = vmul.f32 %v5321, 0.3275911
        %v5354 = vmul.f32 %v5322, 0.3275911
        %v5355 = vmul.f32 %v5323, 0.3275911
        %v5356 = vmul.f32 %v5324, 0.3275911
        %v5357 = vmul.f32 %v5325, 0.3275911
        %v5358 = vmul.f32 %v5326, 0.3275911
        %v5359 = vmul.f32 %v5327, 0.3275911
        %v5360 = vmul.f32 %v5328, 0.3275911
        %v5361 = vmul.f32 %v5329, 0.3275911
        %v5362 = vmul.f32 %v5330, 0.3275911
        %v5363 = vmul.f32 %v5331, 0.3275911
        %v5364 = vmul.f32 %v5332, 0.3275911
        %v5365 = vmul.f32 %v5333, 0.3275911
        %v5366 = vmul.f32 %v5334, 0.3275911
        %v5367 = vmul.f32 %v5335, 0.3275911
        %v5368 = vmul.f32 %v5336, 0.3275911
        %v5369 = vmul.f32 %v5337, 0.3275911
        %v5370 = vmul.f32 %v5338, 0.3275911
        %v5371 = vmul.f32 %v5339, 0.3275911
        %v5372 = vmul.f32 %v5340, 0.3275911
        %v5373 = vmul.f32 %v5341, 0.3275911
        %v5374 = vmul.f32 %v5342, 0.3275911
        %v5375 = vadd.f32 %v5343, 1.0
        %v5376 = vadd.f32 %v5344, 1.0
        %v5377 = vadd.f32 %v5345, 1.0
        %v5378 = vadd.f32 %v5346, 1.0
        %v5379 = vadd.f32 %v5347, 1.0
        %v5380 = vadd.f32 %v5348, 1.0
        %v5381 = vadd.f32 %v5349, 1.0
        %v5382 = vadd.f32 %v5350, 1.0
        %v5383 = vadd.f32 %v5351, 1.0
        %v5384 = vadd.f32 %v5352, 1.0
        %v5385 = vadd.f32 %v5353, 1.0
        %v5386 = vadd.f32 %v5354, 1.0
        %v5387 = vadd.f32 %v5355, 1.0
        %v5388 = vadd.f32 %v5356, 1.0
        %v5389 = vadd.f32 %v5357, 1.0
        %v5390 = vadd.f32 %v5358, 1.0
        %v5391 = vadd.f32 %v5359, 1.0
        %v5392 = vadd.f32 %v5360, 1.0
        %v5393 = vadd.f32 %v5361, 1.0
        %v5394 = vadd.f32 %v5362, 1.0
        %v5395 = vadd.f32 %v5363, 1.0
        %v5396 = vadd.f32 %v5364, 1.0
        %v5397 = vadd.f32 %v5365, 1.0
        %v5398 = vadd.f32 %v5366, 1.0
        %v5399 = vadd.f32 %v5367, 1.0
        %v5400 = vadd.f32 %v5368, 1.0
        %v5401 = vadd.f32 %v5369, 1.0
        %v5402 = vadd.f32 %v5370, 1.0
        %v5403 = vadd.f32 %v5371, 1.0
        %v5404 = vadd.f32 %v5372, 1.0
        %v5405 = vadd.f32 %v5373, 1.0
        %v5406 = vadd.f32 %v5374, 1.0
        %v5407 = vrcp.pop %v5375
        %v5408 = vmul.f32 1.0, %v5407
        %v5409 = vrcp.pop %v5376
        %v5410 = vmul.f32 1.0, %v5409
        %v5411 = vrcp.pop %v5377
        %v5412 = vmul.f32 1.0, %v5411
        %v5413 = vrcp.pop %v5378
        %v5414 = vmul.f32 1.0, %v5413
        %v5415 = vrcp.pop %v5379
        %v5416 = vmul.f32 1.0, %v5415
        %v5417 = vrcp.pop %v5380
        %v5418 = vmul.f32 1.0, %v5417
        %v5419 = vrcp.pop %v5381
        %v5420 = vmul.f32 1.0, %v5419
        %v5421 = vrcp.pop %v5382
        %v5422 = vmul.f32 1.0, %v5421
        %v5423 = vrcp.pop %v5383
        %v5424 = vmul.f32 1.0, %v5423
        %v5425 = vrcp.pop %v5384
        %v5426 = vmul.f32 1.0, %v5425
        %v5427 = vrcp.pop %v5385
        %v5428 = vmul.f32 1.0, %v5427
        %v5429 = vrcp.pop %v5386
        %v5430 = vmul.f32 1.0, %v5429
        %v5431 = vrcp.pop %v5387
        %v5432 = vmul.f32 1.0, %v5431
        %v5433 = vrcp.pop %v5388
        %v5434 = vmul.f32 1.0, %v5433
        %v5435 = vrcp.pop %v5389
        %v5436 = vmul.f32 1.0, %v5435
        %v5437 = vrcp.pop %v5390
        %v5438 = vmul.f32 1.0, %v5437
        %v5439 = vrcp.pop %v5391
        %v5440 = vmul.f32 1.0, %v5439
        %v5441 = vrcp.pop %v5392
        %v5442 = vmul.f32 1.0, %v5441
        %v5443 = vrcp.pop %v5393
        %v5444 = vmul.f32 1.0, %v5443
        %v5445 = vrcp.pop %v5394
        %v5446 = vmul.f32 1.0, %v5445
        %v5447 = vrcp.pop %v5395
        %v5448 = vmul.f32 1.0, %v5447
        %v5449 = vrcp.pop %v5396
        %v5450 = vmul.f32 1.0, %v5449
        %v5451 = vrcp.pop %v5397
        %v5452 = vmul.f32 1.0, %v5451
        %v5453 = vrcp.pop %v5398
        %v5454 = vmul.f32 1.0, %v5453
        %v5455 = vrcp.pop %v5399
        %v5456 = vmul.f32 1.0, %v5455
        %v5457 = vrcp.pop %v5400
        %v5458 = vmul.f32 1.0, %v5457
        %v5459 = vrcp.pop %v5401
        %v5460 = vmul.f32 1.0, %v5459
        %v5461 = vrcp.pop %v5402
        %v5462 = vmul.f32 1.0, %v5461
        %v5463 = vrcp.pop %v5403
        %v5464 = vmul.f32 1.0, %v5463
        %v5465 = vrcp.pop %v5404
        %v5466 = vmul.f32 1.0, %v5465
        %v5467 = vrcp.pop %v5405
        %v5468 = vmul.f32 1.0, %v5467
        %v5469 = vrcp.pop %v5406
        %v5470 = vmul.f32 1.0, %v5469
        %v5471 = vmul.f32 %v5408, 1.0614054
        %v5472 = vmul.f32 %v5410, 1.0614054
        %v5473 = vmul.f32 %v5412, 1.0614054
        %v5474 = vmul.f32 %v5414, 1.0614054
        %v5475 = vmul.f32 %v5416, 1.0614054
        %v5476 = vmul.f32 %v5418, 1.0614054
        %v5477 = vmul.f32 %v5420, 1.0614054
        %v5478 = vmul.f32 %v5422, 1.0614054
        %v5479 = vmul.f32 %v5424, 1.0614054
        %v5480 = vmul.f32 %v5426, 1.0614054
        %v5481 = vmul.f32 %v5428, 1.0614054
        %v5482 = vmul.f32 %v5430, 1.0614054
        %v5483 = vmul.f32 %v5432, 1.0614054
        %v5484 = vmul.f32 %v5434, 1.0614054
        %v5485 = vmul.f32 %v5436, 1.0614054
        %v5486 = vmul.f32 %v5438, 1.0614054
        %v5487 = vmul.f32 %v5440, 1.0614054
        %v5488 = vmul.f32 %v5442, 1.0614054
        %v5489 = vmul.f32 %v5444, 1.0614054
        %v5490 = vmul.f32 %v5446, 1.0614054
        %v5491 = vmul.f32 %v5448, 1.0614054
        %v5492 = vmul.f32 %v5450, 1.0614054
        %v5493 = vmul.f32 %v5452, 1.0614054
        %v5494 = vmul.f32 %v5454, 1.0614054
        %v5495 = vmul.f32 %v5456, 1.0614054
        %v5496 = vmul.f32 %v5458, 1.0614054
        %v5497 = vmul.f32 %v5460, 1.0614054
        %v5498 = vmul.f32 %v5462, 1.0614054
        %v5499 = vmul.f32 %v5464, 1.0614054
        %v5500 = vmul.f32 %v5466, 1.0614054
        %v5501 = vmul.f32 %v5468, 1.0614054
        %v5502 = vmul.f32 %v5470, 1.0614054
        %v5503 = vadd.f32 %v5471, -1.4531521
        %v5504 = vadd.f32 %v5472, -1.4531521
        %v5505 = vadd.f32 %v5473, -1.4531521
        %v5506 = vadd.f32 %v5474, -1.4531521
        %v5507 = vadd.f32 %v5475, -1.4531521
        %v5508 = vadd.f32 %v5476, -1.4531521
        %v5509 = vadd.f32 %v5477, -1.4531521
        %v5510 = vadd.f32 %v5478, -1.4531521
        %v5511 = vadd.f32 %v5479, -1.4531521
        %v5512 = vadd.f32 %v5480, -1.4531521
        %v5513 = vadd.f32 %v5481, -1.4531521
        %v5514 = vadd.f32 %v5482, -1.4531521
        %v5515 = vadd.f32 %v5483, -1.4531521
        %v5516 = vadd.f32 %v5484, -1.4531521
        %v5517 = vadd.f32 %v5485, -1.4531521
        %v5518 = vadd.f32 %v5486, -1.4531521
        %v5519 = vadd.f32 %v5487, -1.4531521
        %v5520 = vadd.f32 %v5488, -1.4531521
        %v5521 = vadd.f32 %v5489, -1.4531521
        %v5522 = vadd.f32 %v5490, -1.4531521
        %v5523 = vadd.f32 %v5491, -1.4531521
        %v5524 = vadd.f32 %v5492, -1.4531521
        %v5525 = vadd.f32 %v5493, -1.4531521
        %v5526 = vadd.f32 %v5494, -1.4531521
        %v5527 = vadd.f32 %v5495, -1.4531521
        %v5528 = vadd.f32 %v5496, -1.4531521
        %v5529 = vadd.f32 %v5497, -1.4531521
        %v5530 = vadd.f32 %v5498, -1.4531521
        %v5531 = vadd.f32 %v5499, -1.4531521
        %v5532 = vadd.f32 %v5500, -1.4531521
        %v5533 = vadd.f32 %v5501, -1.4531521
        %v5534 = vadd.f32 %v5502, -1.4531521
        %v5535 = vmul.f32 %v5503, %v5408
        %v5536 = vmul.f32 %v5504, %v5410
        %v5537 = vmul.f32 %v5505, %v5412
        %v5538 = vmul.f32 %v5506, %v5414
        %v5539 = vmul.f32 %v5507, %v5416
        %v5540 = vmul.f32 %v5508, %v5418
        %v5541 = vmul.f32 %v5509, %v5420
        %v5542 = vmul.f32 %v5510, %v5422
        %v5543 = vmul.f32 %v5511, %v5424
        %v5544 = vmul.f32 %v5512, %v5426
        %v5545 = vmul.f32 %v5513, %v5428
        %v5546 = vmul.f32 %v5514, %v5430
        %v5547 = vmul.f32 %v5515, %v5432
        %v5548 = vmul.f32 %v5516, %v5434
        %v5549 = vmul.f32 %v5517, %v5436
        %v5550 = vmul.f32 %v5518, %v5438
        %v5551 = vmul.f32 %v5519, %v5440
        %v5552 = vmul.f32 %v5520, %v5442
        %v5553 = vmul.f32 %v5521, %v5444
        %v5554 = vmul.f32 %v5522, %v5446
        %v5555 = vmul.f32 %v5523, %v5448
        %v5556 = vmul.f32 %v5524, %v5450
        %v5557 = vmul.f32 %v5525, %v5452
        %v5558 = vmul.f32 %v5526, %v5454
        %v5559 = vmul.f32 %v5527, %v5456
        %v5560 = vmul.f32 %v5528, %v5458
        %v5561 = vmul.f32 %v5529, %v5460
        %v5562 = vmul.f32 %v5530, %v5462
        %v5563 = vmul.f32 %v5531, %v5464
        %v5564 = vmul.f32 %v5532, %v5466
        %v5565 = vmul.f32 %v5533, %v5468
        %v5566 = vmul.f32 %v5534, %v5470
        %v5567 = vadd.f32 %v5535, 1.4214138
        %v5568 = vadd.f32 %v5536, 1.4214138
        %v5569 = vadd.f32 %v5537, 1.4214138
        %v5570 = vadd.f32 %v5538, 1.4214138
        %v5571 = vadd.f32 %v5539, 1.4214138
        %v5572 = vadd.f32 %v5540, 1.4214138
        %v5573 = vadd.f32 %v5541, 1.4214138
        %v5574 = vadd.f32 %v5542, 1.4214138
        %v5575 = vadd.f32 %v5543, 1.4214138
        %v5576 = vadd.f32 %v5544, 1.4214138
        %v5577 = vadd.f32 %v5545, 1.4214138
        %v5578 = vadd.f32 %v5546, 1.4214138
        %v5579 = vadd.f32 %v5547, 1.4214138
        %v5580 = vadd.f32 %v5548, 1.4214138
        %v5581 = vadd.f32 %v5549, 1.4214138
        %v5582 = vadd.f32 %v5550, 1.4214138
        %v5583 = vadd.f32 %v5551, 1.4214138
        %v5584 = vadd.f32 %v5552, 1.4214138
        %v5585 = vadd.f32 %v5553, 1.4214138
        %v5586 = vadd.f32 %v5554, 1.4214138
        %v5587 = vadd.f32 %v5555, 1.4214138
        %v5588 = vadd.f32 %v5556, 1.4214138
        %v5589 = vadd.f32 %v5557, 1.4214138
        %v5590 = vadd.f32 %v5558, 1.4214138
        %v5591 = vadd.f32 %v5559, 1.4214138
        %v5592 = vadd.f32 %v5560, 1.4214138
        %v5593 = vadd.f32 %v5561, 1.4214138
        %v5594 = vadd.f32 %v5562, 1.4214138
        %v5595 = vadd.f32 %v5563, 1.4214138
        %v5596 = vadd.f32 %v5564, 1.4214138
        %v5597 = vadd.f32 %v5565, 1.4214138
        %v5598 = vadd.f32 %v5566, 1.4214138
        %v5599 = vmul.f32 %v5567, %v5408
        %v5600 = vmul.f32 %v5568, %v5410
        %v5601 = vmul.f32 %v5569, %v5412
        %v5602 = vmul.f32 %v5570, %v5414
        %v5603 = vmul.f32 %v5571, %v5416
        %v5604 = vmul.f32 %v5572, %v5418
        %v5605 = vmul.f32 %v5573, %v5420
        %v5606 = vmul.f32 %v5574, %v5422
        %v5607 = vmul.f32 %v5575, %v5424
        %v5608 = vmul.f32 %v5576, %v5426
        %v5609 = vmul.f32 %v5577, %v5428
        %v5610 = vmul.f32 %v5578, %v5430
        %v5611 = vmul.f32 %v5579, %v5432
        %v5612 = vmul.f32 %v5580, %v5434
        %v5613 = vmul.f32 %v5581, %v5436
        %v5614 = vmul.f32 %v5582, %v5438
        %v5615 = vmul.f32 %v5583, %v5440
        %v5616 = vmul.f32 %v5584, %v5442
        %v5617 = vmul.f32 %v5585, %v5444
        %v5618 = vmul.f32 %v5586, %v5446
        %v5619 = vmul.f32 %v5587, %v5448
        %v5620 = vmul.f32 %v5588, %v5450
        %v5621 = vmul.f32 %v5589, %v5452
        %v5622 = vmul.f32 %v5590, %v5454
        %v5623 = vmul.f32 %v5591, %v5456
        %v5624 = vmul.f32 %v5592, %v5458
        %v5625 = vmul.f32 %v5593, %v5460
        %v5626 = vmul.f32 %v5594, %v5462
        %v5627 = vmul.f32 %v5595, %v5464
        %v5628 = vmul.f32 %v5596, %v5466
        %v5629 = vmul.f32 %v5597, %v5468
        %v5630 = vmul.f32 %v5598, %v5470
        %v5631 = vadd.f32 %v5599, -0.28449672
        %v5632 = vadd.f32 %v5600, -0.28449672
        %v5633 = vadd.f32 %v5601, -0.28449672
        %v5634 = vadd.f32 %v5602, -0.28449672
        %v5635 = vadd.f32 %v5603, -0.28449672
        %v5636 = vadd.f32 %v5604, -0.28449672
        %v5637 = vadd.f32 %v5605, -0.28449672
        %v5638 = vadd.f32 %v5606, -0.28449672
        %v5639 = vadd.f32 %v5607, -0.28449672
        %v5640 = vadd.f32 %v5608, -0.28449672
        %v5641 = vadd.f32 %v5609, -0.28449672
        %v5642 = vadd.f32 %v5610, -0.28449672
        %v5643 = vadd.f32 %v5611, -0.28449672
        %v5644 = vadd.f32 %v5612, -0.28449672
        %v5645 = vadd.f32 %v5613, -0.28449672
        %v5646 = vadd.f32 %v5614, -0.28449672
        %v5647 = vadd.f32 %v5615, -0.28449672
        %v5648 = vadd.f32 %v5616, -0.28449672
        %v5649 = vadd.f32 %v5617, -0.28449672
        %v5650 = vadd.f32 %v5618, -0.28449672
        %v5651 = vadd.f32 %v5619, -0.28449672
        %v5652 = vadd.f32 %v5620, -0.28449672
        %v5653 = vadd.f32 %v5621, -0.28449672
        %v5654 = vadd.f32 %v5622, -0.28449672
        %v5655 = vadd.f32 %v5623, -0.28449672
        %v5656 = vadd.f32 %v5624, -0.28449672
        %v5657 = vadd.f32 %v5625, -0.28449672
        %v5658 = vadd.f32 %v5626, -0.28449672
        %v5659 = vadd.f32 %v5627, -0.28449672
        %v5660 = vadd.f32 %v5628, -0.28449672
        %v5661 = vadd.f32 %v5629, -0.28449672
        %v5662 = vadd.f32 %v5630, -0.28449672
        %v5663 = vmul.f32 %v5631, %v5408
        %v5664 = vmul.f32 %v5632, %v5410
        %v5665 = vmul.f32 %v5633, %v5412
        %v5666 = vmul.f32 %v5634, %v5414
        %v5667 = vmul.f32 %v5635, %v5416
        %v5668 = vmul.f32 %v5636, %v5418
        %v5669 = vmul.f32 %v5637, %v5420
        %v5670 = vmul.f32 %v5638, %v5422
        %v5671 = vmul.f32 %v5639, %v5424
        %v5672 = vmul.f32 %v5640, %v5426
        %v5673 = vmul.f32 %v5641, %v5428
        %v5674 = vmul.f32 %v5642, %v5430
        %v5675 = vmul.f32 %v5643, %v5432
        %v5676 = vmul.f32 %v5644, %v5434
        %v5677 = vmul.f32 %v5645, %v5436
        %v5678 = vmul.f32 %v5646, %v5438
        %v5679 = vmul.f32 %v5647, %v5440
        %v5680 = vmul.f32 %v5648, %v5442
        %v5681 = vmul.f32 %v5649, %v5444
        %v5682 = vmul.f32 %v5650, %v5446
        %v5683 = vmul.f32 %v5651, %v5448
        %v5684 = vmul.f32 %v5652, %v5450
        %v5685 = vmul.f32 %v5653, %v5452
        %v5686 = vmul.f32 %v5654, %v5454
        %v5687 = vmul.f32 %v5655, %v5456
        %v5688 = vmul.f32 %v5656, %v5458
        %v5689 = vmul.f32 %v5657, %v5460
        %v5690 = vmul.f32 %v5658, %v5462
        %v5691 = vmul.f32 %v5659, %v5464
        %v5692 = vmul.f32 %v5660, %v5466
        %v5693 = vmul.f32 %v5661, %v5468
        %v5694 = vmul.f32 %v5662, %v5470
        %v5695 = vadd.f32 %v5663, 0.2548296
        %v5696 = vadd.f32 %v5664, 0.2548296
        %v5697 = vadd.f32 %v5665, 0.2548296
        %v5698 = vadd.f32 %v5666, 0.2548296
        %v5699 = vadd.f32 %v5667, 0.2548296
        %v5700 = vadd.f32 %v5668, 0.2548296
        %v5701 = vadd.f32 %v5669, 0.2548296
        %v5702 = vadd.f32 %v5670, 0.2548296
        %v5703 = vadd.f32 %v5671, 0.2548296
        %v5704 = vadd.f32 %v5672, 0.2548296
        %v5705 = vadd.f32 %v5673, 0.2548296
        %v5706 = vadd.f32 %v5674, 0.2548296
        %v5707 = vadd.f32 %v5675, 0.2548296
        %v5708 = vadd.f32 %v5676, 0.2548296
        %v5709 = vadd.f32 %v5677, 0.2548296
        %v5710 = vadd.f32 %v5678, 0.2548296
        %v5711 = vadd.f32 %v5679, 0.2548296
        %v5712 = vadd.f32 %v5680, 0.2548296
        %v5713 = vadd.f32 %v5681, 0.2548296
        %v5714 = vadd.f32 %v5682, 0.2548296
        %v5715 = vadd.f32 %v5683, 0.2548296
        %v5716 = vadd.f32 %v5684, 0.2548296
        %v5717 = vadd.f32 %v5685, 0.2548296
        %v5718 = vadd.f32 %v5686, 0.2548296
        %v5719 = vadd.f32 %v5687, 0.2548296
        %v5720 = vadd.f32 %v5688, 0.2548296
        %v5721 = vadd.f32 %v5689, 0.2548296
        %v5722 = vadd.f32 %v5690, 0.2548296
        %v5723 = vadd.f32 %v5691, 0.2548296
        %v5724 = vadd.f32 %v5692, 0.2548296
        %v5725 = vadd.f32 %v5693, 0.2548296
        %v5726 = vadd.f32 %v5694, 0.2548296
        %v5727 = vmul.f32 %v5695, %v5408
        %v5728 = vmul.f32 %v5696, %v5410
        %v5729 = vmul.f32 %v5697, %v5412
        %v5730 = vmul.f32 %v5698, %v5414
        %v5731 = vmul.f32 %v5699, %v5416
        %v5732 = vmul.f32 %v5700, %v5418
        %v5733 = vmul.f32 %v5701, %v5420
        %v5734 = vmul.f32 %v5702, %v5422
        %v5735 = vmul.f32 %v5703, %v5424
        %v5736 = vmul.f32 %v5704, %v5426
        %v5737 = vmul.f32 %v5705, %v5428
        %v5738 = vmul.f32 %v5706, %v5430
        %v5739 = vmul.f32 %v5707, %v5432
        %v5740 = vmul.f32 %v5708, %v5434
        %v5741 = vmul.f32 %v5709, %v5436
        %v5742 = vmul.f32 %v5710, %v5438
        %v5743 = vmul.f32 %v5711, %v5440
        %v5744 = vmul.f32 %v5712, %v5442
        %v5745 = vmul.f32 %v5713, %v5444
        %v5746 = vmul.f32 %v5714, %v5446
        %v5747 = vmul.f32 %v5715, %v5448
        %v5748 = vmul.f32 %v5716, %v5450
        %v5749 = vmul.f32 %v5717, %v5452
        %v5750 = vmul.f32 %v5718, %v5454
        %v5751 = vmul.f32 %v5719, %v5456
        %v5752 = vmul.f32 %v5720, %v5458
        %v5753 = vmul.f32 %v5721, %v5460
        %v5754 = vmul.f32 %v5722, %v5462
        %v5755 = vmul.f32 %v5723, %v5464
        %v5756 = vmul.f32 %v5724, %v5466
        %v5757 = vmul.f32 %v5725, %v5468
        %v5758 = vmul.f32 %v5726, %v5470
        %v5759 = vsub.f32 0.0, %v5311
        %v5760 = vsub.f32 0.0, %v5312
        %v5761 = vsub.f32 0.0, %v5313
        %v5762 = vsub.f32 0.0, %v5314
        %v5763 = vsub.f32 0.0, %v5315
        %v5764 = vsub.f32 0.0, %v5316
        %v5765 = vsub.f32 0.0, %v5317
        %v5766 = vsub.f32 0.0, %v5318
        %v5767 = vsub.f32 0.0, %v5319
        %v5768 = vsub.f32 0.0, %v5320
        %v5769 = vsub.f32 0.0, %v5321
        %v5770 = vsub.f32 0.0, %v5322
        %v5771 = vsub.f32 0.0, %v5323
        %v5772 = vsub.f32 0.0, %v5324
        %v5773 = vsub.f32 0.0, %v5325
        %v5774 = vsub.f32 0.0, %v5326
        %v5775 = vsub.f32 0.0, %v5327
        %v5776 = vsub.f32 0.0, %v5328
        %v5777 = vsub.f32 0.0, %v5329
        %v5778 = vsub.f32 0.0, %v5330
        %v5779 = vsub.f32 0.0, %v5331
        %v5780 = vsub.f32 0.0, %v5332
        %v5781 = vsub.f32 0.0, %v5333
        %v5782 = vsub.f32 0.0, %v5334
        %v5783 = vsub.f32 0.0, %v5335
        %v5784 = vsub.f32 0.0, %v5336
        %v5785 = vsub.f32 0.0, %v5337
        %v5786 = vsub.f32 0.0, %v5338
        %v5787 = vsub.f32 0.0, %v5339
        %v5788 = vsub.f32 0.0, %v5340
        %v5789 = vsub.f32 0.0, %v5341
        %v5790 = vsub.f32 0.0, %v5342
        %v5791 = vmul.f32 %v5759, %v5311
        %v5792 = vmul.f32 %v5760, %v5312
        %v5793 = vmul.f32 %v5761, %v5313
        %v5794 = vmul.f32 %v5762, %v5314
        %v5795 = vmul.f32 %v5763, %v5315
        %v5796 = vmul.f32 %v5764, %v5316
        %v5797 = vmul.f32 %v5765, %v5317
        %v5798 = vmul.f32 %v5766, %v5318
        %v5799 = vmul.f32 %v5767, %v5319
        %v5800 = vmul.f32 %v5768, %v5320
        %v5801 = vmul.f32 %v5769, %v5321
        %v5802 = vmul.f32 %v5770, %v5322
        %v5803 = vmul.f32 %v5771, %v5323
        %v5804 = vmul.f32 %v5772, %v5324
        %v5805 = vmul.f32 %v5773, %v5325
        %v5806 = vmul.f32 %v5774, %v5326
        %v5807 = vmul.f32 %v5775, %v5327
        %v5808 = vmul.f32 %v5776, %v5328
        %v5809 = vmul.f32 %v5777, %v5329
        %v5810 = vmul.f32 %v5778, %v5330
        %v5811 = vmul.f32 %v5779, %v5331
        %v5812 = vmul.f32 %v5780, %v5332
        %v5813 = vmul.f32 %v5781, %v5333
        %v5814 = vmul.f32 %v5782, %v5334
        %v5815 = vmul.f32 %v5783, %v5335
        %v5816 = vmul.f32 %v5784, %v5336
        %v5817 = vmul.f32 %v5785, %v5337
        %v5818 = vmul.f32 %v5786, %v5338
        %v5819 = vmul.f32 %v5787, %v5339
        %v5820 = vmul.f32 %v5788, %v5340
        %v5821 = vmul.f32 %v5789, %v5341
        %v5822 = vmul.f32 %v5790, %v5342
        %v5823 = vmul.f32 %v5791, 1.442695
        %v5824 = vpow.pop %v5823
        %v5825 = vmul.f32 %v5792, 1.442695
        %v5826 = vpow.pop %v5825
        %v5827 = vmul.f32 %v5793, 1.442695
        %v5828 = vpow.pop %v5827
        %v5829 = vmul.f32 %v5794, 1.442695
        %v5830 = vpow.pop %v5829
        %v5831 = vmul.f32 %v5795, 1.442695
        %v5832 = vpow.pop %v5831
        %v5833 = vmul.f32 %v5796, 1.442695
        %v5834 = vpow.pop %v5833
        %v5835 = vmul.f32 %v5797, 1.442695
        %v5836 = vpow.pop %v5835
        %v5837 = vmul.f32 %v5798, 1.442695
        %v5838 = vpow.pop %v5837
        %v5839 = vmul.f32 %v5799, 1.442695
        %v5840 = vpow.pop %v5839
        %v5841 = vmul.f32 %v5800, 1.442695
        %v5842 = vpow.pop %v5841
        %v5843 = vmul.f32 %v5801, 1.442695
        %v5844 = vpow.pop %v5843
        %v5845 = vmul.f32 %v5802, 1.442695
        %v5846 = vpow.pop %v5845
        %v5847 = vmul.f32 %v5803, 1.442695
        %v5848 = vpow.pop %v5847
        %v5849 = vmul.f32 %v5804, 1.442695
        %v5850 = vpow.pop %v5849
        %v5851 = vmul.f32 %v5805, 1.442695
        %v5852 = vpow.pop %v5851
        %v5853 = vmul.f32 %v5806, 1.442695
        %v5854 = vpow.pop %v5853
        %v5855 = vmul.f32 %v5807, 1.442695
        %v5856 = vpow.pop %v5855
        %v5857 = vmul.f32 %v5808, 1.442695
        %v5858 = vpow.pop %v5857
        %v5859 = vmul.f32 %v5809, 1.442695
        %v5860 = vpow.pop %v5859
        %v5861 = vmul.f32 %v5810, 1.442695
        %v5862 = vpow.pop %v5861
        %v5863 = vmul.f32 %v5811, 1.442695
        %v5864 = vpow.pop %v5863
        %v5865 = vmul.f32 %v5812, 1.442695
        %v5866 = vpow.pop %v5865
        %v5867 = vmul.f32 %v5813, 1.442695
        %v5868 = vpow.pop %v5867
        %v5869 = vmul.f32 %v5814, 1.442695
        %v5870 = vpow.pop %v5869
        %v5871 = vmul.f32 %v5815, 1.442695
        %v5872 = vpow.pop %v5871
        %v5873 = vmul.f32 %v5816, 1.442695
        %v5874 = vpow.pop %v5873
        %v5875 = vmul.f32 %v5817, 1.442695
        %v5876 = vpow.pop %v5875
        %v5877 = vmul.f32 %v5818, 1.442695
        %v5878 = vpow.pop %v5877
        %v5879 = vmul.f32 %v5819, 1.442695
        %v5880 = vpow.pop %v5879
        %v5881 = vmul.f32 %v5820, 1.442695
        %v5882 = vpow.pop %v5881
        %v5883 = vmul.f32 %v5821, 1.442695
        %v5884 = vpow.pop %v5883
        %v5885 = vmul.f32 %v5822, 1.442695
        %v5886 = vpow.pop %v5885
        %v5887 = vmul.f32 %v5727, %v5824
        %v5888 = vmul.f32 %v5728, %v5826
        %v5889 = vmul.f32 %v5729, %v5828
        %v5890 = vmul.f32 %v5730, %v5830
        %v5891 = vmul.f32 %v5731, %v5832
        %v5892 = vmul.f32 %v5732, %v5834
        %v5893 = vmul.f32 %v5733, %v5836
        %v5894 = vmul.f32 %v5734, %v5838
        %v5895 = vmul.f32 %v5735, %v5840
        %v5896 = vmul.f32 %v5736, %v5842
        %v5897 = vmul.f32 %v5737, %v5844
        %v5898 = vmul.f32 %v5738, %v5846
        %v5899 = vmul.f32 %v5739, %v5848
        %v5900 = vmul.f32 %v5740, %v5850
        %v5901 = vmul.f32 %v5741, %v5852
        %v5902 = vmul.f32 %v5742, %v5854
        %v5903 = vmul.f32 %v5743, %v5856
        %v5904 = vmul.f32 %v5744, %v5858
        %v5905 = vmul.f32 %v5745, %v5860
        %v5906 = vmul.f32 %v5746, %v5862
        %v5907 = vmul.f32 %v5747, %v5864
        %v5908 = vmul.f32 %v5748, %v5866
        %v5909 = vmul.f32 %v5749, %v5868
        %v5910 = vmul.f32 %v5750, %v5870
        %v5911 = vmul.f32 %v5751, %v5872
        %v5912 = vmul.f32 %v5752, %v5874
        %v5913 = vmul.f32 %v5753, %v5876
        %v5914 = vmul.f32 %v5754, %v5878
        %v5915 = vmul.f32 %v5755, %v5880
        %v5916 = vmul.f32 %v5756, %v5882
        %v5917 = vmul.f32 %v5757, %v5884
        %v5918 = vmul.f32 %v5758, %v5886
        %v5919 = vsub.f32 1.0, %v5887
        %v5920 = vsub.f32 1.0, %v5888
        %v5921 = vsub.f32 1.0, %v5889
        %v5922 = vsub.f32 1.0, %v5890
        %v5923 = vsub.f32 1.0, %v5891
        %v5924 = vsub.f32 1.0, %v5892
        %v5925 = vsub.f32 1.0, %v5893
        %v5926 = vsub.f32 1.0, %v5894
        %v5927 = vsub.f32 1.0, %v5895
        %v5928 = vsub.f32 1.0, %v5896
        %v5929 = vsub.f32 1.0, %v5897
        %v5930 = vsub.f32 1.0, %v5898
        %v5931 = vsub.f32 1.0, %v5899
        %v5932 = vsub.f32 1.0, %v5900
        %v5933 = vsub.f32 1.0, %v5901
        %v5934 = vsub.f32 1.0, %v5902
        %v5935 = vsub.f32 1.0, %v5903
        %v5936 = vsub.f32 1.0, %v5904
        %v5937 = vsub.f32 1.0, %v5905
        %v5938 = vsub.f32 1.0, %v5906
        %v5939 = vsub.f32 1.0, %v5907
        %v5940 = vsub.f32 1.0, %v5908
        %v5941 = vsub.f32 1.0, %v5909
        %v5942 = vsub.f32 1.0, %v5910
        %v5943 = vsub.f32 1.0, %v5911
        %v5944 = vsub.f32 1.0, %v5912
        %v5945 = vsub.f32 1.0, %v5913
        %v5946 = vsub.f32 1.0, %v5914
        %v5947 = vsub.f32 1.0, %v5915
        %v5948 = vsub.f32 1.0, %v5916
        %v5949 = vsub.f32 1.0, %v5917
        %v5950 = vsub.f32 1.0, %v5918
        %v5951 = vmul.f32 %v5279, %v5919
        %v5952 = vmul.f32 %v5280, %v5920
        %v5953 = vmul.f32 %v5281, %v5921
        %v5954 = vmul.f32 %v5282, %v5922
        %v5955 = vmul.f32 %v5283, %v5923
        %v5956 = vmul.f32 %v5284, %v5924
        %v5957 = vmul.f32 %v5285, %v5925
        %v5958 = vmul.f32 %v5286, %v5926
        %v5959 = vmul.f32 %v5287, %v5927
        %v5960 = vmul.f32 %v5288, %v5928
        %v5961 = vmul.f32 %v5289, %v5929
        %v5962 = vmul.f32 %v5290, %v5930
        %v5963 = vmul.f32 %v5291, %v5931
        %v5964 = vmul.f32 %v5292, %v5932
        %v5965 = vmul.f32 %v5293, %v5933
        %v5966 = vmul.f32 %v5294, %v5934
        %v5967 = vmul.f32 %v5295, %v5935
        %v5968 = vmul.f32 %v5296, %v5936
        %v5969 = vmul.f32 %v5297, %v5937
        %v5970 = vmul.f32 %v5298, %v5938
        %v5971 = vmul.f32 %v5299, %v5939
        %v5972 = vmul.f32 %v5300, %v5940
        %v5973 = vmul.f32 %v5301, %v5941
        %v5974 = vmul.f32 %v5302, %v5942
        %v5975 = vmul.f32 %v5303, %v5943
        %v5976 = vmul.f32 %v5304, %v5944
        %v5977 = vmul.f32 %v5305, %v5945
        %v5978 = vmul.f32 %v5306, %v5946
        %v5979 = vmul.f32 %v5307, %v5947
        %v5980 = vmul.f32 %v5308, %v5948
        %v5981 = vmul.f32 %v5309, %v5949
        %v5982 = vmul.f32 %v5310, %v5950
        %v5983 = vadd.f32 %v5951, 1.0
        %v5984 = vadd.f32 %v5952, 1.0
        %v5985 = vadd.f32 %v5953, 1.0
        %v5986 = vadd.f32 %v5954, 1.0
        %v5987 = vadd.f32 %v5955, 1.0
        %v5988 = vadd.f32 %v5956, 1.0
        %v5989 = vadd.f32 %v5957, 1.0
        %v5990 = vadd.f32 %v5958, 1.0
        %v5991 = vadd.f32 %v5959, 1.0
        %v5992 = vadd.f32 %v5960, 1.0
        %v5993 = vadd.f32 %v5961, 1.0
        %v5994 = vadd.f32 %v5962, 1.0
        %v5995 = vadd.f32 %v5963, 1.0
        %v5996 = vadd.f32 %v5964, 1.0
        %v5997 = vadd.f32 %v5965, 1.0
        %v5998 = vadd.f32 %v5966, 1.0
        %v5999 = vadd.f32 %v5967, 1.0
        %v6000 = vadd.f32 %v5968, 1.0
        %v6001 = vadd.f32 %v5969, 1.0
        %v6002 = vadd.f32 %v5970, 1.0
        %v6003 = vadd.f32 %v5971, 1.0
        %v6004 = vadd.f32 %v5972, 1.0
        %v6005 = vadd.f32 %v5973, 1.0
        %v6006 = vadd.f32 %v5974, 1.0
        %v6007 = vadd.f32 %v5975, 1.0
        %v6008 = vadd.f32 %v5976, 1.0
        %v6009 = vadd.f32 %v5977, 1.0
        %v6010 = vadd.f32 %v5978, 1.0
        %v6011 = vadd.f32 %v5979, 1.0
        %v6012 = vadd.f32 %v5980, 1.0
        %v6013 = vadd.f32 %v5981, 1.0
        %v6014 = vadd.f32 %v5982, 1.0
        %v6015 = vmul.f32 %v5183, %v5983
        %v6016 = vmul.f32 %v5184, %v5984
        %v6017 = vmul.f32 %v5185, %v5985
        %v6018 = vmul.f32 %v5186, %v5986
        %v6019 = vmul.f32 %v5187, %v5987
        %v6020 = vmul.f32 %v5188, %v5988
        %v6021 = vmul.f32 %v5189, %v5989
        %v6022 = vmul.f32 %v5190, %v5990
        %v6023 = vmul.f32 %v5191, %v5991
        %v6024 = vmul.f32 %v5192, %v5992
        %v6025 = vmul.f32 %v5193, %v5993
        %v6026 = vmul.f32 %v5194, %v5994
        %v6027 = vmul.f32 %v5195, %v5995
        %v6028 = vmul.f32 %v5196, %v5996
        %v6029 = vmul.f32 %v5197, %v5997
        %v6030 = vmul.f32 %v5198, %v5998
        %v6031 = vmul.f32 %v5199, %v5999
        %v6032 = vmul.f32 %v5200, %v6000
        %v6033 = vmul.f32 %v5201, %v6001
        %v6034 = vmul.f32 %v5202, %v6002
        %v6035 = vmul.f32 %v5203, %v6003
        %v6036 = vmul.f32 %v5204, %v6004
        %v6037 = vmul.f32 %v5205, %v6005
        %v6038 = vmul.f32 %v5206, %v6006
        %v6039 = vmul.f32 %v5207, %v6007
        %v6040 = vmul.f32 %v5208, %v6008
        %v6041 = vmul.f32 %v5209, %v6009
        %v6042 = vmul.f32 %v5210, %v6010
        %v6043 = vmul.f32 %v5211, %v6011
        %v6044 = vmul.f32 %v5212, %v6012
        %v6045 = vmul.f32 %v5213, %v6013
        %v6046 = vmul.f32 %v5214, %v6014
        %v6047 = vpack.c.bf16 %v6017, %v6015
        %v6048 = vpack.c.bf16 %v6018, %v6016
        %v6049 = vpack.c.bf16 %v6021, %v6019
        %v6050 = vpack.c.bf16 %v6022, %v6020
        %v6051 = vpack.c.bf16 %v6025, %v6023
        %v6052 = vpack.c.bf16 %v6026, %v6024
        %v6053 = vpack.c.bf16 %v6029, %v6027
        %v6054 = vpack.c.bf16 %v6030, %v6028
        %v6055 = vpack.c.bf16 %v6033, %v6031
        %v6056 = vpack.c.bf16 %v6034, %v6032
        %v6057 = vpack.c.bf16 %v6037, %v6035
        %v6058 = vpack.c.bf16 %v6038, %v6036
        %v6059 = vpack.c.bf16 %v6041, %v6039
        %v6060 = vpack.c.bf16 %v6042, %v6040
        %v6061 = vpack.c.bf16 %v6045, %v6043
        %v6062 = vpack.c.bf16 %v6046, %v6044
        %v6063 = vld [vmem:[#allocation17] sm:$0xf]
        %v6064 = vld [vmem:[#allocation17 + $0x4] sm:$0xf]
        %v6065 = vld [vmem:[#allocation17 + $0x8] sm:$0xf]
        %v6066 = vld [vmem:[#allocation17 + $0xc] sm:$0xf]
        %v6067 = vld [vmem:[#allocation17 + $0x10] sm:$0xf]
        %v6068 = vld [vmem:[#allocation17 + $0x14] sm:$0xf]
        %v6069 = vld [vmem:[#allocation17 + $0x18] sm:$0xf]
        %v6070 = vld [vmem:[#allocation17 + $0x1c] sm:$0xf]
        %v6071 = vld [vmem:[#allocation17 + $0x20] sm:$0xf]
        %v6072 = vld [vmem:[#allocation17 + $0x24] sm:$0xf]
        %v6073 = vld [vmem:[#allocation17 + $0x28] sm:$0xf]
        %v6074 = vld [vmem:[#allocation17 + $0x2c] sm:$0xf]
        %v6075 = vld [vmem:[#allocation17 + $0x30] sm:$0xf]
        %v6076 = vld [vmem:[#allocation17 + $0x34] sm:$0xf]
        %v6077 = vld [vmem:[#allocation17 + $0x38] sm:$0xf]
        %v6078 = vld [vmem:[#allocation17 + $0x3c] sm:$0xf]
        %v6079 = vld [vmem:[#allocation17 + $0x40] sm:$0xf]
        %v6080 = vld [vmem:[#allocation17 + $0x44] sm:$0xf]
        %v6081 = vld [vmem:[#allocation17 + $0x48] sm:$0xf]
        %v6082 = vld [vmem:[#allocation17 + $0x4c] sm:$0xf]
        %v6083 = vld [vmem:[#allocation17 + $0x50] sm:$0xf]
        %v6084 = vld [vmem:[#allocation17 + $0x54] sm:$0xf]
        %v6085 = vld [vmem:[#allocation17 + $0x58] sm:$0xf]
        %v6086 = vld [vmem:[#allocation17 + $0x5c] sm:$0xf]
        %v6087 = vld [vmem:[#allocation17 + $0x60] sm:$0xf]
        %v6088 = vld [vmem:[#allocation17 + $0x64] sm:$0xf]
        %v6089 = vld [vmem:[#allocation17 + $0x68] sm:$0xf]
        %v6090 = vld [vmem:[#allocation17 + $0x6c] sm:$0xf]
        %v6091 = vld [vmem:[#allocation17 + $0x70] sm:$0xf]
        %v6092 = vld [vmem:[#allocation17 + $0x74] sm:$0xf]
        %v6093 = vld [vmem:[#allocation17 + $0x78] sm:$0xf]
        %v6094 = vld [vmem:[#allocation17 + $0x7c] sm:$0xf]
        %v6096 = vlaneseq
        %v6097 = vshrl.u32 %v6096, 7
        %v6098 = vsub.s32 0, %v6097
        %v6099 = vrot.slane %v679, %v6098
        %v6133 = vunpack.c.l.b16 %v6063
        %v6134 = vunpack.c.l.b16 %v6064
        %v6135 = vunpack.c.l.b16 %v6065
        %v6136 = vunpack.c.l.b16 %v6066
        %v6137 = vunpack.c.l.b16 %v6067
        %v6138 = vunpack.c.l.b16 %v6068
        %v6139 = vunpack.c.l.b16 %v6069
        %v6140 = vunpack.c.l.b16 %v6070
        %v6141 = vunpack.c.l.b16 %v6071
        %v6142 = vunpack.c.l.b16 %v6072
        %v6143 = vunpack.c.l.b16 %v6073
        %v6144 = vunpack.c.l.b16 %v6074
        %v6145 = vunpack.c.l.b16 %v6075
        %v6146 = vunpack.c.l.b16 %v6076
        %v6147 = vunpack.c.l.b16 %v6077
        %v6148 = vunpack.c.l.b16 %v6078
        %v6149 = vunpack.c.l.b16 %v6079
        %v6150 = vunpack.c.l.b16 %v6080
        %v6151 = vunpack.c.l.b16 %v6081
        %v6152 = vunpack.c.l.b16 %v6082
        %v6153 = vunpack.c.l.b16 %v6083
        %v6154 = vunpack.c.l.b16 %v6084
        %v6155 = vunpack.c.l.b16 %v6085
        %v6156 = vunpack.c.l.b16 %v6086
        %v6157 = vunpack.c.l.b16 %v6087
        %v6158 = vunpack.c.l.b16 %v6088
        %v6159 = vunpack.c.l.b16 %v6089
        %v6160 = vunpack.c.l.b16 %v6090
        %v6161 = vunpack.c.l.b16 %v6091
        %v6162 = vunpack.c.l.b16 %v6092
        %v6163 = vunpack.c.l.b16 %v6093
        %v6164 = vunpack.c.l.b16 %v6094
        %v6165 = vpack.c.b16 %v6134, %v6133
        %v6166 = vpack.c.b16 %v6136, %v6135
        %v6167 = vpack.c.b16 %v6138, %v6137
        %v6168 = vpack.c.b16 %v6140, %v6139
        %v6169 = vpack.c.b16 %v6142, %v6141
        %v6170 = vpack.c.b16 %v6144, %v6143
        %v6171 = vpack.c.b16 %v6146, %v6145
        %v6172 = vpack.c.b16 %v6148, %v6147
        %v6173 = vpack.c.b16 %v6150, %v6149
        %v6174 = vpack.c.b16 %v6152, %v6151
        %v6175 = vpack.c.b16 %v6154, %v6153
        %v6176 = vpack.c.b16 %v6156, %v6155
        %v6177 = vpack.c.b16 %v6158, %v6157
        %v6178 = vpack.c.b16 %v6160, %v6159
        %v6179 = vpack.c.b16 %v6162, %v6161
        %v6180 = vpack.c.b16 %v6164, %v6163
        %6197 = vmatprep.subr.bf16.mxu0 0
        %6198 = vmatpush1.bf16.msra.mxu0 %v6172
        %6199 = vmatprep.subr.bf16.mxu0 0
        %6200 = vmatpush1.bf16.msra.mxu0 %v6171
        %6201 = vmatprep.subr.bf16.mxu0 0
        %6202 = vmatpush1.bf16.msra.mxu0 %v6170
        %6203 = vmatprep.subr.bf16.mxu0 0
        %6204 = vmatpush1.bf16.msra.mxu0 %v6169
        %6205 = vmatprep.subr.bf16.mxu0 0
        %6206 = vmatpush1.bf16.msra.mxu0 %v6168
        %6207 = vmatprep.subr.bf16.mxu0 0
        %6208 = vmatpush1.bf16.msra.mxu0 %v6167
        %6209 = vmatprep.subr.bf16.mxu0 0
        %6210 = vmatpush1.bf16.msra.mxu0 %v6166
        %6211 = vmatprep.subr.bf16.mxu0 0
        %6212 = vmatpush1.bf16.msra.mxu0 %v6165
        %6213 = vmatprep.subr.bf16.mxu0 0
        %6214 = vmatpush2.bf16.msra.mxu0 %v6180
        %6215 = vmatprep.subr.bf16.mxu0 0
        %6216 = vmatpush2.bf16.msra.mxu0 %v6179
        %6217 = vmatprep.subr.bf16.mxu0 0
        %6218 = vmatpush2.bf16.msra.mxu0 %v6178
        %6219 = vmatprep.subr.bf16.mxu0 0
        %6220 = vmatpush2.bf16.msra.mxu0 %v6177
        %6221 = vmatprep.subr.bf16.mxu0 0
        %6222 = vmatpush2.bf16.msra.mxu0 %v6176
        %6223 = vmatprep.subr.bf16.mxu0 0
        %6224 = vmatpush2.bf16.msra.mxu0 %v6175
        %6225 = vmatprep.subr.bf16.mxu0 0
        %6226 = vmatpush2.bf16.msra.mxu0 %v6174
        %6227 = vmatprep.subr.bf16.mxu0 0
        %6228 = vmatpush2.bf16.msra.mxu0 %v6173
        %6229 = vmatprep.mubr.bf16.mxu0 %v6048
        %6230 = vmatmul.mubr.bf16.gmra.mxu0 %v6047
        %v6231 = vpop.f32.mrf.mxu0
        %v6232 = vadd.f32 %v6099, %v6231
        %v6233 = vpop.f32.mrf.mxu0
        %v6234 = vpop.f32.mrf.mxu0
        %v6235 = vadd.f32 %v6099, %v6234
        %v6236 = vpop.f32.mrf.mxu0
        %6237 = vmatprep.mubr.bf16.mxu0 %v6050
        %6238 = vmatmul.mubr.bf16.gmra.mxu0 %v6049
        %v6239 = vpop.f32.mrf.mxu0
        %v6240 = vadd.f32 %v6099, %v6239
        %v6241 = vpop.f32.mrf.mxu0
        %v6242 = vpop.f32.mrf.mxu0
        %v6243 = vadd.f32 %v6099, %v6242
        %v6244 = vpop.f32.mrf.mxu0
        %6245 = vmatprep.mubr.bf16.mxu0 %v6052
        %6246 = vmatmul.mubr.bf16.gmra.mxu0 %v6051
        %v6247 = vpop.f32.mrf.mxu0
        %v6248 = vadd.f32 %v6099, %v6247
        %v6249 = vpop.f32.mrf.mxu0
        %v6250 = vpop.f32.mrf.mxu0
        %v6251 = vadd.f32 %v6099, %v6250
        %v6252 = vpop.f32.mrf.mxu0
        %6253 = vmatprep.mubr.bf16.mxu0 %v6054
        %6254 = vmatmul.mubr.bf16.gmra.mxu0 %v6053
        %v6255 = vpop.f32.mrf.mxu0
        %v6256 = vadd.f32 %v6099, %v6255
        %v6257 = vpop.f32.mrf.mxu0
        %v6258 = vpop.f32.mrf.mxu0
        %v6259 = vadd.f32 %v6099, %v6258
        %v6260 = vpop.f32.mrf.mxu0
        %6261 = vmatprep.mubr.bf16.mxu0 %v6056
        %6262 = vmatmul.mubr.bf16.gmra.mxu0 %v6055
        %v6263 = vpop.f32.mrf.mxu0
        %v6264 = vadd.f32 %v6099, %v6263
        %v6265 = vpop.f32.mrf.mxu0
        %v6266 = vpop.f32.mrf.mxu0
        %v6267 = vadd.f32 %v6099, %v6266
        %v6268 = vpop.f32.mrf.mxu0
        %6269 = vmatprep.mubr.bf16.mxu0 %v6058
        %6270 = vmatmul.mubr.bf16.gmra.mxu0 %v6057
        %v6271 = vpop.f32.mrf.mxu0
        %v6272 = vadd.f32 %v6099, %v6271
        %v6273 = vpop.f32.mrf.mxu0
        %v6274 = vpop.f32.mrf.mxu0
        %v6275 = vadd.f32 %v6099, %v6274
        %v6276 = vpop.f32.mrf.mxu0
        %6277 = vmatprep.mubr.bf16.mxu0 %v6060
        %6278 = vmatmul.mubr.bf16.gmra.mxu0 %v6059
        %v6279 = vpop.f32.mrf.mxu0
        %v6280 = vadd.f32 %v6099, %v6279
        %v6281 = vpop.f32.mrf.mxu0
        %v6282 = vpop.f32.mrf.mxu0
        %v6283 = vadd.f32 %v6099, %v6282
        %v6284 = vpop.f32.mrf.mxu0
        %6285 = vmatprep.mubr.bf16.mxu0 %v6062
        %6286 = vmatmul.mubr.bf16.gmra.mxu0 %v6061
        %v6287 = vpop.f32.mrf.mxu0
        %v6288 = vadd.f32 %v6099, %v6287
        %v6289 = vpop.f32.mrf.mxu0
        %v6290 = vpop.f32.mrf.mxu0
        %v6291 = vadd.f32 %v6099, %v6290
        %v6292 = vpop.f32.mrf.mxu0
        %6293 = vdwg.mxu0
        %v6294 = vadd.f32 %v4719, %v6232
        %v6295 = vadd.f32 %v4720, %v6235
        %v6296 = vadd.f32 %v4721, %v6240
        %v6297 = vadd.f32 %v4722, %v6243
        %v6298 = vadd.f32 %v4723, %v6248
        %v6299 = vadd.f32 %v4724, %v6251
        %v6300 = vadd.f32 %v4725, %v6256
        %v6301 = vadd.f32 %v4726, %v6259
        %v6302 = vadd.f32 %v4727, %v6264
        %v6303 = vadd.f32 %v4728, %v6267
        %v6304 = vadd.f32 %v4729, %v6272
        %v6305 = vadd.f32 %v4730, %v6275
        %v6306 = vadd.f32 %v4731, %v6280
        %v6307 = vadd.f32 %v4732, %v6283
        %v6308 = vadd.f32 %v4733, %v6288
        %v6309 = vadd.f32 %v4734, %v6291
        %6310 = vst [vmem:[%s655] sm:$0xff] %v6294
        %6311 = vst [vmem:[%s655 + $0x8] sm:$0xff] %v6295
        %6312 = vst [vmem:[%s655 + $0x10] sm:$0xff] %v6296
        %6313 = vst [vmem:[%s655 + $0x18] sm:$0xff] %v6297
        %6314 = vst [vmem:[%s655 + $0x20] sm:$0xff] %v6298
        %6315 = vst [vmem:[%s655 + $0x28] sm:$0xff] %v6299
        %6316 = vst [vmem:[%s655 + $0x30] sm:$0xff] %v6300
        %6317 = vst [vmem:[%s655 + $0x38] sm:$0xff] %v6301
        %6318 = vst [vmem:[%s655 + $0x40] sm:$0xff] %v6302
        %6319 = vst [vmem:[%s655 + $0x48] sm:$0xff] %v6303
        %6320 = vst [vmem:[%s655 + $0x50] sm:$0xff] %v6304
        %6321 = vst [vmem:[%s655 + $0x58] sm:$0xff] %v6305
        %6322 = vst [vmem:[%s655 + $0x60] sm:$0xff] %v6306
        %6323 = vst [vmem:[%s655 + $0x68] sm:$0xff] %v6307
        %6324 = vst [vmem:[%s655 + $0x70] sm:$0xff] %v6308
        %6325 = vst [vmem:[%s655 + $0x78] sm:$0xff] %v6309
        %s6326 = sand.u32 %s386, 1
        %s6327 = scalar_lea.sflag [#allocation5], %s6326
        %s6328 = sand.u32 %s386, 1
        %s6329 = smul.addr %s6328, 128
        %s6330 = scalar_lea.vmem [#allocation18], %s6329
        // Predicated region
        $region121: #{tpu_custom_call.1} parent=83 // pred_check
          %p6331 = pneg %p396
        $region122: #{tpu_custom_call.1} parent=83 // pred_check_branch
          %6333 = sbr.rel (%p6331) target = $region124
        $region123: #{tpu_custom_call.1} parent=83 // pred_region
          %s6335 = ssub.s32 2048, 2048
          %6336 = vsyncadd %s6327, %s6335
          %s6337 = smul.addr %s37, 16
          %s6338 = smul.addr %s6337, 128
          %s6339 = scalar_lea.hbm %s16, %s6338
          %s6340 = sshll.u32 %s6330, 4
          %s6341 = int_to_ptr.vmem [resolvable:$true] %s6340
          %6346 = dma.vmem_to_hbm [thread:$0]  %s6341, 2048, %s6339, %s6327, 128, 128, 8
        $region124: #{tpu_custom_call.1} parent=83 // pred_fallthru
          _
      $region84: #{tpu_custom_call.1} parent=5 // pred_fallthru
        _
      %p6347 = scmp.le.s32.totalorder 2, %s32
      // Predicated region
      $region125: #{tpu_custom_call.1} parent=5 // pred_check
        %p6348 = pneg %p6347
      $region126: #{tpu_custom_call.1} parent=5 // pred_check_branch
        %6350 = sbr.rel (%p6348) target = $region128
      $region127: #{tpu_custom_call.1} parent=5 // pred_region
        %s6351 = ssub.s32 %s32, 2
        // Predicated region
        $region129: #{tpu_custom_call.1} parent=127 // pred_check
          %p6352 = pneg %p402
        $region130: #{tpu_custom_call.1} parent=127 // pred_check_branch
          %6354 = sbr.rel (%p6352) target = $region132
        $region131: #{tpu_custom_call.1} parent=127 // pred_region
          %s6355 = sand.u32 %s387, 1
          %s6356 = scalar_lea.sflag [#allocation5], %s6355
          %s6357 = sand.u32 %s387, 1
          %s6358 = smul.addr %s6357, 128
          %s6359 = scalar_lea.vmem [#allocation18], %s6358
          %6360 = dma.done %s6356, 2048
        $region132: #{tpu_custom_call.1} parent=127 // pred_fallthru
          _
      $region128: #{tpu_custom_call.1} parent=5 // pred_fallthru
        _
    $region6: #{tpu_custom_call.1} parent=1 // loop_footer
      %s36 = sadd.s32 1, %s32
    $region7: #{tpu_custom_call.1} parent=1 // loop_footer_branch
      %31 = sbr.rel target = $region3
    $region8: #{tpu_custom_call.1} parent=1 // loop_exit
      _
    %6361 = vsyncpa [#allocation4], 1
    %s6362 = scalar_lea.sflag [#allocation4], 1
    %6363 = vsyncpa %s6362, 1
    %6364 = vsyncpa [#allocation7], 1
    %6365 = vsyncpa [#allocation10], 1
    %6366 = vsyncpa [#allocation13], 1
    %6367 = vsyncpa [#allocation16], 1
    %6368 = vsyncpa [#allocation5], 1
    %s6369 = scalar_lea.sflag [#allocation5], 1
    %6370 = vsyncpa %s6369, 1

</llo_original>
